<compile_context>
chip_gen: v7x
topology: tpu7x:2x2x1
jax: 0.10.0
libtpu: 0.0.40
codegen_flags: <defaults>
</compile_context>

<pallas_src>
import functools

import numpy as np
import jax
import jax.numpy as jnp
from jax import lax
from jax.experimental import pallas as pl
from jax.experimental.pallas import tpu as pltpu


def _fused_final_conv_kernel(x_ref, w1b_ref, b1t_ref, w2b_ref, b2t_ref, out_ref,
                             xpad_ref, hpad_ref, xslab_ref, hslab_ref,
                             acc1_ref, acc2_ref, *,
                             N, D, H, W, KD, KH, Cin, Cmid, Cout):
    """Fused conv1 + bias + ReLU + conv2 + bias for the whole (folded) batch.

    x_ref    : (N, D, H, W*Cin)   f32   input, (W, C) lane-folded
    w1b_ref  : (KD, KH, W*Cin,  W*Cmid) bf16 banded conv1 weights
    b1t_ref  : (1, W*Cmid)        f32   conv1 bias tiled over W
    w2b_ref  : (KD, KH, W*Cmid, W*Cout) bf16 banded conv2 weights
    b2t_ref  : (1, W*Cout)        f32   conv2 bias tiled over W
    out_ref  : (N, D*H, W*Cout)   f32   output
    xpad_ref : (N, D+KD-1, H+KH-1, W*Cin)   VMEM scratch (D/H zero-padded x)
    hpad_ref : (N, D+KD-1, H+KH-1, W*Cmid)  VMEM scratch (D/H zero-padded h)
    xslab_ref: (N, D+KD-1, H, W*Cin)        VMEM scratch (H-shifted slab)
    hslab_ref: (N, D+KD-1, H, W*Cmid)       VMEM scratch (H-shifted slab)
    acc1_ref : (N*D*H, W*Cmid)    f32   conv1 accumulator
    acc2_ref : (N*D*H, W*Cout)    f32   conv2 accumulator
    """
    pd, ph = KD // 2, KH // 2
    Dp, Hp = D + 2 * pd, H + 2 * ph
    NDH = N * D * H
    Lin, Lmid, Lout = W * Cin, W * Cmid, W * Cout
    f32 = jnp.float32

    # ---- zero only the halo strips (one-time; interiors fully rewritten) ----
    def zero_halo(ref, L):
        ref[:, 0:pd, :, :] = jnp.zeros((N, pd, Hp, L), f32)
        ref[:, pd + D:Dp, :, :] = jnp.zeros((N, Dp - D - pd, Hp, L), f32)
        ref[:, pd:pd + D, 0:ph, :] = jnp.zeros((N, D, ph, L), f32)
        ref[:, pd:pd + D, ph + H:Hp, :] = jnp.zeros((N, D, Hp - H - ph, L), f32)

    zero_halo(xpad_ref, Lin)
    zero_halo(hpad_ref, Lmid)

    # ---- stage the input into the D/H zero-padded scratch -------------------
    xpad_ref[:, pd:pd + D, ph:ph + H, :] = x_ref[...]

    # ---- conv1 + bias + ReLU: KD*KH MXU matmuls, K = W*Cin, bf16 operands ----
    acc1_ref[...] = jnp.zeros_like(acc1_ref)
    for b in range(KH):
        # Hoist the sublane-misaligned H shift: one relayout copy per b
        # instead of one per (a, b) tap; the a-slices below are tile-aligned.
        xslab_ref[...] = xpad_ref[:, :, b:b + H, :]
        for a in range(KD):
            lhs = (xslab_ref[:, a:a + D, :, :]
                   .reshape(NDH, Lin).astype(jnp.bfloat16))
            acc1_ref[...] += jnp.dot(lhs, w1b_ref[a, b],
                                     preferred_element_type=jnp.float32)
    h = jnp.maximum(acc1_ref[...] + b1t_ref[...], 0.0)

    # ---- stage hidden activation into its padded scratch (stays in VMEM) ----
    hpad_ref[:, pd:pd + D, ph:ph + H, :] = h.reshape(N, D, H, Lmid)

    # ---- conv2 + bias --------------------------------------------------------
    acc2_ref[...] = jnp.zeros_like(acc2_ref)
    for b in range(KH):
        hslab_ref[...] = hpad_ref[:, :, b:b + H, :]
        for a in range(KD):
            lhs = (hslab_ref[:, a:a + D, :, :]
                   .reshape(NDH, Lmid).astype(jnp.bfloat16))
            acc2_ref[...] += jnp.dot(lhs, w2b_ref[a, b],
                                     preferred_element_type=jnp.float32)
    out = acc2_ref[...] + b2t_ref[...]
    out_ref[...] = out.reshape(N, D * H, Lout).astype(out_ref.dtype)


def _build_banded_weights(w, w_len):
    """Fold the KW taps (and implicit W zero padding) into the matmul K dim.

    w: (KD, KH, KW, Cin, Cout) -> band: (KD, KH, W*Cin, W*Cout) with
    band[a, b, wi*Cin+ci, wo*Cout+co] = w[a, b, wi-wo+pw, ci, co] when the tap
    is in range, 0 otherwise (out-of-range taps == zero padding along W).
    Host-side numpy: runs once per parameter set, not per forward call.
    """
    kd, kh, kw, cin, cout = w.shape
    pw = kw // 2
    band = np.zeros((kd, kh, w_len * cin, w_len * cout), np.float32)
    for wo in range(w_len):
        for c in range(kw):
            wi = wo + c - pw
            if 0 <= wi < w_len:
                band[:, :, wi * cin:(wi + 1) * cin,
                     wo * cout:(wo + 1) * cout] = w[:, :, c]
    return band


def prepare_params(params, ksize, spatial_w):
    """One-time host-side prep: banded bf16 weights + W-tiled f32 biases."""
    del ksize  # kernel extents come from the weight shapes
    w1 = np.asarray(params["w1"], np.float32)
    w2 = np.asarray(params["w2"], np.float32)
    b1 = np.asarray(params["b1"], np.float32)
    b2 = np.asarray(params["b2"], np.float32)
    cmid, cout = w1.shape[-1], w2.shape[-1]
    return {
        "w1b": jnp.asarray(_build_banded_weights(w1, spatial_w), jnp.bfloat16),
        "w2b": jnp.asarray(_build_banded_weights(w2, spatial_w), jnp.bfloat16),
        "b1t": jnp.asarray(np.tile(b1, spatial_w).reshape(1, spatial_w * cmid),
                           jnp.float32),
        "b2t": jnp.asarray(np.tile(b2, spatial_w).reshape(1, spatial_w * cout),
                           jnp.float32),
    }


@functools.partial(jax.jit, static_argnames=("ksize",))
def final_conv_block(x_ncdhw, prepped, ksize):
    """Forward pass of FinalConvBlock. Input/output are PyTorch NCDHW."""
    kd, kh, kw = ksize
    if not all(k % 2 == 1 for k in ksize):
        # PyTorch padding=k//2 is only "same" for odd kernels.
        raise NotImplementedError("odd kernel sizes only")
    N, Cin, D, H, W = x_ncdhw.shape
    Lmid = prepped["w1b"].shape[-1]
    Lout = prepped["w2b"].shape[-1]
    Cmid, Cout = Lmid // W, Lout // W
    pd, ph = kd // 2, kh // 2
    Dp, Hp = D + 2 * pd, H + 2 * ph

    # NCDHW -> NDHWC with (W, C) folded into one lane-dense minor axis.
    # TODO(synk): accept NDHWC at the module boundary to drop this transpose.
    x = jnp.transpose(x_ncdhw, (0, 2, 3, 4, 1)).reshape(N, D, H, W * Cin)

    kernel = functools.partial(
        _fused_final_conv_kernel,
        N=N, D=D, H=H, W=W, KD=kd, KH=kh, Cin=Cin, Cmid=Cmid, Cout=Cout)

    vmem = pl.BlockSpec(memory_space=pltpu.MemorySpace.VMEM)
    out = pl.pallas_call(
        kernel,
        out_shape=jax.ShapeDtypeStruct((N, D * H, W * Cout), x_ncdhw.dtype),
        in_specs=[vmem, vmem, vmem, vmem, vmem],
        out_specs=vmem,
        scratch_shapes=[
            pltpu.VMEM((N, Dp, Hp, W * Cin), jnp.float32),    # xpad
            pltpu.VMEM((N, Dp, Hp, W * Cmid), jnp.float32),   # hpad
            pltpu.VMEM((N, Dp, H, W * Cin), jnp.float32),     # xslab
            pltpu.VMEM((N, Dp, H, W * Cmid), jnp.float32),    # hslab
            pltpu.VMEM((N * D * H, W * Cmid), jnp.float32),   # acc1
            pltpu.VMEM((N * D * H, W * Cout), jnp.float32),   # acc2
        ],
    )(x, prepped["w1b"], prepped["b1t"], prepped["w2b"], prepped["b2t"])

    if Cout == 1:
        # NDHWC -> NCDHW only moves a size-1 axis: pure reshape, no transpose.
        return out.reshape(N, 1, D, H, W)
    out = out.reshape(N, D, H, W, Cout)
    return jnp.transpose(out, (0, 4, 1, 2, 3))


def _reference(x_ncdhw, params, ksize):
    """Pure-JAX reference using lax.conv_general_dilated (validation only)."""
    kd, kh, kw = ksize
    pad = [(kd // 2, kd // 2), (kh // 2, kh // 2), (kw // 2, kw // 2)]
    x = jnp.transpose(x_ncdhw, (0, 2, 3, 4, 1))
    dn = lax.conv_dimension_numbers(x.shape, params["w1"].shape,
                                    ("NDHWC", "DHWIO", "NDHWC"))
    h = lax.conv_general_dilated(x, params["w1"], (1, 1, 1), pad,
                                 dimension_numbers=dn)
    h = jax.nn.relu(h + params["b1"])
    dn2 = lax.conv_dimension_numbers(h.shape, params["w2"].shape,
                                     ("NDHWC", "DHWIO", "NDHWC"))
    y = lax.conv_general_dilated(h, params["w2"], (1, 1, 1), pad,
                                 dimension_numbers=dn2)
    y = y + params["b2"]
    return jnp.transpose(y, (0, 4, 1, 2, 3))


def init_params(key, ksize):
    kd, kh, kw = ksize
    k1, k2, k3, k4 = jax.random.split(key, 4)
    fan = 32 * kd * kh * kw
    # conv1: 32 -> 32 ; conv2: 32 -> 1, stored as (KD, KH, KW, Cin, Cout)
    w1 = jax.random.normal(k1, (kd, kh, kw, 32, 32), jnp.float32) * (1.0 / fan) ** 0.5
    b1 = jax.random.normal(k2, (32,), jnp.float32) * 0.01
    w2 = jax.random.normal(k3, (kd, kh, kw, 32, 1), jnp.float32) * (1.0 / fan) ** 0.5
    b2 = jax.random.normal(k4, (1,), jnp.float32) * 0.01
    return {"w1": w1, "b1": b1, "w2": w2, "b2": b2}


if __name__ == "__main__":
    ksize = (3, 3, 3)
    key = jax.random.PRNGKey(0)
    kx, kp = jax.random.split(key)

    # PyTorch layout NCDHW: (batch=2, channels=32 fixed by the module, D=H=W=8)
    x = jax.random.normal(kx, (2, 32, 8, 8, 8), jnp.float32)
    params = init_params(kp, ksize)

    # One-time weight prep (banded bf16 weights, tiled biases) — NOT per call.
    prepped = prepare_params(params, ksize, x.shape[-1])

    out = jax.block_until_ready(final_conv_block(x, prepped, ksize))
    ref = jax.block_until_ready(_reference(x, params, ksize))

    assert out.shape == (2, 1, 8, 8, 8), out.shape
    err = float(jnp.max(jnp.abs(out - ref)))
    # bf16 MXU operands with f32 accumulation over K=256 x 9 taps: expected
    # max abs error ~1e-2 against the f32 reference (outputs are O(1)).
    assert err < 3e-2, err

    print("KERNEL_OK")
</pallas_src>

<mosaic_0001>
module attributes {stable_mosaic.version = 11 : i64} {
  func.func @_fused_final_conv_kernel(%arg0: memref<2x8x8x256xf32, #tpu.memory_space<vmem>>, %arg1: memref<3x3x256x256xbf16, #tpu.memory_space<vmem>>, %arg2: memref<1x256xf32, #tpu.memory_space<vmem>>, %arg3: memref<3x3x256x8xbf16, #tpu.memory_space<vmem>>, %arg4: memref<1x8xf32, #tpu.memory_space<vmem>>, %arg5: memref<2x64x8xf32, #tpu.memory_space<vmem>>, %arg6: memref<2x10x10x256xf32, #tpu.memory_space<vmem>>, %arg7: memref<2x10x10x256xf32, #tpu.memory_space<vmem>>, %arg8: memref<2x10x8x256xf32, #tpu.memory_space<vmem>>, %arg9: memref<2x10x8x256xf32, #tpu.memory_space<vmem>>, %arg10: memref<128x256xf32, #tpu.memory_space<vmem>>, %arg11: memref<128x8xf32, #tpu.memory_space<vmem>>) attributes {dimension_semantics = [], scalar_prefetch = 0 : i64, scratch_operands = 6 : i64, tpu.core_type = #tpu.core_type<tc>} {
    %cst = arith.constant 0.000000e+00 : f32
    %0 = vector.broadcast %cst : f32 to vector<2x1x10x256xf32>
    %c0 = arith.constant 0 : index
    %c0_0 = arith.constant 0 : index
    %c0_1 = arith.constant 0 : index
    %c0_2 = arith.constant 0 : index
    %1 = vector.load %arg6[%c0, %c0_0, %c0_1, %c0_2] : memref<2x10x10x256xf32, #tpu.memory_space<vmem>>, vector<2x1x10x256xf32>
    tpu.vector_store %arg6[%c0, %c0_0, %c0_1, %c0_2], %0 {strides = array<i32>} : memref<2x10x10x256xf32, #tpu.memory_space<vmem>>, vector<2x1x10x256xf32>,
    %cst_3 = arith.constant 0.000000e+00 : f32
    %2 = vector.broadcast %cst_3 : f32 to vector<2x1x10x256xf32>
    %c0_4 = arith.constant 0 : index
    %c9 = arith.constant 9 : index
    %c0_5 = arith.constant 0 : index
    %c0_6 = arith.constant 0 : index
    %3 = vector.load %arg6[%c0_4, %c9, %c0_5, %c0_6] : memref<2x10x10x256xf32, #tpu.memory_space<vmem>>, vector<2x1x10x256xf32>
    tpu.vector_store %arg6[%c0_4, %c9, %c0_5, %c0_6], %2 {strides = array<i32>} : memref<2x10x10x256xf32, #tpu.memory_space<vmem>>, vector<2x1x10x256xf32>,
    %cst_7 = arith.constant 0.000000e+00 : f32
    %4 = vector.broadcast %cst_7 : f32 to vector<2x8x1x256xf32>
    %c0_8 = arith.constant 0 : index
    %c1 = arith.constant 1 : index
    %c0_9 = arith.constant 0 : index
    %c0_10 = arith.constant 0 : index
    %5 = vector.load %arg6[%c0_8, %c1, %c0_9, %c0_10] : memref<2x10x10x256xf32, #tpu.memory_space<vmem>>, vector<2x8x1x256xf32>
    tpu.vector_store %arg6[%c0_8, %c1, %c0_9, %c0_10], %4 {strides = array<i32>} : memref<2x10x10x256xf32, #tpu.memory_space<vmem>>, vector<2x8x1x256xf32>,
    %cst_11 = arith.constant 0.000000e+00 : f32
    %6 = vector.broadcast %cst_11 : f32 to vector<2x8x1x256xf32>
    %c0_12 = arith.constant 0 : index
    %c1_13 = arith.constant 1 : index
    %c9_14 = arith.constant 9 : index
    %c0_15 = arith.constant 0 : index
    %7 = vector.load %arg6[%c0_12, %c1_13, %c9_14, %c0_15] : memref<2x10x10x256xf32, #tpu.memory_space<vmem>>, vector<2x8x1x256xf32>
    tpu.vector_store %arg6[%c0_12, %c1_13, %c9_14, %c0_15], %6 {strides = array<i32>} : memref<2x10x10x256xf32, #tpu.memory_space<vmem>>, vector<2x8x1x256xf32>,
    %cst_16 = arith.constant 0.000000e+00 : f32
    %8 = vector.broadcast %cst_16 : f32 to vector<2x1x10x256xf32>
    %c0_17 = arith.constant 0 : index
    %c0_18 = arith.constant 0 : index
    %c0_19 = arith.constant 0 : index
    %c0_20 = arith.constant 0 : index
    %9 = vector.load %arg7[%c0_17, %c0_18, %c0_19, %c0_20] : memref<2x10x10x256xf32, #tpu.memory_space<vmem>>, vector<2x1x10x256xf32>
    tpu.vector_store %arg7[%c0_17, %c0_18, %c0_19, %c0_20], %8 {strides = array<i32>} : memref<2x10x10x256xf32, #tpu.memory_space<vmem>>, vector<2x1x10x256xf32>,
    %cst_21 = arith.constant 0.000000e+00 : f32
    %10 = vector.broadcast %cst_21 : f32 to vector<2x1x10x256xf32>
    %c0_22 = arith.constant 0 : index
    %c9_23 = arith.constant 9 : index
    %c0_24 = arith.constant 0 : index
    %c0_25 = arith.constant 0 : index
    %11 = vector.load %arg7[%c0_22, %c9_23, %c0_24, %c0_25] : memref<2x10x10x256xf32, #tpu.memory_space<vmem>>, vector<2x1x10x256xf32>
    tpu.vector_store %arg7[%c0_22, %c9_23, %c0_24, %c0_25], %10 {strides = array<i32>} : memref<2x10x10x256xf32, #tpu.memory_space<vmem>>, vector<2x1x10x256xf32>,
    %cst_26 = arith.constant 0.000000e+00 : f32
    %12 = vector.broadcast %cst_26 : f32 to vector<2x8x1x256xf32>
    %c0_27 = arith.constant 0 : index
    %c1_28 = arith.constant 1 : index
    %c0_29 = arith.constant 0 : index
    %c0_30 = arith.constant 0 : index
    %13 = vector.load %arg7[%c0_27, %c1_28, %c0_29, %c0_30] : memref<2x10x10x256xf32, #tpu.memory_space<vmem>>, vector<2x8x1x256xf32>
    tpu.vector_store %arg7[%c0_27, %c1_28, %c0_29, %c0_30], %12 {strides = array<i32>} : memref<2x10x10x256xf32, #tpu.memory_space<vmem>>, vector<2x8x1x256xf32>,
    %cst_31 = arith.constant 0.000000e+00 : f32
    %14 = vector.broadcast %cst_31 : f32 to vector<2x8x1x256xf32>
    %c0_32 = arith.constant 0 : index
    %c1_33 = arith.constant 1 : index
    %c9_34 = arith.constant 9 : index
    %c0_35 = arith.constant 0 : index
    %15 = vector.load %arg7[%c0_32, %c1_33, %c9_34, %c0_35] : memref<2x10x10x256xf32, #tpu.memory_space<vmem>>, vector<2x8x1x256xf32>
    tpu.vector_store %arg7[%c0_32, %c1_33, %c9_34, %c0_35], %14 {strides = array<i32>} : memref<2x10x10x256xf32, #tpu.memory_space<vmem>>, vector<2x8x1x256xf32>,
    %c0_36 = arith.constant 0 : index
    %c0_37 = arith.constant 0 : index
    %c0_38 = arith.constant 0 : index
    %c0_39 = arith.constant 0 : index
    %16 = vector.load %arg0[%c0_36, %c0_37, %c0_38, %c0_39] : memref<2x8x8x256xf32, #tpu.memory_space<vmem>>, vector<2x8x8x256xf32>
    %c0_40 = arith.constant 0 : index
    %c1_41 = arith.constant 1 : index
    %c1_42 = arith.constant 1 : index
    %c0_43 = arith.constant 0 : index
    %17 = vector.load %arg6[%c0_40, %c1_41, %c1_42, %c0_43] : memref<2x10x10x256xf32, #tpu.memory_space<vmem>>, vector<2x8x8x256xf32>
    tpu.vector_store %arg6[%c0_40, %c1_41, %c1_42, %c0_43], %16 {strides = array<i32>} : memref<2x10x10x256xf32, #tpu.memory_space<vmem>>, vector<2x8x8x256xf32>,
    %cst_44 = arith.constant 0.000000e+00 : f32
    %18 = vector.broadcast %cst_44 : f32 to vector<128x256xf32>
    %c0_45 = arith.constant 0 : index
    %c0_46 = arith.constant 0 : index
    %19 = vector.load %arg10[%c0_45, %c0_46] : memref<128x256xf32, #tpu.memory_space<vmem>>, vector<128x256xf32>
    tpu.vector_store %arg10[%c0_45, %c0_46], %18 {strides = array<i32>} : memref<128x256xf32, #tpu.memory_space<vmem>>, vector<128x256xf32>,
    %c0_47 = arith.constant 0 : index
    %c0_48 = arith.constant 0 : index
    %c0_49 = arith.constant 0 : index
    %c0_50 = arith.constant 0 : index
    %20 = vector.load %arg6[%c0_47, %c0_48, %c0_49, %c0_50] : memref<2x10x10x256xf32, #tpu.memory_space<vmem>>, vector<2x10x8x256xf32>
    %c0_51 = arith.constant 0 : index
    %c0_52 = arith.constant 0 : index
    %c0_53 = arith.constant 0 : index
    %c0_54 = arith.constant 0 : index
    %21 = vector.load %arg8[%c0_51, %c0_52, %c0_53, %c0_54] : memref<2x10x8x256xf32, #tpu.memory_space<vmem>>, vector<2x10x8x256xf32>
    tpu.vector_store %arg8[%c0_51, %c0_52, %c0_53, %c0_54], %20 {strides = array<i32>} : memref<2x10x8x256xf32, #tpu.memory_space<vmem>>, vector<2x10x8x256xf32>,
    %c0_55 = arith.constant 0 : index
    %c0_56 = arith.constant 0 : index
    %c0_57 = arith.constant 0 : index
    %c0_58 = arith.constant 0 : index
    %22 = vector.load %arg8[%c0_55, %c0_56, %c0_57, %c0_58] : memref<2x10x8x256xf32, #tpu.memory_space<vmem>>, vector<2x8x8x256xf32>
    %23 = vector.shape_cast %22 : vector<2x8x8x256xf32> to vector<128x256xf32>
    %24 = arith.truncf %23 : vector<128x256xf32> to vector<128x256xbf16>
    %c0_59 = arith.constant 0 : index
    %c0_60 = arith.constant 0 : index
    %25 = vector.load %arg10[%c0_59, %c0_60] : memref<128x256xf32, #tpu.memory_space<vmem>>, vector<128x256xf32>
    %c0_61 = arith.constant 0 : index
    %c0_62 = arith.constant 0 : index
    %c0_63 = arith.constant 0 : index
    %c0_64 = arith.constant 0 : index
    %26 = vector.load %arg1[%c0_61, %c0_62, %c0_63, %c0_64] : memref<3x3x256x256xbf16, #tpu.memory_space<vmem>>, vector<1x1x256x256xbf16>
    %27 = vector.shape_cast %26 : vector<1x1x256x256xbf16> to vector<256x256xbf16>
    %cst_65 = arith.constant dense<0.000000e+00> : vector<128x256xf32>
    %28 = tpu.matmul %24, %27, %cst_65 {dimension_numbers = #tpu.dot_dimension_numbers<[1], [0], [0], [1], [0, 0, 1, 1], [], []>} : vector<128x256xbf16>, vector<256x256xbf16>, vector<128x256xf32> -> vector<128x256xf32>
    %29 = arith.addf %25, %28 : vector<128x256xf32>
    %c0_66 = arith.constant 0 : index
    %c0_67 = arith.constant 0 : index
    %30 = vector.load %arg10[%c0_66, %c0_67] : memref<128x256xf32, #tpu.memory_space<vmem>>, vector<128x256xf32>
    tpu.vector_store %arg10[%c0_66, %c0_67], %29 {strides = array<i32>} : memref<128x256xf32, #tpu.memory_space<vmem>>, vector<128x256xf32>,
    %c0_68 = arith.constant 0 : index
    %c1_69 = arith.constant 1 : index
    %c0_70 = arith.constant 0 : index
    %c0_71 = arith.constant 0 : index
    %31 = vector.load %arg8[%c0_68, %c1_69, %c0_70, %c0_71] : memref<2x10x8x256xf32, #tpu.memory_space<vmem>>, vector<2x8x8x256xf32>
    %32 = vector.shape_cast %31 : vector<2x8x8x256xf32> to vector<128x256xf32>
    %33 = arith.truncf %32 : vector<128x256xf32> to vector<128x256xbf16>
    %c0_72 = arith.constant 0 : index
    %c0_73 = arith.constant 0 : index
    %34 = vector.load %arg10[%c0_72, %c0_73] : memref<128x256xf32, #tpu.memory_space<vmem>>, vector<128x256xf32>
    %c1_74 = arith.constant 1 : index
    %c0_75 = arith.constant 0 : index
    %c0_76 = arith.constant 0 : index
    %c0_77 = arith.constant 0 : index
    %35 = vector.load %arg1[%c1_74, %c0_75, %c0_76, %c0_77] : memref<3x3x256x256xbf16, #tpu.memory_space<vmem>>, vector<1x1x256x256xbf16>
    %36 = vector.shape_cast %35 : vector<1x1x256x256xbf16> to vector<256x256xbf16>
    %cst_78 = arith.constant dense<0.000000e+00> : vector<128x256xf32>
    %37 = tpu.matmul %33, %36, %cst_78 {dimension_numbers = #tpu.dot_dimension_numbers<[1], [0], [0], [1], [0, 0, 1, 1], [], []>} : vector<128x256xbf16>, vector<256x256xbf16>, vector<128x256xf32> -> vector<128x256xf32>
    %38 = arith.addf %34, %37 : vector<128x256xf32>
    %c0_79 = arith.constant 0 : index
    %c0_80 = arith.constant 0 : index
    %39 = vector.load %arg10[%c0_79, %c0_80] : memref<128x256xf32, #tpu.memory_space<vmem>>, vector<128x256xf32>
    tpu.vector_store %arg10[%c0_79, %c0_80], %38 {strides = array<i32>} : memref<128x256xf32, #tpu.memory_space<vmem>>, vector<128x256xf32>,
    %c0_81 = arith.constant 0 : index
    %c2 = arith.constant 2 : index
    %c0_82 = arith.constant 0 : index
    %c0_83 = arith.constant 0 : index
    %40 = vector.load %arg8[%c0_81, %c2, %c0_82, %c0_83] : memref<2x10x8x256xf32, #tpu.memory_space<vmem>>, vector<2x8x8x256xf32>
    %41 = vector.shape_cast %40 : vector<2x8x8x256xf32> to vector<128x256xf32>
    %42 = arith.truncf %41 : vector<128x256xf32> to vector<128x256xbf16>
    %c0_84 = arith.constant 0 : index
    %c0_85 = arith.constant 0 : index
    %43 = vector.load %arg10[%c0_84, %c0_85] : memref<128x256xf32, #tpu.memory_space<vmem>>, vector<128x256xf32>
    %c2_86 = arith.constant 2 : index
    %c0_87 = arith.constant 0 : index
    %c0_88 = arith.constant 0 : index
    %c0_89 = arith.constant 0 : index
    %44 = vector.load %arg1[%c2_86, %c0_87, %c0_88, %c0_89] : memref<3x3x256x256xbf16, #tpu.memory_space<vmem>>, vector<1x1x256x256xbf16>
    %45 = vector.shape_cast %44 : vector<1x1x256x256xbf16> to vector<256x256xbf16>
    %cst_90 = arith.constant dense<0.000000e+00> : vector<128x256xf32>
    %46 = tpu.matmul %42, %45, %cst_90 {dimension_numbers = #tpu.dot_dimension_numbers<[1], [0], [0], [1], [0, 0, 1, 1], [], []>} : vector<128x256xbf16>, vector<256x256xbf16>, vector<128x256xf32> -> vector<128x256xf32>
    %47 = arith.addf %43, %46 : vector<128x256xf32>
    %c0_91 = arith.constant 0 : index
    %c0_92 = arith.constant 0 : index
    %48 = vector.load %arg10[%c0_91, %c0_92] : memref<128x256xf32, #tpu.memory_space<vmem>>, vector<128x256xf32>
    tpu.vector_store %arg10[%c0_91, %c0_92], %47 {strides = array<i32>} : memref<128x256xf32, #tpu.memory_space<vmem>>, vector<128x256xf32>,
    %c0_93 = arith.constant 0 : index
    %c0_94 = arith.constant 0 : index
    %c1_95 = arith.constant 1 : index
    %c0_96 = arith.constant 0 : index
    %49 = vector.load %arg6[%c0_93, %c0_94, %c1_95, %c0_96] : memref<2x10x10x256xf32, #tpu.memory_space<vmem>>, vector<2x10x8x256xf32>
    %c0_97 = arith.constant 0 : index
    %c0_98 = arith.constant 0 : index
    %c0_99 = arith.constant 0 : index
    %c0_100 = arith.constant 0 : index
    %50 = vector.load %arg8[%c0_97, %c0_98, %c0_99, %c0_100] : memref<2x10x8x256xf32, #tpu.memory_space<vmem>>, vector<2x10x8x256xf32>
    tpu.vector_store %arg8[%c0_97, %c0_98, %c0_99, %c0_100], %49 {strides = array<i32>} : memref<2x10x8x256xf32, #tpu.memory_space<vmem>>, vector<2x10x8x256xf32>,
    %c0_101 = arith.constant 0 : index
    %c0_102 = arith.constant 0 : index
    %c0_103 = arith.constant 0 : index
    %c0_104 = arith.constant 0 : index
    %51 = vector.load %arg8[%c0_101, %c0_102, %c0_103, %c0_104] : memref<2x10x8x256xf32, #tpu.memory_space<vmem>>, vector<2x8x8x256xf32>
    %52 = vector.shape_cast %51 : vector<2x8x8x256xf32> to vector<128x256xf32>
    %53 = arith.truncf %52 : vector<128x256xf32> to vector<128x256xbf16>
    %c0_105 = arith.constant 0 : index
    %c0_106 = arith.constant 0 : index
    %54 = vector.load %arg10[%c0_105, %c0_106] : memref<128x256xf32, #tpu.memory_space<vmem>>, vector<128x256xf32>
    %c0_107 = arith.constant 0 : index
    %c1_108 = arith.constant 1 : index
    %c0_109 = arith.constant 0 : index
    %c0_110 = arith.constant 0 : index
    %55 = vector.load %arg1[%c0_107, %c1_108, %c0_109, %c0_110] : memref<3x3x256x256xbf16, #tpu.memory_space<vmem>>, vector<1x1x256x256xbf16>
    %56 = vector.shape_cast %55 : vector<1x1x256x256xbf16> to vector<256x256xbf16>
    %cst_111 = arith.constant dense<0.000000e+00> : vector<128x256xf32>
    %57 = tpu.matmul %53, %56, %cst_111 {dimension_numbers = #tpu.dot_dimension_numbers<[1], [0], [0], [1], [0, 0, 1, 1], [], []>} : vector<128x256xbf16>, vector<256x256xbf16>, vector<128x256xf32> -> vector<128x256xf32>
    %58 = arith.addf %54, %57 : vector<128x256xf32>
    %c0_112 = arith.constant 0 : index
    %c0_113 = arith.constant 0 : index
    %59 = vector.load %arg10[%c0_112, %c0_113] : memref<128x256xf32, #tpu.memory_space<vmem>>, vector<128x256xf32>
    tpu.vector_store %arg10[%c0_112, %c0_113], %58 {strides = array<i32>} : memref<128x256xf32, #tpu.memory_space<vmem>>, vector<128x256xf32>,
    %c0_114 = arith.constant 0 : index
    %c1_115 = arith.constant 1 : index
    %c0_116 = arith.constant 0 : index
    %c0_117 = arith.constant 0 : index
    %60 = vector.load %arg8[%c0_114, %c1_115, %c0_116, %c0_117] : memref<2x10x8x256xf32, #tpu.memory_space<vmem>>, vector<2x8x8x256xf32>
    %61 = vector.shape_cast %60 : vector<2x8x8x256xf32> to vector<128x256xf32>
    %62 = arith.truncf %61 : vector<128x256xf32> to vector<128x256xbf16>
    %c0_118 = arith.constant 0 : index
    %c0_119 = arith.constant 0 : index
    %63 = vector.load %arg10[%c0_118, %c0_119] : memref<128x256xf32, #tpu.memory_space<vmem>>, vector<128x256xf32>
    %c1_120 = arith.constant 1 : index
    %c1_121 = arith.constant 1 : index
    %c0_122 = arith.constant 0 : index
    %c0_123 = arith.constant 0 : index
    %64 = vector.load %arg1[%c1_120, %c1_121, %c0_122, %c0_123] : memref<3x3x256x256xbf16, #tpu.memory_space<vmem>>, vector<1x1x256x256xbf16>
    %65 = vector.shape_cast %64 : vector<1x1x256x256xbf16> to vector<256x256xbf16>
    %cst_124 = arith.constant dense<0.000000e+00> : vector<128x256xf32>
    %66 = tpu.matmul %62, %65, %cst_124 {dimension_numbers = #tpu.dot_dimension_numbers<[1], [0], [0], [1], [0, 0, 1, 1], [], []>} : vector<128x256xbf16>, vector<256x256xbf16>, vector<128x256xf32> -> vector<128x256xf32>
    %67 = arith.addf %63, %66 : vector<128x256xf32>
    %c0_125 = arith.constant 0 : index
    %c0_126 = arith.constant 0 : index
    %68 = vector.load %arg10[%c0_125, %c0_126] : memref<128x256xf32, #tpu.memory_space<vmem>>, vector<128x256xf32>
    tpu.vector_store %arg10[%c0_125, %c0_126], %67 {strides = array<i32>} : memref<128x256xf32, #tpu.memory_space<vmem>>, vector<128x256xf32>,
    %c0_127 = arith.constant 0 : index
    %c2_128 = arith.constant 2 : index
    %c0_129 = arith.constant 0 : index
    %c0_130 = arith.constant 0 : index
    %69 = vector.load %arg8[%c0_127, %c2_128, %c0_129, %c0_130] : memref<2x10x8x256xf32, #tpu.memory_space<vmem>>, vector<2x8x8x256xf32>
    %70 = vector.shape_cast %69 : vector<2x8x8x256xf32> to vector<128x256xf32>
    %71 = arith.truncf %70 : vector<128x256xf32> to vector<128x256xbf16>
    %c0_131 = arith.constant 0 : index
    %c0_132 = arith.constant 0 : index
    %72 = vector.load %arg10[%c0_131, %c0_132] : memref<128x256xf32, #tpu.memory_space<vmem>>, vector<128x256xf32>
    %c2_133 = arith.constant 2 : index
    %c1_134 = arith.constant 1 : index
    %c0_135 = arith.constant 0 : index
    %c0_136 = arith.constant 0 : index
    %73 = vector.load %arg1[%c2_133, %c1_134, %c0_135, %c0_136] : memref<3x3x256x256xbf16, #tpu.memory_space<vmem>>, vector<1x1x256x256xbf16>
    %74 = vector.shape_cast %73 : vector<1x1x256x256xbf16> to vector<256x256xbf16>
    %cst_137 = arith.constant dense<0.000000e+00> : vector<128x256xf32>
    %75 = tpu.matmul %71, %74, %cst_137 {dimension_numbers = #tpu.dot_dimension_numbers<[1], [0], [0], [1], [0, 0, 1, 1], [], []>} : vector<128x256xbf16>, vector<256x256xbf16>, vector<128x256xf32> -> vector<128x256xf32>
    %76 = arith.addf %72, %75 : vector<128x256xf32>
    %c0_138 = arith.constant 0 : index
    %c0_139 = arith.constant 0 : index
    %77 = vector.load %arg10[%c0_138, %c0_139] : memref<128x256xf32, #tpu.memory_space<vmem>>, vector<128x256xf32>
    tpu.vector_store %arg10[%c0_138, %c0_139], %76 {strides = array<i32>} : memref<128x256xf32, #tpu.memory_space<vmem>>, vector<128x256xf32>,
    %c0_140 = arith.constant 0 : index
    %c0_141 = arith.constant 0 : index
    %c2_142 = arith.constant 2 : index
    %c0_143 = arith.constant 0 : index
    %78 = vector.load %arg6[%c0_140, %c0_141, %c2_142, %c0_143] : memref<2x10x10x256xf32, #tpu.memory_space<vmem>>, vector<2x10x8x256xf32>
    %c0_144 = arith.constant 0 : index
    %c0_145 = arith.constant 0 : index
    %c0_146 = arith.constant 0 : index
    %c0_147 = arith.constant 0 : index
    %79 = vector.load %arg8[%c0_144, %c0_145, %c0_146, %c0_147] : memref<2x10x8x256xf32, #tpu.memory_space<vmem>>, vector<2x10x8x256xf32>
    tpu.vector_store %arg8[%c0_144, %c0_145, %c0_146, %c0_147], %78 {strides = array<i32>} : memref<2x10x8x256xf32, #tpu.memory_space<vmem>>, vector<2x10x8x256xf32>,
    %c0_148 = arith.constant 0 : index
    %c0_149 = arith.constant 0 : index
    %c0_150 = arith.constant 0 : index
    %c0_151 = arith.constant 0 : index
    %80 = vector.load %arg8[%c0_148, %c0_149, %c0_150, %c0_151] : memref<2x10x8x256xf32, #tpu.memory_space<vmem>>, vector<2x8x8x256xf32>
    %81 = vector.shape_cast %80 : vector<2x8x8x256xf32> to vector<128x256xf32>
    %82 = arith.truncf %81 : vector<128x256xf32> to vector<128x256xbf16>
    %c0_152 = arith.constant 0 : index
    %c0_153 = arith.constant 0 : index
    %83 = vector.load %arg10[%c0_152, %c0_153] : memref<128x256xf32, #tpu.memory_space<vmem>>, vector<128x256xf32>
    %c0_154 = arith.constant 0 : index
    %c2_155 = arith.constant 2 : index
    %c0_156 = arith.constant 0 : index
    %c0_157 = arith.constant 0 : index
    %84 = vector.load %arg1[%c0_154, %c2_155, %c0_156, %c0_157] : memref<3x3x256x256xbf16, #tpu.memory_space<vmem>>, vector<1x1x256x256xbf16>
    %85 = vector.shape_cast %84 : vector<1x1x256x256xbf16> to vector<256x256xbf16>
    %cst_158 = arith.constant dense<0.000000e+00> : vector<128x256xf32>
    %86 = tpu.matmul %82, %85, %cst_158 {dimension_numbers = #tpu.dot_dimension_numbers<[1], [0], [0], [1], [0, 0, 1, 1], [], []>} : vector<128x256xbf16>, vector<256x256xbf16>, vector<128x256xf32> -> vector<128x256xf32>
    %87 = arith.addf %83, %86 : vector<128x256xf32>
    %c0_159 = arith.constant 0 : index
    %c0_160 = arith.constant 0 : index
    %88 = vector.load %arg10[%c0_159, %c0_160] : memref<128x256xf32, #tpu.memory_space<vmem>>, vector<128x256xf32>
    tpu.vector_store %arg10[%c0_159, %c0_160], %87 {strides = array<i32>} : memref<128x256xf32, #tpu.memory_space<vmem>>, vector<128x256xf32>,
    %c0_161 = arith.constant 0 : index
    %c1_162 = arith.constant 1 : index
    %c0_163 = arith.constant 0 : index
    %c0_164 = arith.constant 0 : index
    %89 = vector.load %arg8[%c0_161, %c1_162, %c0_163, %c0_164] : memref<2x10x8x256xf32, #tpu.memory_space<vmem>>, vector<2x8x8x256xf32>
    %90 = vector.shape_cast %89 : vector<2x8x8x256xf32> to vector<128x256xf32>
    %91 = arith.truncf %90 : vector<128x256xf32> to vector<128x256xbf16>
    %c0_165 = arith.constant 0 : index
    %c0_166 = arith.constant 0 : index
    %92 = vector.load %arg10[%c0_165, %c0_166] : memref<128x256xf32, #tpu.memory_space<vmem>>, vector<128x256xf32>
    %c1_167 = arith.constant 1 : index
    %c2_168 = arith.constant 2 : index
    %c0_169 = arith.constant 0 : index
    %c0_170 = arith.constant 0 : index
    %93 = vector.load %arg1[%c1_167, %c2_168, %c0_169, %c0_170] : memref<3x3x256x256xbf16, #tpu.memory_space<vmem>>, vector<1x1x256x256xbf16>
    %94 = vector.shape_cast %93 : vector<1x1x256x256xbf16> to vector<256x256xbf16>
    %cst_171 = arith.constant dense<0.000000e+00> : vector<128x256xf32>
    %95 = tpu.matmul %91, %94, %cst_171 {dimension_numbers = #tpu.dot_dimension_numbers<[1], [0], [0], [1], [0, 0, 1, 1], [], []>} : vector<128x256xbf16>, vector<256x256xbf16>, vector<128x256xf32> -> vector<128x256xf32>
    %96 = arith.addf %92, %95 : vector<128x256xf32>
    %c0_172 = arith.constant 0 : index
    %c0_173 = arith.constant 0 : index
    %97 = vector.load %arg10[%c0_172, %c0_173] : memref<128x256xf32, #tpu.memory_space<vmem>>, vector<128x256xf32>
    tpu.vector_store %arg10[%c0_172, %c0_173], %96 {strides = array<i32>} : memref<128x256xf32, #tpu.memory_space<vmem>>, vector<128x256xf32>,
    %c0_174 = arith.constant 0 : index
    %c2_175 = arith.constant 2 : index
    %c0_176 = arith.constant 0 : index
    %c0_177 = arith.constant 0 : index
    %98 = vector.load %arg8[%c0_174, %c2_175, %c0_176, %c0_177] : memref<2x10x8x256xf32, #tpu.memory_space<vmem>>, vector<2x8x8x256xf32>
    %99 = vector.shape_cast %98 : vector<2x8x8x256xf32> to vector<128x256xf32>
    %100 = arith.truncf %99 : vector<128x256xf32> to vector<128x256xbf16>
    %c0_178 = arith.constant 0 : index
    %c0_179 = arith.constant 0 : index
    %101 = vector.load %arg10[%c0_178, %c0_179] : memref<128x256xf32, #tpu.memory_space<vmem>>, vector<128x256xf32>
    %c2_180 = arith.constant 2 : index
    %c2_181 = arith.constant 2 : index
    %c0_182 = arith.constant 0 : index
    %c0_183 = arith.constant 0 : index
    %102 = vector.load %arg1[%c2_180, %c2_181, %c0_182, %c0_183] : memref<3x3x256x256xbf16, #tpu.memory_space<vmem>>, vector<1x1x256x256xbf16>
    %103 = vector.shape_cast %102 : vector<1x1x256x256xbf16> to vector<256x256xbf16>
    %cst_184 = arith.constant dense<0.000000e+00> : vector<128x256xf32>
    %104 = tpu.matmul %100, %103, %cst_184 {dimension_numbers = #tpu.dot_dimension_numbers<[1], [0], [0], [1], [0, 0, 1, 1], [], []>} : vector<128x256xbf16>, vector<256x256xbf16>, vector<128x256xf32> -> vector<128x256xf32>
    %105 = arith.addf %101, %104 : vector<128x256xf32>
    %c0_185 = arith.constant 0 : index
    %c0_186 = arith.constant 0 : index
    %106 = vector.load %arg10[%c0_185, %c0_186] : memref<128x256xf32, #tpu.memory_space<vmem>>, vector<128x256xf32>
    tpu.vector_store %arg10[%c0_185, %c0_186], %105 {strides = array<i32>} : memref<128x256xf32, #tpu.memory_space<vmem>>, vector<128x256xf32>,
    %c0_187 = arith.constant 0 : index
    %c0_188 = arith.constant 0 : index
    %107 = vector.load %arg10[%c0_187, %c0_188] : memref<128x256xf32, #tpu.memory_space<vmem>>, vector<128x256xf32>
    %c0_189 = arith.constant 0 : index
    %c0_190 = arith.constant 0 : index
    %108 = vector.load %arg2[%c0_189, %c0_190] : memref<1x256xf32, #tpu.memory_space<vmem>>, vector<1x256xf32>
    %109 = vector.broadcast %108 : vector<1x256xf32> to vector<128x256xf32>
    %110 = arith.addf %107, %109 : vector<128x256xf32>
    %cst_191 = arith.constant 0.000000e+00 : f32
    %111 = vector.broadcast %cst_191 : f32 to vector<128x256xf32>
    %112 = arith.maximumf %110, %111 : vector<128x256xf32>
    %113 = vector.shape_cast %112 : vector<128x256xf32> to vector<2x8x8x256xf32>
    %c0_192 = arith.constant 0 : index
    %c1_193 = arith.constant 1 : index
    %c1_194 = arith.constant 1 : index
    %c0_195 = arith.constant 0 : index
    %114 = vector.load %arg7[%c0_192, %c1_193, %c1_194, %c0_195] : memref<2x10x10x256xf32, #tpu.memory_space<vmem>>, vector<2x8x8x256xf32>
    tpu.vector_store %arg7[%c0_192, %c1_193, %c1_194, %c0_195], %113 {strides = array<i32>} : memref<2x10x10x256xf32, #tpu.memory_space<vmem>>, vector<2x8x8x256xf32>,
    %cst_196 = arith.constant 0.000000e+00 : f32
    %115 = vector.broadcast %cst_196 : f32 to vector<128x8xf32>
    %c0_197 = arith.constant 0 : index
    %c0_198 = arith.constant 0 : index
    %116 = vector.load %arg11[%c0_197, %c0_198] : memref<128x8xf32, #tpu.memory_space<vmem>>, vector<128x8xf32>
    tpu.vector_store %arg11[%c0_197, %c0_198], %115 {strides = array<i32>} : memref<128x8xf32, #tpu.memory_space<vmem>>, vector<128x8xf32>,
    %c0_199 = arith.constant 0 : index
    %c0_200 = arith.constant 0 : index
    %c0_201 = arith.constant 0 : index
    %c0_202 = arith.constant 0 : index
    %117 = vector.load %arg7[%c0_199, %c0_200, %c0_201, %c0_202] : memref<2x10x10x256xf32, #tpu.memory_space<vmem>>, vector<2x10x8x256xf32>
    %c0_203 = arith.constant 0 : index
    %c0_204 = arith.constant 0 : index
    %c0_205 = arith.constant 0 : index
    %c0_206 = arith.constant 0 : index
    %118 = vector.load %arg9[%c0_203, %c0_204, %c0_205, %c0_206] : memref<2x10x8x256xf32, #tpu.memory_space<vmem>>, vector<2x10x8x256xf32>
    tpu.vector_store %arg9[%c0_203, %c0_204, %c0_205, %c0_206], %117 {strides = array<i32>} : memref<2x10x8x256xf32, #tpu.memory_space<vmem>>, vector<2x10x8x256xf32>,
    %c0_207 = arith.constant 0 : index
    %c0_208 = arith.constant 0 : index
    %c0_209 = arith.constant 0 : index
    %c0_210 = arith.constant 0 : index
    %119 = vector.load %arg9[%c0_207, %c0_208, %c0_209, %c0_210] : memref<2x10x8x256xf32, #tpu.memory_space<vmem>>, vector<2x8x8x256xf32>
    %120 = vector.shape_cast %119 : vector<2x8x8x256xf32> to vector<128x256xf32>
    %121 = arith.truncf %120 : vector<128x256xf32> to vector<128x256xbf16>
    %c0_211 = arith.constant 0 : index
    %c0_212 = arith.constant 0 : index
    %122 = vector.load %arg11[%c0_211, %c0_212] : memref<128x8xf32, #tpu.memory_space<vmem>>, vector<128x8xf32>
    %c0_213 = arith.constant 0 : index
    %c0_214 = arith.constant 0 : index
    %c0_215 = arith.constant 0 : index
    %c0_216 = arith.constant 0 : index
    %123 = vector.load %arg3[%c0_213, %c0_214, %c0_215, %c0_216] : memref<3x3x256x8xbf16, #tpu.memory_space<vmem>>, vector<1x1x256x8xbf16>
    %124 = vector.shape_cast %123 : vector<1x1x256x8xbf16> to vector<256x8xbf16>
    %cst_217 = arith.constant dense<0.000000e+00> : vector<128x8xf32>
    %125 = tpu.matmul %121, %124, %cst_217 {dimension_numbers = #tpu.dot_dimension_numbers<[1], [0], [0], [1], [0, 0, 1, 1], [], []>} : vector<128x256xbf16>, vector<256x8xbf16>, vector<128x8xf32> -> vector<128x8xf32>
    %126 = arith.addf %122, %125 : vector<128x8xf32>
    %c0_218 = arith.constant 0 : index
    %c0_219 = arith.constant 0 : index
    %127 = vector.load %arg11[%c0_218, %c0_219] : memref<128x8xf32, #tpu.memory_space<vmem>>, vector<128x8xf32>
    tpu.vector_store %arg11[%c0_218, %c0_219], %126 {strides = array<i32>} : memref<128x8xf32, #tpu.memory_space<vmem>>, vector<128x8xf32>,
    %c0_220 = arith.constant 0 : index
    %c1_221 = arith.constant 1 : index
    %c0_222 = arith.constant 0 : index
    %c0_223 = arith.constant 0 : index
    %128 = vector.load %arg9[%c0_220, %c1_221, %c0_222, %c0_223] : memref<2x10x8x256xf32, #tpu.memory_space<vmem>>, vector<2x8x8x256xf32>
    %129 = vector.shape_cast %128 : vector<2x8x8x256xf32> to vector<128x256xf32>
    %130 = arith.truncf %129 : vector<128x256xf32> to vector<128x256xbf16>
    %c0_224 = arith.constant 0 : index
    %c0_225 = arith.constant 0 : index
    %131 = vector.load %arg11[%c0_224, %c0_225] : memref<128x8xf32, #tpu.memory_space<vmem>>, vector<128x8xf32>
    %c1_226 = arith.constant 1 : index
    %c0_227 = arith.constant 0 : index
    %c0_228 = arith.constant 0 : index
    %c0_229 = arith.constant 0 : index
    %132 = vector.load %arg3[%c1_226, %c0_227, %c0_228, %c0_229] : memref<3x3x256x8xbf16, #tpu.memory_space<vmem>>, vector<1x1x256x8xbf16>
    %133 = vector.shape_cast %132 : vector<1x1x256x8xbf16> to vector<256x8xbf16>
    %cst_230 = arith.constant dense<0.000000e+00> : vector<128x8xf32>
    %134 = tpu.matmul %130, %133, %cst_230 {dimension_numbers = #tpu.dot_dimension_numbers<[1], [0], [0], [1], [0, 0, 1, 1], [], []>} : vector<128x256xbf16>, vector<256x8xbf16>, vector<128x8xf32> -> vector<128x8xf32>
    %135 = arith.addf %131, %134 : vector<128x8xf32>
    %c0_231 = arith.constant 0 : index
    %c0_232 = arith.constant 0 : index
    %136 = vector.load %arg11[%c0_231, %c0_232] : memref<128x8xf32, #tpu.memory_space<vmem>>, vector<128x8xf32>
    tpu.vector_store %arg11[%c0_231, %c0_232], %135 {strides = array<i32>} : memref<128x8xf32, #tpu.memory_space<vmem>>, vector<128x8xf32>,
    %c0_233 = arith.constant 0 : index
    %c2_234 = arith.constant 2 : index
    %c0_235 = arith.constant 0 : index
    %c0_236 = arith.constant 0 : index
    %137 = vector.load %arg9[%c0_233, %c2_234, %c0_235, %c0_236] : memref<2x10x8x256xf32, #tpu.memory_space<vmem>>, vector<2x8x8x256xf32>
    %138 = vector.shape_cast %137 : vector<2x8x8x256xf32> to vector<128x256xf32>
    %139 = arith.truncf %138 : vector<128x256xf32> to vector<128x256xbf16>
    %c0_237 = arith.constant 0 : index
    %c0_238 = arith.constant 0 : index
    %140 = vector.load %arg11[%c0_237, %c0_238] : memref<128x8xf32, #tpu.memory_space<vmem>>, vector<128x8xf32>
    %c2_239 = arith.constant 2 : index
    %c0_240 = arith.constant 0 : index
    %c0_241 = arith.constant 0 : index
    %c0_242 = arith.constant 0 : index
    %141 = vector.load %arg3[%c2_239, %c0_240, %c0_241, %c0_242] : memref<3x3x256x8xbf16, #tpu.memory_space<vmem>>, vector<1x1x256x8xbf16>
    %142 = vector.shape_cast %141 : vector<1x1x256x8xbf16> to vector<256x8xbf16>
    %cst_243 = arith.constant dense<0.000000e+00> : vector<128x8xf32>
    %143 = tpu.matmul %139, %142, %cst_243 {dimension_numbers = #tpu.dot_dimension_numbers<[1], [0], [0], [1], [0, 0, 1, 1], [], []>} : vector<128x256xbf16>, vector<256x8xbf16>, vector<128x8xf32> -> vector<128x8xf32>
    %144 = arith.addf %140, %143 : vector<128x8xf32>
    %c0_244 = arith.constant 0 : index
    %c0_245 = arith.constant 0 : index
    %145 = vector.load %arg11[%c0_244, %c0_245] : memref<128x8xf32, #tpu.memory_space<vmem>>, vector<128x8xf32>
    tpu.vector_store %arg11[%c0_244, %c0_245], %144 {strides = array<i32>} : memref<128x8xf32, #tpu.memory_space<vmem>>, vector<128x8xf32>,
    %c0_246 = arith.constant 0 : index
    %c0_247 = arith.constant 0 : index
    %c1_248 = arith.constant 1 : index
    %c0_249 = arith.constant 0 : index
    %146 = vector.load %arg7[%c0_246, %c0_247, %c1_248, %c0_249] : memref<2x10x10x256xf32, #tpu.memory_space<vmem>>, vector<2x10x8x256xf32>
    %c0_250 = arith.constant 0 : index
    %c0_251 = arith.constant 0 : index
    %c0_252 = arith.constant 0 : index
    %c0_253 = arith.constant 0 : index
    %147 = vector.load %arg9[%c0_250, %c0_251, %c0_252, %c0_253] : memref<2x10x8x256xf32, #tpu.memory_space<vmem>>, vector<2x10x8x256xf32>
    tpu.vector_store %arg9[%c0_250, %c0_251, %c0_252, %c0_253], %146 {strides = array<i32>} : memref<2x10x8x256xf32, #tpu.memory_space<vmem>>, vector<2x10x8x256xf32>,
    %c0_254 = arith.constant 0 : index
    %c0_255 = arith.constant 0 : index
    %c0_256 = arith.constant 0 : index
    %c0_257 = arith.constant 0 : index
    %148 = vector.load %arg9[%c0_254, %c0_255, %c0_256, %c0_257] : memref<2x10x8x256xf32, #tpu.memory_space<vmem>>, vector<2x8x8x256xf32>
    %149 = vector.shape_cast %148 : vector<2x8x8x256xf32> to vector<128x256xf32>
    %150 = arith.truncf %149 : vector<128x256xf32> to vector<128x256xbf16>
    %c0_258 = arith.constant 0 : index
    %c0_259 = arith.constant 0 : index
    %151 = vector.load %arg11[%c0_258, %c0_259] : memref<128x8xf32, #tpu.memory_space<vmem>>, vector<128x8xf32>
    %c0_260 = arith.constant 0 : index
    %c1_261 = arith.constant 1 : index
    %c0_262 = arith.constant 0 : index
    %c0_263 = arith.constant 0 : index
    %152 = vector.load %arg3[%c0_260, %c1_261, %c0_262, %c0_263] : memref<3x3x256x8xbf16, #tpu.memory_space<vmem>>, vector<1x1x256x8xbf16>
    %153 = vector.shape_cast %152 : vector<1x1x256x8xbf16> to vector<256x8xbf16>
    %cst_264 = arith.constant dense<0.000000e+00> : vector<128x8xf32>
    %154 = tpu.matmul %150, %153, %cst_264 {dimension_numbers = #tpu.dot_dimension_numbers<[1], [0], [0], [1], [0, 0, 1, 1], [], []>} : vector<128x256xbf16>, vector<256x8xbf16>, vector<128x8xf32> -> vector<128x8xf32>
    %155 = arith.addf %151, %154 : vector<128x8xf32>
    %c0_265 = arith.constant 0 : index
    %c0_266 = arith.constant 0 : index
    %156 = vector.load %arg11[%c0_265, %c0_266] : memref<128x8xf32, #tpu.memory_space<vmem>>, vector<128x8xf32>
    tpu.vector_store %arg11[%c0_265, %c0_266], %155 {strides = array<i32>} : memref<128x8xf32, #tpu.memory_space<vmem>>, vector<128x8xf32>,
    %c0_267 = arith.constant 0 : index
    %c1_268 = arith.constant 1 : index
    %c0_269 = arith.constant 0 : index
    %c0_270 = arith.constant 0 : index
    %157 = vector.load %arg9[%c0_267, %c1_268, %c0_269, %c0_270] : memref<2x10x8x256xf32, #tpu.memory_space<vmem>>, vector<2x8x8x256xf32>
    %158 = vector.shape_cast %157 : vector<2x8x8x256xf32> to vector<128x256xf32>
    %159 = arith.truncf %158 : vector<128x256xf32> to vector<128x256xbf16>
    %c0_271 = arith.constant 0 : index
    %c0_272 = arith.constant 0 : index
    %160 = vector.load %arg11[%c0_271, %c0_272] : memref<128x8xf32, #tpu.memory_space<vmem>>, vector<128x8xf32>
    %c1_273 = arith.constant 1 : index
    %c1_274 = arith.constant 1 : index
    %c0_275 = arith.constant 0 : index
    %c0_276 = arith.constant 0 : index
    %161 = vector.load %arg3[%c1_273, %c1_274, %c0_275, %c0_276] : memref<3x3x256x8xbf16, #tpu.memory_space<vmem>>, vector<1x1x256x8xbf16>
    %162 = vector.shape_cast %161 : vector<1x1x256x8xbf16> to vector<256x8xbf16>
    %cst_277 = arith.constant dense<0.000000e+00> : vector<128x8xf32>
    %163 = tpu.matmul %159, %162, %cst_277 {dimension_numbers = #tpu.dot_dimension_numbers<[1], [0], [0], [1], [0, 0, 1, 1], [], []>} : vector<128x256xbf16>, vector<256x8xbf16>, vector<128x8xf32> -> vector<128x8xf32>
    %164 = arith.addf %160, %163 : vector<128x8xf32>
    %c0_278 = arith.constant 0 : index
    %c0_279 = arith.constant 0 : index
    %165 = vector.load %arg11[%c0_278, %c0_279] : memref<128x8xf32, #tpu.memory_space<vmem>>, vector<128x8xf32>
    tpu.vector_store %arg11[%c0_278, %c0_279], %164 {strides = array<i32>} : memref<128x8xf32, #tpu.memory_space<vmem>>, vector<128x8xf32>,
    %c0_280 = arith.constant 0 : index
    %c2_281 = arith.constant 2 : index
    %c0_282 = arith.constant 0 : index
    %c0_283 = arith.constant 0 : index
    %166 = vector.load %arg9[%c0_280, %c2_281, %c0_282, %c0_283] : memref<2x10x8x256xf32, #tpu.memory_space<vmem>>, vector<2x8x8x256xf32>
    %167 = vector.shape_cast %166 : vector<2x8x8x256xf32> to vector<128x256xf32>
    %168 = arith.truncf %167 : vector<128x256xf32> to vector<128x256xbf16>
    %c0_284 = arith.constant 0 : index
    %c0_285 = arith.constant 0 : index
    %169 = vector.load %arg11[%c0_284, %c0_285] : memref<128x8xf32, #tpu.memory_space<vmem>>, vector<128x8xf32>
    %c2_286 = arith.constant 2 : index
    %c1_287 = arith.constant 1 : index
    %c0_288 = arith.constant 0 : index
    %c0_289 = arith.constant 0 : index
    %170 = vector.load %arg3[%c2_286, %c1_287, %c0_288, %c0_289] : memref<3x3x256x8xbf16, #tpu.memory_space<vmem>>, vector<1x1x256x8xbf16>
    %171 = vector.shape_cast %170 : vector<1x1x256x8xbf16> to vector<256x8xbf16>
    %cst_290 = arith.constant dense<0.000000e+00> : vector<128x8xf32>
    %172 = tpu.matmul %168, %171, %cst_290 {dimension_numbers = #tpu.dot_dimension_numbers<[1], [0], [0], [1], [0, 0, 1, 1], [], []>} : vector<128x256xbf16>, vector<256x8xbf16>, vector<128x8xf32> -> vector<128x8xf32>
    %173 = arith.addf %169, %172 : vector<128x8xf32>
    %c0_291 = arith.constant 0 : index
    %c0_292 = arith.constant 0 : index
    %174 = vector.load %arg11[%c0_291, %c0_292] : memref<128x8xf32, #tpu.memory_space<vmem>>, vector<128x8xf32>
    tpu.vector_store %arg11[%c0_291, %c0_292], %173 {strides = array<i32>} : memref<128x8xf32, #tpu.memory_space<vmem>>, vector<128x8xf32>,
    %c0_293 = arith.constant 0 : index
    %c0_294 = arith.constant 0 : index
    %c2_295 = arith.constant 2 : index
    %c0_296 = arith.constant 0 : index
    %175 = vector.load %arg7[%c0_293, %c0_294, %c2_295, %c0_296] : memref<2x10x10x256xf32, #tpu.memory_space<vmem>>, vector<2x10x8x256xf32>
    %c0_297 = arith.constant 0 : index
    %c0_298 = arith.constant 0 : index
    %c0_299 = arith.constant 0 : index
    %c0_300 = arith.constant 0 : index
    %176 = vector.load %arg9[%c0_297, %c0_298, %c0_299, %c0_300] : memref<2x10x8x256xf32, #tpu.memory_space<vmem>>, vector<2x10x8x256xf32>
    tpu.vector_store %arg9[%c0_297, %c0_298, %c0_299, %c0_300], %175 {strides = array<i32>} : memref<2x10x8x256xf32, #tpu.memory_space<vmem>>, vector<2x10x8x256xf32>,
    %c0_301 = arith.constant 0 : index
    %c0_302 = arith.constant 0 : index
    %c0_303 = arith.constant 0 : index
    %c0_304 = arith.constant 0 : index
    %177 = vector.load %arg9[%c0_301, %c0_302, %c0_303, %c0_304] : memref<2x10x8x256xf32, #tpu.memory_space<vmem>>, vector<2x8x8x256xf32>
    %178 = vector.shape_cast %177 : vector<2x8x8x256xf32> to vector<128x256xf32>
    %179 = arith.truncf %178 : vector<128x256xf32> to vector<128x256xbf16>
    %c0_305 = arith.constant 0 : index
    %c0_306 = arith.constant 0 : index
    %180 = vector.load %arg11[%c0_305, %c0_306] : memref<128x8xf32, #tpu.memory_space<vmem>>, vector<128x8xf32>
    %c0_307 = arith.constant 0 : index
    %c2_308 = arith.constant 2 : index
    %c0_309 = arith.constant 0 : index
    %c0_310 = arith.constant 0 : index
    %181 = vector.load %arg3[%c0_307, %c2_308, %c0_309, %c0_310] : memref<3x3x256x8xbf16, #tpu.memory_space<vmem>>, vector<1x1x256x8xbf16>
    %182 = vector.shape_cast %181 : vector<1x1x256x8xbf16> to vector<256x8xbf16>
    %cst_311 = arith.constant dense<0.000000e+00> : vector<128x8xf32>
    %183 = tpu.matmul %179, %182, %cst_311 {dimension_numbers = #tpu.dot_dimension_numbers<[1], [0], [0], [1], [0, 0, 1, 1], [], []>} : vector<128x256xbf16>, vector<256x8xbf16>, vector<128x8xf32> -> vector<128x8xf32>
    %184 = arith.addf %180, %183 : vector<128x8xf32>
    %c0_312 = arith.constant 0 : index
    %c0_313 = arith.constant 0 : index
    %185 = vector.load %arg11[%c0_312, %c0_313] : memref<128x8xf32, #tpu.memory_space<vmem>>, vector<128x8xf32>
    tpu.vector_store %arg11[%c0_312, %c0_313], %184 {strides = array<i32>} : memref<128x8xf32, #tpu.memory_space<vmem>>, vector<128x8xf32>,
    %c0_314 = arith.constant 0 : index
    %c1_315 = arith.constant 1 : index
    %c0_316 = arith.constant 0 : index
    %c0_317 = arith.constant 0 : index
    %186 = vector.load %arg9[%c0_314, %c1_315, %c0_316, %c0_317] : memref<2x10x8x256xf32, #tpu.memory_space<vmem>>, vector<2x8x8x256xf32>
    %187 = vector.shape_cast %186 : vector<2x8x8x256xf32> to vector<128x256xf32>
    %188 = arith.truncf %187 : vector<128x256xf32> to vector<128x256xbf16>
    %c0_318 = arith.constant 0 : index
    %c0_319 = arith.constant 0 : index
    %189 = vector.load %arg11[%c0_318, %c0_319] : memref<128x8xf32, #tpu.memory_space<vmem>>, vector<128x8xf32>
    %c1_320 = arith.constant 1 : index
    %c2_321 = arith.constant 2 : index
    %c0_322 = arith.constant 0 : index
    %c0_323 = arith.constant 0 : index
    %190 = vector.load %arg3[%c1_320, %c2_321, %c0_322, %c0_323] : memref<3x3x256x8xbf16, #tpu.memory_space<vmem>>, vector<1x1x256x8xbf16>
    %191 = vector.shape_cast %190 : vector<1x1x256x8xbf16> to vector<256x8xbf16>
    %cst_324 = arith.constant dense<0.000000e+00> : vector<128x8xf32>
    %192 = tpu.matmul %188, %191, %cst_324 {dimension_numbers = #tpu.dot_dimension_numbers<[1], [0], [0], [1], [0, 0, 1, 1], [], []>} : vector<128x256xbf16>, vector<256x8xbf16>, vector<128x8xf32> -> vector<128x8xf32>
    %193 = arith.addf %189, %192 : vector<128x8xf32>
    %c0_325 = arith.constant 0 : index
    %c0_326 = arith.constant 0 : index
    %194 = vector.load %arg11[%c0_325, %c0_326] : memref<128x8xf32, #tpu.memory_space<vmem>>, vector<128x8xf32>
    tpu.vector_store %arg11[%c0_325, %c0_326], %193 {strides = array<i32>} : memref<128x8xf32, #tpu.memory_space<vmem>>, vector<128x8xf32>,
    %c0_327 = arith.constant 0 : index
    %c2_328 = arith.constant 2 : index
    %c0_329 = arith.constant 0 : index
    %c0_330 = arith.constant 0 : index
    %195 = vector.load %arg9[%c0_327, %c2_328, %c0_329, %c0_330] : memref<2x10x8x256xf32, #tpu.memory_space<vmem>>, vector<2x8x8x256xf32>
    %196 = vector.shape_cast %195 : vector<2x8x8x256xf32> to vector<128x256xf32>
    %197 = arith.truncf %196 : vector<128x256xf32> to vector<128x256xbf16>
    %c0_331 = arith.constant 0 : index
    %c0_332 = arith.constant 0 : index
    %198 = vector.load %arg11[%c0_331, %c0_332] : memref<128x8xf32, #tpu.memory_space<vmem>>, vector<128x8xf32>
    %c2_333 = arith.constant 2 : index
    %c2_334 = arith.constant 2 : index
    %c0_335 = arith.constant 0 : index
    %c0_336 = arith.constant 0 : index
    %199 = vector.load %arg3[%c2_333, %c2_334, %c0_335, %c0_336] : memref<3x3x256x8xbf16, #tpu.memory_space<vmem>>, vector<1x1x256x8xbf16>
    %200 = vector.shape_cast %199 : vector<1x1x256x8xbf16> to vector<256x8xbf16>
    %cst_337 = arith.constant dense<0.000000e+00> : vector<128x8xf32>
    %201 = tpu.matmul %197, %200, %cst_337 {dimension_numbers = #tpu.dot_dimension_numbers<[1], [0], [0], [1], [0, 0, 1, 1], [], []>} : vector<128x256xbf16>, vector<256x8xbf16>, vector<128x8xf32> -> vector<128x8xf32>
    %202 = arith.addf %198, %201 : vector<128x8xf32>
    %c0_338 = arith.constant 0 : index
    %c0_339 = arith.constant 0 : index
    %203 = vector.load %arg11[%c0_338, %c0_339] : memref<128x8xf32, #tpu.memory_space<vmem>>, vector<128x8xf32>
    tpu.vector_store %arg11[%c0_338, %c0_339], %202 {strides = array<i32>} : memref<128x8xf32, #tpu.memory_space<vmem>>, vector<128x8xf32>,
    %c0_340 = arith.constant 0 : index
    %c0_341 = arith.constant 0 : index
    %204 = vector.load %arg11[%c0_340, %c0_341] : memref<128x8xf32, #tpu.memory_space<vmem>>, vector<128x8xf32>
    %c0_342 = arith.constant 0 : index
    %c0_343 = arith.constant 0 : index
    %205 = vector.load %arg4[%c0_342, %c0_343] : memref<1x8xf32, #tpu.memory_space<vmem>>, vector<1x8xf32>
    %206 = vector.broadcast %205 : vector<1x8xf32> to vector<128x8xf32>
    %207 = arith.addf %204, %206 : vector<128x8xf32>
    %208 = vector.shape_cast %207 : vector<128x8xf32> to vector<2x64x8xf32>
    %c0_344 = arith.constant 0 : index
    %c0_345 = arith.constant 0 : index
    %c0_346 = arith.constant 0 : index
    %209 = vector.load %arg5[%c0_344, %c0_345, %c0_346] : memref<2x64x8xf32, #tpu.memory_space<vmem>>, vector<2x64x8xf32>
    tpu.vector_store %arg5[%c0_344, %c0_345, %c0_346], %208 {strides = array<i32>} : memref<2x64x8xf32, #tpu.memory_space<vmem>>, vector<2x64x8xf32>,
    return
  }
}

</mosaic_0001>

<llo_original>
// kernel: final_conv_block.1
$region0: #{final_conv_block.1}
  #allocation0 [shape = 'u32[]', space=smem, size = 0x4, offset = 0x4, fixed_abs, tag = 'smem constant byte address 0x4 - core index']
  #allocation1 [shape = 'u32[144,128]{1,0:T(1,128)}', space=vmem, size = 0x12000, scoped, tag = 'internal scratch']
  #allocation2 [shape = 'f32[2,10,10,256]{3,2,1,0:T(8,128)}', space=vmem, size = 0x50000, scoped, tag = 'scratch operand']
  #allocation3 [shape = 'f32[2,10,10,256]{3,2,1,0:T(8,128)}', space=vmem, size = 0x50000, scoped, tag = 'scratch operand']
  #allocation4 [shape = 'f32[2,10,8,256]{3,2,1,0:T(8,128)}', space=vmem, size = 0x28000, scoped, tag = 'scratch operand']
  #allocation5 [shape = 'f32[2,10,8,256]{3,2,1,0:T(8,128)}', space=vmem, size = 0x28000, scoped, tag = 'scratch operand']
  #allocation6 [shape = 'f32[128,256]{1,0:T(8,128)}', space=vmem, size = 0x20000, scoped, tag = 'scratch operand']
  #allocation7 [shape = 'f32[128,8]{1,0:T(8,128)}', space=vmem, size = 0x10000, scoped, tag = 'scratch operand']
  %s0 = inlined_call_operand.vmem [shape: f32[2,8,8,256], index: 0, kind: input, shape index: {}]
  %s1 = inlined_call_operand.vmem [shape: bf16[3,3,256,256], index: 1, kind: input, shape index: {}]
  %s2 = inlined_call_operand.vmem [shape: f32[1,256], index: 2, kind: input, shape index: {}]
  %s3 = inlined_call_operand.vmem [shape: bf16[3,3,256,8], index: 3, kind: input, shape index: {}]
  %s4 = inlined_call_operand.vmem [shape: f32[1,8], index: 4, kind: input, shape index: {}]
  %s5 = inlined_call_operand.hbm [shape: f32[2,64,8], index: 5, kind: output, shape index: {}]
  %s6 = sld [smem:[#allocation0]]
  $region30: #{final_conv_block.1} parent=0
    _
  %s8 = ssub.s32 1, %s6
  %s9 = scalar_select 0, %s8, %s6
  $region1: #{final_conv_block.1} parent=0
    #allocation8 [shape = 'u8[65536]{0}', space=vmem, size = 0x10000, scoped, tag = 'output window, operand 0, single buffered']
    #allocation9 [shape = 's32[1]{0}', space=sflag, size = 0x4, scoped, tag = 'scoped memory for final_conv_block.1']
    %10 = vsyncpa [#allocation9], 0
    // Predicated region
    $region2: #{final_conv_block.1} parent=1 // pred_check
      _
    $region3: #{final_conv_block.1} parent=1 // pred_check_branch
      %12 = sbr.rel (0) target = $region5
    $region4: #{final_conv_block.1} parent=1 // pred_region
      _
    $region5: #{final_conv_block.1} parent=1 // pred_fallthru
      _
    // Predicated region
    $region6: #{final_conv_block.1} parent=1 // pred_check
      _
    $region7: #{final_conv_block.1} parent=1 // pred_check_branch
      %14 = sbr.rel (0) target = $region9
    $region8: #{final_conv_block.1} parent=1 // pred_region
      _
    $region9: #{final_conv_block.1} parent=1 // pred_fallthru
      _
    // Predicated region
    $region10: #{final_conv_block.1} parent=1 // pred_check
      _
    $region11: #{final_conv_block.1} parent=1 // pred_check_branch
      %16 = sbr.rel (0) target = $region13
    $region12: #{final_conv_block.1} parent=1 // pred_region
      _
    $region13: #{final_conv_block.1} parent=1 // pred_fallthru
      _
    // Predicated region
    $region14: #{final_conv_block.1} parent=1 // pred_check
      _
    $region15: #{final_conv_block.1} parent=1 // pred_check_branch
      %18 = sbr.rel (0) target = $region17
    $region16: #{final_conv_block.1} parent=1 // pred_region
      _
    $region17: #{final_conv_block.1} parent=1 // pred_fallthru
      _
    // Predicated region
    $region18: #{final_conv_block.1} parent=1 // pred_check
      _
    $region19: #{final_conv_block.1} parent=1 // pred_check_branch
      %20 = sbr.rel (0) target = $region21
    $region20: #{final_conv_block.1} parent=1 // pred_region
      _
    $region21: #{final_conv_block.1} parent=1 // pred_fallthru
      _
    %22 = vst [vmem:[#allocation2] sm:$0xff] 0.0
    %23 = vst [vmem:[#allocation2 + $0x8] sm:$0xff] 0.0
    %24 = vst [vmem:[#allocation2 + $0x10] sm:$0x3] 0.0
    %25 = vst [vmem:[#allocation2 + $0x18] sm:$0x3] 0.0
    %26 = vst [vmem:[#allocation2 + $0x140] sm:$0xff] 0.0
    %27 = vst [vmem:[#allocation2 + $0x148] sm:$0xff] 0.0
    %28 = vst [vmem:[#allocation2 + $0x150] sm:$0x3] 0.0
    %29 = vst [vmem:[#allocation2 + $0x158] sm:$0x3] 0.0
    %s30 = scalar_lea.vmem [#allocation2], 288
    %31 = vst [vmem:[%s30] sm:$0xff] 0.0
    %32 = vst [vmem:[%s30 + $0x8] sm:$0xff] 0.0
    %33 = vst [vmem:[%s30 + $0x10] sm:$0x3] 0.0
    %34 = vst [vmem:[%s30 + $0x18] sm:$0x3] 0.0
    %35 = vst [vmem:[%s30 + $0x140] sm:$0xff] 0.0
    %36 = vst [vmem:[%s30 + $0x148] sm:$0xff] 0.0
    %37 = vst [vmem:[%s30 + $0x150] sm:$0x3] 0.0
    %38 = vst [vmem:[%s30 + $0x158] sm:$0x3] 0.0
    %s39 = scalar_lea.vmem [#allocation2], 32
    %v40 = vlaneseq
    %vm41 = vcmp.ge.s32.totalorder %v40, 0
    %vm42 = vcmp.lt.s32.totalorder %v40, 256
    %vm43 = vmand %vm41, %vm42
    %44 = vst.msk [vmem:[%s39] ss:$8 sm:$0x3] %vm43, 0.0
    %45 = vst.msk [vmem:[%s39] ss:$8 sm:$0x0] %vm43, 0.0
    %s46 = scalar_lea.vmem %s39, 32 [#allocation2]
    %47 = vst.msk [vmem:[%s46] ss:$8 sm:$0x3] %vm43, 0.0
    %48 = vst.msk [vmem:[%s46] ss:$8 sm:$0x0] %vm43, 0.0
    %s49 = scalar_lea.vmem %s39, 64 [#allocation2]
    %50 = vst.msk [vmem:[%s49] ss:$8 sm:$0x3] %vm43, 0.0
    %51 = vst.msk [vmem:[%s49] ss:$8 sm:$0x0] %vm43, 0.0
    %s52 = scalar_lea.vmem %s39, 96 [#allocation2]
    %53 = vst.msk [vmem:[%s52] ss:$8 sm:$0x3] %vm43, 0.0
    %54 = vst.msk [vmem:[%s52] ss:$8 sm:$0x0] %vm43, 0.0
    %s55 = scalar_lea.vmem %s39, 128 [#allocation2]
    %56 = vst.msk [vmem:[%s55] ss:$8 sm:$0x3] %vm43, 0.0
    %57 = vst.msk [vmem:[%s55] ss:$8 sm:$0x0] %vm43, 0.0
    %s58 = scalar_lea.vmem %s39, 160 [#allocation2]
    %59 = vst.msk [vmem:[%s58] ss:$8 sm:$0x3] %vm43, 0.0
    %60 = vst.msk [vmem:[%s58] ss:$8 sm:$0x0] %vm43, 0.0
    %s61 = scalar_lea.vmem %s39, 192 [#allocation2]
    %62 = vst.msk [vmem:[%s61] ss:$8 sm:$0x3] %vm43, 0.0
    %63 = vst.msk [vmem:[%s61] ss:$8 sm:$0x0] %vm43, 0.0
    %s64 = scalar_lea.vmem %s39, 224 [#allocation2]
    %65 = vst.msk [vmem:[%s64] ss:$8 sm:$0x3] %vm43, 0.0
    %66 = vst.msk [vmem:[%s64] ss:$8 sm:$0x0] %vm43, 0.0
    %s67 = scalar_lea.vmem %s39, 320 [#allocation2]
    %68 = vst.msk [vmem:[%s67] ss:$8 sm:$0x3] %vm43, 0.0
    %69 = vst.msk [vmem:[%s67] ss:$8 sm:$0x0] %vm43, 0.0
    %s70 = scalar_lea.vmem %s39, 352 [#allocation2]
    %71 = vst.msk [vmem:[%s70] ss:$8 sm:$0x3] %vm43, 0.0
    %72 = vst.msk [vmem:[%s70] ss:$8 sm:$0x0] %vm43, 0.0
    %s73 = scalar_lea.vmem %s39, 384 [#allocation2]
    %74 = vst.msk [vmem:[%s73] ss:$8 sm:$0x3] %vm43, 0.0
    %75 = vst.msk [vmem:[%s73] ss:$8 sm:$0x0] %vm43, 0.0
    %s76 = scalar_lea.vmem %s39, 416 [#allocation2]
    %77 = vst.msk [vmem:[%s76] ss:$8 sm:$0x3] %vm43, 0.0
    %78 = vst.msk [vmem:[%s76] ss:$8 sm:$0x0] %vm43, 0.0
    %s79 = scalar_lea.vmem %s39, 448 [#allocation2]
    %80 = vst.msk [vmem:[%s79] ss:$8 sm:$0x3] %vm43, 0.0
    %81 = vst.msk [vmem:[%s79] ss:$8 sm:$0x0] %vm43, 0.0
    %s82 = scalar_lea.vmem %s39, 480 [#allocation2]
    %83 = vst.msk [vmem:[%s82] ss:$8 sm:$0x3] %vm43, 0.0
    %84 = vst.msk [vmem:[%s82] ss:$8 sm:$0x0] %vm43, 0.0
    %s85 = scalar_lea.vmem %s39, 512 [#allocation2]
    %86 = vst.msk [vmem:[%s85] ss:$8 sm:$0x3] %vm43, 0.0
    %87 = vst.msk [vmem:[%s85] ss:$8 sm:$0x0] %vm43, 0.0
    %s88 = scalar_lea.vmem %s39, 544 [#allocation2]
    %89 = vst.msk [vmem:[%s88] ss:$8 sm:$0x3] %vm43, 0.0
    %90 = vst.msk [vmem:[%s88] ss:$8 sm:$0x0] %vm43, 0.0
    %s91 = scalar_lea.vmem %s39, 17 [#allocation2]
    %92 = vst.msk [vmem:[%s91] ss:$8 sm:$0x3] %vm43, 0.0
    %93 = vst.msk [vmem:[%s91] ss:$8 sm:$0x0] %vm43, 0.0
    %s94 = scalar_lea.vmem %s39, 49 [#allocation2]
    %95 = vst.msk [vmem:[%s94] ss:$8 sm:$0x3] %vm43, 0.0
    %96 = vst.msk [vmem:[%s94] ss:$8 sm:$0x0] %vm43, 0.0
    %s97 = scalar_lea.vmem %s39, 81 [#allocation2]
    %98 = vst.msk [vmem:[%s97] ss:$8 sm:$0x3] %vm43, 0.0
    %99 = vst.msk [vmem:[%s97] ss:$8 sm:$0x0] %vm43, 0.0
    %s100 = scalar_lea.vmem %s39, 113 [#allocation2]
    %101 = vst.msk [vmem:[%s100] ss:$8 sm:$0x3] %vm43, 0.0
    %102 = vst.msk [vmem:[%s100] ss:$8 sm:$0x0] %vm43, 0.0
    %s103 = scalar_lea.vmem %s39, 145 [#allocation2]
    %104 = vst.msk [vmem:[%s103] ss:$8 sm:$0x3] %vm43, 0.0
    %105 = vst.msk [vmem:[%s103] ss:$8 sm:$0x0] %vm43, 0.0
    %s106 = scalar_lea.vmem %s39, 177 [#allocation2]
    %107 = vst.msk [vmem:[%s106] ss:$8 sm:$0x3] %vm43, 0.0
    %108 = vst.msk [vmem:[%s106] ss:$8 sm:$0x0] %vm43, 0.0
    %s109 = scalar_lea.vmem %s39, 209 [#allocation2]
    %110 = vst.msk [vmem:[%s109] ss:$8 sm:$0x3] %vm43, 0.0
    %111 = vst.msk [vmem:[%s109] ss:$8 sm:$0x0] %vm43, 0.0
    %s112 = scalar_lea.vmem %s39, 241 [#allocation2]
    %113 = vst.msk [vmem:[%s112] ss:$8 sm:$0x3] %vm43, 0.0
    %114 = vst.msk [vmem:[%s112] ss:$8 sm:$0x0] %vm43, 0.0
    %s115 = scalar_lea.vmem %s39, 337 [#allocation2]
    %116 = vst.msk [vmem:[%s115] ss:$8 sm:$0x3] %vm43, 0.0
    %117 = vst.msk [vmem:[%s115] ss:$8 sm:$0x0] %vm43, 0.0
    %s118 = scalar_lea.vmem %s39, 369 [#allocation2]
    %119 = vst.msk [vmem:[%s118] ss:$8 sm:$0x3] %vm43, 0.0
    %120 = vst.msk [vmem:[%s118] ss:$8 sm:$0x0] %vm43, 0.0
    %s121 = scalar_lea.vmem %s39, 401 [#allocation2]
    %122 = vst.msk [vmem:[%s121] ss:$8 sm:$0x3] %vm43, 0.0
    %123 = vst.msk [vmem:[%s121] ss:$8 sm:$0x0] %vm43, 0.0
    %s124 = scalar_lea.vmem %s39, 433 [#allocation2]
    %125 = vst.msk [vmem:[%s124] ss:$8 sm:$0x3] %vm43, 0.0
    %126 = vst.msk [vmem:[%s124] ss:$8 sm:$0x0] %vm43, 0.0
    %s127 = scalar_lea.vmem %s39, 465 [#allocation2]
    %128 = vst.msk [vmem:[%s127] ss:$8 sm:$0x3] %vm43, 0.0
    %129 = vst.msk [vmem:[%s127] ss:$8 sm:$0x0] %vm43, 0.0
    %s130 = scalar_lea.vmem %s39, 497 [#allocation2]
    %131 = vst.msk [vmem:[%s130] ss:$8 sm:$0x3] %vm43, 0.0
    %132 = vst.msk [vmem:[%s130] ss:$8 sm:$0x0] %vm43, 0.0
    %s133 = scalar_lea.vmem %s39, 529 [#allocation2]
    %134 = vst.msk [vmem:[%s133] ss:$8 sm:$0x3] %vm43, 0.0
    %135 = vst.msk [vmem:[%s133] ss:$8 sm:$0x0] %vm43, 0.0
    %s136 = scalar_lea.vmem %s39, 561 [#allocation2]
    %137 = vst.msk [vmem:[%s136] ss:$8 sm:$0x3] %vm43, 0.0
    %138 = vst.msk [vmem:[%s136] ss:$8 sm:$0x0] %vm43, 0.0
    %139 = vst [vmem:[#allocation3] sm:$0xff] 0.0
    %140 = vst [vmem:[#allocation3 + $0x8] sm:$0xff] 0.0
    %141 = vst [vmem:[#allocation3 + $0x10] sm:$0x3] 0.0
    %142 = vst [vmem:[#allocation3 + $0x18] sm:$0x3] 0.0
    %143 = vst [vmem:[#allocation3 + $0x140] sm:$0xff] 0.0
    %144 = vst [vmem:[#allocation3 + $0x148] sm:$0xff] 0.0
    %145 = vst [vmem:[#allocation3 + $0x150] sm:$0x3] 0.0
    %146 = vst [vmem:[#allocation3 + $0x158] sm:$0x3] 0.0
    %s147 = scalar_lea.vmem [#allocation3], 288
    %148 = vst [vmem:[%s147] sm:$0xff] 0.0
    %149 = vst [vmem:[%s147 + $0x8] sm:$0xff] 0.0
    %150 = vst [vmem:[%s147 + $0x10] sm:$0x3] 0.0
    %151 = vst [vmem:[%s147 + $0x18] sm:$0x3] 0.0
    %152 = vst [vmem:[%s147 + $0x140] sm:$0xff] 0.0
    %153 = vst [vmem:[%s147 + $0x148] sm:$0xff] 0.0
    %154 = vst [vmem:[%s147 + $0x150] sm:$0x3] 0.0
    %155 = vst [vmem:[%s147 + $0x158] sm:$0x3] 0.0
    %s156 = scalar_lea.vmem [#allocation3], 32
    %157 = vst.msk [vmem:[%s156] ss:$8 sm:$0x3] %vm43, 0.0
    %158 = vst.msk [vmem:[%s156] ss:$8 sm:$0x0] %vm43, 0.0
    %s159 = scalar_lea.vmem %s156, 32 [#allocation3]
    %160 = vst.msk [vmem:[%s159] ss:$8 sm:$0x3] %vm43, 0.0
    %161 = vst.msk [vmem:[%s159] ss:$8 sm:$0x0] %vm43, 0.0
    %s162 = scalar_lea.vmem %s156, 64 [#allocation3]
    %163 = vst.msk [vmem:[%s162] ss:$8 sm:$0x3] %vm43, 0.0
    %164 = vst.msk [vmem:[%s162] ss:$8 sm:$0x0] %vm43, 0.0
    %s165 = scalar_lea.vmem %s156, 96 [#allocation3]
    %166 = vst.msk [vmem:[%s165] ss:$8 sm:$0x3] %vm43, 0.0
    %167 = vst.msk [vmem:[%s165] ss:$8 sm:$0x0] %vm43, 0.0
    %s168 = scalar_lea.vmem %s156, 128 [#allocation3]
    %169 = vst.msk [vmem:[%s168] ss:$8 sm:$0x3] %vm43, 0.0
    %170 = vst.msk [vmem:[%s168] ss:$8 sm:$0x0] %vm43, 0.0
    %s171 = scalar_lea.vmem %s156, 160 [#allocation3]
    %172 = vst.msk [vmem:[%s171] ss:$8 sm:$0x3] %vm43, 0.0
    %173 = vst.msk [vmem:[%s171] ss:$8 sm:$0x0] %vm43, 0.0
    %s174 = scalar_lea.vmem %s156, 192 [#allocation3]
    %175 = vst.msk [vmem:[%s174] ss:$8 sm:$0x3] %vm43, 0.0
    %176 = vst.msk [vmem:[%s174] ss:$8 sm:$0x0] %vm43, 0.0
    %s177 = scalar_lea.vmem %s156, 224 [#allocation3]
    %178 = vst.msk [vmem:[%s177] ss:$8 sm:$0x3] %vm43, 0.0
    %179 = vst.msk [vmem:[%s177] ss:$8 sm:$0x0] %vm43, 0.0
    %s180 = scalar_lea.vmem %s156, 320 [#allocation3]
    %181 = vst.msk [vmem:[%s180] ss:$8 sm:$0x3] %vm43, 0.0
    %182 = vst.msk [vmem:[%s180] ss:$8 sm:$0x0] %vm43, 0.0
    %s183 = scalar_lea.vmem %s156, 352 [#allocation3]
    %184 = vst.msk [vmem:[%s183] ss:$8 sm:$0x3] %vm43, 0.0
    %185 = vst.msk [vmem:[%s183] ss:$8 sm:$0x0] %vm43, 0.0
    %s186 = scalar_lea.vmem %s156, 384 [#allocation3]
    %187 = vst.msk [vmem:[%s186] ss:$8 sm:$0x3] %vm43, 0.0
    %188 = vst.msk [vmem:[%s186] ss:$8 sm:$0x0] %vm43, 0.0
    %s189 = scalar_lea.vmem %s156, 416 [#allocation3]
    %190 = vst.msk [vmem:[%s189] ss:$8 sm:$0x3] %vm43, 0.0
    %191 = vst.msk [vmem:[%s189] ss:$8 sm:$0x0] %vm43, 0.0
    %s192 = scalar_lea.vmem %s156, 448 [#allocation3]
    %193 = vst.msk [vmem:[%s192] ss:$8 sm:$0x3] %vm43, 0.0
    %194 = vst.msk [vmem:[%s192] ss:$8 sm:$0x0] %vm43, 0.0
    %s195 = scalar_lea.vmem %s156, 480 [#allocation3]
    %196 = vst.msk [vmem:[%s195] ss:$8 sm:$0x3] %vm43, 0.0
    %197 = vst.msk [vmem:[%s195] ss:$8 sm:$0x0] %vm43, 0.0
    %s198 = scalar_lea.vmem %s156, 512 [#allocation3]
    %199 = vst.msk [vmem:[%s198] ss:$8 sm:$0x3] %vm43, 0.0
    %200 = vst.msk [vmem:[%s198] ss:$8 sm:$0x0] %vm43, 0.0
    %s201 = scalar_lea.vmem %s156, 544 [#allocation3]
    %202 = vst.msk [vmem:[%s201] ss:$8 sm:$0x3] %vm43, 0.0
    %203 = vst.msk [vmem:[%s201] ss:$8 sm:$0x0] %vm43, 0.0
    %s204 = scalar_lea.vmem %s156, 17 [#allocation3]
    %205 = vst.msk [vmem:[%s204] ss:$8 sm:$0x3] %vm43, 0.0
    %206 = vst.msk [vmem:[%s204] ss:$8 sm:$0x0] %vm43, 0.0
    %s207 = scalar_lea.vmem %s156, 49 [#allocation3]
    %208 = vst.msk [vmem:[%s207] ss:$8 sm:$0x3] %vm43, 0.0
    %209 = vst.msk [vmem:[%s207] ss:$8 sm:$0x0] %vm43, 0.0
    %s210 = scalar_lea.vmem %s156, 81 [#allocation3]
    %211 = vst.msk [vmem:[%s210] ss:$8 sm:$0x3] %vm43, 0.0
    %212 = vst.msk [vmem:[%s210] ss:$8 sm:$0x0] %vm43, 0.0
    %s213 = scalar_lea.vmem %s156, 113 [#allocation3]
    %214 = vst.msk [vmem:[%s213] ss:$8 sm:$0x3] %vm43, 0.0
    %215 = vst.msk [vmem:[%s213] ss:$8 sm:$0x0] %vm43, 0.0
    %s216 = scalar_lea.vmem %s156, 145 [#allocation3]
    %217 = vst.msk [vmem:[%s216] ss:$8 sm:$0x3] %vm43, 0.0
    %218 = vst.msk [vmem:[%s216] ss:$8 sm:$0x0] %vm43, 0.0
    %s219 = scalar_lea.vmem %s156, 177 [#allocation3]
    %220 = vst.msk [vmem:[%s219] ss:$8 sm:$0x3] %vm43, 0.0
    %221 = vst.msk [vmem:[%s219] ss:$8 sm:$0x0] %vm43, 0.0
    %s222 = scalar_lea.vmem %s156, 209 [#allocation3]
    %223 = vst.msk [vmem:[%s222] ss:$8 sm:$0x3] %vm43, 0.0
    %224 = vst.msk [vmem:[%s222] ss:$8 sm:$0x0] %vm43, 0.0
    %s225 = scalar_lea.vmem %s156, 241 [#allocation3]
    %226 = vst.msk [vmem:[%s225] ss:$8 sm:$0x3] %vm43, 0.0
    %227 = vst.msk [vmem:[%s225] ss:$8 sm:$0x0] %vm43, 0.0
    %s228 = scalar_lea.vmem %s156, 337 [#allocation3]
    %229 = vst.msk [vmem:[%s228] ss:$8 sm:$0x3] %vm43, 0.0
    %230 = vst.msk [vmem:[%s228] ss:$8 sm:$0x0] %vm43, 0.0
    %s231 = scalar_lea.vmem %s156, 369 [#allocation3]
    %232 = vst.msk [vmem:[%s231] ss:$8 sm:$0x3] %vm43, 0.0
    %233 = vst.msk [vmem:[%s231] ss:$8 sm:$0x0] %vm43, 0.0
    %s234 = scalar_lea.vmem %s156, 401 [#allocation3]
    %235 = vst.msk [vmem:[%s234] ss:$8 sm:$0x3] %vm43, 0.0
    %236 = vst.msk [vmem:[%s234] ss:$8 sm:$0x0] %vm43, 0.0
    %s237 = scalar_lea.vmem %s156, 433 [#allocation3]
    %238 = vst.msk [vmem:[%s237] ss:$8 sm:$0x3] %vm43, 0.0
    %239 = vst.msk [vmem:[%s237] ss:$8 sm:$0x0] %vm43, 0.0
    %s240 = scalar_lea.vmem %s156, 465 [#allocation3]
    %241 = vst.msk [vmem:[%s240] ss:$8 sm:$0x3] %vm43, 0.0
    %242 = vst.msk [vmem:[%s240] ss:$8 sm:$0x0] %vm43, 0.0
    %s243 = scalar_lea.vmem %s156, 497 [#allocation3]
    %244 = vst.msk [vmem:[%s243] ss:$8 sm:$0x3] %vm43, 0.0
    %245 = vst.msk [vmem:[%s243] ss:$8 sm:$0x0] %vm43, 0.0
    %s246 = scalar_lea.vmem %s156, 529 [#allocation3]
    %247 = vst.msk [vmem:[%s246] ss:$8 sm:$0x3] %vm43, 0.0
    %248 = vst.msk [vmem:[%s246] ss:$8 sm:$0x0] %vm43, 0.0
    %s249 = scalar_lea.vmem %s156, 561 [#allocation3]
    %250 = vst.msk [vmem:[%s249] ss:$8 sm:$0x3] %vm43, 0.0
    %251 = vst.msk [vmem:[%s249] ss:$8 sm:$0x0] %vm43, 0.0
    %v252 = vld [vmem:[%s0] sm:$0xff]
    %v253 = vld [vmem:[%s0 + $0x8] sm:$0xff]
    %v254 = vld [vmem:[%s0 + $0x10] sm:$0xff]
    %v255 = vld [vmem:[%s0 + $0x18] sm:$0xff]
    %v256 = vld [vmem:[%s0 + $0x20] sm:$0xff]
    %v257 = vld [vmem:[%s0 + $0x28] sm:$0xff]
    %v258 = vld [vmem:[%s0 + $0x30] sm:$0xff]
    %v259 = vld [vmem:[%s0 + $0x38] sm:$0xff]
    %v260 = vld [vmem:[%s0 + $0x40] sm:$0xff]
    %v261 = vld [vmem:[%s0 + $0x48] sm:$0xff]
    %v262 = vld [vmem:[%s0 + $0x50] sm:$0xff]
    %v263 = vld [vmem:[%s0 + $0x58] sm:$0xff]
    %v264 = vld [vmem:[%s0 + $0x60] sm:$0xff]
    %v265 = vld [vmem:[%s0 + $0x68] sm:$0xff]
    %v266 = vld [vmem:[%s0 + $0x70] sm:$0xff]
    %v267 = vld [vmem:[%s0 + $0x78] sm:$0xff]
    %v268 = vld [vmem:[%s0 + $0x80] sm:$0xff]
    %v269 = vld [vmem:[%s0 + $0x88] sm:$0xff]
    %v270 = vld [vmem:[%s0 + $0x90] sm:$0xff]
    %v271 = vld [vmem:[%s0 + $0x98] sm:$0xff]
    %v272 = vld [vmem:[%s0 + $0xa0] sm:$0xff]
    %v273 = vld [vmem:[%s0 + $0xa8] sm:$0xff]
    %v274 = vld [vmem:[%s0 + $0xb0] sm:$0xff]
    %v275 = vld [vmem:[%s0 + $0xb8] sm:$0xff]
    %v276 = vld [vmem:[%s0 + $0xc0] sm:$0xff]
    %v277 = vld [vmem:[%s0 + $0xc8] sm:$0xff]
    %v278 = vld [vmem:[%s0 + $0xd0] sm:$0xff]
    %v279 = vld [vmem:[%s0 + $0xd8] sm:$0xff]
    %v280 = vld [vmem:[%s0 + $0xe0] sm:$0xff]
    %v281 = vld [vmem:[%s0 + $0xe8] sm:$0xff]
    %v282 = vld [vmem:[%s0 + $0xf0] sm:$0xff]
    %v283 = vld [vmem:[%s0 + $0xf8] sm:$0xff]
    %v316 = vrot.slane %v252, 7
    %v317 = vrot.slane %v253, 7
    %v318 = vrot.slane %v254, 7
    %v319 = vrot.slane %v255, 7
    %v320 = vrot.slane %v256, 7
    %v321 = vrot.slane %v257, 7
    %v322 = vrot.slane %v258, 7
    %v323 = vrot.slane %v259, 7
    %v324 = vrot.slane %v260, 7
    %v325 = vrot.slane %v261, 7
    %v326 = vrot.slane %v262, 7
    %v327 = vrot.slane %v263, 7
    %v328 = vrot.slane %v264, 7
    %v329 = vrot.slane %v265, 7
    %v330 = vrot.slane %v266, 7
    %v331 = vrot.slane %v267, 7
    %v332 = vrot.slane %v268, 7
    %v333 = vrot.slane %v269, 7
    %v334 = vrot.slane %v270, 7
    %v335 = vrot.slane %v271, 7
    %v336 = vrot.slane %v272, 7
    %v337 = vrot.slane %v273, 7
    %v338 = vrot.slane %v274, 7
    %v339 = vrot.slane %v275, 7
    %v340 = vrot.slane %v276, 7
    %v341 = vrot.slane %v277, 7
    %v342 = vrot.slane %v278, 7
    %v343 = vrot.slane %v279, 7
    %v344 = vrot.slane %v280, 7
    %v345 = vrot.slane %v281, 7
    %v346 = vrot.slane %v282, 7
    %v347 = vrot.slane %v283, 7
    %380 = vst [vmem:[%s39] sm:$0xfe] %v316
    %381 = vst [vmem:[%s39 + $0x8] sm:$0xfe] %v317
    %382 = vst [vmem:[%s39 + $0x10] sm:$0x1] %v316
    %383 = vst [vmem:[%s39 + $0x18] sm:$0x1] %v317
    %384 = vst [vmem:[%s39 + $0x20] sm:$0xfe] %v318
    %385 = vst [vmem:[%s39 + $0x28] sm:$0xfe] %v319
    %386 = vst [vmem:[%s39 + $0x30] sm:$0x1] %v318
    %387 = vst [vmem:[%s39 + $0x38] sm:$0x1] %v319
    %388 = vst [vmem:[%s39 + $0x40] sm:$0xfe] %v320
    %389 = vst [vmem:[%s39 + $0x48] sm:$0xfe] %v321
    %390 = vst [vmem:[%s39 + $0x50] sm:$0x1] %v320
    %391 = vst [vmem:[%s39 + $0x58] sm:$0x1] %v321
    %392 = vst [vmem:[%s39 + $0x60] sm:$0xfe] %v322
    %393 = vst [vmem:[%s39 + $0x68] sm:$0xfe] %v323
    %394 = vst [vmem:[%s39 + $0x70] sm:$0x1] %v322
    %395 = vst [vmem:[%s39 + $0x78] sm:$0x1] %v323
    %396 = vst [vmem:[%s39 + $0x80] sm:$0xfe] %v324
    %397 = vst [vmem:[%s39 + $0x88] sm:$0xfe] %v325
    %398 = vst [vmem:[%s39 + $0x90] sm:$0x1] %v324
    %399 = vst [vmem:[%s39 + $0x98] sm:$0x1] %v325
    %400 = vst [vmem:[%s39 + $0xa0] sm:$0xfe] %v326
    %401 = vst [vmem:[%s39 + $0xa8] sm:$0xfe] %v327
    %402 = vst [vmem:[%s39 + $0xb0] sm:$0x1] %v326
    %403 = vst [vmem:[%s39 + $0xb8] sm:$0x1] %v327
    %404 = vst [vmem:[%s39 + $0xc0] sm:$0xfe] %v328
    %405 = vst [vmem:[%s39 + $0xc8] sm:$0xfe] %v329
    %406 = vst [vmem:[%s39 + $0xd0] sm:$0x1] %v328
    %407 = vst [vmem:[%s39 + $0xd8] sm:$0x1] %v329
    %408 = vst [vmem:[%s39 + $0xe0] sm:$0xfe] %v330
    %409 = vst [vmem:[%s39 + $0xe8] sm:$0xfe] %v331
    %410 = vst [vmem:[%s39 + $0xf0] sm:$0x1] %v330
    %411 = vst [vmem:[%s39 + $0xf8] sm:$0x1] %v331
    %412 = vst [vmem:[%s39 + $0x140] sm:$0xfe] %v332
    %413 = vst [vmem:[%s39 + $0x148] sm:$0xfe] %v333
    %414 = vst [vmem:[%s39 + $0x150] sm:$0x1] %v332
    %415 = vst [vmem:[%s39 + $0x158] sm:$0x1] %v333
    %416 = vst [vmem:[%s39 + $0x160] sm:$0xfe] %v334
    %417 = vst [vmem:[%s39 + $0x168] sm:$0xfe] %v335
    %418 = vst [vmem:[%s39 + $0x170] sm:$0x1] %v334
    %419 = vst [vmem:[%s39 + $0x178] sm:$0x1] %v335
    %420 = vst [vmem:[%s39 + $0x180] sm:$0xfe] %v336
    %421 = vst [vmem:[%s39 + $0x188] sm:$0xfe] %v337
    %422 = vst [vmem:[%s39 + $0x190] sm:$0x1] %v336
    %423 = vst [vmem:[%s39 + $0x198] sm:$0x1] %v337
    %424 = vst [vmem:[%s39 + $0x1a0] sm:$0xfe] %v338
    %425 = vst [vmem:[%s39 + $0x1a8] sm:$0xfe] %v339
    %426 = vst [vmem:[%s39 + $0x1b0] sm:$0x1] %v338
    %427 = vst [vmem:[%s39 + $0x1b8] sm:$0x1] %v339
    %428 = vst [vmem:[%s39 + $0x1c0] sm:$0xfe] %v340
    %429 = vst [vmem:[%s39 + $0x1c8] sm:$0xfe] %v341
    %430 = vst [vmem:[%s39 + $0x1d0] sm:$0x1] %v340
    %431 = vst [vmem:[%s39 + $0x1d8] sm:$0x1] %v341
    %432 = vst [vmem:[%s39 + $0x1e0] sm:$0xfe] %v342
    %433 = vst [vmem:[%s39 + $0x1e8] sm:$0xfe] %v343
    %434 = vst [vmem:[%s39 + $0x1f0] sm:$0x1] %v342
    %435 = vst [vmem:[%s39 + $0x1f8] sm:$0x1] %v343
    %436 = vst [vmem:[%s39 + $0x200] sm:$0xfe] %v344
    %437 = vst [vmem:[%s39 + $0x208] sm:$0xfe] %v345
    %438 = vst [vmem:[%s39 + $0x210] sm:$0x1] %v344
    %439 = vst [vmem:[%s39 + $0x218] sm:$0x1] %v345
    %440 = vst [vmem:[%s39 + $0x220] sm:$0xfe] %v346
    %441 = vst [vmem:[%s39 + $0x228] sm:$0xfe] %v347
    %442 = vst [vmem:[%s39 + $0x230] sm:$0x1] %v346
    %443 = vst [vmem:[%s39 + $0x238] sm:$0x1] %v347
    %444 = vst [vmem:[#allocation6] sm:$0xff] 0.0
    %445 = vst [vmem:[#allocation6 + $0x8] sm:$0xff] 0.0
    %446 = vst [vmem:[#allocation6 + $0x10] sm:$0xff] 0.0
    %447 = vst [vmem:[#allocation6 + $0x18] sm:$0xff] 0.0
    %448 = vst [vmem:[#allocation6 + $0x20] sm:$0xff] 0.0
    %449 = vst [vmem:[#allocation6 + $0x28] sm:$0xff] 0.0
    %450 = vst [vmem:[#allocation6 + $0x30] sm:$0xff] 0.0
    %451 = vst [vmem:[#allocation6 + $0x38] sm:$0xff] 0.0
    %452 = vst [vmem:[#allocation6 + $0x40] sm:$0xff] 0.0
    %453 = vst [vmem:[#allocation6 + $0x48] sm:$0xff] 0.0
    %454 = vst [vmem:[#allocation6 + $0x50] sm:$0xff] 0.0
    %455 = vst [vmem:[#allocation6 + $0x58] sm:$0xff] 0.0
    %456 = vst [vmem:[#allocation6 + $0x60] sm:$0xff] 0.0
    %457 = vst [vmem:[#allocation6 + $0x68] sm:$0xff] 0.0
    %458 = vst [vmem:[#allocation6 + $0x70] sm:$0xff] 0.0
    %459 = vst [vmem:[#allocation6 + $0x78] sm:$0xff] 0.0
    %460 = vst [vmem:[#allocation6 + $0x80] sm:$0xff] 0.0
    %461 = vst [vmem:[#allocation6 + $0x88] sm:$0xff] 0.0
    %462 = vst [vmem:[#allocation6 + $0x90] sm:$0xff] 0.0
    %463 = vst [vmem:[#allocation6 + $0x98] sm:$0xff] 0.0
    %464 = vst [vmem:[#allocation6 + $0xa0] sm:$0xff] 0.0
    %465 = vst [vmem:[#allocation6 + $0xa8] sm:$0xff] 0.0
    %466 = vst [vmem:[#allocation6 + $0xb0] sm:$0xff] 0.0
    %467 = vst [vmem:[#allocation6 + $0xb8] sm:$0xff] 0.0
    %468 = vst [vmem:[#allocation6 + $0xc0] sm:$0xff] 0.0
    %469 = vst [vmem:[#allocation6 + $0xc8] sm:$0xff] 0.0
    %470 = vst [vmem:[#allocation6 + $0xd0] sm:$0xff] 0.0
    %471 = vst [vmem:[#allocation6 + $0xd8] sm:$0xff] 0.0
    %472 = vst [vmem:[#allocation6 + $0xe0] sm:$0xff] 0.0
    %473 = vst [vmem:[#allocation6 + $0xe8] sm:$0xff] 0.0
    %474 = vst [vmem:[#allocation6 + $0xf0] sm:$0xff] 0.0
    %475 = vst [vmem:[#allocation6 + $0xf8] sm:$0xff] 0.0
    %v476 = vld [vmem:[#allocation2] sm:$0xff]
    %v477 = vld [vmem:[#allocation2 + $0x8] sm:$0xff]
    %v478 = vld [vmem:[#allocation2 + $0x20] sm:$0xff]
    %v479 = vld [vmem:[#allocation2 + $0x28] sm:$0xff]
    %v480 = vld [vmem:[#allocation2 + $0x40] sm:$0xff]
    %v481 = vld [vmem:[#allocation2 + $0x48] sm:$0xff]
    %v482 = vld [vmem:[#allocation2 + $0x60] sm:$0xff]
    %v483 = vld [vmem:[#allocation2 + $0x68] sm:$0xff]
    %v484 = vld [vmem:[#allocation2 + $0x80] sm:$0xff]
    %v485 = vld [vmem:[#allocation2 + $0x88] sm:$0xff]
    %v486 = vld [vmem:[#allocation2 + $0xa0] sm:$0xff]
    %v487 = vld [vmem:[#allocation2 + $0xa8] sm:$0xff]
    %v488 = vld [vmem:[#allocation2 + $0xc0] sm:$0xff]
    %v489 = vld [vmem:[#allocation2 + $0xc8] sm:$0xff]
    %v490 = vld [vmem:[#allocation2 + $0xe0] sm:$0xff]
    %v491 = vld [vmem:[#allocation2 + $0xe8] sm:$0xff]
    %v492 = vld [vmem:[#allocation2 + $0x100] sm:$0xff]
    %v493 = vld [vmem:[#allocation2 + $0x108] sm:$0xff]
    %v494 = vld [vmem:[#allocation2 + $0x120] sm:$0xff]
    %v495 = vld [vmem:[#allocation2 + $0x128] sm:$0xff]
    %v496 = vld [vmem:[#allocation2 + $0x140] sm:$0xff]
    %v497 = vld [vmem:[#allocation2 + $0x148] sm:$0xff]
    %v498 = vld [vmem:[#allocation2 + $0x160] sm:$0xff]
    %v499 = vld [vmem:[#allocation2 + $0x168] sm:$0xff]
    %v500 = vld [vmem:[#allocation2 + $0x180] sm:$0xff]
    %v501 = vld [vmem:[#allocation2 + $0x188] sm:$0xff]
    %v502 = vld [vmem:[#allocation2 + $0x1a0] sm:$0xff]
    %v503 = vld [vmem:[#allocation2 + $0x1a8] sm:$0xff]
    %v504 = vld [vmem:[#allocation2 + $0x1c0] sm:$0xff]
    %v505 = vld [vmem:[#allocation2 + $0x1c8] sm:$0xff]
    %v506 = vld [vmem:[#allocation2 + $0x1e0] sm:$0xff]
    %v507 = vld [vmem:[#allocation2 + $0x1e8] sm:$0xff]
    %v508 = vld [vmem:[#allocation2 + $0x200] sm:$0xff]
    %v509 = vld [vmem:[#allocation2 + $0x208] sm:$0xff]
    %v510 = vld [vmem:[#allocation2 + $0x220] sm:$0xff]
    %v511 = vld [vmem:[#allocation2 + $0x228] sm:$0xff]
    %v512 = vld [vmem:[#allocation2 + $0x240] sm:$0xff]
    %v513 = vld [vmem:[#allocation2 + $0x248] sm:$0xff]
    %v514 = vld [vmem:[#allocation2 + $0x260] sm:$0xff]
    %v515 = vld [vmem:[#allocation2 + $0x268] sm:$0xff]
    %516 = vst [vmem:[#allocation4] sm:$0xff] %v476
    %517 = vst [vmem:[#allocation4 + $0x8] sm:$0xff] %v477
    %518 = vst [vmem:[#allocation4 + $0x10] sm:$0xff] %v478
    %519 = vst [vmem:[#allocation4 + $0x18] sm:$0xff] %v479
    %520 = vst [vmem:[#allocation4 + $0x20] sm:$0xff] %v480
    %521 = vst [vmem:[#allocation4 + $0x28] sm:$0xff] %v481
    %522 = vst [vmem:[#allocation4 + $0x30] sm:$0xff] %v482
    %523 = vst [vmem:[#allocation4 + $0x38] sm:$0xff] %v483
    %524 = vst [vmem:[#allocation4 + $0x40] sm:$0xff] %v484
    %525 = vst [vmem:[#allocation4 + $0x48] sm:$0xff] %v485
    %526 = vst [vmem:[#allocation4 + $0x50] sm:$0xff] %v486
    %527 = vst [vmem:[#allocation4 + $0x58] sm:$0xff] %v487
    %528 = vst [vmem:[#allocation4 + $0x60] sm:$0xff] %v488
    %529 = vst [vmem:[#allocation4 + $0x68] sm:$0xff] %v489
    %530 = vst [vmem:[#allocation4 + $0x70] sm:$0xff] %v490
    %531 = vst [vmem:[#allocation4 + $0x78] sm:$0xff] %v491
    %532 = vst [vmem:[#allocation4 + $0x80] sm:$0xff] %v492
    %533 = vst [vmem:[#allocation4 + $0x88] sm:$0xff] %v493
    %534 = vst [vmem:[#allocation4 + $0x90] sm:$0xff] %v494
    %535 = vst [vmem:[#allocation4 + $0x98] sm:$0xff] %v495
    %536 = vst [vmem:[#allocation4 + $0xa0] sm:$0xff] %v496
    %537 = vst [vmem:[#allocation4 + $0xa8] sm:$0xff] %v497
    %538 = vst [vmem:[#allocation4 + $0xb0] sm:$0xff] %v498
    %539 = vst [vmem:[#allocation4 + $0xb8] sm:$0xff] %v499
    %540 = vst [vmem:[#allocation4 + $0xc0] sm:$0xff] %v500
    %541 = vst [vmem:[#allocation4 + $0xc8] sm:$0xff] %v501
    %542 = vst [vmem:[#allocation4 + $0xd0] sm:$0xff] %v502
    %543 = vst [vmem:[#allocation4 + $0xd8] sm:$0xff] %v503
    %544 = vst [vmem:[#allocation4 + $0xe0] sm:$0xff] %v504
    %545 = vst [vmem:[#allocation4 + $0xe8] sm:$0xff] %v505
    %546 = vst [vmem:[#allocation4 + $0xf0] sm:$0xff] %v506
    %547 = vst [vmem:[#allocation4 + $0xf8] sm:$0xff] %v507
    %548 = vst [vmem:[#allocation4 + $0x100] sm:$0xff] %v508
    %549 = vst [vmem:[#allocation4 + $0x108] sm:$0xff] %v509
    %550 = vst [vmem:[#allocation4 + $0x110] sm:$0xff] %v510
    %551 = vst [vmem:[#allocation4 + $0x118] sm:$0xff] %v511
    %552 = vst [vmem:[#allocation4 + $0x120] sm:$0xff] %v512
    %553 = vst [vmem:[#allocation4 + $0x128] sm:$0xff] %v513
    %554 = vst [vmem:[#allocation4 + $0x130] sm:$0xff] %v514
    %555 = vst [vmem:[#allocation4 + $0x138] sm:$0xff] %v515
    %v556 = vld [vmem:[#allocation4] sm:$0xff]
    %v557 = vld [vmem:[#allocation4 + $0x8] sm:$0xff]
    %v558 = vld [vmem:[#allocation4 + $0x10] sm:$0xff]
    %v559 = vld [vmem:[#allocation4 + $0x18] sm:$0xff]
    %v560 = vld [vmem:[#allocation4 + $0x20] sm:$0xff]
    %v561 = vld [vmem:[#allocation4 + $0x28] sm:$0xff]
    %v562 = vld [vmem:[#allocation4 + $0x30] sm:$0xff]
    %v563 = vld [vmem:[#allocation4 + $0x38] sm:$0xff]
    %v564 = vld [vmem:[#allocation4 + $0x40] sm:$0xff]
    %v565 = vld [vmem:[#allocation4 + $0x48] sm:$0xff]
    %v566 = vld [vmem:[#allocation4 + $0x50] sm:$0xff]
    %v567 = vld [vmem:[#allocation4 + $0x58] sm:$0xff]
    %v568 = vld [vmem:[#allocation4 + $0x60] sm:$0xff]
    %v569 = vld [vmem:[#allocation4 + $0x68] sm:$0xff]
    %v570 = vld [vmem:[#allocation4 + $0x70] sm:$0xff]
    %v571 = vld [vmem:[#allocation4 + $0x78] sm:$0xff]
    %v572 = vld [vmem:[#allocation4 + $0xa0] sm:$0xff]
    %v573 = vld [vmem:[#allocation4 + $0xa8] sm:$0xff]
    %v574 = vld [vmem:[#allocation4 + $0xb0] sm:$0xff]
    %v575 = vld [vmem:[#allocation4 + $0xb8] sm:$0xff]
    %v576 = vld [vmem:[#allocation4 + $0xc0] sm:$0xff]
    %v577 = vld [vmem:[#allocation4 + $0xc8] sm:$0xff]
    %v578 = vld [vmem:[#allocation4 + $0xd0] sm:$0xff]
    %v579 = vld [vmem:[#allocation4 + $0xd8] sm:$0xff]
    %v580 = vld [vmem:[#allocation4 + $0xe0] sm:$0xff]
    %v581 = vld [vmem:[#allocation4 + $0xe8] sm:$0xff]
    %v582 = vld [vmem:[#allocation4 + $0xf0] sm:$0xff]
    %v583 = vld [vmem:[#allocation4 + $0xf8] sm:$0xff]
    %v584 = vld [vmem:[#allocation4 + $0x100] sm:$0xff]
    %v585 = vld [vmem:[#allocation4 + $0x108] sm:$0xff]
    %v586 = vld [vmem:[#allocation4 + $0x110] sm:$0xff]
    %v587 = vld [vmem:[#allocation4 + $0x118] sm:$0xff]
    %v588 = vpack.c.bf16 %v558, %v556
    %v589 = vpack.c.bf16 %v559, %v557
    %v590 = vpack.c.bf16 %v562, %v560
    %v591 = vpack.c.bf16 %v563, %v561
    %v592 = vpack.c.bf16 %v566, %v564
    %v593 = vpack.c.bf16 %v567, %v565
    %v594 = vpack.c.bf16 %v570, %v568
    %v595 = vpack.c.bf16 %v571, %v569
    %v596 = vpack.c.bf16 %v574, %v572
    %v597 = vpack.c.bf16 %v575, %v573
    %v598 = vpack.c.bf16 %v578, %v576
    %v599 = vpack.c.bf16 %v579, %v577
    %v600 = vpack.c.bf16 %v582, %v580
    %v601 = vpack.c.bf16 %v583, %v581
    %v602 = vpack.c.bf16 %v586, %v584
    %v603 = vpack.c.bf16 %v587, %v585
    %v604 = vld [vmem:[#allocation6] sm:$0xff]
    %v605 = vld [vmem:[#allocation6 + $0x8] sm:$0xff]
    %v606 = vld [vmem:[#allocation6 + $0x10] sm:$0xff]
    %v607 = vld [vmem:[#allocation6 + $0x18] sm:$0xff]
    %v608 = vld [vmem:[#allocation6 + $0x20] sm:$0xff]
    %v609 = vld [vmem:[#allocation6 + $0x28] sm:$0xff]
    %v610 = vld [vmem:[#allocation6 + $0x30] sm:$0xff]
    %v611 = vld [vmem:[#allocation6 + $0x38] sm:$0xff]
    %v612 = vld [vmem:[#allocation6 + $0x40] sm:$0xff]
    %v613 = vld [vmem:[#allocation6 + $0x48] sm:$0xff]
    %v614 = vld [vmem:[#allocation6 + $0x50] sm:$0xff]
    %v615 = vld [vmem:[#allocation6 + $0x58] sm:$0xff]
    %v616 = vld [vmem:[#allocation6 + $0x60] sm:$0xff]
    %v617 = vld [vmem:[#allocation6 + $0x68] sm:$0xff]
    %v618 = vld [vmem:[#allocation6 + $0x70] sm:$0xff]
    %v619 = vld [vmem:[#allocation6 + $0x78] sm:$0xff]
    %v620 = vld [vmem:[#allocation6 + $0x80] sm:$0xff]
    %v621 = vld [vmem:[#allocation6 + $0x88] sm:$0xff]
    %v622 = vld [vmem:[#allocation6 + $0x90] sm:$0xff]
    %v623 = vld [vmem:[#allocation6 + $0x98] sm:$0xff]
    %v624 = vld [vmem:[#allocation6 + $0xa0] sm:$0xff]
    %v625 = vld [vmem:[#allocation6 + $0xa8] sm:$0xff]
    %v626 = vld [vmem:[#allocation6 + $0xb0] sm:$0xff]
    %v627 = vld [vmem:[#allocation6 + $0xb8] sm:$0xff]
    %v628 = vld [vmem:[#allocation6 + $0xc0] sm:$0xff]
    %v629 = vld [vmem:[#allocation6 + $0xc8] sm:$0xff]
    %v630 = vld [vmem:[#allocation6 + $0xd0] sm:$0xff]
    %v631 = vld [vmem:[#allocation6 + $0xd8] sm:$0xff]
    %v632 = vld [vmem:[#allocation6 + $0xe0] sm:$0xff]
    %v633 = vld [vmem:[#allocation6 + $0xe8] sm:$0xff]
    %v634 = vld [vmem:[#allocation6 + $0xf0] sm:$0xff]
    %v635 = vld [vmem:[#allocation6 + $0xf8] sm:$0xff]
    %v636 = vld [vmem:[%s1] sm:$0xff]
    %v637 = vld [vmem:[%s1 + $0x8] sm:$0xff]
    %v638 = vld [vmem:[%s1 + $0x10] sm:$0xff]
    %v639 = vld [vmem:[%s1 + $0x18] sm:$0xff]
    %v640 = vld [vmem:[%s1 + $0x20] sm:$0xff]
    %v641 = vld [vmem:[%s1 + $0x28] sm:$0xff]
    %v642 = vld [vmem:[%s1 + $0x30] sm:$0xff]
    %v643 = vld [vmem:[%s1 + $0x38] sm:$0xff]
    %v644 = vld [vmem:[%s1 + $0x40] sm:$0xff]
    %v645 = vld [vmem:[%s1 + $0x48] sm:$0xff]
    %v646 = vld [vmem:[%s1 + $0x50] sm:$0xff]
    %v647 = vld [vmem:[%s1 + $0x58] sm:$0xff]
    %v648 = vld [vmem:[%s1 + $0x60] sm:$0xff]
    %v649 = vld [vmem:[%s1 + $0x68] sm:$0xff]
    %v650 = vld [vmem:[%s1 + $0x70] sm:$0xff]
    %v651 = vld [vmem:[%s1 + $0x78] sm:$0xff]
    %v652 = vld [vmem:[%s1 + $0x80] sm:$0xff]
    %v653 = vld [vmem:[%s1 + $0x88] sm:$0xff]
    %v654 = vld [vmem:[%s1 + $0x90] sm:$0xff]
    %v655 = vld [vmem:[%s1 + $0x98] sm:$0xff]
    %v656 = vld [vmem:[%s1 + $0xa0] sm:$0xff]
    %v657 = vld [vmem:[%s1 + $0xa8] sm:$0xff]
    %v658 = vld [vmem:[%s1 + $0xb0] sm:$0xff]
    %v659 = vld [vmem:[%s1 + $0xb8] sm:$0xff]
    %v660 = vld [vmem:[%s1 + $0xc0] sm:$0xff]
    %v661 = vld [vmem:[%s1 + $0xc8] sm:$0xff]
    %v662 = vld [vmem:[%s1 + $0xd0] sm:$0xff]
    %v663 = vld [vmem:[%s1 + $0xd8] sm:$0xff]
    %v664 = vld [vmem:[%s1 + $0xe0] sm:$0xff]
    %v665 = vld [vmem:[%s1 + $0xe8] sm:$0xff]
    %v666 = vld [vmem:[%s1 + $0xf0] sm:$0xff]
    %v667 = vld [vmem:[%s1 + $0xf8] sm:$0xff]
    %v700 = vunpack.c.l.b16 %v636
    %v701 = vunpack.c.h.b16 %v636
    %v702 = vunpack.c.l.b16 %v637
    %v703 = vunpack.c.h.b16 %v637
    %v704 = vunpack.c.l.b16 %v638
    %v705 = vunpack.c.h.b16 %v638
    %v706 = vunpack.c.l.b16 %v639
    %v707 = vunpack.c.h.b16 %v639
    %v708 = vunpack.c.l.b16 %v640
    %v709 = vunpack.c.h.b16 %v640
    %v710 = vunpack.c.l.b16 %v641
    %v711 = vunpack.c.h.b16 %v641
    %v712 = vunpack.c.l.b16 %v642
    %v713 = vunpack.c.h.b16 %v642
    %v714 = vunpack.c.l.b16 %v643
    %v715 = vunpack.c.h.b16 %v643
    %v716 = vunpack.c.l.b16 %v644
    %v717 = vunpack.c.h.b16 %v644
    %v718 = vunpack.c.l.b16 %v645
    %v719 = vunpack.c.h.b16 %v645
    %v720 = vunpack.c.l.b16 %v646
    %v721 = vunpack.c.h.b16 %v646
    %v722 = vunpack.c.l.b16 %v647
    %v723 = vunpack.c.h.b16 %v647
    %v724 = vunpack.c.l.b16 %v648
    %v725 = vunpack.c.h.b16 %v648
    %v726 = vunpack.c.l.b16 %v649
    %v727 = vunpack.c.h.b16 %v649
    %v728 = vunpack.c.l.b16 %v650
    %v729 = vunpack.c.h.b16 %v650
    %v730 = vunpack.c.l.b16 %v651
    %v731 = vunpack.c.h.b16 %v651
    %v732 = vunpack.c.l.b16 %v652
    %v733 = vunpack.c.h.b16 %v652
    %v734 = vunpack.c.l.b16 %v653
    %v735 = vunpack.c.h.b16 %v653
    %v736 = vunpack.c.l.b16 %v654
    %v737 = vunpack.c.h.b16 %v654
    %v738 = vunpack.c.l.b16 %v655
    %v739 = vunpack.c.h.b16 %v655
    %v740 = vunpack.c.l.b16 %v656
    %v741 = vunpack.c.h.b16 %v656
    %v742 = vunpack.c.l.b16 %v657
    %v743 = vunpack.c.h.b16 %v657
    %v744 = vunpack.c.l.b16 %v658
    %v745 = vunpack.c.h.b16 %v658
    %v746 = vunpack.c.l.b16 %v659
    %v747 = vunpack.c.h.b16 %v659
    %v748 = vunpack.c.l.b16 %v660
    %v749 = vunpack.c.h.b16 %v660
    %v750 = vunpack.c.l.b16 %v661
    %v751 = vunpack.c.h.b16 %v661
    %v752 = vunpack.c.l.b16 %v662
    %v753 = vunpack.c.h.b16 %v662
    %v754 = vunpack.c.l.b16 %v663
    %v755 = vunpack.c.h.b16 %v663
    %v756 = vunpack.c.l.b16 %v664
    %v757 = vunpack.c.h.b16 %v664
    %v758 = vunpack.c.l.b16 %v665
    %v759 = vunpack.c.h.b16 %v665
    %v760 = vunpack.c.l.b16 %v666
    %v761 = vunpack.c.h.b16 %v666
    %v762 = vunpack.c.l.b16 %v667
    %v763 = vunpack.c.h.b16 %v667
    %v764 = vpack.c.b16 %v702, %v700
    %v765 = vpack.c.b16 %v703, %v701
    %v766 = vpack.c.b16 %v706, %v704
    %v767 = vpack.c.b16 %v707, %v705
    %v768 = vpack.c.b16 %v710, %v708
    %v769 = vpack.c.b16 %v711, %v709
    %v770 = vpack.c.b16 %v714, %v712
    %v771 = vpack.c.b16 %v715, %v713
    %v772 = vpack.c.b16 %v718, %v716
    %v773 = vpack.c.b16 %v719, %v717
    %v774 = vpack.c.b16 %v722, %v720
    %v775 = vpack.c.b16 %v723, %v721
    %v776 = vpack.c.b16 %v726, %v724
    %v777 = vpack.c.b16 %v727, %v725
    %v778 = vpack.c.b16 %v730, %v728
    %v779 = vpack.c.b16 %v731, %v729
    %v780 = vpack.c.b16 %v734, %v732
    %v781 = vpack.c.b16 %v735, %v733
    %v782 = vpack.c.b16 %v738, %v736
    %v783 = vpack.c.b16 %v739, %v737
    %v784 = vpack.c.b16 %v742, %v740
    %v785 = vpack.c.b16 %v743, %v741
    %v786 = vpack.c.b16 %v746, %v744
    %v787 = vpack.c.b16 %v747, %v745
    %v788 = vpack.c.b16 %v750, %v748
    %v789 = vpack.c.b16 %v751, %v749
    %v790 = vpack.c.b16 %v754, %v752
    %v791 = vpack.c.b16 %v755, %v753
    %v792 = vpack.c.b16 %v758, %v756
    %v793 = vpack.c.b16 %v759, %v757
    %v794 = vpack.c.b16 %v762, %v760
    %v795 = vpack.c.b16 %v763, %v761
    %828 = vmatprep.subr.bf16.mxu0 %v765
    %829 = vmatpush1.bf16.msra.mxu0 %v764
    %830 = vmatprep.subr.bf16.mxu0 %v767
    %831 = vmatpush1.bf16.msra.mxu0 %v766
    %832 = vmatprep.subr.bf16.mxu0 %v769
    %833 = vmatpush1.bf16.msra.mxu0 %v768
    %834 = vmatprep.subr.bf16.mxu0 %v771
    %835 = vmatpush1.bf16.msra.mxu0 %v770
    %836 = vmatprep.subr.bf16.mxu0 %v773
    %837 = vmatpush1.bf16.msra.mxu0 %v772
    %838 = vmatprep.subr.bf16.mxu0 %v775
    %839 = vmatpush1.bf16.msra.mxu0 %v774
    %840 = vmatprep.subr.bf16.mxu0 %v777
    %841 = vmatpush1.bf16.msra.mxu0 %v776
    %842 = vmatprep.subr.bf16.mxu0 %v779
    %843 = vmatpush1.bf16.msra.mxu0 %v778
    %844 = vmatprep.subr.bf16.mxu0 %v781
    %845 = vmatpush1.bf16.msra.mxu0 %v780
    %846 = vmatprep.subr.bf16.mxu0 %v783
    %847 = vmatpush1.bf16.msra.mxu0 %v782
    %848 = vmatprep.subr.bf16.mxu0 %v785
    %849 = vmatpush1.bf16.msra.mxu0 %v784
    %850 = vmatprep.subr.bf16.mxu0 %v787
    %851 = vmatpush1.bf16.msra.mxu0 %v786
    %852 = vmatprep.subr.bf16.mxu0 %v789
    %853 = vmatpush1.bf16.msra.mxu0 %v788
    %854 = vmatprep.subr.bf16.mxu0 %v791
    %855 = vmatpush1.bf16.msra.mxu0 %v790
    %856 = vmatprep.subr.bf16.mxu0 %v793
    %857 = vmatpush1.bf16.msra.mxu0 %v792
    %858 = vmatprep.subr.bf16.mxu0 %v795
    %859 = vmatpush1.bf16.msra.mxu0 %v794
    %860 = vmatprep.mubr.bf16.mxu0 %v589
    %861 = vmatmul.mubr.bf16.gmra.mrb[0].mxu0 %v588
    %v862 = vpop.f32.mrb[0].mxu0
    %v863 = vadd.f32 0.0, %v862
    %v864 = vpop.f32.mrb[0].mxu0
    %v865 = vadd.f32 0.0, %v864
    %v866 = vpop.f32.mrb[0].mxu0
    %v867 = vadd.f32 0.0, %v866
    %v868 = vpop.f32.mrb[0].mxu0
    %v869 = vadd.f32 0.0, %v868
    %870 = vmatprep.mubr.bf16.mxu0 %v591
    %871 = vmatmul.mubr.bf16.gmra.mrb[0].mxu0 %v590
    %v872 = vpop.f32.mrb[0].mxu0
    %v873 = vadd.f32 0.0, %v872
    %v874 = vpop.f32.mrb[0].mxu0
    %v875 = vadd.f32 0.0, %v874
    %v876 = vpop.f32.mrb[0].mxu0
    %v877 = vadd.f32 0.0, %v876
    %v878 = vpop.f32.mrb[0].mxu0
    %v879 = vadd.f32 0.0, %v878
    %880 = vmatprep.mubr.bf16.mxu0 %v593
    %881 = vmatmul.mubr.bf16.gmra.mrb[0].mxu0 %v592
    %v882 = vpop.f32.mrb[0].mxu0
    %v883 = vadd.f32 0.0, %v882
    %v884 = vpop.f32.mrb[0].mxu0
    %v885 = vadd.f32 0.0, %v884
    %v886 = vpop.f32.mrb[0].mxu0
    %v887 = vadd.f32 0.0, %v886
    %v888 = vpop.f32.mrb[0].mxu0
    %v889 = vadd.f32 0.0, %v888
    %890 = vmatprep.mubr.bf16.mxu0 %v595
    %891 = vmatmul.mubr.bf16.gmra.mrb[0].mxu0 %v594
    %v892 = vpop.f32.mrb[0].mxu0
    %v893 = vadd.f32 0.0, %v892
    %v894 = vpop.f32.mrb[0].mxu0
    %v895 = vadd.f32 0.0, %v894
    %v896 = vpop.f32.mrb[0].mxu0
    %v897 = vadd.f32 0.0, %v896
    %v898 = vpop.f32.mrb[0].mxu0
    %v899 = vadd.f32 0.0, %v898
    %900 = vmatprep.mubr.bf16.mxu0 %v597
    %901 = vmatmul.mubr.bf16.gmra.mrb[0].mxu0 %v596
    %v902 = vpop.f32.mrb[0].mxu0
    %v903 = vadd.f32 0.0, %v902
    %v904 = vpop.f32.mrb[0].mxu0
    %v905 = vadd.f32 0.0, %v904
    %v906 = vpop.f32.mrb[0].mxu0
    %v907 = vadd.f32 0.0, %v906
    %v908 = vpop.f32.mrb[0].mxu0
    %v909 = vadd.f32 0.0, %v908
    %910 = vmatprep.mubr.bf16.mxu0 %v599
    %911 = vmatmul.mubr.bf16.gmra.mrb[0].mxu0 %v598
    %v912 = vpop.f32.mrb[0].mxu0
    %v913 = vadd.f32 0.0, %v912
    %v914 = vpop.f32.mrb[0].mxu0
    %v915 = vadd.f32 0.0, %v914
    %v916 = vpop.f32.mrb[0].mxu0
    %v917 = vadd.f32 0.0, %v916
    %v918 = vpop.f32.mrb[0].mxu0
    %v919 = vadd.f32 0.0, %v918
    %920 = vmatprep.mubr.bf16.mxu0 %v601
    %921 = vmatmul.mubr.bf16.gmra.mrb[0].mxu0 %v600
    %v922 = vpop.f32.mrb[0].mxu0
    %v923 = vadd.f32 0.0, %v922
    %v924 = vpop.f32.mrb[0].mxu0
    %v925 = vadd.f32 0.0, %v924
    %v926 = vpop.f32.mrb[0].mxu0
    %v927 = vadd.f32 0.0, %v926
    %v928 = vpop.f32.mrb[0].mxu0
    %v929 = vadd.f32 0.0, %v928
    %930 = vmatprep.mubr.bf16.mxu0 %v603
    %931 = vmatmul.mubr.bf16.gmra.mrb[0].mxu0 %v602
    %v932 = vpop.f32.mrb[0].mxu0
    %v933 = vadd.f32 0.0, %v932
    %v934 = vpop.f32.mrb[0].mxu0
    %v935 = vadd.f32 0.0, %v934
    %v936 = vpop.f32.mrb[0].mxu0
    %v937 = vadd.f32 0.0, %v936
    %v938 = vpop.f32.mrb[0].mxu0
    %v939 = vadd.f32 0.0, %v938
    %940 = vdwg.mxu0
    %v941 = vadd.f32 %v604, %v863
    %v942 = vadd.f32 %v605, %v865
    %v943 = vadd.f32 %v606, %v867
    %v944 = vadd.f32 %v607, %v869
    %v945 = vadd.f32 %v608, %v873
    %v946 = vadd.f32 %v609, %v875
    %v947 = vadd.f32 %v610, %v877
    %v948 = vadd.f32 %v611, %v879
    %v949 = vadd.f32 %v612, %v883
    %v950 = vadd.f32 %v613, %v885
    %v951 = vadd.f32 %v614, %v887
    %v952 = vadd.f32 %v615, %v889
    %v953 = vadd.f32 %v616, %v893
    %v954 = vadd.f32 %v617, %v895
    %v955 = vadd.f32 %v618, %v897
    %v956 = vadd.f32 %v619, %v899
    %v957 = vadd.f32 %v620, %v903
    %v958 = vadd.f32 %v621, %v905
    %v959 = vadd.f32 %v622, %v907
    %v960 = vadd.f32 %v623, %v909
    %v961 = vadd.f32 %v624, %v913
    %v962 = vadd.f32 %v625, %v915
    %v963 = vadd.f32 %v626, %v917
    %v964 = vadd.f32 %v627, %v919
    %v965 = vadd.f32 %v628, %v923
    %v966 = vadd.f32 %v629, %v925
    %v967 = vadd.f32 %v630, %v927
    %v968 = vadd.f32 %v631, %v929
    %v969 = vadd.f32 %v632, %v933
    %v970 = vadd.f32 %v633, %v935
    %v971 = vadd.f32 %v634, %v937
    %v972 = vadd.f32 %v635, %v939
    %973 = vst [vmem:[#allocation6] sm:$0xff] %v941
    %974 = vst [vmem:[#allocation6 + $0x8] sm:$0xff] %v942
    %975 = vst [vmem:[#allocation6 + $0x10] sm:$0xff] %v943
    %976 = vst [vmem:[#allocation6 + $0x18] sm:$0xff] %v944
    %977 = vst [vmem:[#allocation6 + $0x20] sm:$0xff] %v945
    %978 = vst [vmem:[#allocation6 + $0x28] sm:$0xff] %v946
    %979 = vst [vmem:[#allocation6 + $0x30] sm:$0xff] %v947
    %980 = vst [vmem:[#allocation6 + $0x38] sm:$0xff] %v948
    %981 = vst [vmem:[#allocation6 + $0x40] sm:$0xff] %v949
    %982 = vst [vmem:[#allocation6 + $0x48] sm:$0xff] %v950
    %983 = vst [vmem:[#allocation6 + $0x50] sm:$0xff] %v951
    %984 = vst [vmem:[#allocation6 + $0x58] sm:$0xff] %v952
    %985 = vst [vmem:[#allocation6 + $0x60] sm:$0xff] %v953
    %986 = vst [vmem:[#allocation6 + $0x68] sm:$0xff] %v954
    %987 = vst [vmem:[#allocation6 + $0x70] sm:$0xff] %v955
    %988 = vst [vmem:[#allocation6 + $0x78] sm:$0xff] %v956
    %989 = vst [vmem:[#allocation6 + $0x80] sm:$0xff] %v957
    %990 = vst [vmem:[#allocation6 + $0x88] sm:$0xff] %v958
    %991 = vst [vmem:[#allocation6 + $0x90] sm:$0xff] %v959
    %992 = vst [vmem:[#allocation6 + $0x98] sm:$0xff] %v960
    %993 = vst [vmem:[#allocation6 + $0xa0] sm:$0xff] %v961
    %994 = vst [vmem:[#allocation6 + $0xa8] sm:$0xff] %v962
    %995 = vst [vmem:[#allocation6 + $0xb0] sm:$0xff] %v963
    %996 = vst [vmem:[#allocation6 + $0xb8] sm:$0xff] %v964
    %997 = vst [vmem:[#allocation6 + $0xc0] sm:$0xff] %v965
    %998 = vst [vmem:[#allocation6 + $0xc8] sm:$0xff] %v966
    %999 = vst [vmem:[#allocation6 + $0xd0] sm:$0xff] %v967
    %1000 = vst [vmem:[#allocation6 + $0xd8] sm:$0xff] %v968
    %1001 = vst [vmem:[#allocation6 + $0xe0] sm:$0xff] %v969
    %1002 = vst [vmem:[#allocation6 + $0xe8] sm:$0xff] %v970
    %1003 = vst [vmem:[#allocation6 + $0xf0] sm:$0xff] %v971
    %1004 = vst [vmem:[#allocation6 + $0xf8] sm:$0xff] %v972
    %s1005 = scalar_lea.vmem [#allocation4], 16
    %v1006 = vld [vmem:[%s1005] sm:$0xff]
    %v1007 = vld [vmem:[%s1005 + $0x8] sm:$0xff]
    %v1008 = vld [vmem:[%s1005 + $0x10] sm:$0xff]
    %v1009 = vld [vmem:[%s1005 + $0x18] sm:$0xff]
    %v1010 = vld [vmem:[%s1005 + $0x20] sm:$0xff]
    %v1011 = vld [vmem:[%s1005 + $0x28] sm:$0xff]
    %v1012 = vld [vmem:[%s1005 + $0x30] sm:$0xff]
    %v1013 = vld [vmem:[%s1005 + $0x38] sm:$0xff]
    %v1014 = vld [vmem:[%s1005 + $0x40] sm:$0xff]
    %v1015 = vld [vmem:[%s1005 + $0x48] sm:$0xff]
    %v1016 = vld [vmem:[%s1005 + $0x50] sm:$0xff]
    %v1017 = vld [vmem:[%s1005 + $0x58] sm:$0xff]
    %v1018 = vld [vmem:[%s1005 + $0x60] sm:$0xff]
    %v1019 = vld [vmem:[%s1005 + $0x68] sm:$0xff]
    %v1020 = vld [vmem:[%s1005 + $0x70] sm:$0xff]
    %v1021 = vld [vmem:[%s1005 + $0x78] sm:$0xff]
    %v1022 = vld [vmem:[%s1005 + $0xa0] sm:$0xff]
    %v1023 = vld [vmem:[%s1005 + $0xa8] sm:$0xff]
    %v1024 = vld [vmem:[%s1005 + $0xb0] sm:$0xff]
    %v1025 = vld [vmem:[%s1005 + $0xb8] sm:$0xff]
    %v1026 = vld [vmem:[%s1005 + $0xc0] sm:$0xff]
    %v1027 = vld [vmem:[%s1005 + $0xc8] sm:$0xff]
    %v1028 = vld [vmem:[%s1005 + $0xd0] sm:$0xff]
    %v1029 = vld [vmem:[%s1005 + $0xd8] sm:$0xff]
    %v1030 = vld [vmem:[%s1005 + $0xe0] sm:$0xff]
    %v1031 = vld [vmem:[%s1005 + $0xe8] sm:$0xff]
    %v1032 = vld [vmem:[%s1005 + $0xf0] sm:$0xff]
    %v1033 = vld [vmem:[%s1005 + $0xf8] sm:$0xff]
    %v1034 = vld [vmem:[%s1005 + $0x100] sm:$0xff]
    %v1035 = vld [vmem:[%s1005 + $0x108] sm:$0xff]
    %v1036 = vld [vmem:[%s1005 + $0x110] sm:$0xff]
    %v1037 = vld [vmem:[%s1005 + $0x118] sm:$0xff]
    %v1038 = vpack.c.bf16 %v1008, %v1006
    %v1039 = vpack.c.bf16 %v1009, %v1007
    %v1040 = vpack.c.bf16 %v1012, %v1010
    %v1041 = vpack.c.bf16 %v1013, %v1011
    %v1042 = vpack.c.bf16 %v1016, %v1014
    %v1043 = vpack.c.bf16 %v1017, %v1015
    %v1044 = vpack.c.bf16 %v1020, %v1018
    %v1045 = vpack.c.bf16 %v1021, %v1019
    %v1046 = vpack.c.bf16 %v1024, %v1022
    %v1047 = vpack.c.bf16 %v1025, %v1023
    %v1048 = vpack.c.bf16 %v1028, %v1026
    %v1049 = vpack.c.bf16 %v1029, %v1027
    %v1050 = vpack.c.bf16 %v1032, %v1030
    %v1051 = vpack.c.bf16 %v1033, %v1031
    %v1052 = vpack.c.bf16 %v1036, %v1034
    %v1053 = vpack.c.bf16 %v1037, %v1035
    %v1054 = vld [vmem:[#allocation6] sm:$0xff]
    %v1055 = vld [vmem:[#allocation6 + $0x8] sm:$0xff]
    %v1056 = vld [vmem:[#allocation6 + $0x10] sm:$0xff]
    %v1057 = vld [vmem:[#allocation6 + $0x18] sm:$0xff]
    %v1058 = vld [vmem:[#allocation6 + $0x20] sm:$0xff]
    %v1059 = vld [vmem:[#allocation6 + $0x28] sm:$0xff]
    %v1060 = vld [vmem:[#allocation6 + $0x30] sm:$0xff]
    %v1061 = vld [vmem:[#allocation6 + $0x38] sm:$0xff]
    %v1062 = vld [vmem:[#allocation6 + $0x40] sm:$0xff]
    %v1063 = vld [vmem:[#allocation6 + $0x48] sm:$0xff]
    %v1064 = vld [vmem:[#allocation6 + $0x50] sm:$0xff]
    %v1065 = vld [vmem:[#allocation6 + $0x58] sm:$0xff]
    %v1066 = vld [vmem:[#allocation6 + $0x60] sm:$0xff]
    %v1067 = vld [vmem:[#allocation6 + $0x68] sm:$0xff]
    %v1068 = vld [vmem:[#allocation6 + $0x70] sm:$0xff]
    %v1069 = vld [vmem:[#allocation6 + $0x78] sm:$0xff]
    %v1070 = vld [vmem:[#allocation6 + $0x80] sm:$0xff]
    %v1071 = vld [vmem:[#allocation6 + $0x88] sm:$0xff]
    %v1072 = vld [vmem:[#allocation6 + $0x90] sm:$0xff]
    %v1073 = vld [vmem:[#allocation6 + $0x98] sm:$0xff]
    %v1074 = vld [vmem:[#allocation6 + $0xa0] sm:$0xff]
    %v1075 = vld [vmem:[#allocation6 + $0xa8] sm:$0xff]
    %v1076 = vld [vmem:[#allocation6 + $0xb0] sm:$0xff]
    %v1077 = vld [vmem:[#allocation6 + $0xb8] sm:$0xff]
    %v1078 = vld [vmem:[#allocation6 + $0xc0] sm:$0xff]
    %v1079 = vld [vmem:[#allocation6 + $0xc8] sm:$0xff]
    %v1080 = vld [vmem:[#allocation6 + $0xd0] sm:$0xff]
    %v1081 = vld [vmem:[#allocation6 + $0xd8] sm:$0xff]
    %v1082 = vld [vmem:[#allocation6 + $0xe0] sm:$0xff]
    %v1083 = vld [vmem:[#allocation6 + $0xe8] sm:$0xff]
    %v1084 = vld [vmem:[#allocation6 + $0xf0] sm:$0xff]
    %v1085 = vld [vmem:[#allocation6 + $0xf8] sm:$0xff]
    %s1086 = scalar_lea.vmem %s1, 768
    %v1087 = vld [vmem:[%s1086] sm:$0xff]
    %v1088 = vld [vmem:[%s1086 + $0x8] sm:$0xff]
    %v1089 = vld [vmem:[%s1086 + $0x10] sm:$0xff]
    %v1090 = vld [vmem:[%s1086 + $0x18] sm:$0xff]
    %v1091 = vld [vmem:[%s1086 + $0x20] sm:$0xff]
    %v1092 = vld [vmem:[%s1086 + $0x28] sm:$0xff]
    %v1093 = vld [vmem:[%s1086 + $0x30] sm:$0xff]
    %v1094 = vld [vmem:[%s1086 + $0x38] sm:$0xff]
    %v1095 = vld [vmem:[%s1086 + $0x40] sm:$0xff]
    %v1096 = vld [vmem:[%s1086 + $0x48] sm:$0xff]
    %v1097 = vld [vmem:[%s1086 + $0x50] sm:$0xff]
    %v1098 = vld [vmem:[%s1086 + $0x58] sm:$0xff]
    %v1099 = vld [vmem:[%s1086 + $0x60] sm:$0xff]
    %v1100 = vld [vmem:[%s1086 + $0x68] sm:$0xff]
    %v1101 = vld [vmem:[%s1086 + $0x70] sm:$0xff]
    %v1102 = vld [vmem:[%s1086 + $0x78] sm:$0xff]
    %v1103 = vld [vmem:[%s1086 + $0x80] sm:$0xff]
    %v1104 = vld [vmem:[%s1086 + $0x88] sm:$0xff]
    %v1105 = vld [vmem:[%s1086 + $0x90] sm:$0xff]
    %v1106 = vld [vmem:[%s1086 + $0x98] sm:$0xff]
    %v1107 = vld [vmem:[%s1086 + $0xa0] sm:$0xff]
    %v1108 = vld [vmem:[%s1086 + $0xa8] sm:$0xff]
    %v1109 = vld [vmem:[%s1086 + $0xb0] sm:$0xff]
    %v1110 = vld [vmem:[%s1086 + $0xb8] sm:$0xff]
    %v1111 = vld [vmem:[%s1086 + $0xc0] sm:$0xff]
    %v1112 = vld [vmem:[%s1086 + $0xc8] sm:$0xff]
    %v1113 = vld [vmem:[%s1086 + $0xd0] sm:$0xff]
    %v1114 = vld [vmem:[%s1086 + $0xd8] sm:$0xff]
    %v1115 = vld [vmem:[%s1086 + $0xe0] sm:$0xff]
    %v1116 = vld [vmem:[%s1086 + $0xe8] sm:$0xff]
    %v1117 = vld [vmem:[%s1086 + $0xf0] sm:$0xff]
    %v1118 = vld [vmem:[%s1086 + $0xf8] sm:$0xff]
    %v1151 = vunpack.c.l.b16 %v1087
    %v1152 = vunpack.c.h.b16 %v1087
    %v1153 = vunpack.c.l.b16 %v1088
    %v1154 = vunpack.c.h.b16 %v1088
    %v1155 = vunpack.c.l.b16 %v1089
    %v1156 = vunpack.c.h.b16 %v1089
    %v1157 = vunpack.c.l.b16 %v1090
    %v1158 = vunpack.c.h.b16 %v1090
    %v1159 = vunpack.c.l.b16 %v1091
    %v1160 = vunpack.c.h.b16 %v1091
    %v1161 = vunpack.c.l.b16 %v1092
    %v1162 = vunpack.c.h.b16 %v1092
    %v1163 = vunpack.c.l.b16 %v1093
    %v1164 = vunpack.c.h.b16 %v1093
    %v1165 = vunpack.c.l.b16 %v1094
    %v1166 = vunpack.c.h.b16 %v1094
    %v1167 = vunpack.c.l.b16 %v1095
    %v1168 = vunpack.c.h.b16 %v1095
    %v1169 = vunpack.c.l.b16 %v1096
    %v1170 = vunpack.c.h.b16 %v1096
    %v1171 = vunpack.c.l.b16 %v1097
    %v1172 = vunpack.c.h.b16 %v1097
    %v1173 = vunpack.c.l.b16 %v1098
    %v1174 = vunpack.c.h.b16 %v1098
    %v1175 = vunpack.c.l.b16 %v1099
    %v1176 = vunpack.c.h.b16 %v1099
    %v1177 = vunpack.c.l.b16 %v1100
    %v1178 = vunpack.c.h.b16 %v1100
    %v1179 = vunpack.c.l.b16 %v1101
    %v1180 = vunpack.c.h.b16 %v1101
    %v1181 = vunpack.c.l.b16 %v1102
    %v1182 = vunpack.c.h.b16 %v1102
    %v1183 = vunpack.c.l.b16 %v1103
    %v1184 = vunpack.c.h.b16 %v1103
    %v1185 = vunpack.c.l.b16 %v1104
    %v1186 = vunpack.c.h.b16 %v1104
    %v1187 = vunpack.c.l.b16 %v1105
    %v1188 = vunpack.c.h.b16 %v1105
    %v1189 = vunpack.c.l.b16 %v1106
    %v1190 = vunpack.c.h.b16 %v1106
    %v1191 = vunpack.c.l.b16 %v1107
    %v1192 = vunpack.c.h.b16 %v1107
    %v1193 = vunpack.c.l.b16 %v1108
    %v1194 = vunpack.c.h.b16 %v1108
    %v1195 = vunpack.c.l.b16 %v1109
    %v1196 = vunpack.c.h.b16 %v1109
    %v1197 = vunpack.c.l.b16 %v1110
    %v1198 = vunpack.c.h.b16 %v1110
    %v1199 = vunpack.c.l.b16 %v1111
    %v1200 = vunpack.c.h.b16 %v1111
    %v1201 = vunpack.c.l.b16 %v1112
    %v1202 = vunpack.c.h.b16 %v1112
    %v1203 = vunpack.c.l.b16 %v1113
    %v1204 = vunpack.c.h.b16 %v1113
    %v1205 = vunpack.c.l.b16 %v1114
    %v1206 = vunpack.c.h.b16 %v1114
    %v1207 = vunpack.c.l.b16 %v1115
    %v1208 = vunpack.c.h.b16 %v1115
    %v1209 = vunpack.c.l.b16 %v1116
    %v1210 = vunpack.c.h.b16 %v1116
    %v1211 = vunpack.c.l.b16 %v1117
    %v1212 = vunpack.c.h.b16 %v1117
    %v1213 = vunpack.c.l.b16 %v1118
    %v1214 = vunpack.c.h.b16 %v1118
    %v1215 = vpack.c.b16 %v1153, %v1151
    %v1216 = vpack.c.b16 %v1154, %v1152
    %v1217 = vpack.c.b16 %v1157, %v1155
    %v1218 = vpack.c.b16 %v1158, %v1156
    %v1219 = vpack.c.b16 %v1161, %v1159
    %v1220 = vpack.c.b16 %v1162, %v1160
    %v1221 = vpack.c.b16 %v1165, %v1163
    %v1222 = vpack.c.b16 %v1166, %v1164
    %v1223 = vpack.c.b16 %v1169, %v1167
    %v1224 = vpack.c.b16 %v1170, %v1168
    %v1225 = vpack.c.b16 %v1173, %v1171
    %v1226 = vpack.c.b16 %v1174, %v1172
    %v1227 = vpack.c.b16 %v1177, %v1175
    %v1228 = vpack.c.b16 %v1178, %v1176
    %v1229 = vpack.c.b16 %v1181, %v1179
    %v1230 = vpack.c.b16 %v1182, %v1180
    %v1231 = vpack.c.b16 %v1185, %v1183
    %v1232 = vpack.c.b16 %v1186, %v1184
    %v1233 = vpack.c.b16 %v1189, %v1187
    %v1234 = vpack.c.b16 %v1190, %v1188
    %v1235 = vpack.c.b16 %v1193, %v1191
    %v1236 = vpack.c.b16 %v1194, %v1192
    %v1237 = vpack.c.b16 %v1197, %v1195
    %v1238 = vpack.c.b16 %v1198, %v1196
    %v1239 = vpack.c.b16 %v1201, %v1199
    %v1240 = vpack.c.b16 %v1202, %v1200
    %v1241 = vpack.c.b16 %v1205, %v1203
    %v1242 = vpack.c.b16 %v1206, %v1204
    %v1243 = vpack.c.b16 %v1209, %v1207
    %v1244 = vpack.c.b16 %v1210, %v1208
    %v1245 = vpack.c.b16 %v1213, %v1211
    %v1246 = vpack.c.b16 %v1214, %v1212
    %1279 = vmatprep.subr.bf16.mxu0 %v1216
    %1280 = vmatpush1.bf16.msra.mxu0 %v1215
    %1281 = vmatprep.subr.bf16.mxu0 %v1218
    %1282 = vmatpush1.bf16.msra.mxu0 %v1217
    %1283 = vmatprep.subr.bf16.mxu0 %v1220
    %1284 = vmatpush1.bf16.msra.mxu0 %v1219
    %1285 = vmatprep.subr.bf16.mxu0 %v1222
    %1286 = vmatpush1.bf16.msra.mxu0 %v1221
    %1287 = vmatprep.subr.bf16.mxu0 %v1224
    %1288 = vmatpush1.bf16.msra.mxu0 %v1223
    %1289 = vmatprep.subr.bf16.mxu0 %v1226
    %1290 = vmatpush1.bf16.msra.mxu0 %v1225
    %1291 = vmatprep.subr.bf16.mxu0 %v1228
    %1292 = vmatpush1.bf16.msra.mxu0 %v1227
    %1293 = vmatprep.subr.bf16.mxu0 %v1230
    %1294 = vmatpush1.bf16.msra.mxu0 %v1229
    %1295 = vmatprep.subr.bf16.mxu0 %v1232
    %1296 = vmatpush1.bf16.msra.mxu0 %v1231
    %1297 = vmatprep.subr.bf16.mxu0 %v1234
    %1298 = vmatpush1.bf16.msra.mxu0 %v1233
    %1299 = vmatprep.subr.bf16.mxu0 %v1236
    %1300 = vmatpush1.bf16.msra.mxu0 %v1235
    %1301 = vmatprep.subr.bf16.mxu0 %v1238
    %1302 = vmatpush1.bf16.msra.mxu0 %v1237
    %1303 = vmatprep.subr.bf16.mxu0 %v1240
    %1304 = vmatpush1.bf16.msra.mxu0 %v1239
    %1305 = vmatprep.subr.bf16.mxu0 %v1242
    %1306 = vmatpush1.bf16.msra.mxu0 %v1241
    %1307 = vmatprep.subr.bf16.mxu0 %v1244
    %1308 = vmatpush1.bf16.msra.mxu0 %v1243
    %1309 = vmatprep.subr.bf16.mxu0 %v1246
    %1310 = vmatpush1.bf16.msra.mxu0 %v1245
    %1311 = vmatprep.mubr.bf16.mxu0 %v1039
    %1312 = vmatmul.mubr.bf16.gmra.mrb[0].mxu0 %v1038
    %v1313 = vpop.f32.mrb[0].mxu0
    %v1314 = vadd.f32 0.0, %v1313
    %v1315 = vpop.f32.mrb[0].mxu0
    %v1316 = vadd.f32 0.0, %v1315
    %v1317 = vpop.f32.mrb[0].mxu0
    %v1318 = vadd.f32 0.0, %v1317
    %v1319 = vpop.f32.mrb[0].mxu0
    %v1320 = vadd.f32 0.0, %v1319
    %1321 = vmatprep.mubr.bf16.mxu0 %v1041
    %1322 = vmatmul.mubr.bf16.gmra.mrb[0].mxu0 %v1040
    %v1323 = vpop.f32.mrb[0].mxu0
    %v1324 = vadd.f32 0.0, %v1323
    %v1325 = vpop.f32.mrb[0].mxu0
    %v1326 = vadd.f32 0.0, %v1325
    %v1327 = vpop.f32.mrb[0].mxu0
    %v1328 = vadd.f32 0.0, %v1327
    %v1329 = vpop.f32.mrb[0].mxu0
    %v1330 = vadd.f32 0.0, %v1329
    %1331 = vmatprep.mubr.bf16.mxu0 %v1043
    %1332 = vmatmul.mubr.bf16.gmra.mrb[0].mxu0 %v1042
    %v1333 = vpop.f32.mrb[0].mxu0
    %v1334 = vadd.f32 0.0, %v1333
    %v1335 = vpop.f32.mrb[0].mxu0
    %v1336 = vadd.f32 0.0, %v1335
    %v1337 = vpop.f32.mrb[0].mxu0
    %v1338 = vadd.f32 0.0, %v1337
    %v1339 = vpop.f32.mrb[0].mxu0
    %v1340 = vadd.f32 0.0, %v1339
    %1341 = vmatprep.mubr.bf16.mxu0 %v1045
    %1342 = vmatmul.mubr.bf16.gmra.mrb[0].mxu0 %v1044
    %v1343 = vpop.f32.mrb[0].mxu0
    %v1344 = vadd.f32 0.0, %v1343
    %v1345 = vpop.f32.mrb[0].mxu0
    %v1346 = vadd.f32 0.0, %v1345
    %v1347 = vpop.f32.mrb[0].mxu0
    %v1348 = vadd.f32 0.0, %v1347
    %v1349 = vpop.f32.mrb[0].mxu0
    %v1350 = vadd.f32 0.0, %v1349
    %1351 = vmatprep.mubr.bf16.mxu0 %v1047
    %1352 = vmatmul.mubr.bf16.gmra.mrb[0].mxu0 %v1046
    %v1353 = vpop.f32.mrb[0].mxu0
    %v1354 = vadd.f32 0.0, %v1353
    %v1355 = vpop.f32.mrb[0].mxu0
    %v1356 = vadd.f32 0.0, %v1355
    %v1357 = vpop.f32.mrb[0].mxu0
    %v1358 = vadd.f32 0.0, %v1357
    %v1359 = vpop.f32.mrb[0].mxu0
    %v1360 = vadd.f32 0.0, %v1359
    %1361 = vmatprep.mubr.bf16.mxu0 %v1049
    %1362 = vmatmul.mubr.bf16.gmra.mrb[0].mxu0 %v1048
    %v1363 = vpop.f32.mrb[0].mxu0
    %v1364 = vadd.f32 0.0, %v1363
    %v1365 = vpop.f32.mrb[0].mxu0
    %v1366 = vadd.f32 0.0, %v1365
    %v1367 = vpop.f32.mrb[0].mxu0
    %v1368 = vadd.f32 0.0, %v1367
    %v1369 = vpop.f32.mrb[0].mxu0
    %v1370 = vadd.f32 0.0, %v1369
    %1371 = vmatprep.mubr.bf16.mxu0 %v1051
    %1372 = vmatmul.mubr.bf16.gmra.mrb[0].mxu0 %v1050
    %v1373 = vpop.f32.mrb[0].mxu0
    %v1374 = vadd.f32 0.0, %v1373
    %v1375 = vpop.f32.mrb[0].mxu0
    %v1376 = vadd.f32 0.0, %v1375
    %v1377 = vpop.f32.mrb[0].mxu0
    %v1378 = vadd.f32 0.0, %v1377
    %v1379 = vpop.f32.mrb[0].mxu0
    %v1380 = vadd.f32 0.0, %v1379
    %1381 = vmatprep.mubr.bf16.mxu0 %v1053
    %1382 = vmatmul.mubr.bf16.gmra.mrb[0].mxu0 %v1052
    %v1383 = vpop.f32.mrb[0].mxu0
    %v1384 = vadd.f32 0.0, %v1383
    %v1385 = vpop.f32.mrb[0].mxu0
    %v1386 = vadd.f32 0.0, %v1385
    %v1387 = vpop.f32.mrb[0].mxu0
    %v1388 = vadd.f32 0.0, %v1387
    %v1389 = vpop.f32.mrb[0].mxu0
    %v1390 = vadd.f32 0.0, %v1389
    %1391 = vdwg.mxu0
    %v1392 = vadd.f32 %v1054, %v1314
    %v1393 = vadd.f32 %v1055, %v1316
    %v1394 = vadd.f32 %v1056, %v1318
    %v1395 = vadd.f32 %v1057, %v1320
    %v1396 = vadd.f32 %v1058, %v1324
    %v1397 = vadd.f32 %v1059, %v1326
    %v1398 = vadd.f32 %v1060, %v1328
    %v1399 = vadd.f32 %v1061, %v1330
    %v1400 = vadd.f32 %v1062, %v1334
    %v1401 = vadd.f32 %v1063, %v1336
    %v1402 = vadd.f32 %v1064, %v1338
    %v1403 = vadd.f32 %v1065, %v1340
    %v1404 = vadd.f32 %v1066, %v1344
    %v1405 = vadd.f32 %v1067, %v1346
    %v1406 = vadd.f32 %v1068, %v1348
    %v1407 = vadd.f32 %v1069, %v1350
    %v1408 = vadd.f32 %v1070, %v1354
    %v1409 = vadd.f32 %v1071, %v1356
    %v1410 = vadd.f32 %v1072, %v1358
    %v1411 = vadd.f32 %v1073, %v1360
    %v1412 = vadd.f32 %v1074, %v1364
    %v1413 = vadd.f32 %v1075, %v1366
    %v1414 = vadd.f32 %v1076, %v1368
    %v1415 = vadd.f32 %v1077, %v1370
    %v1416 = vadd.f32 %v1078, %v1374
    %v1417 = vadd.f32 %v1079, %v1376
    %v1418 = vadd.f32 %v1080, %v1378
    %v1419 = vadd.f32 %v1081, %v1380
    %v1420 = vadd.f32 %v1082, %v1384
    %v1421 = vadd.f32 %v1083, %v1386
    %v1422 = vadd.f32 %v1084, %v1388
    %v1423 = vadd.f32 %v1085, %v1390
    %1424 = vst [vmem:[#allocation6] sm:$0xff] %v1392
    %1425 = vst [vmem:[#allocation6 + $0x8] sm:$0xff] %v1393
    %1426 = vst [vmem:[#allocation6 + $0x10] sm:$0xff] %v1394
    %1427 = vst [vmem:[#allocation6 + $0x18] sm:$0xff] %v1395
    %1428 = vst [vmem:[#allocation6 + $0x20] sm:$0xff] %v1396
    %1429 = vst [vmem:[#allocation6 + $0x28] sm:$0xff] %v1397
    %1430 = vst [vmem:[#allocation6 + $0x30] sm:$0xff] %v1398
    %1431 = vst [vmem:[#allocation6 + $0x38] sm:$0xff] %v1399
    %1432 = vst [vmem:[#allocation6 + $0x40] sm:$0xff] %v1400
    %1433 = vst [vmem:[#allocation6 + $0x48] sm:$0xff] %v1401
    %1434 = vst [vmem:[#allocation6 + $0x50] sm:$0xff] %v1402
    %1435 = vst [vmem:[#allocation6 + $0x58] sm:$0xff] %v1403
    %1436 = vst [vmem:[#allocation6 + $0x60] sm:$0xff] %v1404
    %1437 = vst [vmem:[#allocation6 + $0x68] sm:$0xff] %v1405
    %1438 = vst [vmem:[#allocation6 + $0x70] sm:$0xff] %v1406
    %1439 = vst [vmem:[#allocation6 + $0x78] sm:$0xff] %v1407
    %1440 = vst [vmem:[#allocation6 + $0x80] sm:$0xff] %v1408
    %1441 = vst [vmem:[#allocation6 + $0x88] sm:$0xff] %v1409
    %1442 = vst [vmem:[#allocation6 + $0x90] sm:$0xff] %v1410
    %1443 = vst [vmem:[#allocation6 + $0x98] sm:$0xff] %v1411
    %1444 = vst [vmem:[#allocation6 + $0xa0] sm:$0xff] %v1412
    %1445 = vst [vmem:[#allocation6 + $0xa8] sm:$0xff] %v1413
    %1446 = vst [vmem:[#allocation6 + $0xb0] sm:$0xff] %v1414
    %1447 = vst [vmem:[#allocation6 + $0xb8] sm:$0xff] %v1415
    %1448 = vst [vmem:[#allocation6 + $0xc0] sm:$0xff] %v1416
    %1449 = vst [vmem:[#allocation6 + $0xc8] sm:$0xff] %v1417
    %1450 = vst [vmem:[#allocation6 + $0xd0] sm:$0xff] %v1418
    %1451 = vst [vmem:[#allocation6 + $0xd8] sm:$0xff] %v1419
    %1452 = vst [vmem:[#allocation6 + $0xe0] sm:$0xff] %v1420
    %1453 = vst [vmem:[#allocation6 + $0xe8] sm:$0xff] %v1421
    %1454 = vst [vmem:[#allocation6 + $0xf0] sm:$0xff] %v1422
    %1455 = vst [vmem:[#allocation6 + $0xf8] sm:$0xff] %v1423
    %s1456 = scalar_lea.vmem [#allocation4], 32
    %v1457 = vld [vmem:[%s1456] sm:$0xff]
    %v1458 = vld [vmem:[%s1456 + $0x8] sm:$0xff]
    %v1459 = vld [vmem:[%s1456 + $0x10] sm:$0xff]
    %v1460 = vld [vmem:[%s1456 + $0x18] sm:$0xff]
    %v1461 = vld [vmem:[%s1456 + $0x20] sm:$0xff]
    %v1462 = vld [vmem:[%s1456 + $0x28] sm:$0xff]
    %v1463 = vld [vmem:[%s1456 + $0x30] sm:$0xff]
    %v1464 = vld [vmem:[%s1456 + $0x38] sm:$0xff]
    %v1465 = vld [vmem:[%s1456 + $0x40] sm:$0xff]
    %v1466 = vld [vmem:[%s1456 + $0x48] sm:$0xff]
    %v1467 = vld [vmem:[%s1456 + $0x50] sm:$0xff]
    %v1468 = vld [vmem:[%s1456 + $0x58] sm:$0xff]
    %v1469 = vld [vmem:[%s1456 + $0x60] sm:$0xff]
    %v1470 = vld [vmem:[%s1456 + $0x68] sm:$0xff]
    %v1471 = vld [vmem:[%s1456 + $0x70] sm:$0xff]
    %v1472 = vld [vmem:[%s1456 + $0x78] sm:$0xff]
    %v1473 = vld [vmem:[%s1456 + $0xa0] sm:$0xff]
    %v1474 = vld [vmem:[%s1456 + $0xa8] sm:$0xff]
    %v1475 = vld [vmem:[%s1456 + $0xb0] sm:$0xff]
    %v1476 = vld [vmem:[%s1456 + $0xb8] sm:$0xff]
    %v1477 = vld [vmem:[%s1456 + $0xc0] sm:$0xff]
    %v1478 = vld [vmem:[%s1456 + $0xc8] sm:$0xff]
    %v1479 = vld [vmem:[%s1456 + $0xd0] sm:$0xff]
    %v1480 = vld [vmem:[%s1456 + $0xd8] sm:$0xff]
    %v1481 = vld [vmem:[%s1456 + $0xe0] sm:$0xff]
    %v1482 = vld [vmem:[%s1456 + $0xe8] sm:$0xff]
    %v1483 = vld [vmem:[%s1456 + $0xf0] sm:$0xff]
    %v1484 = vld [vmem:[%s1456 + $0xf8] sm:$0xff]
    %v1485 = vld [vmem:[%s1456 + $0x100] sm:$0xff]
    %v1486 = vld [vmem:[%s1456 + $0x108] sm:$0xff]
    %v1487 = vld [vmem:[%s1456 + $0x110] sm:$0xff]
    %v1488 = vld [vmem:[%s1456 + $0x118] sm:$0xff]
    %v1489 = vpack.c.bf16 %v1459, %v1457
    %v1490 = vpack.c.bf16 %v1460, %v1458
    %v1491 = vpack.c.bf16 %v1463, %v1461
    %v1492 = vpack.c.bf16 %v1464, %v1462
    %v1493 = vpack.c.bf16 %v1467, %v1465
    %v1494 = vpack.c.bf16 %v1468, %v1466
    %v1495 = vpack.c.bf16 %v1471, %v1469
    %v1496 = vpack.c.bf16 %v1472, %v1470
    %v1497 = vpack.c.bf16 %v1475, %v1473
    %v1498 = vpack.c.bf16 %v1476, %v1474
    %v1499 = vpack.c.bf16 %v1479, %v1477
    %v1500 = vpack.c.bf16 %v1480, %v1478
    %v1501 = vpack.c.bf16 %v1483, %v1481
    %v1502 = vpack.c.bf16 %v1484, %v1482
    %v1503 = vpack.c.bf16 %v1487, %v1485
    %v1504 = vpack.c.bf16 %v1488, %v1486
    %v1505 = vld [vmem:[#allocation6] sm:$0xff]
    %v1506 = vld [vmem:[#allocation6 + $0x8] sm:$0xff]
    %v1507 = vld [vmem:[#allocation6 + $0x10] sm:$0xff]
    %v1508 = vld [vmem:[#allocation6 + $0x18] sm:$0xff]
    %v1509 = vld [vmem:[#allocation6 + $0x20] sm:$0xff]
    %v1510 = vld [vmem:[#allocation6 + $0x28] sm:$0xff]
    %v1511 = vld [vmem:[#allocation6 + $0x30] sm:$0xff]
    %v1512 = vld [vmem:[#allocation6 + $0x38] sm:$0xff]
    %v1513 = vld [vmem:[#allocation6 + $0x40] sm:$0xff]
    %v1514 = vld [vmem:[#allocation6 + $0x48] sm:$0xff]
    %v1515 = vld [vmem:[#allocation6 + $0x50] sm:$0xff]
    %v1516 = vld [vmem:[#allocation6 + $0x58] sm:$0xff]
    %v1517 = vld [vmem:[#allocation6 + $0x60] sm:$0xff]
    %v1518 = vld [vmem:[#allocation6 + $0x68] sm:$0xff]
    %v1519 = vld [vmem:[#allocation6 + $0x70] sm:$0xff]
    %v1520 = vld [vmem:[#allocation6 + $0x78] sm:$0xff]
    %v1521 = vld [vmem:[#allocation6 + $0x80] sm:$0xff]
    %v1522 = vld [vmem:[#allocation6 + $0x88] sm:$0xff]
    %v1523 = vld [vmem:[#allocation6 + $0x90] sm:$0xff]
    %v1524 = vld [vmem:[#allocation6 + $0x98] sm:$0xff]
    %v1525 = vld [vmem:[#allocation6 + $0xa0] sm:$0xff]
    %v1526 = vld [vmem:[#allocation6 + $0xa8] sm:$0xff]
    %v1527 = vld [vmem:[#allocation6 + $0xb0] sm:$0xff]
    %v1528 = vld [vmem:[#allocation6 + $0xb8] sm:$0xff]
    %v1529 = vld [vmem:[#allocation6 + $0xc0] sm:$0xff]
    %v1530 = vld [vmem:[#allocation6 + $0xc8] sm:$0xff]
    %v1531 = vld [vmem:[#allocation6 + $0xd0] sm:$0xff]
    %v1532 = vld [vmem:[#allocation6 + $0xd8] sm:$0xff]
    %v1533 = vld [vmem:[#allocation6 + $0xe0] sm:$0xff]
    %v1534 = vld [vmem:[#allocation6 + $0xe8] sm:$0xff]
    %v1535 = vld [vmem:[#allocation6 + $0xf0] sm:$0xff]
    %v1536 = vld [vmem:[#allocation6 + $0xf8] sm:$0xff]
    %s1537 = scalar_lea.vmem %s1, 1536
    %v1538 = vld [vmem:[%s1537] sm:$0xff]
    %v1539 = vld [vmem:[%s1537 + $0x8] sm:$0xff]
    %v1540 = vld [vmem:[%s1537 + $0x10] sm:$0xff]
    %v1541 = vld [vmem:[%s1537 + $0x18] sm:$0xff]
    %v1542 = vld [vmem:[%s1537 + $0x20] sm:$0xff]
    %v1543 = vld [vmem:[%s1537 + $0x28] sm:$0xff]
    %v1544 = vld [vmem:[%s1537 + $0x30] sm:$0xff]
    %v1545 = vld [vmem:[%s1537 + $0x38] sm:$0xff]
    %v1546 = vld [vmem:[%s1537 + $0x40] sm:$0xff]
    %v1547 = vld [vmem:[%s1537 + $0x48] sm:$0xff]
    %v1548 = vld [vmem:[%s1537 + $0x50] sm:$0xff]
    %v1549 = vld [vmem:[%s1537 + $0x58] sm:$0xff]
    %v1550 = vld [vmem:[%s1537 + $0x60] sm:$0xff]
    %v1551 = vld [vmem:[%s1537 + $0x68] sm:$0xff]
    %v1552 = vld [vmem:[%s1537 + $0x70] sm:$0xff]
    %v1553 = vld [vmem:[%s1537 + $0x78] sm:$0xff]
    %v1554 = vld [vmem:[%s1537 + $0x80] sm:$0xff]
    %v1555 = vld [vmem:[%s1537 + $0x88] sm:$0xff]
    %v1556 = vld [vmem:[%s1537 + $0x90] sm:$0xff]
    %v1557 = vld [vmem:[%s1537 + $0x98] sm:$0xff]
    %v1558 = vld [vmem:[%s1537 + $0xa0] sm:$0xff]
    %v1559 = vld [vmem:[%s1537 + $0xa8] sm:$0xff]
    %v1560 = vld [vmem:[%s1537 + $0xb0] sm:$0xff]
    %v1561 = vld [vmem:[%s1537 + $0xb8] sm:$0xff]
    %v1562 = vld [vmem:[%s1537 + $0xc0] sm:$0xff]
    %v1563 = vld [vmem:[%s1537 + $0xc8] sm:$0xff]
    %v1564 = vld [vmem:[%s1537 + $0xd0] sm:$0xff]
    %v1565 = vld [vmem:[%s1537 + $0xd8] sm:$0xff]
    %v1566 = vld [vmem:[%s1537 + $0xe0] sm:$0xff]
    %v1567 = vld [vmem:[%s1537 + $0xe8] sm:$0xff]
    %v1568 = vld [vmem:[%s1537 + $0xf0] sm:$0xff]
    %v1569 = vld [vmem:[%s1537 + $0xf8] sm:$0xff]
    %v1602 = vunpack.c.l.b16 %v1538
    %v1603 = vunpack.c.h.b16 %v1538
    %v1604 = vunpack.c.l.b16 %v1539
    %v1605 = vunpack.c.h.b16 %v1539
    %v1606 = vunpack.c.l.b16 %v1540
    %v1607 = vunpack.c.h.b16 %v1540
    %v1608 = vunpack.c.l.b16 %v1541
    %v1609 = vunpack.c.h.b16 %v1541
    %v1610 = vunpack.c.l.b16 %v1542
    %v1611 = vunpack.c.h.b16 %v1542
    %v1612 = vunpack.c.l.b16 %v1543
    %v1613 = vunpack.c.h.b16 %v1543
    %v1614 = vunpack.c.l.b16 %v1544
    %v1615 = vunpack.c.h.b16 %v1544
    %v1616 = vunpack.c.l.b16 %v1545
    %v1617 = vunpack.c.h.b16 %v1545
    %v1618 = vunpack.c.l.b16 %v1546
    %v1619 = vunpack.c.h.b16 %v1546
    %v1620 = vunpack.c.l.b16 %v1547
    %v1621 = vunpack.c.h.b16 %v1547
    %v1622 = vunpack.c.l.b16 %v1548
    %v1623 = vunpack.c.h.b16 %v1548
    %v1624 = vunpack.c.l.b16 %v1549
    %v1625 = vunpack.c.h.b16 %v1549
    %v1626 = vunpack.c.l.b16 %v1550
    %v1627 = vunpack.c.h.b16 %v1550
    %v1628 = vunpack.c.l.b16 %v1551
    %v1629 = vunpack.c.h.b16 %v1551
    %v1630 = vunpack.c.l.b16 %v1552
    %v1631 = vunpack.c.h.b16 %v1552
    %v1632 = vunpack.c.l.b16 %v1553
    %v1633 = vunpack.c.h.b16 %v1553
    %v1634 = vunpack.c.l.b16 %v1554
    %v1635 = vunpack.c.h.b16 %v1554
    %v1636 = vunpack.c.l.b16 %v1555
    %v1637 = vunpack.c.h.b16 %v1555
    %v1638 = vunpack.c.l.b16 %v1556
    %v1639 = vunpack.c.h.b16 %v1556
    %v1640 = vunpack.c.l.b16 %v1557
    %v1641 = vunpack.c.h.b16 %v1557
    %v1642 = vunpack.c.l.b16 %v1558
    %v1643 = vunpack.c.h.b16 %v1558
    %v1644 = vunpack.c.l.b16 %v1559
    %v1645 = vunpack.c.h.b16 %v1559
    %v1646 = vunpack.c.l.b16 %v1560
    %v1647 = vunpack.c.h.b16 %v1560
    %v1648 = vunpack.c.l.b16 %v1561
    %v1649 = vunpack.c.h.b16 %v1561
    %v1650 = vunpack.c.l.b16 %v1562
    %v1651 = vunpack.c.h.b16 %v1562
    %v1652 = vunpack.c.l.b16 %v1563
    %v1653 = vunpack.c.h.b16 %v1563
    %v1654 = vunpack.c.l.b16 %v1564
    %v1655 = vunpack.c.h.b16 %v1564
    %v1656 = vunpack.c.l.b16 %v1565
    %v1657 = vunpack.c.h.b16 %v1565
    %v1658 = vunpack.c.l.b16 %v1566
    %v1659 = vunpack.c.h.b16 %v1566
    %v1660 = vunpack.c.l.b16 %v1567
    %v1661 = vunpack.c.h.b16 %v1567
    %v1662 = vunpack.c.l.b16 %v1568
    %v1663 = vunpack.c.h.b16 %v1568
    %v1664 = vunpack.c.l.b16 %v1569
    %v1665 = vunpack.c.h.b16 %v1569
    %v1666 = vpack.c.b16 %v1604, %v1602
    %v1667 = vpack.c.b16 %v1605, %v1603
    %v1668 = vpack.c.b16 %v1608, %v1606
    %v1669 = vpack.c.b16 %v1609, %v1607
    %v1670 = vpack.c.b16 %v1612, %v1610
    %v1671 = vpack.c.b16 %v1613, %v1611
    %v1672 = vpack.c.b16 %v1616, %v1614
    %v1673 = vpack.c.b16 %v1617, %v1615
    %v1674 = vpack.c.b16 %v1620, %v1618
    %v1675 = vpack.c.b16 %v1621, %v1619
    %v1676 = vpack.c.b16 %v1624, %v1622
    %v1677 = vpack.c.b16 %v1625, %v1623
    %v1678 = vpack.c.b16 %v1628, %v1626
    %v1679 = vpack.c.b16 %v1629, %v1627
    %v1680 = vpack.c.b16 %v1632, %v1630
    %v1681 = vpack.c.b16 %v1633, %v1631
    %v1682 = vpack.c.b16 %v1636, %v1634
    %v1683 = vpack.c.b16 %v1637, %v1635
    %v1684 = vpack.c.b16 %v1640, %v1638
    %v1685 = vpack.c.b16 %v1641, %v1639
    %v1686 = vpack.c.b16 %v1644, %v1642
    %v1687 = vpack.c.b16 %v1645, %v1643
    %v1688 = vpack.c.b16 %v1648, %v1646
    %v1689 = vpack.c.b16 %v1649, %v1647
    %v1690 = vpack.c.b16 %v1652, %v1650
    %v1691 = vpack.c.b16 %v1653, %v1651
    %v1692 = vpack.c.b16 %v1656, %v1654
    %v1693 = vpack.c.b16 %v1657, %v1655
    %v1694 = vpack.c.b16 %v1660, %v1658
    %v1695 = vpack.c.b16 %v1661, %v1659
    %v1696 = vpack.c.b16 %v1664, %v1662
    %v1697 = vpack.c.b16 %v1665, %v1663
    %1730 = vmatprep.subr.bf16.mxu0 %v1667
    %1731 = vmatpush1.bf16.msra.mxu0 %v1666
    %1732 = vmatprep.subr.bf16.mxu0 %v1669
    %1733 = vmatpush1.bf16.msra.mxu0 %v1668
    %1734 = vmatprep.subr.bf16.mxu0 %v1671
    %1735 = vmatpush1.bf16.msra.mxu0 %v1670
    %1736 = vmatprep.subr.bf16.mxu0 %v1673
    %1737 = vmatpush1.bf16.msra.mxu0 %v1672
    %1738 = vmatprep.subr.bf16.mxu0 %v1675
    %1739 = vmatpush1.bf16.msra.mxu0 %v1674
    %1740 = vmatprep.subr.bf16.mxu0 %v1677
    %1741 = vmatpush1.bf16.msra.mxu0 %v1676
    %1742 = vmatprep.subr.bf16.mxu0 %v1679
    %1743 = vmatpush1.bf16.msra.mxu0 %v1678
    %1744 = vmatprep.subr.bf16.mxu0 %v1681
    %1745 = vmatpush1.bf16.msra.mxu0 %v1680
    %1746 = vmatprep.subr.bf16.mxu0 %v1683
    %1747 = vmatpush1.bf16.msra.mxu0 %v1682
    %1748 = vmatprep.subr.bf16.mxu0 %v1685
    %1749 = vmatpush1.bf16.msra.mxu0 %v1684
    %1750 = vmatprep.subr.bf16.mxu0 %v1687
    %1751 = vmatpush1.bf16.msra.mxu0 %v1686
    %1752 = vmatprep.subr.bf16.mxu0 %v1689
    %1753 = vmatpush1.bf16.msra.mxu0 %v1688
    %1754 = vmatprep.subr.bf16.mxu0 %v1691
    %1755 = vmatpush1.bf16.msra.mxu0 %v1690
    %1756 = vmatprep.subr.bf16.mxu0 %v1693
    %1757 = vmatpush1.bf16.msra.mxu0 %v1692
    %1758 = vmatprep.subr.bf16.mxu0 %v1695
    %1759 = vmatpush1.bf16.msra.mxu0 %v1694
    %1760 = vmatprep.subr.bf16.mxu0 %v1697
    %1761 = vmatpush1.bf16.msra.mxu0 %v1696
    %1762 = vmatprep.mubr.bf16.mxu0 %v1490
    %1763 = vmatmul.mubr.bf16.gmra.mrb[0].mxu0 %v1489
    %v1764 = vpop.f32.mrb[0].mxu0
    %v1765 = vadd.f32 0.0, %v1764
    %v1766 = vpop.f32.mrb[0].mxu0
    %v1767 = vadd.f32 0.0, %v1766
    %v1768 = vpop.f32.mrb[0].mxu0
    %v1769 = vadd.f32 0.0, %v1768
    %v1770 = vpop.f32.mrb[0].mxu0
    %v1771 = vadd.f32 0.0, %v1770
    %1772 = vmatprep.mubr.bf16.mxu0 %v1492
    %1773 = vmatmul.mubr.bf16.gmra.mrb[0].mxu0 %v1491
    %v1774 = vpop.f32.mrb[0].mxu0
    %v1775 = vadd.f32 0.0, %v1774
    %v1776 = vpop.f32.mrb[0].mxu0
    %v1777 = vadd.f32 0.0, %v1776
    %v1778 = vpop.f32.mrb[0].mxu0
    %v1779 = vadd.f32 0.0, %v1778
    %v1780 = vpop.f32.mrb[0].mxu0
    %v1781 = vadd.f32 0.0, %v1780
    %1782 = vmatprep.mubr.bf16.mxu0 %v1494
    %1783 = vmatmul.mubr.bf16.gmra.mrb[0].mxu0 %v1493
    %v1784 = vpop.f32.mrb[0].mxu0
    %v1785 = vadd.f32 0.0, %v1784
    %v1786 = vpop.f32.mrb[0].mxu0
    %v1787 = vadd.f32 0.0, %v1786
    %v1788 = vpop.f32.mrb[0].mxu0
    %v1789 = vadd.f32 0.0, %v1788
    %v1790 = vpop.f32.mrb[0].mxu0
    %v1791 = vadd.f32 0.0, %v1790
    %1792 = vmatprep.mubr.bf16.mxu0 %v1496
    %1793 = vmatmul.mubr.bf16.gmra.mrb[0].mxu0 %v1495
    %v1794 = vpop.f32.mrb[0].mxu0
    %v1795 = vadd.f32 0.0, %v1794
    %v1796 = vpop.f32.mrb[0].mxu0
    %v1797 = vadd.f32 0.0, %v1796
    %v1798 = vpop.f32.mrb[0].mxu0
    %v1799 = vadd.f32 0.0, %v1798
    %v1800 = vpop.f32.mrb[0].mxu0
    %v1801 = vadd.f32 0.0, %v1800
    %1802 = vmatprep.mubr.bf16.mxu0 %v1498
    %1803 = vmatmul.mubr.bf16.gmra.mrb[0].mxu0 %v1497
    %v1804 = vpop.f32.mrb[0].mxu0
    %v1805 = vadd.f32 0.0, %v1804
    %v1806 = vpop.f32.mrb[0].mxu0
    %v1807 = vadd.f32 0.0, %v1806
    %v1808 = vpop.f32.mrb[0].mxu0
    %v1809 = vadd.f32 0.0, %v1808
    %v1810 = vpop.f32.mrb[0].mxu0
    %v1811 = vadd.f32 0.0, %v1810
    %1812 = vmatprep.mubr.bf16.mxu0 %v1500
    %1813 = vmatmul.mubr.bf16.gmra.mrb[0].mxu0 %v1499
    %v1814 = vpop.f32.mrb[0].mxu0
    %v1815 = vadd.f32 0.0, %v1814
    %v1816 = vpop.f32.mrb[0].mxu0
    %v1817 = vadd.f32 0.0, %v1816
    %v1818 = vpop.f32.mrb[0].mxu0
    %v1819 = vadd.f32 0.0, %v1818
    %v1820 = vpop.f32.mrb[0].mxu0
    %v1821 = vadd.f32 0.0, %v1820
    %1822 = vmatprep.mubr.bf16.mxu0 %v1502
    %1823 = vmatmul.mubr.bf16.gmra.mrb[0].mxu0 %v1501
    %v1824 = vpop.f32.mrb[0].mxu0
    %v1825 = vadd.f32 0.0, %v1824
    %v1826 = vpop.f32.mrb[0].mxu0
    %v1827 = vadd.f32 0.0, %v1826
    %v1828 = vpop.f32.mrb[0].mxu0
    %v1829 = vadd.f32 0.0, %v1828
    %v1830 = vpop.f32.mrb[0].mxu0
    %v1831 = vadd.f32 0.0, %v1830
    %1832 = vmatprep.mubr.bf16.mxu0 %v1504
    %1833 = vmatmul.mubr.bf16.gmra.mrb[0].mxu0 %v1503
    %v1834 = vpop.f32.mrb[0].mxu0
    %v1835 = vadd.f32 0.0, %v1834
    %v1836 = vpop.f32.mrb[0].mxu0
    %v1837 = vadd.f32 0.0, %v1836
    %v1838 = vpop.f32.mrb[0].mxu0
    %v1839 = vadd.f32 0.0, %v1838
    %v1840 = vpop.f32.mrb[0].mxu0
    %v1841 = vadd.f32 0.0, %v1840
    %1842 = vdwg.mxu0
    %v1843 = vadd.f32 %v1505, %v1765
    %v1844 = vadd.f32 %v1506, %v1767
    %v1845 = vadd.f32 %v1507, %v1769
    %v1846 = vadd.f32 %v1508, %v1771
    %v1847 = vadd.f32 %v1509, %v1775
    %v1848 = vadd.f32 %v1510, %v1777
    %v1849 = vadd.f32 %v1511, %v1779
    %v1850 = vadd.f32 %v1512, %v1781
    %v1851 = vadd.f32 %v1513, %v1785
    %v1852 = vadd.f32 %v1514, %v1787
    %v1853 = vadd.f32 %v1515, %v1789
    %v1854 = vadd.f32 %v1516, %v1791
    %v1855 = vadd.f32 %v1517, %v1795
    %v1856 = vadd.f32 %v1518, %v1797
    %v1857 = vadd.f32 %v1519, %v1799
    %v1858 = vadd.f32 %v1520, %v1801
    %v1859 = vadd.f32 %v1521, %v1805
    %v1860 = vadd.f32 %v1522, %v1807
    %v1861 = vadd.f32 %v1523, %v1809
    %v1862 = vadd.f32 %v1524, %v1811
    %v1863 = vadd.f32 %v1525, %v1815
    %v1864 = vadd.f32 %v1526, %v1817
    %v1865 = vadd.f32 %v1527, %v1819
    %v1866 = vadd.f32 %v1528, %v1821
    %v1867 = vadd.f32 %v1529, %v1825
    %v1868 = vadd.f32 %v1530, %v1827
    %v1869 = vadd.f32 %v1531, %v1829
    %v1870 = vadd.f32 %v1532, %v1831
    %v1871 = vadd.f32 %v1533, %v1835
    %v1872 = vadd.f32 %v1534, %v1837
    %v1873 = vadd.f32 %v1535, %v1839
    %v1874 = vadd.f32 %v1536, %v1841
    %1875 = vst [vmem:[#allocation6] sm:$0xff] %v1843
    %1876 = vst [vmem:[#allocation6 + $0x8] sm:$0xff] %v1844
    %1877 = vst [vmem:[#allocation6 + $0x10] sm:$0xff] %v1845
    %1878 = vst [vmem:[#allocation6 + $0x18] sm:$0xff] %v1846
    %1879 = vst [vmem:[#allocation6 + $0x20] sm:$0xff] %v1847
    %1880 = vst [vmem:[#allocation6 + $0x28] sm:$0xff] %v1848
    %1881 = vst [vmem:[#allocation6 + $0x30] sm:$0xff] %v1849
    %1882 = vst [vmem:[#allocation6 + $0x38] sm:$0xff] %v1850
    %1883 = vst [vmem:[#allocation6 + $0x40] sm:$0xff] %v1851
    %1884 = vst [vmem:[#allocation6 + $0x48] sm:$0xff] %v1852
    %1885 = vst [vmem:[#allocation6 + $0x50] sm:$0xff] %v1853
    %1886 = vst [vmem:[#allocation6 + $0x58] sm:$0xff] %v1854
    %1887 = vst [vmem:[#allocation6 + $0x60] sm:$0xff] %v1855
    %1888 = vst [vmem:[#allocation6 + $0x68] sm:$0xff] %v1856
    %1889 = vst [vmem:[#allocation6 + $0x70] sm:$0xff] %v1857
    %1890 = vst [vmem:[#allocation6 + $0x78] sm:$0xff] %v1858
    %1891 = vst [vmem:[#allocation6 + $0x80] sm:$0xff] %v1859
    %1892 = vst [vmem:[#allocation6 + $0x88] sm:$0xff] %v1860
    %1893 = vst [vmem:[#allocation6 + $0x90] sm:$0xff] %v1861
    %1894 = vst [vmem:[#allocation6 + $0x98] sm:$0xff] %v1862
    %1895 = vst [vmem:[#allocation6 + $0xa0] sm:$0xff] %v1863
    %1896 = vst [vmem:[#allocation6 + $0xa8] sm:$0xff] %v1864
    %1897 = vst [vmem:[#allocation6 + $0xb0] sm:$0xff] %v1865
    %1898 = vst [vmem:[#allocation6 + $0xb8] sm:$0xff] %v1866
    %1899 = vst [vmem:[#allocation6 + $0xc0] sm:$0xff] %v1867
    %1900 = vst [vmem:[#allocation6 + $0xc8] sm:$0xff] %v1868
    %1901 = vst [vmem:[#allocation6 + $0xd0] sm:$0xff] %v1869
    %1902 = vst [vmem:[#allocation6 + $0xd8] sm:$0xff] %v1870
    %1903 = vst [vmem:[#allocation6 + $0xe0] sm:$0xff] %v1871
    %1904 = vst [vmem:[#allocation6 + $0xe8] sm:$0xff] %v1872
    %1905 = vst [vmem:[#allocation6 + $0xf0] sm:$0xff] %v1873
    %1906 = vst [vmem:[#allocation6 + $0xf8] sm:$0xff] %v1874
    %v1907 = vld [vmem:[#allocation2] sm:$0xfe]
    %v1908 = vld [vmem:[#allocation2 + $0x8] sm:$0xfe]
    %v1909 = vld [vmem:[#allocation2 + $0x10] sm:$0x1]
    %v1910 = vld [vmem:[#allocation2 + $0x18] sm:$0x1]
    %v1911 = vld [vmem:[#allocation2 + $0x20] sm:$0xfe]
    %v1912 = vld [vmem:[#allocation2 + $0x28] sm:$0xfe]
    %v1913 = vld [vmem:[#allocation2 + $0x30] sm:$0x1]
    %v1914 = vld [vmem:[#allocation2 + $0x38] sm:$0x1]
    %v1915 = vld [vmem:[#allocation2 + $0x40] sm:$0xfe]
    %v1916 = vld [vmem:[#allocation2 + $0x48] sm:$0xfe]
    %v1917 = vld [vmem:[#allocation2 + $0x50] sm:$0x1]
    %v1918 = vld [vmem:[#allocation2 + $0x58] sm:$0x1]
    %v1919 = vld [vmem:[#allocation2 + $0x60] sm:$0xfe]
    %v1920 = vld [vmem:[#allocation2 + $0x68] sm:$0xfe]
    %v1921 = vld [vmem:[#allocation2 + $0x70] sm:$0x1]
    %v1922 = vld [vmem:[#allocation2 + $0x78] sm:$0x1]
    %v1923 = vld [vmem:[#allocation2 + $0x80] sm:$0xfe]
    %v1924 = vld [vmem:[#allocation2 + $0x88] sm:$0xfe]
    %v1925 = vld [vmem:[#allocation2 + $0x90] sm:$0x1]
    %v1926 = vld [vmem:[#allocation2 + $0x98] sm:$0x1]
    %v1927 = vld [vmem:[#allocation2 + $0xa0] sm:$0xfe]
    %v1928 = vld [vmem:[#allocation2 + $0xa8] sm:$0xfe]
    %v1929 = vld [vmem:[#allocation2 + $0xb0] sm:$0x1]
    %v1930 = vld [vmem:[#allocation2 + $0xb8] sm:$0x1]
    %v1931 = vld [vmem:[#allocation2 + $0xc0] sm:$0xfe]
    %v1932 = vld [vmem:[#allocation2 + $0xc8] sm:$0xfe]
    %v1933 = vld [vmem:[#allocation2 + $0xd0] sm:$0x1]
    %v1934 = vld [vmem:[#allocation2 + $0xd8] sm:$0x1]
    %v1935 = vld [vmem:[#allocation2 + $0xe0] sm:$0xfe]
    %v1936 = vld [vmem:[#allocation2 + $0xe8] sm:$0xfe]
    %v1937 = vld [vmem:[#allocation2 + $0xf0] sm:$0x1]
    %v1938 = vld [vmem:[#allocation2 + $0xf8] sm:$0x1]
    %v1939 = vld [vmem:[#allocation2 + $0x100] sm:$0xfe]
    %v1940 = vld [vmem:[#allocation2 + $0x108] sm:$0xfe]
    %v1941 = vld [vmem:[#allocation2 + $0x110] sm:$0x1]
    %v1942 = vld [vmem:[#allocation2 + $0x118] sm:$0x1]
    %v1943 = vld [vmem:[#allocation2 + $0x120] sm:$0xfe]
    %v1944 = vld [vmem:[#allocation2 + $0x128] sm:$0xfe]
    %v1945 = vld [vmem:[#allocation2 + $0x130] sm:$0x1]
    %v1946 = vld [vmem:[#allocation2 + $0x138] sm:$0x1]
    %v1947 = vld [vmem:[#allocation2 + $0x140] sm:$0xfe]
    %v1948 = vld [vmem:[#allocation2 + $0x148] sm:$0xfe]
    %v1949 = vld [vmem:[#allocation2 + $0x150] sm:$0x1]
    %v1950 = vld [vmem:[#allocation2 + $0x158] sm:$0x1]
    %v1951 = vld [vmem:[#allocation2 + $0x160] sm:$0xfe]
    %v1952 = vld [vmem:[#allocation2 + $0x168] sm:$0xfe]
    %v1953 = vld [vmem:[#allocation2 + $0x170] sm:$0x1]
    %v1954 = vld [vmem:[#allocation2 + $0x178] sm:$0x1]
    %v1955 = vld [vmem:[#allocation2 + $0x180] sm:$0xfe]
    %v1956 = vld [vmem:[#allocation2 + $0x188] sm:$0xfe]
    %v1957 = vld [vmem:[#allocation2 + $0x190] sm:$0x1]
    %v1958 = vld [vmem:[#allocation2 + $0x198] sm:$0x1]
    %v1959 = vld [vmem:[#allocation2 + $0x1a0] sm:$0xfe]
    %v1960 = vld [vmem:[#allocation2 + $0x1a8] sm:$0xfe]
    %v1961 = vld [vmem:[#allocation2 + $0x1b0] sm:$0x1]
    %v1962 = vld [vmem:[#allocation2 + $0x1b8] sm:$0x1]
    %v1963 = vld [vmem:[#allocation2 + $0x1c0] sm:$0xfe]
    %v1964 = vld [vmem:[#allocation2 + $0x1c8] sm:$0xfe]
    %v1965 = vld [vmem:[#allocation2 + $0x1d0] sm:$0x1]
    %v1966 = vld [vmem:[#allocation2 + $0x1d8] sm:$0x1]
    %v1967 = vld [vmem:[#allocation2 + $0x1e0] sm:$0xfe]
    %v1968 = vld [vmem:[#allocation2 + $0x1e8] sm:$0xfe]
    %v1969 = vld [vmem:[#allocation2 + $0x1f0] sm:$0x1]
    %v1970 = vld [vmem:[#allocation2 + $0x1f8] sm:$0x1]
    %v1971 = vld [vmem:[#allocation2 + $0x200] sm:$0xfe]
    %v1972 = vld [vmem:[#allocation2 + $0x208] sm:$0xfe]
    %v1973 = vld [vmem:[#allocation2 + $0x210] sm:$0x1]
    %v1974 = vld [vmem:[#allocation2 + $0x218] sm:$0x1]
    %v1975 = vld [vmem:[#allocation2 + $0x220] sm:$0xfe]
    %v1976 = vld [vmem:[#allocation2 + $0x228] sm:$0xfe]
    %v1977 = vld [vmem:[#allocation2 + $0x230] sm:$0x1]
    %v1978 = vld [vmem:[#allocation2 + $0x238] sm:$0x1]
    %v1979 = vld [vmem:[#allocation2 + $0x240] sm:$0xfe]
    %v1980 = vld [vmem:[#allocation2 + $0x248] sm:$0xfe]
    %v1981 = vld [vmem:[#allocation2 + $0x250] sm:$0x1]
    %v1982 = vld [vmem:[#allocation2 + $0x258] sm:$0x1]
    %v1983 = vld [vmem:[#allocation2 + $0x260] sm:$0xfe]
    %v1984 = vld [vmem:[#allocation2 + $0x268] sm:$0xfe]
    %v1985 = vld [vmem:[#allocation2 + $0x270] sm:$0x1]
    %v1986 = vld [vmem:[#allocation2 + $0x278] sm:$0x1]
    %vm2067 = vcmask 1046528
    %v2068 = vrot.slane %v1907, 1
    %v2069 = vrot.slane %v1909, 1
    %v2070 = vsel %vm2067, %v2068, %v2069
    %v2071 = vrot.slane %v1908, 1
    %v2072 = vrot.slane %v1910, 1
    %v2073 = vsel %vm2067, %v2071, %v2072
    %v2074 = vrot.slane %v1911, 1
    %v2075 = vrot.slane %v1913, 1
    %v2076 = vsel %vm2067, %v2074, %v2075
    %v2077 = vrot.slane %v1912, 1
    %v2078 = vrot.slane %v1914, 1
    %v2079 = vsel %vm2067, %v2077, %v2078
    %v2080 = vrot.slane %v1915, 1
    %v2081 = vrot.slane %v1917, 1
    %v2082 = vsel %vm2067, %v2080, %v2081
    %v2083 = vrot.slane %v1916, 1
    %v2084 = vrot.slane %v1918, 1
    %v2085 = vsel %vm2067, %v2083, %v2084
    %v2086 = vrot.slane %v1919, 1
    %v2087 = vrot.slane %v1921, 1
    %v2088 = vsel %vm2067, %v2086, %v2087
    %v2089 = vrot.slane %v1920, 1
    %v2090 = vrot.slane %v1922, 1
    %v2091 = vsel %vm2067, %v2089, %v2090
    %v2092 = vrot.slane %v1923, 1
    %v2093 = vrot.slane %v1925, 1
    %v2094 = vsel %vm2067, %v2092, %v2093
    %v2095 = vrot.slane %v1924, 1
    %v2096 = vrot.slane %v1926, 1
    %v2097 = vsel %vm2067, %v2095, %v2096
    %v2098 = vrot.slane %v1927, 1
    %v2099 = vrot.slane %v1929, 1
    %v2100 = vsel %vm2067, %v2098, %v2099
    %v2101 = vrot.slane %v1928, 1
    %v2102 = vrot.slane %v1930, 1
    %v2103 = vsel %vm2067, %v2101, %v2102
    %v2104 = vrot.slane %v1931, 1
    %v2105 = vrot.slane %v1933, 1
    %v2106 = vsel %vm2067, %v2104, %v2105
    %v2107 = vrot.slane %v1932, 1
    %v2108 = vrot.slane %v1934, 1
    %v2109 = vsel %vm2067, %v2107, %v2108
    %v2110 = vrot.slane %v1935, 1
    %v2111 = vrot.slane %v1937, 1
    %v2112 = vsel %vm2067, %v2110, %v2111
    %v2113 = vrot.slane %v1936, 1
    %v2114 = vrot.slane %v1938, 1
    %v2115 = vsel %vm2067, %v2113, %v2114
    %v2116 = vrot.slane %v1939, 1
    %v2117 = vrot.slane %v1941, 1
    %v2118 = vsel %vm2067, %v2116, %v2117
    %v2119 = vrot.slane %v1940, 1
    %v2120 = vrot.slane %v1942, 1
    %v2121 = vsel %vm2067, %v2119, %v2120
    %v2122 = vrot.slane %v1943, 1
    %v2123 = vrot.slane %v1945, 1
    %v2124 = vsel %vm2067, %v2122, %v2123
    %v2125 = vrot.slane %v1944, 1
    %v2126 = vrot.slane %v1946, 1
    %v2127 = vsel %vm2067, %v2125, %v2126
    %v2128 = vrot.slane %v1947, 1
    %v2129 = vrot.slane %v1949, 1
    %v2130 = vsel %vm2067, %v2128, %v2129
    %v2131 = vrot.slane %v1948, 1
    %v2132 = vrot.slane %v1950, 1
    %v2133 = vsel %vm2067, %v2131, %v2132
    %v2134 = vrot.slane %v1951, 1
    %v2135 = vrot.slane %v1953, 1
    %v2136 = vsel %vm2067, %v2134, %v2135
    %v2137 = vrot.slane %v1952, 1
    %v2138 = vrot.slane %v1954, 1
    %v2139 = vsel %vm2067, %v2137, %v2138
    %v2140 = vrot.slane %v1955, 1
    %v2141 = vrot.slane %v1957, 1
    %v2142 = vsel %vm2067, %v2140, %v2141
    %v2143 = vrot.slane %v1956, 1
    %v2144 = vrot.slane %v1958, 1
    %v2145 = vsel %vm2067, %v2143, %v2144
    %v2146 = vrot.slane %v1959, 1
    %v2147 = vrot.slane %v1961, 1
    %v2148 = vsel %vm2067, %v2146, %v2147
    %v2149 = vrot.slane %v1960, 1
    %v2150 = vrot.slane %v1962, 1
    %v2151 = vsel %vm2067, %v2149, %v2150
    %v2152 = vrot.slane %v1963, 1
    %v2153 = vrot.slane %v1965, 1
    %v2154 = vsel %vm2067, %v2152, %v2153
    %v2155 = vrot.slane %v1964, 1
    %v2156 = vrot.slane %v1966, 1
    %v2157 = vsel %vm2067, %v2155, %v2156
    %v2158 = vrot.slane %v1967, 1
    %v2159 = vrot.slane %v1969, 1
    %v2160 = vsel %vm2067, %v2158, %v2159
    %v2161 = vrot.slane %v1968, 1
    %v2162 = vrot.slane %v1970, 1
    %v2163 = vsel %vm2067, %v2161, %v2162
    %v2164 = vrot.slane %v1971, 1
    %v2165 = vrot.slane %v1973, 1
    %v2166 = vsel %vm2067, %v2164, %v2165
    %v2167 = vrot.slane %v1972, 1
    %v2168 = vrot.slane %v1974, 1
    %v2169 = vsel %vm2067, %v2167, %v2168
    %v2170 = vrot.slane %v1975, 1
    %v2171 = vrot.slane %v1977, 1
    %v2172 = vsel %vm2067, %v2170, %v2171
    %v2173 = vrot.slane %v1976, 1
    %v2174 = vrot.slane %v1978, 1
    %v2175 = vsel %vm2067, %v2173, %v2174
    %v2176 = vrot.slane %v1979, 1
    %v2177 = vrot.slane %v1981, 1
    %v2178 = vsel %vm2067, %v2176, %v2177
    %v2179 = vrot.slane %v1980, 1
    %v2180 = vrot.slane %v1982, 1
    %v2181 = vsel %vm2067, %v2179, %v2180
    %v2182 = vrot.slane %v1983, 1
    %v2183 = vrot.slane %v1985, 1
    %v2184 = vsel %vm2067, %v2182, %v2183
    %v2185 = vrot.slane %v1984, 1
    %v2186 = vrot.slane %v1986, 1
    %v2187 = vsel %vm2067, %v2185, %v2186
    %2228 = vst [vmem:[#allocation4] sm:$0xff] %v2070
    %2229 = vst [vmem:[#allocation4 + $0x8] sm:$0xff] %v2073
    %2230 = vst [vmem:[#allocation4 + $0x10] sm:$0xff] %v2076
    %2231 = vst [vmem:[#allocation4 + $0x18] sm:$0xff] %v2079
    %2232 = vst [vmem:[#allocation4 + $0x20] sm:$0xff] %v2082
    %2233 = vst [vmem:[#allocation4 + $0x28] sm:$0xff] %v2085
    %2234 = vst [vmem:[#allocation4 + $0x30] sm:$0xff] %v2088
    %2235 = vst [vmem:[#allocation4 + $0x38] sm:$0xff] %v2091
    %2236 = vst [vmem:[#allocation4 + $0x40] sm:$0xff] %v2094
    %2237 = vst [vmem:[#allocation4 + $0x48] sm:$0xff] %v2097
    %2238 = vst [vmem:[#allocation4 + $0x50] sm:$0xff] %v2100
    %2239 = vst [vmem:[#allocation4 + $0x58] sm:$0xff] %v2103
    %2240 = vst [vmem:[#allocation4 + $0x60] sm:$0xff] %v2106
    %2241 = vst [vmem:[#allocation4 + $0x68] sm:$0xff] %v2109
    %2242 = vst [vmem:[#allocation4 + $0x70] sm:$0xff] %v2112
    %2243 = vst [vmem:[#allocation4 + $0x78] sm:$0xff] %v2115
    %2244 = vst [vmem:[#allocation4 + $0x80] sm:$0xff] %v2118
    %2245 = vst [vmem:[#allocation4 + $0x88] sm:$0xff] %v2121
    %2246 = vst [vmem:[#allocation4 + $0x90] sm:$0xff] %v2124
    %2247 = vst [vmem:[#allocation4 + $0x98] sm:$0xff] %v2127
    %2248 = vst [vmem:[#allocation4 + $0xa0] sm:$0xff] %v2130
    %2249 = vst [vmem:[#allocation4 + $0xa8] sm:$0xff] %v2133
    %2250 = vst [vmem:[#allocation4 + $0xb0] sm:$0xff] %v2136
    %2251 = vst [vmem:[#allocation4 + $0xb8] sm:$0xff] %v2139
    %2252 = vst [vmem:[#allocation4 + $0xc0] sm:$0xff] %v2142
    %2253 = vst [vmem:[#allocation4 + $0xc8] sm:$0xff] %v2145
    %2254 = vst [vmem:[#allocation4 + $0xd0] sm:$0xff] %v2148
    %2255 = vst [vmem:[#allocation4 + $0xd8] sm:$0xff] %v2151
    %2256 = vst [vmem:[#allocation4 + $0xe0] sm:$0xff] %v2154
    %2257 = vst [vmem:[#allocation4 + $0xe8] sm:$0xff] %v2157
    %2258 = vst [vmem:[#allocation4 + $0xf0] sm:$0xff] %v2160
    %2259 = vst [vmem:[#allocation4 + $0xf8] sm:$0xff] %v2163
    %2260 = vst [vmem:[#allocation4 + $0x100] sm:$0xff] %v2166
    %2261 = vst [vmem:[#allocation4 + $0x108] sm:$0xff] %v2169
    %2262 = vst [vmem:[#allocation4 + $0x110] sm:$0xff] %v2172
    %2263 = vst [vmem:[#allocation4 + $0x118] sm:$0xff] %v2175
    %2264 = vst [vmem:[#allocation4 + $0x120] sm:$0xff] %v2178
    %2265 = vst [vmem:[#allocation4 + $0x128] sm:$0xff] %v2181
    %2266 = vst [vmem:[#allocation4 + $0x130] sm:$0xff] %v2184
    %2267 = vst [vmem:[#allocation4 + $0x138] sm:$0xff] %v2187
    %v2268 = vld [vmem:[#allocation4] sm:$0xff]
    %v2269 = vld [vmem:[#allocation4 + $0x8] sm:$0xff]
    %v2270 = vld [vmem:[#allocation4 + $0x10] sm:$0xff]
    %v2271 = vld [vmem:[#allocation4 + $0x18] sm:$0xff]
    %v2272 = vld [vmem:[#allocation4 + $0x20] sm:$0xff]
    %v2273 = vld [vmem:[#allocation4 + $0x28] sm:$0xff]
    %v2274 = vld [vmem:[#allocation4 + $0x30] sm:$0xff]
    %v2275 = vld [vmem:[#allocation4 + $0x38] sm:$0xff]
    %v2276 = vld [vmem:[#allocation4 + $0x40] sm:$0xff]
    %v2277 = vld [vmem:[#allocation4 + $0x48] sm:$0xff]
    %v2278 = vld [vmem:[#allocation4 + $0x50] sm:$0xff]
    %v2279 = vld [vmem:[#allocation4 + $0x58] sm:$0xff]
    %v2280 = vld [vmem:[#allocation4 + $0x60] sm:$0xff]
    %v2281 = vld [vmem:[#allocation4 + $0x68] sm:$0xff]
    %v2282 = vld [vmem:[#allocation4 + $0x70] sm:$0xff]
    %v2283 = vld [vmem:[#allocation4 + $0x78] sm:$0xff]
    %v2284 = vld [vmem:[#allocation4 + $0xa0] sm:$0xff]
    %v2285 = vld [vmem:[#allocation4 + $0xa8] sm:$0xff]
    %v2286 = vld [vmem:[#allocation4 + $0xb0] sm:$0xff]
    %v2287 = vld [vmem:[#allocation4 + $0xb8] sm:$0xff]
    %v2288 = vld [vmem:[#allocation4 + $0xc0] sm:$0xff]
    %v2289 = vld [vmem:[#allocation4 + $0xc8] sm:$0xff]
    %v2290 = vld [vmem:[#allocation4 + $0xd0] sm:$0xff]
    %v2291 = vld [vmem:[#allocation4 + $0xd8] sm:$0xff]
    %v2292 = vld [vmem:[#allocation4 + $0xe0] sm:$0xff]
    %v2293 = vld [vmem:[#allocation4 + $0xe8] sm:$0xff]
    %v2294 = vld [vmem:[#allocation4 + $0xf0] sm:$0xff]
    %v2295 = vld [vmem:[#allocation4 + $0xf8] sm:$0xff]
    %v2296 = vld [vmem:[#allocation4 + $0x100] sm:$0xff]
    %v2297 = vld [vmem:[#allocation4 + $0x108] sm:$0xff]
    %v2298 = vld [vmem:[#allocation4 + $0x110] sm:$0xff]
    %v2299 = vld [vmem:[#allocation4 + $0x118] sm:$0xff]
    %v2300 = vpack.c.bf16 %v2270, %v2268
    %v2301 = vpack.c.bf16 %v2271, %v2269
    %v2302 = vpack.c.bf16 %v2274, %v2272
    %v2303 = vpack.c.bf16 %v2275, %v2273
    %v2304 = vpack.c.bf16 %v2278, %v2276
    %v2305 = vpack.c.bf16 %v2279, %v2277
    %v2306 = vpack.c.bf16 %v2282, %v2280
    %v2307 = vpack.c.bf16 %v2283, %v2281
    %v2308 = vpack.c.bf16 %v2286, %v2284
    %v2309 = vpack.c.bf16 %v2287, %v2285
    %v2310 = vpack.c.bf16 %v2290, %v2288
    %v2311 = vpack.c.bf16 %v2291, %v2289
    %v2312 = vpack.c.bf16 %v2294, %v2292
    %v2313 = vpack.c.bf16 %v2295, %v2293
    %v2314 = vpack.c.bf16 %v2298, %v2296
    %v2315 = vpack.c.bf16 %v2299, %v2297
    %v2316 = vld [vmem:[#allocation6] sm:$0xff]
    %v2317 = vld [vmem:[#allocation6 + $0x8] sm:$0xff]
    %v2318 = vld [vmem:[#allocation6 + $0x10] sm:$0xff]
    %v2319 = vld [vmem:[#allocation6 + $0x18] sm:$0xff]
    %v2320 = vld [vmem:[#allocation6 + $0x20] sm:$0xff]
    %v2321 = vld [vmem:[#allocation6 + $0x28] sm:$0xff]
    %v2322 = vld [vmem:[#allocation6 + $0x30] sm:$0xff]
    %v2323 = vld [vmem:[#allocation6 + $0x38] sm:$0xff]
    %v2324 = vld [vmem:[#allocation6 + $0x40] sm:$0xff]
    %v2325 = vld [vmem:[#allocation6 + $0x48] sm:$0xff]
    %v2326 = vld [vmem:[#allocation6 + $0x50] sm:$0xff]
    %v2327 = vld [vmem:[#allocation6 + $0x58] sm:$0xff]
    %v2328 = vld [vmem:[#allocation6 + $0x60] sm:$0xff]
    %v2329 = vld [vmem:[#allocation6 + $0x68] sm:$0xff]
    %v2330 = vld [vmem:[#allocation6 + $0x70] sm:$0xff]
    %v2331 = vld [vmem:[#allocation6 + $0x78] sm:$0xff]
    %v2332 = vld [vmem:[#allocation6 + $0x80] sm:$0xff]
    %v2333 = vld [vmem:[#allocation6 + $0x88] sm:$0xff]
    %v2334 = vld [vmem:[#allocation6 + $0x90] sm:$0xff]
    %v2335 = vld [vmem:[#allocation6 + $0x98] sm:$0xff]
    %v2336 = vld [vmem:[#allocation6 + $0xa0] sm:$0xff]
    %v2337 = vld [vmem:[#allocation6 + $0xa8] sm:$0xff]
    %v2338 = vld [vmem:[#allocation6 + $0xb0] sm:$0xff]
    %v2339 = vld [vmem:[#allocation6 + $0xb8] sm:$0xff]
    %v2340 = vld [vmem:[#allocation6 + $0xc0] sm:$0xff]
    %v2341 = vld [vmem:[#allocation6 + $0xc8] sm:$0xff]
    %v2342 = vld [vmem:[#allocation6 + $0xd0] sm:$0xff]
    %v2343 = vld [vmem:[#allocation6 + $0xd8] sm:$0xff]
    %v2344 = vld [vmem:[#allocation6 + $0xe0] sm:$0xff]
    %v2345 = vld [vmem:[#allocation6 + $0xe8] sm:$0xff]
    %v2346 = vld [vmem:[#allocation6 + $0xf0] sm:$0xff]
    %v2347 = vld [vmem:[#allocation6 + $0xf8] sm:$0xff]
    %s2348 = scalar_lea.vmem %s1, 256
    %v2349 = vld [vmem:[%s2348] sm:$0xff]
    %v2350 = vld [vmem:[%s2348 + $0x8] sm:$0xff]
    %v2351 = vld [vmem:[%s2348 + $0x10] sm:$0xff]
    %v2352 = vld [vmem:[%s2348 + $0x18] sm:$0xff]
    %v2353 = vld [vmem:[%s2348 + $0x20] sm:$0xff]
    %v2354 = vld [vmem:[%s2348 + $0x28] sm:$0xff]
    %v2355 = vld [vmem:[%s2348 + $0x30] sm:$0xff]
    %v2356 = vld [vmem:[%s2348 + $0x38] sm:$0xff]
    %v2357 = vld [vmem:[%s2348 + $0x40] sm:$0xff]
    %v2358 = vld [vmem:[%s2348 + $0x48] sm:$0xff]
    %v2359 = vld [vmem:[%s2348 + $0x50] sm:$0xff]
    %v2360 = vld [vmem:[%s2348 + $0x58] sm:$0xff]
    %v2361 = vld [vmem:[%s2348 + $0x60] sm:$0xff]
    %v2362 = vld [vmem:[%s2348 + $0x68] sm:$0xff]
    %v2363 = vld [vmem:[%s2348 + $0x70] sm:$0xff]
    %v2364 = vld [vmem:[%s2348 + $0x78] sm:$0xff]
    %v2365 = vld [vmem:[%s2348 + $0x80] sm:$0xff]
    %v2366 = vld [vmem:[%s2348 + $0x88] sm:$0xff]
    %v2367 = vld [vmem:[%s2348 + $0x90] sm:$0xff]
    %v2368 = vld [vmem:[%s2348 + $0x98] sm:$0xff]
    %v2369 = vld [vmem:[%s2348 + $0xa0] sm:$0xff]
    %v2370 = vld [vmem:[%s2348 + $0xa8] sm:$0xff]
    %v2371 = vld [vmem:[%s2348 + $0xb0] sm:$0xff]
    %v2372 = vld [vmem:[%s2348 + $0xb8] sm:$0xff]
    %v2373 = vld [vmem:[%s2348 + $0xc0] sm:$0xff]
    %v2374 = vld [vmem:[%s2348 + $0xc8] sm:$0xff]
    %v2375 = vld [vmem:[%s2348 + $0xd0] sm:$0xff]
    %v2376 = vld [vmem:[%s2348 + $0xd8] sm:$0xff]
    %v2377 = vld [vmem:[%s2348 + $0xe0] sm:$0xff]
    %v2378 = vld [vmem:[%s2348 + $0xe8] sm:$0xff]
    %v2379 = vld [vmem:[%s2348 + $0xf0] sm:$0xff]
    %v2380 = vld [vmem:[%s2348 + $0xf8] sm:$0xff]
    %v2413 = vunpack.c.l.b16 %v2349
    %v2414 = vunpack.c.h.b16 %v2349
    %v2415 = vunpack.c.l.b16 %v2350
    %v2416 = vunpack.c.h.b16 %v2350
    %v2417 = vunpack.c.l.b16 %v2351
    %v2418 = vunpack.c.h.b16 %v2351
    %v2419 = vunpack.c.l.b16 %v2352
    %v2420 = vunpack.c.h.b16 %v2352
    %v2421 = vunpack.c.l.b16 %v2353
    %v2422 = vunpack.c.h.b16 %v2353
    %v2423 = vunpack.c.l.b16 %v2354
    %v2424 = vunpack.c.h.b16 %v2354
    %v2425 = vunpack.c.l.b16 %v2355
    %v2426 = vunpack.c.h.b16 %v2355
    %v2427 = vunpack.c.l.b16 %v2356
    %v2428 = vunpack.c.h.b16 %v2356
    %v2429 = vunpack.c.l.b16 %v2357
    %v2430 = vunpack.c.h.b16 %v2357
    %v2431 = vunpack.c.l.b16 %v2358
    %v2432 = vunpack.c.h.b16 %v2358
    %v2433 = vunpack.c.l.b16 %v2359
    %v2434 = vunpack.c.h.b16 %v2359
    %v2435 = vunpack.c.l.b16 %v2360
    %v2436 = vunpack.c.h.b16 %v2360
    %v2437 = vunpack.c.l.b16 %v2361
    %v2438 = vunpack.c.h.b16 %v2361
    %v2439 = vunpack.c.l.b16 %v2362
    %v2440 = vunpack.c.h.b16 %v2362
    %v2441 = vunpack.c.l.b16 %v2363
    %v2442 = vunpack.c.h.b16 %v2363
    %v2443 = vunpack.c.l.b16 %v2364
    %v2444 = vunpack.c.h.b16 %v2364
    %v2445 = vunpack.c.l.b16 %v2365
    %v2446 = vunpack.c.h.b16 %v2365
    %v2447 = vunpack.c.l.b16 %v2366
    %v2448 = vunpack.c.h.b16 %v2366
    %v2449 = vunpack.c.l.b16 %v2367
    %v2450 = vunpack.c.h.b16 %v2367
    %v2451 = vunpack.c.l.b16 %v2368
    %v2452 = vunpack.c.h.b16 %v2368
    %v2453 = vunpack.c.l.b16 %v2369
    %v2454 = vunpack.c.h.b16 %v2369
    %v2455 = vunpack.c.l.b16 %v2370
    %v2456 = vunpack.c.h.b16 %v2370
    %v2457 = vunpack.c.l.b16 %v2371
    %v2458 = vunpack.c.h.b16 %v2371
    %v2459 = vunpack.c.l.b16 %v2372
    %v2460 = vunpack.c.h.b16 %v2372
    %v2461 = vunpack.c.l.b16 %v2373
    %v2462 = vunpack.c.h.b16 %v2373
    %v2463 = vunpack.c.l.b16 %v2374
    %v2464 = vunpack.c.h.b16 %v2374
    %v2465 = vunpack.c.l.b16 %v2375
    %v2466 = vunpack.c.h.b16 %v2375
    %v2467 = vunpack.c.l.b16 %v2376
    %v2468 = vunpack.c.h.b16 %v2376
    %v2469 = vunpack.c.l.b16 %v2377
    %v2470 = vunpack.c.h.b16 %v2377
    %v2471 = vunpack.c.l.b16 %v2378
    %v2472 = vunpack.c.h.b16 %v2378
    %v2473 = vunpack.c.l.b16 %v2379
    %v2474 = vunpack.c.h.b16 %v2379
    %v2475 = vunpack.c.l.b16 %v2380
    %v2476 = vunpack.c.h.b16 %v2380
    %v2477 = vpack.c.b16 %v2415, %v2413
    %v2478 = vpack.c.b16 %v2416, %v2414
    %v2479 = vpack.c.b16 %v2419, %v2417
    %v2480 = vpack.c.b16 %v2420, %v2418
    %v2481 = vpack.c.b16 %v2423, %v2421
    %v2482 = vpack.c.b16 %v2424, %v2422
    %v2483 = vpack.c.b16 %v2427, %v2425
    %v2484 = vpack.c.b16 %v2428, %v2426
    %v2485 = vpack.c.b16 %v2431, %v2429
    %v2486 = vpack.c.b16 %v2432, %v2430
    %v2487 = vpack.c.b16 %v2435, %v2433
    %v2488 = vpack.c.b16 %v2436, %v2434
    %v2489 = vpack.c.b16 %v2439, %v2437
    %v2490 = vpack.c.b16 %v2440, %v2438
    %v2491 = vpack.c.b16 %v2443, %v2441
    %v2492 = vpack.c.b16 %v2444, %v2442
    %v2493 = vpack.c.b16 %v2447, %v2445
    %v2494 = vpack.c.b16 %v2448, %v2446
    %v2495 = vpack.c.b16 %v2451, %v2449
    %v2496 = vpack.c.b16 %v2452, %v2450
    %v2497 = vpack.c.b16 %v2455, %v2453
    %v2498 = vpack.c.b16 %v2456, %v2454
    %v2499 = vpack.c.b16 %v2459, %v2457
    %v2500 = vpack.c.b16 %v2460, %v2458
    %v2501 = vpack.c.b16 %v2463, %v2461
    %v2502 = vpack.c.b16 %v2464, %v2462
    %v2503 = vpack.c.b16 %v2467, %v2465
    %v2504 = vpack.c.b16 %v2468, %v2466
    %v2505 = vpack.c.b16 %v2471, %v2469
    %v2506 = vpack.c.b16 %v2472, %v2470
    %v2507 = vpack.c.b16 %v2475, %v2473
    %v2508 = vpack.c.b16 %v2476, %v2474
    %2541 = vmatprep.subr.bf16.mxu0 %v2478
    %2542 = vmatpush1.bf16.msra.mxu0 %v2477
    %2543 = vmatprep.subr.bf16.mxu0 %v2480
    %2544 = vmatpush1.bf16.msra.mxu0 %v2479
    %2545 = vmatprep.subr.bf16.mxu0 %v2482
    %2546 = vmatpush1.bf16.msra.mxu0 %v2481
    %2547 = vmatprep.subr.bf16.mxu0 %v2484
    %2548 = vmatpush1.bf16.msra.mxu0 %v2483
    %2549 = vmatprep.subr.bf16.mxu0 %v2486
    %2550 = vmatpush1.bf16.msra.mxu0 %v2485
    %2551 = vmatprep.subr.bf16.mxu0 %v2488
    %2552 = vmatpush1.bf16.msra.mxu0 %v2487
    %2553 = vmatprep.subr.bf16.mxu0 %v2490
    %2554 = vmatpush1.bf16.msra.mxu0 %v2489
    %2555 = vmatprep.subr.bf16.mxu0 %v2492
    %2556 = vmatpush1.bf16.msra.mxu0 %v2491
    %2557 = vmatprep.subr.bf16.mxu0 %v2494
    %2558 = vmatpush1.bf16.msra.mxu0 %v2493
    %2559 = vmatprep.subr.bf16.mxu0 %v2496
    %2560 = vmatpush1.bf16.msra.mxu0 %v2495
    %2561 = vmatprep.subr.bf16.mxu0 %v2498
    %2562 = vmatpush1.bf16.msra.mxu0 %v2497
    %2563 = vmatprep.subr.bf16.mxu0 %v2500
    %2564 = vmatpush1.bf16.msra.mxu0 %v2499
    %2565 = vmatprep.subr.bf16.mxu0 %v2502
    %2566 = vmatpush1.bf16.msra.mxu0 %v2501
    %2567 = vmatprep.subr.bf16.mxu0 %v2504
    %2568 = vmatpush1.bf16.msra.mxu0 %v2503
    %2569 = vmatprep.subr.bf16.mxu0 %v2506
    %2570 = vmatpush1.bf16.msra.mxu0 %v2505
    %2571 = vmatprep.subr.bf16.mxu0 %v2508
    %2572 = vmatpush1.bf16.msra.mxu0 %v2507
    %2573 = vmatprep.mubr.bf16.mxu0 %v2301
    %2574 = vmatmul.mubr.bf16.gmra.mrb[0].mxu0 %v2300
    %v2575 = vpop.f32.mrb[0].mxu0
    %v2576 = vadd.f32 0.0, %v2575
    %v2577 = vpop.f32.mrb[0].mxu0
    %v2578 = vadd.f32 0.0, %v2577
    %v2579 = vpop.f32.mrb[0].mxu0
    %v2580 = vadd.f32 0.0, %v2579
    %v2581 = vpop.f32.mrb[0].mxu0
    %v2582 = vadd.f32 0.0, %v2581
    %2583 = vmatprep.mubr.bf16.mxu0 %v2303
    %2584 = vmatmul.mubr.bf16.gmra.mrb[0].mxu0 %v2302
    %v2585 = vpop.f32.mrb[0].mxu0
    %v2586 = vadd.f32 0.0, %v2585
    %v2587 = vpop.f32.mrb[0].mxu0
    %v2588 = vadd.f32 0.0, %v2587
    %v2589 = vpop.f32.mrb[0].mxu0
    %v2590 = vadd.f32 0.0, %v2589
    %v2591 = vpop.f32.mrb[0].mxu0
    %v2592 = vadd.f32 0.0, %v2591
    %2593 = vmatprep.mubr.bf16.mxu0 %v2305
    %2594 = vmatmul.mubr.bf16.gmra.mrb[0].mxu0 %v2304
    %v2595 = vpop.f32.mrb[0].mxu0
    %v2596 = vadd.f32 0.0, %v2595
    %v2597 = vpop.f32.mrb[0].mxu0
    %v2598 = vadd.f32 0.0, %v2597
    %v2599 = vpop.f32.mrb[0].mxu0
    %v2600 = vadd.f32 0.0, %v2599
    %v2601 = vpop.f32.mrb[0].mxu0
    %v2602 = vadd.f32 0.0, %v2601
    %2603 = vmatprep.mubr.bf16.mxu0 %v2307
    %2604 = vmatmul.mubr.bf16.gmra.mrb[0].mxu0 %v2306
    %v2605 = vpop.f32.mrb[0].mxu0
    %v2606 = vadd.f32 0.0, %v2605
    %v2607 = vpop.f32.mrb[0].mxu0
    %v2608 = vadd.f32 0.0, %v2607
    %v2609 = vpop.f32.mrb[0].mxu0
    %v2610 = vadd.f32 0.0, %v2609
    %v2611 = vpop.f32.mrb[0].mxu0
    %v2612 = vadd.f32 0.0, %v2611
    %2613 = vmatprep.mubr.bf16.mxu0 %v2309
    %2614 = vmatmul.mubr.bf16.gmra.mrb[0].mxu0 %v2308
    %v2615 = vpop.f32.mrb[0].mxu0
    %v2616 = vadd.f32 0.0, %v2615
    %v2617 = vpop.f32.mrb[0].mxu0
    %v2618 = vadd.f32 0.0, %v2617
    %v2619 = vpop.f32.mrb[0].mxu0
    %v2620 = vadd.f32 0.0, %v2619
    %v2621 = vpop.f32.mrb[0].mxu0
    %v2622 = vadd.f32 0.0, %v2621
    %2623 = vmatprep.mubr.bf16.mxu0 %v2311
    %2624 = vmatmul.mubr.bf16.gmra.mrb[0].mxu0 %v2310
    %v2625 = vpop.f32.mrb[0].mxu0
    %v2626 = vadd.f32 0.0, %v2625
    %v2627 = vpop.f32.mrb[0].mxu0
    %v2628 = vadd.f32 0.0, %v2627
    %v2629 = vpop.f32.mrb[0].mxu0
    %v2630 = vadd.f32 0.0, %v2629
    %v2631 = vpop.f32.mrb[0].mxu0
    %v2632 = vadd.f32 0.0, %v2631
    %2633 = vmatprep.mubr.bf16.mxu0 %v2313
    %2634 = vmatmul.mubr.bf16.gmra.mrb[0].mxu0 %v2312
    %v2635 = vpop.f32.mrb[0].mxu0
    %v2636 = vadd.f32 0.0, %v2635
    %v2637 = vpop.f32.mrb[0].mxu0
    %v2638 = vadd.f32 0.0, %v2637
    %v2639 = vpop.f32.mrb[0].mxu0
    %v2640 = vadd.f32 0.0, %v2639
    %v2641 = vpop.f32.mrb[0].mxu0
    %v2642 = vadd.f32 0.0, %v2641
    %2643 = vmatprep.mubr.bf16.mxu0 %v2315
    %2644 = vmatmul.mubr.bf16.gmra.mrb[0].mxu0 %v2314
    %v2645 = vpop.f32.mrb[0].mxu0
    %v2646 = vadd.f32 0.0, %v2645
    %v2647 = vpop.f32.mrb[0].mxu0
    %v2648 = vadd.f32 0.0, %v2647
    %v2649 = vpop.f32.mrb[0].mxu0
    %v2650 = vadd.f32 0.0, %v2649
    %v2651 = vpop.f32.mrb[0].mxu0
    %v2652 = vadd.f32 0.0, %v2651
    %2653 = vdwg.mxu0
    %v2654 = vadd.f32 %v2316, %v2576
    %v2655 = vadd.f32 %v2317, %v2578
    %v2656 = vadd.f32 %v2318, %v2580
    %v2657 = vadd.f32 %v2319, %v2582
    %v2658 = vadd.f32 %v2320, %v2586
    %v2659 = vadd.f32 %v2321, %v2588
    %v2660 = vadd.f32 %v2322, %v2590
    %v2661 = vadd.f32 %v2323, %v2592
    %v2662 = vadd.f32 %v2324, %v2596
    %v2663 = vadd.f32 %v2325, %v2598
    %v2664 = vadd.f32 %v2326, %v2600
    %v2665 = vadd.f32 %v2327, %v2602
    %v2666 = vadd.f32 %v2328, %v2606
    %v2667 = vadd.f32 %v2329, %v2608
    %v2668 = vadd.f32 %v2330, %v2610
    %v2669 = vadd.f32 %v2331, %v2612
    %v2670 = vadd.f32 %v2332, %v2616
    %v2671 = vadd.f32 %v2333, %v2618
    %v2672 = vadd.f32 %v2334, %v2620
    %v2673 = vadd.f32 %v2335, %v2622
    %v2674 = vadd.f32 %v2336, %v2626
    %v2675 = vadd.f32 %v2337, %v2628
    %v2676 = vadd.f32 %v2338, %v2630
    %v2677 = vadd.f32 %v2339, %v2632
    %v2678 = vadd.f32 %v2340, %v2636
    %v2679 = vadd.f32 %v2341, %v2638
    %v2680 = vadd.f32 %v2342, %v2640
    %v2681 = vadd.f32 %v2343, %v2642
    %v2682 = vadd.f32 %v2344, %v2646
    %v2683 = vadd.f32 %v2345, %v2648
    %v2684 = vadd.f32 %v2346, %v2650
    %v2685 = vadd.f32 %v2347, %v2652
    %2686 = vst [vmem:[#allocation6] sm:$0xff] %v2654
    %2687 = vst [vmem:[#allocation6 + $0x8] sm:$0xff] %v2655
    %2688 = vst [vmem:[#allocation6 + $0x10] sm:$0xff] %v2656
    %2689 = vst [vmem:[#allocation6 + $0x18] sm:$0xff] %v2657
    %2690 = vst [vmem:[#allocation6 + $0x20] sm:$0xff] %v2658
    %2691 = vst [vmem:[#allocation6 + $0x28] sm:$0xff] %v2659
    %2692 = vst [vmem:[#allocation6 + $0x30] sm:$0xff] %v2660
    %2693 = vst [vmem:[#allocation6 + $0x38] sm:$0xff] %v2661
    %2694 = vst [vmem:[#allocation6 + $0x40] sm:$0xff] %v2662
    %2695 = vst [vmem:[#allocation6 + $0x48] sm:$0xff] %v2663
    %2696 = vst [vmem:[#allocation6 + $0x50] sm:$0xff] %v2664
    %2697 = vst [vmem:[#allocation6 + $0x58] sm:$0xff] %v2665
    %2698 = vst [vmem:[#allocation6 + $0x60] sm:$0xff] %v2666
    %2699 = vst [vmem:[#allocation6 + $0x68] sm:$0xff] %v2667
    %2700 = vst [vmem:[#allocation6 + $0x70] sm:$0xff] %v2668
    %2701 = vst [vmem:[#allocation6 + $0x78] sm:$0xff] %v2669
    %2702 = vst [vmem:[#allocation6 + $0x80] sm:$0xff] %v2670
    %2703 = vst [vmem:[#allocation6 + $0x88] sm:$0xff] %v2671
    %2704 = vst [vmem:[#allocation6 + $0x90] sm:$0xff] %v2672
    %2705 = vst [vmem:[#allocation6 + $0x98] sm:$0xff] %v2673
    %2706 = vst [vmem:[#allocation6 + $0xa0] sm:$0xff] %v2674
    %2707 = vst [vmem:[#allocation6 + $0xa8] sm:$0xff] %v2675
    %2708 = vst [vmem:[#allocation6 + $0xb0] sm:$0xff] %v2676
    %2709 = vst [vmem:[#allocation6 + $0xb8] sm:$0xff] %v2677
    %2710 = vst [vmem:[#allocation6 + $0xc0] sm:$0xff] %v2678
    %2711 = vst [vmem:[#allocation6 + $0xc8] sm:$0xff] %v2679
    %2712 = vst [vmem:[#allocation6 + $0xd0] sm:$0xff] %v2680
    %2713 = vst [vmem:[#allocation6 + $0xd8] sm:$0xff] %v2681
    %2714 = vst [vmem:[#allocation6 + $0xe0] sm:$0xff] %v2682
    %2715 = vst [vmem:[#allocation6 + $0xe8] sm:$0xff] %v2683
    %2716 = vst [vmem:[#allocation6 + $0xf0] sm:$0xff] %v2684
    %2717 = vst [vmem:[#allocation6 + $0xf8] sm:$0xff] %v2685
    %v2718 = vld [vmem:[%s1005] sm:$0xff]
    %v2719 = vld [vmem:[%s1005 + $0x8] sm:$0xff]
    %v2720 = vld [vmem:[%s1005 + $0x10] sm:$0xff]
    %v2721 = vld [vmem:[%s1005 + $0x18] sm:$0xff]
    %v2722 = vld [vmem:[%s1005 + $0x20] sm:$0xff]
    %v2723 = vld [vmem:[%s1005 + $0x28] sm:$0xff]
    %v2724 = vld [vmem:[%s1005 + $0x30] sm:$0xff]
    %v2725 = vld [vmem:[%s1005 + $0x38] sm:$0xff]
    %v2726 = vld [vmem:[%s1005 + $0x40] sm:$0xff]
    %v2727 = vld [vmem:[%s1005 + $0x48] sm:$0xff]
    %v2728 = vld [vmem:[%s1005 + $0x50] sm:$0xff]
    %v2729 = vld [vmem:[%s1005 + $0x58] sm:$0xff]
    %v2730 = vld [vmem:[%s1005 + $0x60] sm:$0xff]
    %v2731 = vld [vmem:[%s1005 + $0x68] sm:$0xff]
    %v2732 = vld [vmem:[%s1005 + $0x70] sm:$0xff]
    %v2733 = vld [vmem:[%s1005 + $0x78] sm:$0xff]
    %v2734 = vld [vmem:[%s1005 + $0xa0] sm:$0xff]
    %v2735 = vld [vmem:[%s1005 + $0xa8] sm:$0xff]
    %v2736 = vld [vmem:[%s1005 + $0xb0] sm:$0xff]
    %v2737 = vld [vmem:[%s1005 + $0xb8] sm:$0xff]
    %v2738 = vld [vmem:[%s1005 + $0xc0] sm:$0xff]
    %v2739 = vld [vmem:[%s1005 + $0xc8] sm:$0xff]
    %v2740 = vld [vmem:[%s1005 + $0xd0] sm:$0xff]
    %v2741 = vld [vmem:[%s1005 + $0xd8] sm:$0xff]
    %v2742 = vld [vmem:[%s1005 + $0xe0] sm:$0xff]
    %v2743 = vld [vmem:[%s1005 + $0xe8] sm:$0xff]
    %v2744 = vld [vmem:[%s1005 + $0xf0] sm:$0xff]
    %v2745 = vld [vmem:[%s1005 + $0xf8] sm:$0xff]
    %v2746 = vld [vmem:[%s1005 + $0x100] sm:$0xff]
    %v2747 = vld [vmem:[%s1005 + $0x108] sm:$0xff]
    %v2748 = vld [vmem:[%s1005 + $0x110] sm:$0xff]
    %v2749 = vld [vmem:[%s1005 + $0x118] sm:$0xff]
    %v2750 = vpack.c.bf16 %v2720, %v2718
    %v2751 = vpack.c.bf16 %v2721, %v2719
    %v2752 = vpack.c.bf16 %v2724, %v2722
    %v2753 = vpack.c.bf16 %v2725, %v2723
    %v2754 = vpack.c.bf16 %v2728, %v2726
    %v2755 = vpack.c.bf16 %v2729, %v2727
    %v2756 = vpack.c.bf16 %v2732, %v2730
    %v2757 = vpack.c.bf16 %v2733, %v2731
    %v2758 = vpack.c.bf16 %v2736, %v2734
    %v2759 = vpack.c.bf16 %v2737, %v2735
    %v2760 = vpack.c.bf16 %v2740, %v2738
    %v2761 = vpack.c.bf16 %v2741, %v2739
    %v2762 = vpack.c.bf16 %v2744, %v2742
    %v2763 = vpack.c.bf16 %v2745, %v2743
    %v2764 = vpack.c.bf16 %v2748, %v2746
    %v2765 = vpack.c.bf16 %v2749, %v2747
    %v2766 = vld [vmem:[#allocation6] sm:$0xff]
    %v2767 = vld [vmem:[#allocation6 + $0x8] sm:$0xff]
    %v2768 = vld [vmem:[#allocation6 + $0x10] sm:$0xff]
    %v2769 = vld [vmem:[#allocation6 + $0x18] sm:$0xff]
    %v2770 = vld [vmem:[#allocation6 + $0x20] sm:$0xff]
    %v2771 = vld [vmem:[#allocation6 + $0x28] sm:$0xff]
    %v2772 = vld [vmem:[#allocation6 + $0x30] sm:$0xff]
    %v2773 = vld [vmem:[#allocation6 + $0x38] sm:$0xff]
    %v2774 = vld [vmem:[#allocation6 + $0x40] sm:$0xff]
    %v2775 = vld [vmem:[#allocation6 + $0x48] sm:$0xff]
    %v2776 = vld [vmem:[#allocation6 + $0x50] sm:$0xff]
    %v2777 = vld [vmem:[#allocation6 + $0x58] sm:$0xff]
    %v2778 = vld [vmem:[#allocation6 + $0x60] sm:$0xff]
    %v2779 = vld [vmem:[#allocation6 + $0x68] sm:$0xff]
    %v2780 = vld [vmem:[#allocation6 + $0x70] sm:$0xff]
    %v2781 = vld [vmem:[#allocation6 + $0x78] sm:$0xff]
    %v2782 = vld [vmem:[#allocation6 + $0x80] sm:$0xff]
    %v2783 = vld [vmem:[#allocation6 + $0x88] sm:$0xff]
    %v2784 = vld [vmem:[#allocation6 + $0x90] sm:$0xff]
    %v2785 = vld [vmem:[#allocation6 + $0x98] sm:$0xff]
    %v2786 = vld [vmem:[#allocation6 + $0xa0] sm:$0xff]
    %v2787 = vld [vmem:[#allocation6 + $0xa8] sm:$0xff]
    %v2788 = vld [vmem:[#allocation6 + $0xb0] sm:$0xff]
    %v2789 = vld [vmem:[#allocation6 + $0xb8] sm:$0xff]
    %v2790 = vld [vmem:[#allocation6 + $0xc0] sm:$0xff]
    %v2791 = vld [vmem:[#allocation6 + $0xc8] sm:$0xff]
    %v2792 = vld [vmem:[#allocation6 + $0xd0] sm:$0xff]
    %v2793 = vld [vmem:[#allocation6 + $0xd8] sm:$0xff]
    %v2794 = vld [vmem:[#allocation6 + $0xe0] sm:$0xff]
    %v2795 = vld [vmem:[#allocation6 + $0xe8] sm:$0xff]
    %v2796 = vld [vmem:[#allocation6 + $0xf0] sm:$0xff]
    %v2797 = vld [vmem:[#allocation6 + $0xf8] sm:$0xff]
    %s2798 = scalar_lea.vmem %s1, 1024
    %v2799 = vld [vmem:[%s2798] sm:$0xff]
    %v2800 = vld [vmem:[%s2798 + $0x8] sm:$0xff]
    %v2801 = vld [vmem:[%s2798 + $0x10] sm:$0xff]
    %v2802 = vld [vmem:[%s2798 + $0x18] sm:$0xff]
    %v2803 = vld [vmem:[%s2798 + $0x20] sm:$0xff]
    %v2804 = vld [vmem:[%s2798 + $0x28] sm:$0xff]
    %v2805 = vld [vmem:[%s2798 + $0x30] sm:$0xff]
    %v2806 = vld [vmem:[%s2798 + $0x38] sm:$0xff]
    %v2807 = vld [vmem:[%s2798 + $0x40] sm:$0xff]
    %v2808 = vld [vmem:[%s2798 + $0x48] sm:$0xff]
    %v2809 = vld [vmem:[%s2798 + $0x50] sm:$0xff]
    %v2810 = vld [vmem:[%s2798 + $0x58] sm:$0xff]
    %v2811 = vld [vmem:[%s2798 + $0x60] sm:$0xff]
    %v2812 = vld [vmem:[%s2798 + $0x68] sm:$0xff]
    %v2813 = vld [vmem:[%s2798 + $0x70] sm:$0xff]
    %v2814 = vld [vmem:[%s2798 + $0x78] sm:$0xff]
    %v2815 = vld [vmem:[%s2798 + $0x80] sm:$0xff]
    %v2816 = vld [vmem:[%s2798 + $0x88] sm:$0xff]
    %v2817 = vld [vmem:[%s2798 + $0x90] sm:$0xff]
    %v2818 = vld [vmem:[%s2798 + $0x98] sm:$0xff]
    %v2819 = vld [vmem:[%s2798 + $0xa0] sm:$0xff]
    %v2820 = vld [vmem:[%s2798 + $0xa8] sm:$0xff]
    %v2821 = vld [vmem:[%s2798 + $0xb0] sm:$0xff]
    %v2822 = vld [vmem:[%s2798 + $0xb8] sm:$0xff]
    %v2823 = vld [vmem:[%s2798 + $0xc0] sm:$0xff]
    %v2824 = vld [vmem:[%s2798 + $0xc8] sm:$0xff]
    %v2825 = vld [vmem:[%s2798 + $0xd0] sm:$0xff]
    %v2826 = vld [vmem:[%s2798 + $0xd8] sm:$0xff]
    %v2827 = vld [vmem:[%s2798 + $0xe0] sm:$0xff]
    %v2828 = vld [vmem:[%s2798 + $0xe8] sm:$0xff]
    %v2829 = vld [vmem:[%s2798 + $0xf0] sm:$0xff]
    %v2830 = vld [vmem:[%s2798 + $0xf8] sm:$0xff]
    %v2863 = vunpack.c.l.b16 %v2799
    %v2864 = vunpack.c.h.b16 %v2799
    %v2865 = vunpack.c.l.b16 %v2800
    %v2866 = vunpack.c.h.b16 %v2800
    %v2867 = vunpack.c.l.b16 %v2801
    %v2868 = vunpack.c.h.b16 %v2801
    %v2869 = vunpack.c.l.b16 %v2802
    %v2870 = vunpack.c.h.b16 %v2802
    %v2871 = vunpack.c.l.b16 %v2803
    %v2872 = vunpack.c.h.b16 %v2803
    %v2873 = vunpack.c.l.b16 %v2804
    %v2874 = vunpack.c.h.b16 %v2804
    %v2875 = vunpack.c.l.b16 %v2805
    %v2876 = vunpack.c.h.b16 %v2805
    %v2877 = vunpack.c.l.b16 %v2806
    %v2878 = vunpack.c.h.b16 %v2806
    %v2879 = vunpack.c.l.b16 %v2807
    %v2880 = vunpack.c.h.b16 %v2807
    %v2881 = vunpack.c.l.b16 %v2808
    %v2882 = vunpack.c.h.b16 %v2808
    %v2883 = vunpack.c.l.b16 %v2809
    %v2884 = vunpack.c.h.b16 %v2809
    %v2885 = vunpack.c.l.b16 %v2810
    %v2886 = vunpack.c.h.b16 %v2810
    %v2887 = vunpack.c.l.b16 %v2811
    %v2888 = vunpack.c.h.b16 %v2811
    %v2889 = vunpack.c.l.b16 %v2812
    %v2890 = vunpack.c.h.b16 %v2812
    %v2891 = vunpack.c.l.b16 %v2813
    %v2892 = vunpack.c.h.b16 %v2813
    %v2893 = vunpack.c.l.b16 %v2814
    %v2894 = vunpack.c.h.b16 %v2814
    %v2895 = vunpack.c.l.b16 %v2815
    %v2896 = vunpack.c.h.b16 %v2815
    %v2897 = vunpack.c.l.b16 %v2816
    %v2898 = vunpack.c.h.b16 %v2816
    %v2899 = vunpack.c.l.b16 %v2817
    %v2900 = vunpack.c.h.b16 %v2817
    %v2901 = vunpack.c.l.b16 %v2818
    %v2902 = vunpack.c.h.b16 %v2818
    %v2903 = vunpack.c.l.b16 %v2819
    %v2904 = vunpack.c.h.b16 %v2819
    %v2905 = vunpack.c.l.b16 %v2820
    %v2906 = vunpack.c.h.b16 %v2820
    %v2907 = vunpack.c.l.b16 %v2821
    %v2908 = vunpack.c.h.b16 %v2821
    %v2909 = vunpack.c.l.b16 %v2822
    %v2910 = vunpack.c.h.b16 %v2822
    %v2911 = vunpack.c.l.b16 %v2823
    %v2912 = vunpack.c.h.b16 %v2823
    %v2913 = vunpack.c.l.b16 %v2824
    %v2914 = vunpack.c.h.b16 %v2824
    %v2915 = vunpack.c.l.b16 %v2825
    %v2916 = vunpack.c.h.b16 %v2825
    %v2917 = vunpack.c.l.b16 %v2826
    %v2918 = vunpack.c.h.b16 %v2826
    %v2919 = vunpack.c.l.b16 %v2827
    %v2920 = vunpack.c.h.b16 %v2827
    %v2921 = vunpack.c.l.b16 %v2828
    %v2922 = vunpack.c.h.b16 %v2828
    %v2923 = vunpack.c.l.b16 %v2829
    %v2924 = vunpack.c.h.b16 %v2829
    %v2925 = vunpack.c.l.b16 %v2830
    %v2926 = vunpack.c.h.b16 %v2830
    %v2927 = vpack.c.b16 %v2865, %v2863
    %v2928 = vpack.c.b16 %v2866, %v2864
    %v2929 = vpack.c.b16 %v2869, %v2867
    %v2930 = vpack.c.b16 %v2870, %v2868
    %v2931 = vpack.c.b16 %v2873, %v2871
    %v2932 = vpack.c.b16 %v2874, %v2872
    %v2933 = vpack.c.b16 %v2877, %v2875
    %v2934 = vpack.c.b16 %v2878, %v2876
    %v2935 = vpack.c.b16 %v2881, %v2879
    %v2936 = vpack.c.b16 %v2882, %v2880
    %v2937 = vpack.c.b16 %v2885, %v2883
    %v2938 = vpack.c.b16 %v2886, %v2884
    %v2939 = vpack.c.b16 %v2889, %v2887
    %v2940 = vpack.c.b16 %v2890, %v2888
    %v2941 = vpack.c.b16 %v2893, %v2891
    %v2942 = vpack.c.b16 %v2894, %v2892
    %v2943 = vpack.c.b16 %v2897, %v2895
    %v2944 = vpack.c.b16 %v2898, %v2896
    %v2945 = vpack.c.b16 %v2901, %v2899
    %v2946 = vpack.c.b16 %v2902, %v2900
    %v2947 = vpack.c.b16 %v2905, %v2903
    %v2948 = vpack.c.b16 %v2906, %v2904
    %v2949 = vpack.c.b16 %v2909, %v2907
    %v2950 = vpack.c.b16 %v2910, %v2908
    %v2951 = vpack.c.b16 %v2913, %v2911
    %v2952 = vpack.c.b16 %v2914, %v2912
    %v2953 = vpack.c.b16 %v2917, %v2915
    %v2954 = vpack.c.b16 %v2918, %v2916
    %v2955 = vpack.c.b16 %v2921, %v2919
    %v2956 = vpack.c.b16 %v2922, %v2920
    %v2957 = vpack.c.b16 %v2925, %v2923
    %v2958 = vpack.c.b16 %v2926, %v2924
    %2991 = vmatprep.subr.bf16.mxu0 %v2928
    %2992 = vmatpush1.bf16.msra.mxu0 %v2927
    %2993 = vmatprep.subr.bf16.mxu0 %v2930
    %2994 = vmatpush1.bf16.msra.mxu0 %v2929
    %2995 = vmatprep.subr.bf16.mxu0 %v2932
    %2996 = vmatpush1.bf16.msra.mxu0 %v2931
    %2997 = vmatprep.subr.bf16.mxu0 %v2934
    %2998 = vmatpush1.bf16.msra.mxu0 %v2933
    %2999 = vmatprep.subr.bf16.mxu0 %v2936
    %3000 = vmatpush1.bf16.msra.mxu0 %v2935
    %3001 = vmatprep.subr.bf16.mxu0 %v2938
    %3002 = vmatpush1.bf16.msra.mxu0 %v2937
    %3003 = vmatprep.subr.bf16.mxu0 %v2940
    %3004 = vmatpush1.bf16.msra.mxu0 %v2939
    %3005 = vmatprep.subr.bf16.mxu0 %v2942
    %3006 = vmatpush1.bf16.msra.mxu0 %v2941
    %3007 = vmatprep.subr.bf16.mxu0 %v2944
    %3008 = vmatpush1.bf16.msra.mxu0 %v2943
    %3009 = vmatprep.subr.bf16.mxu0 %v2946
    %3010 = vmatpush1.bf16.msra.mxu0 %v2945
    %3011 = vmatprep.subr.bf16.mxu0 %v2948
    %3012 = vmatpush1.bf16.msra.mxu0 %v2947
    %3013 = vmatprep.subr.bf16.mxu0 %v2950
    %3014 = vmatpush1.bf16.msra.mxu0 %v2949
    %3015 = vmatprep.subr.bf16.mxu0 %v2952
    %3016 = vmatpush1.bf16.msra.mxu0 %v2951
    %3017 = vmatprep.subr.bf16.mxu0 %v2954
    %3018 = vmatpush1.bf16.msra.mxu0 %v2953
    %3019 = vmatprep.subr.bf16.mxu0 %v2956
    %3020 = vmatpush1.bf16.msra.mxu0 %v2955
    %3021 = vmatprep.subr.bf16.mxu0 %v2958
    %3022 = vmatpush1.bf16.msra.mxu0 %v2957
    %3023 = vmatprep.mubr.bf16.mxu0 %v2751
    %3024 = vmatmul.mubr.bf16.gmra.mrb[0].mxu0 %v2750
    %v3025 = vpop.f32.mrb[0].mxu0
    %v3026 = vadd.f32 0.0, %v3025
    %v3027 = vpop.f32.mrb[0].mxu0
    %v3028 = vadd.f32 0.0, %v3027
    %v3029 = vpop.f32.mrb[0].mxu0
    %v3030 = vadd.f32 0.0, %v3029
    %v3031 = vpop.f32.mrb[0].mxu0
    %v3032 = vadd.f32 0.0, %v3031
    %3033 = vmatprep.mubr.bf16.mxu0 %v2753
    %3034 = vmatmul.mubr.bf16.gmra.mrb[0].mxu0 %v2752
    %v3035 = vpop.f32.mrb[0].mxu0
    %v3036 = vadd.f32 0.0, %v3035
    %v3037 = vpop.f32.mrb[0].mxu0
    %v3038 = vadd.f32 0.0, %v3037
    %v3039 = vpop.f32.mrb[0].mxu0
    %v3040 = vadd.f32 0.0, %v3039
    %v3041 = vpop.f32.mrb[0].mxu0
    %v3042 = vadd.f32 0.0, %v3041
    %3043 = vmatprep.mubr.bf16.mxu0 %v2755
    %3044 = vmatmul.mubr.bf16.gmra.mrb[0].mxu0 %v2754
    %v3045 = vpop.f32.mrb[0].mxu0
    %v3046 = vadd.f32 0.0, %v3045
    %v3047 = vpop.f32.mrb[0].mxu0
    %v3048 = vadd.f32 0.0, %v3047
    %v3049 = vpop.f32.mrb[0].mxu0
    %v3050 = vadd.f32 0.0, %v3049
    %v3051 = vpop.f32.mrb[0].mxu0
    %v3052 = vadd.f32 0.0, %v3051
    %3053 = vmatprep.mubr.bf16.mxu0 %v2757
    %3054 = vmatmul.mubr.bf16.gmra.mrb[0].mxu0 %v2756
    %v3055 = vpop.f32.mrb[0].mxu0
    %v3056 = vadd.f32 0.0, %v3055
    %v3057 = vpop.f32.mrb[0].mxu0
    %v3058 = vadd.f32 0.0, %v3057
    %v3059 = vpop.f32.mrb[0].mxu0
    %v3060 = vadd.f32 0.0, %v3059
    %v3061 = vpop.f32.mrb[0].mxu0
    %v3062 = vadd.f32 0.0, %v3061
    %3063 = vmatprep.mubr.bf16.mxu0 %v2759
    %3064 = vmatmul.mubr.bf16.gmra.mrb[0].mxu0 %v2758
    %v3065 = vpop.f32.mrb[0].mxu0
    %v3066 = vadd.f32 0.0, %v3065
    %v3067 = vpop.f32.mrb[0].mxu0
    %v3068 = vadd.f32 0.0, %v3067
    %v3069 = vpop.f32.mrb[0].mxu0
    %v3070 = vadd.f32 0.0, %v3069
    %v3071 = vpop.f32.mrb[0].mxu0
    %v3072 = vadd.f32 0.0, %v3071
    %3073 = vmatprep.mubr.bf16.mxu0 %v2761
    %3074 = vmatmul.mubr.bf16.gmra.mrb[0].mxu0 %v2760
    %v3075 = vpop.f32.mrb[0].mxu0
    %v3076 = vadd.f32 0.0, %v3075
    %v3077 = vpop.f32.mrb[0].mxu0
    %v3078 = vadd.f32 0.0, %v3077
    %v3079 = vpop.f32.mrb[0].mxu0
    %v3080 = vadd.f32 0.0, %v3079
    %v3081 = vpop.f32.mrb[0].mxu0
    %v3082 = vadd.f32 0.0, %v3081
    %3083 = vmatprep.mubr.bf16.mxu0 %v2763
    %3084 = vmatmul.mubr.bf16.gmra.mrb[0].mxu0 %v2762
    %v3085 = vpop.f32.mrb[0].mxu0
    %v3086 = vadd.f32 0.0, %v3085
    %v3087 = vpop.f32.mrb[0].mxu0
    %v3088 = vadd.f32 0.0, %v3087
    %v3089 = vpop.f32.mrb[0].mxu0
    %v3090 = vadd.f32 0.0, %v3089
    %v3091 = vpop.f32.mrb[0].mxu0
    %v3092 = vadd.f32 0.0, %v3091
    %3093 = vmatprep.mubr.bf16.mxu0 %v2765
    %3094 = vmatmul.mubr.bf16.gmra.mrb[0].mxu0 %v2764
    %v3095 = vpop.f32.mrb[0].mxu0
    %v3096 = vadd.f32 0.0, %v3095
    %v3097 = vpop.f32.mrb[0].mxu0
    %v3098 = vadd.f32 0.0, %v3097
    %v3099 = vpop.f32.mrb[0].mxu0
    %v3100 = vadd.f32 0.0, %v3099
    %v3101 = vpop.f32.mrb[0].mxu0
    %v3102 = vadd.f32 0.0, %v3101
    %3103 = vdwg.mxu0
    %v3104 = vadd.f32 %v2766, %v3026
    %v3105 = vadd.f32 %v2767, %v3028
    %v3106 = vadd.f32 %v2768, %v3030
    %v3107 = vadd.f32 %v2769, %v3032
    %v3108 = vadd.f32 %v2770, %v3036
    %v3109 = vadd.f32 %v2771, %v3038
    %v3110 = vadd.f32 %v2772, %v3040
    %v3111 = vadd.f32 %v2773, %v3042
    %v3112 = vadd.f32 %v2774, %v3046
    %v3113 = vadd.f32 %v2775, %v3048
    %v3114 = vadd.f32 %v2776, %v3050
    %v3115 = vadd.f32 %v2777, %v3052
    %v3116 = vadd.f32 %v2778, %v3056
    %v3117 = vadd.f32 %v2779, %v3058
    %v3118 = vadd.f32 %v2780, %v3060
    %v3119 = vadd.f32 %v2781, %v3062
    %v3120 = vadd.f32 %v2782, %v3066
    %v3121 = vadd.f32 %v2783, %v3068
    %v3122 = vadd.f32 %v2784, %v3070
    %v3123 = vadd.f32 %v2785, %v3072
    %v3124 = vadd.f32 %v2786, %v3076
    %v3125 = vadd.f32 %v2787, %v3078
    %v3126 = vadd.f32 %v2788, %v3080
    %v3127 = vadd.f32 %v2789, %v3082
    %v3128 = vadd.f32 %v2790, %v3086
    %v3129 = vadd.f32 %v2791, %v3088
    %v3130 = vadd.f32 %v2792, %v3090
    %v3131 = vadd.f32 %v2793, %v3092
    %v3132 = vadd.f32 %v2794, %v3096
    %v3133 = vadd.f32 %v2795, %v3098
    %v3134 = vadd.f32 %v2796, %v3100
    %v3135 = vadd.f32 %v2797, %v3102
    %3136 = vst [vmem:[#allocation6] sm:$0xff] %v3104
    %3137 = vst [vmem:[#allocation6 + $0x8] sm:$0xff] %v3105
    %3138 = vst [vmem:[#allocation6 + $0x10] sm:$0xff] %v3106
    %3139 = vst [vmem:[#allocation6 + $0x18] sm:$0xff] %v3107
    %3140 = vst [vmem:[#allocation6 + $0x20] sm:$0xff] %v3108
    %3141 = vst [vmem:[#allocation6 + $0x28] sm:$0xff] %v3109
    %3142 = vst [vmem:[#allocation6 + $0x30] sm:$0xff] %v3110
    %3143 = vst [vmem:[#allocation6 + $0x38] sm:$0xff] %v3111
    %3144 = vst [vmem:[#allocation6 + $0x40] sm:$0xff] %v3112
    %3145 = vst [vmem:[#allocation6 + $0x48] sm:$0xff] %v3113
    %3146 = vst [vmem:[#allocation6 + $0x50] sm:$0xff] %v3114
    %3147 = vst [vmem:[#allocation6 + $0x58] sm:$0xff] %v3115
    %3148 = vst [vmem:[#allocation6 + $0x60] sm:$0xff] %v3116
    %3149 = vst [vmem:[#allocation6 + $0x68] sm:$0xff] %v3117
    %3150 = vst [vmem:[#allocation6 + $0x70] sm:$0xff] %v3118
    %3151 = vst [vmem:[#allocation6 + $0x78] sm:$0xff] %v3119
    %3152 = vst [vmem:[#allocation6 + $0x80] sm:$0xff] %v3120
    %3153 = vst [vmem:[#allocation6 + $0x88] sm:$0xff] %v3121
    %3154 = vst [vmem:[#allocation6 + $0x90] sm:$0xff] %v3122
    %3155 = vst [vmem:[#allocation6 + $0x98] sm:$0xff] %v3123
    %3156 = vst [vmem:[#allocation6 + $0xa0] sm:$0xff] %v3124
    %3157 = vst [vmem:[#allocation6 + $0xa8] sm:$0xff] %v3125
    %3158 = vst [vmem:[#allocation6 + $0xb0] sm:$0xff] %v3126
    %3159 = vst [vmem:[#allocation6 + $0xb8] sm:$0xff] %v3127
    %3160 = vst [vmem:[#allocation6 + $0xc0] sm:$0xff] %v3128
    %3161 = vst [vmem:[#allocation6 + $0xc8] sm:$0xff] %v3129
    %3162 = vst [vmem:[#allocation6 + $0xd0] sm:$0xff] %v3130
    %3163 = vst [vmem:[#allocation6 + $0xd8] sm:$0xff] %v3131
    %3164 = vst [vmem:[#allocation6 + $0xe0] sm:$0xff] %v3132
    %3165 = vst [vmem:[#allocation6 + $0xe8] sm:$0xff] %v3133
    %3166 = vst [vmem:[#allocation6 + $0xf0] sm:$0xff] %v3134
    %3167 = vst [vmem:[#allocation6 + $0xf8] sm:$0xff] %v3135
    %v3168 = vld [vmem:[%s1456] sm:$0xff]
    %v3169 = vld [vmem:[%s1456 + $0x8] sm:$0xff]
    %v3170 = vld [vmem:[%s1456 + $0x10] sm:$0xff]
    %v3171 = vld [vmem:[%s1456 + $0x18] sm:$0xff]
    %v3172 = vld [vmem:[%s1456 + $0x20] sm:$0xff]
    %v3173 = vld [vmem:[%s1456 + $0x28] sm:$0xff]
    %v3174 = vld [vmem:[%s1456 + $0x30] sm:$0xff]
    %v3175 = vld [vmem:[%s1456 + $0x38] sm:$0xff]
    %v3176 = vld [vmem:[%s1456 + $0x40] sm:$0xff]
    %v3177 = vld [vmem:[%s1456 + $0x48] sm:$0xff]
    %v3178 = vld [vmem:[%s1456 + $0x50] sm:$0xff]
    %v3179 = vld [vmem:[%s1456 + $0x58] sm:$0xff]
    %v3180 = vld [vmem:[%s1456 + $0x60] sm:$0xff]
    %v3181 = vld [vmem:[%s1456 + $0x68] sm:$0xff]
    %v3182 = vld [vmem:[%s1456 + $0x70] sm:$0xff]
    %v3183 = vld [vmem:[%s1456 + $0x78] sm:$0xff]
    %v3184 = vld [vmem:[%s1456 + $0xa0] sm:$0xff]
    %v3185 = vld [vmem:[%s1456 + $0xa8] sm:$0xff]
    %v3186 = vld [vmem:[%s1456 + $0xb0] sm:$0xff]
    %v3187 = vld [vmem:[%s1456 + $0xb8] sm:$0xff]
    %v3188 = vld [vmem:[%s1456 + $0xc0] sm:$0xff]
    %v3189 = vld [vmem:[%s1456 + $0xc8] sm:$0xff]
    %v3190 = vld [vmem:[%s1456 + $0xd0] sm:$0xff]
    %v3191 = vld [vmem:[%s1456 + $0xd8] sm:$0xff]
    %v3192 = vld [vmem:[%s1456 + $0xe0] sm:$0xff]
    %v3193 = vld [vmem:[%s1456 + $0xe8] sm:$0xff]
    %v3194 = vld [vmem:[%s1456 + $0xf0] sm:$0xff]
    %v3195 = vld [vmem:[%s1456 + $0xf8] sm:$0xff]
    %v3196 = vld [vmem:[%s1456 + $0x100] sm:$0xff]
    %v3197 = vld [vmem:[%s1456 + $0x108] sm:$0xff]
    %v3198 = vld [vmem:[%s1456 + $0x110] sm:$0xff]
    %v3199 = vld [vmem:[%s1456 + $0x118] sm:$0xff]
    %v3200 = vpack.c.bf16 %v3170, %v3168
    %v3201 = vpack.c.bf16 %v3171, %v3169
    %v3202 = vpack.c.bf16 %v3174, %v3172
    %v3203 = vpack.c.bf16 %v3175, %v3173
    %v3204 = vpack.c.bf16 %v3178, %v3176
    %v3205 = vpack.c.bf16 %v3179, %v3177
    %v3206 = vpack.c.bf16 %v3182, %v3180
    %v3207 = vpack.c.bf16 %v3183, %v3181
    %v3208 = vpack.c.bf16 %v3186, %v3184
    %v3209 = vpack.c.bf16 %v3187, %v3185
    %v3210 = vpack.c.bf16 %v3190, %v3188
    %v3211 = vpack.c.bf16 %v3191, %v3189
    %v3212 = vpack.c.bf16 %v3194, %v3192
    %v3213 = vpack.c.bf16 %v3195, %v3193
    %v3214 = vpack.c.bf16 %v3198, %v3196
    %v3215 = vpack.c.bf16 %v3199, %v3197
    %v3216 = vld [vmem:[#allocation6] sm:$0xff]
    %v3217 = vld [vmem:[#allocation6 + $0x8] sm:$0xff]
    %v3218 = vld [vmem:[#allocation6 + $0x10] sm:$0xff]
    %v3219 = vld [vmem:[#allocation6 + $0x18] sm:$0xff]
    %v3220 = vld [vmem:[#allocation6 + $0x20] sm:$0xff]
    %v3221 = vld [vmem:[#allocation6 + $0x28] sm:$0xff]
    %v3222 = vld [vmem:[#allocation6 + $0x30] sm:$0xff]
    %v3223 = vld [vmem:[#allocation6 + $0x38] sm:$0xff]
    %v3224 = vld [vmem:[#allocation6 + $0x40] sm:$0xff]
    %v3225 = vld [vmem:[#allocation6 + $0x48] sm:$0xff]
    %v3226 = vld [vmem:[#allocation6 + $0x50] sm:$0xff]
    %v3227 = vld [vmem:[#allocation6 + $0x58] sm:$0xff]
    %v3228 = vld [vmem:[#allocation6 + $0x60] sm:$0xff]
    %v3229 = vld [vmem:[#allocation6 + $0x68] sm:$0xff]
    %v3230 = vld [vmem:[#allocation6 + $0x70] sm:$0xff]
    %v3231 = vld [vmem:[#allocation6 + $0x78] sm:$0xff]
    %v3232 = vld [vmem:[#allocation6 + $0x80] sm:$0xff]
    %v3233 = vld [vmem:[#allocation6 + $0x88] sm:$0xff]
    %v3234 = vld [vmem:[#allocation6 + $0x90] sm:$0xff]
    %v3235 = vld [vmem:[#allocation6 + $0x98] sm:$0xff]
    %v3236 = vld [vmem:[#allocation6 + $0xa0] sm:$0xff]
    %v3237 = vld [vmem:[#allocation6 + $0xa8] sm:$0xff]
    %v3238 = vld [vmem:[#allocation6 + $0xb0] sm:$0xff]
    %v3239 = vld [vmem:[#allocation6 + $0xb8] sm:$0xff]
    %v3240 = vld [vmem:[#allocation6 + $0xc0] sm:$0xff]
    %v3241 = vld [vmem:[#allocation6 + $0xc8] sm:$0xff]
    %v3242 = vld [vmem:[#allocation6 + $0xd0] sm:$0xff]
    %v3243 = vld [vmem:[#allocation6 + $0xd8] sm:$0xff]
    %v3244 = vld [vmem:[#allocation6 + $0xe0] sm:$0xff]
    %v3245 = vld [vmem:[#allocation6 + $0xe8] sm:$0xff]
    %v3246 = vld [vmem:[#allocation6 + $0xf0] sm:$0xff]
    %v3247 = vld [vmem:[#allocation6 + $0xf8] sm:$0xff]
    %s3248 = scalar_lea.vmem %s1, 1792
    %v3249 = vld [vmem:[%s3248] sm:$0xff]
    %v3250 = vld [vmem:[%s3248 + $0x8] sm:$0xff]
    %v3251 = vld [vmem:[%s3248 + $0x10] sm:$0xff]
    %v3252 = vld [vmem:[%s3248 + $0x18] sm:$0xff]
    %v3253 = vld [vmem:[%s3248 + $0x20] sm:$0xff]
    %v3254 = vld [vmem:[%s3248 + $0x28] sm:$0xff]
    %v3255 = vld [vmem:[%s3248 + $0x30] sm:$0xff]
    %v3256 = vld [vmem:[%s3248 + $0x38] sm:$0xff]
    %v3257 = vld [vmem:[%s3248 + $0x40] sm:$0xff]
    %v3258 = vld [vmem:[%s3248 + $0x48] sm:$0xff]
    %v3259 = vld [vmem:[%s3248 + $0x50] sm:$0xff]
    %v3260 = vld [vmem:[%s3248 + $0x58] sm:$0xff]
    %v3261 = vld [vmem:[%s3248 + $0x60] sm:$0xff]
    %v3262 = vld [vmem:[%s3248 + $0x68] sm:$0xff]
    %v3263 = vld [vmem:[%s3248 + $0x70] sm:$0xff]
    %v3264 = vld [vmem:[%s3248 + $0x78] sm:$0xff]
    %v3265 = vld [vmem:[%s3248 + $0x80] sm:$0xff]
    %v3266 = vld [vmem:[%s3248 + $0x88] sm:$0xff]
    %v3267 = vld [vmem:[%s3248 + $0x90] sm:$0xff]
    %v3268 = vld [vmem:[%s3248 + $0x98] sm:$0xff]
    %v3269 = vld [vmem:[%s3248 + $0xa0] sm:$0xff]
    %v3270 = vld [vmem:[%s3248 + $0xa8] sm:$0xff]
    %v3271 = vld [vmem:[%s3248 + $0xb0] sm:$0xff]
    %v3272 = vld [vmem:[%s3248 + $0xb8] sm:$0xff]
    %v3273 = vld [vmem:[%s3248 + $0xc0] sm:$0xff]
    %v3274 = vld [vmem:[%s3248 + $0xc8] sm:$0xff]
    %v3275 = vld [vmem:[%s3248 + $0xd0] sm:$0xff]
    %v3276 = vld [vmem:[%s3248 + $0xd8] sm:$0xff]
    %v3277 = vld [vmem:[%s3248 + $0xe0] sm:$0xff]
    %v3278 = vld [vmem:[%s3248 + $0xe8] sm:$0xff]
    %v3279 = vld [vmem:[%s3248 + $0xf0] sm:$0xff]
    %v3280 = vld [vmem:[%s3248 + $0xf8] sm:$0xff]
    %v3313 = vunpack.c.l.b16 %v3249
    %v3314 = vunpack.c.h.b16 %v3249
    %v3315 = vunpack.c.l.b16 %v3250
    %v3316 = vunpack.c.h.b16 %v3250
    %v3317 = vunpack.c.l.b16 %v3251
    %v3318 = vunpack.c.h.b16 %v3251
    %v3319 = vunpack.c.l.b16 %v3252
    %v3320 = vunpack.c.h.b16 %v3252
    %v3321 = vunpack.c.l.b16 %v3253
    %v3322 = vunpack.c.h.b16 %v3253
    %v3323 = vunpack.c.l.b16 %v3254
    %v3324 = vunpack.c.h.b16 %v3254
    %v3325 = vunpack.c.l.b16 %v3255
    %v3326 = vunpack.c.h.b16 %v3255
    %v3327 = vunpack.c.l.b16 %v3256
    %v3328 = vunpack.c.h.b16 %v3256
    %v3329 = vunpack.c.l.b16 %v3257
    %v3330 = vunpack.c.h.b16 %v3257
    %v3331 = vunpack.c.l.b16 %v3258
    %v3332 = vunpack.c.h.b16 %v3258
    %v3333 = vunpack.c.l.b16 %v3259
    %v3334 = vunpack.c.h.b16 %v3259
    %v3335 = vunpack.c.l.b16 %v3260
    %v3336 = vunpack.c.h.b16 %v3260
    %v3337 = vunpack.c.l.b16 %v3261
    %v3338 = vunpack.c.h.b16 %v3261
    %v3339 = vunpack.c.l.b16 %v3262
    %v3340 = vunpack.c.h.b16 %v3262
    %v3341 = vunpack.c.l.b16 %v3263
    %v3342 = vunpack.c.h.b16 %v3263
    %v3343 = vunpack.c.l.b16 %v3264
    %v3344 = vunpack.c.h.b16 %v3264
    %v3345 = vunpack.c.l.b16 %v3265
    %v3346 = vunpack.c.h.b16 %v3265
    %v3347 = vunpack.c.l.b16 %v3266
    %v3348 = vunpack.c.h.b16 %v3266
    %v3349 = vunpack.c.l.b16 %v3267
    %v3350 = vunpack.c.h.b16 %v3267
    %v3351 = vunpack.c.l.b16 %v3268
    %v3352 = vunpack.c.h.b16 %v3268
    %v3353 = vunpack.c.l.b16 %v3269
    %v3354 = vunpack.c.h.b16 %v3269
    %v3355 = vunpack.c.l.b16 %v3270
    %v3356 = vunpack.c.h.b16 %v3270
    %v3357 = vunpack.c.l.b16 %v3271
    %v3358 = vunpack.c.h.b16 %v3271
    %v3359 = vunpack.c.l.b16 %v3272
    %v3360 = vunpack.c.h.b16 %v3272
    %v3361 = vunpack.c.l.b16 %v3273
    %v3362 = vunpack.c.h.b16 %v3273
    %v3363 = vunpack.c.l.b16 %v3274
    %v3364 = vunpack.c.h.b16 %v3274
    %v3365 = vunpack.c.l.b16 %v3275
    %v3366 = vunpack.c.h.b16 %v3275
    %v3367 = vunpack.c.l.b16 %v3276
    %v3368 = vunpack.c.h.b16 %v3276
    %v3369 = vunpack.c.l.b16 %v3277
    %v3370 = vunpack.c.h.b16 %v3277
    %v3371 = vunpack.c.l.b16 %v3278
    %v3372 = vunpack.c.h.b16 %v3278
    %v3373 = vunpack.c.l.b16 %v3279
    %v3374 = vunpack.c.h.b16 %v3279
    %v3375 = vunpack.c.l.b16 %v3280
    %v3376 = vunpack.c.h.b16 %v3280
    %v3377 = vpack.c.b16 %v3315, %v3313
    %v3378 = vpack.c.b16 %v3316, %v3314
    %v3379 = vpack.c.b16 %v3319, %v3317
    %v3380 = vpack.c.b16 %v3320, %v3318
    %v3381 = vpack.c.b16 %v3323, %v3321
    %v3382 = vpack.c.b16 %v3324, %v3322
    %v3383 = vpack.c.b16 %v3327, %v3325
    %v3384 = vpack.c.b16 %v3328, %v3326
    %v3385 = vpack.c.b16 %v3331, %v3329
    %v3386 = vpack.c.b16 %v3332, %v3330
    %v3387 = vpack.c.b16 %v3335, %v3333
    %v3388 = vpack.c.b16 %v3336, %v3334
    %v3389 = vpack.c.b16 %v3339, %v3337
    %v3390 = vpack.c.b16 %v3340, %v3338
    %v3391 = vpack.c.b16 %v3343, %v3341
    %v3392 = vpack.c.b16 %v3344, %v3342
    %v3393 = vpack.c.b16 %v3347, %v3345
    %v3394 = vpack.c.b16 %v3348, %v3346
    %v3395 = vpack.c.b16 %v3351, %v3349
    %v3396 = vpack.c.b16 %v3352, %v3350
    %v3397 = vpack.c.b16 %v3355, %v3353
    %v3398 = vpack.c.b16 %v3356, %v3354
    %v3399 = vpack.c.b16 %v3359, %v3357
    %v3400 = vpack.c.b16 %v3360, %v3358
    %v3401 = vpack.c.b16 %v3363, %v3361
    %v3402 = vpack.c.b16 %v3364, %v3362
    %v3403 = vpack.c.b16 %v3367, %v3365
    %v3404 = vpack.c.b16 %v3368, %v3366
    %v3405 = vpack.c.b16 %v3371, %v3369
    %v3406 = vpack.c.b16 %v3372, %v3370
    %v3407 = vpack.c.b16 %v3375, %v3373
    %v3408 = vpack.c.b16 %v3376, %v3374
    %3441 = vmatprep.subr.bf16.mxu0 %v3378
    %3442 = vmatpush1.bf16.msra.mxu0 %v3377
    %3443 = vmatprep.subr.bf16.mxu0 %v3380
    %3444 = vmatpush1.bf16.msra.mxu0 %v3379
    %3445 = vmatprep.subr.bf16.mxu0 %v3382
    %3446 = vmatpush1.bf16.msra.mxu0 %v3381
    %3447 = vmatprep.subr.bf16.mxu0 %v3384
    %3448 = vmatpush1.bf16.msra.mxu0 %v3383
    %3449 = vmatprep.subr.bf16.mxu0 %v3386
    %3450 = vmatpush1.bf16.msra.mxu0 %v3385
    %3451 = vmatprep.subr.bf16.mxu0 %v3388
    %3452 = vmatpush1.bf16.msra.mxu0 %v3387
    %3453 = vmatprep.subr.bf16.mxu0 %v3390
    %3454 = vmatpush1.bf16.msra.mxu0 %v3389
    %3455 = vmatprep.subr.bf16.mxu0 %v3392
    %3456 = vmatpush1.bf16.msra.mxu0 %v3391
    %3457 = vmatprep.subr.bf16.mxu0 %v3394
    %3458 = vmatpush1.bf16.msra.mxu0 %v3393
    %3459 = vmatprep.subr.bf16.mxu0 %v3396
    %3460 = vmatpush1.bf16.msra.mxu0 %v3395
    %3461 = vmatprep.subr.bf16.mxu0 %v3398
    %3462 = vmatpush1.bf16.msra.mxu0 %v3397
    %3463 = vmatprep.subr.bf16.mxu0 %v3400
    %3464 = vmatpush1.bf16.msra.mxu0 %v3399
    %3465 = vmatprep.subr.bf16.mxu0 %v3402
    %3466 = vmatpush1.bf16.msra.mxu0 %v3401
    %3467 = vmatprep.subr.bf16.mxu0 %v3404
    %3468 = vmatpush1.bf16.msra.mxu0 %v3403
    %3469 = vmatprep.subr.bf16.mxu0 %v3406
    %3470 = vmatpush1.bf16.msra.mxu0 %v3405
    %3471 = vmatprep.subr.bf16.mxu0 %v3408
    %3472 = vmatpush1.bf16.msra.mxu0 %v3407
    %3473 = vmatprep.mubr.bf16.mxu0 %v3201
    %3474 = vmatmul.mubr.bf16.gmra.mrb[0].mxu0 %v3200
    %v3475 = vpop.f32.mrb[0].mxu0
    %v3476 = vadd.f32 0.0, %v3475
    %v3477 = vpop.f32.mrb[0].mxu0
    %v3478 = vadd.f32 0.0, %v3477
    %v3479 = vpop.f32.mrb[0].mxu0
    %v3480 = vadd.f32 0.0, %v3479
    %v3481 = vpop.f32.mrb[0].mxu0
    %v3482 = vadd.f32 0.0, %v3481
    %3483 = vmatprep.mubr.bf16.mxu0 %v3203
    %3484 = vmatmul.mubr.bf16.gmra.mrb[0].mxu0 %v3202
    %v3485 = vpop.f32.mrb[0].mxu0
    %v3486 = vadd.f32 0.0, %v3485
    %v3487 = vpop.f32.mrb[0].mxu0
    %v3488 = vadd.f32 0.0, %v3487
    %v3489 = vpop.f32.mrb[0].mxu0
    %v3490 = vadd.f32 0.0, %v3489
    %v3491 = vpop.f32.mrb[0].mxu0
    %v3492 = vadd.f32 0.0, %v3491
    %3493 = vmatprep.mubr.bf16.mxu0 %v3205
    %3494 = vmatmul.mubr.bf16.gmra.mrb[0].mxu0 %v3204
    %v3495 = vpop.f32.mrb[0].mxu0
    %v3496 = vadd.f32 0.0, %v3495
    %v3497 = vpop.f32.mrb[0].mxu0
    %v3498 = vadd.f32 0.0, %v3497
    %v3499 = vpop.f32.mrb[0].mxu0
    %v3500 = vadd.f32 0.0, %v3499
    %v3501 = vpop.f32.mrb[0].mxu0
    %v3502 = vadd.f32 0.0, %v3501
    %3503 = vmatprep.mubr.bf16.mxu0 %v3207
    %3504 = vmatmul.mubr.bf16.gmra.mrb[0].mxu0 %v3206
    %v3505 = vpop.f32.mrb[0].mxu0
    %v3506 = vadd.f32 0.0, %v3505
    %v3507 = vpop.f32.mrb[0].mxu0
    %v3508 = vadd.f32 0.0, %v3507
    %v3509 = vpop.f32.mrb[0].mxu0
    %v3510 = vadd.f32 0.0, %v3509
    %v3511 = vpop.f32.mrb[0].mxu0
    %v3512 = vadd.f32 0.0, %v3511
    %3513 = vmatprep.mubr.bf16.mxu0 %v3209
    %3514 = vmatmul.mubr.bf16.gmra.mrb[0].mxu0 %v3208
    %v3515 = vpop.f32.mrb[0].mxu0
    %v3516 = vadd.f32 0.0, %v3515
    %v3517 = vpop.f32.mrb[0].mxu0
    %v3518 = vadd.f32 0.0, %v3517
    %v3519 = vpop.f32.mrb[0].mxu0
    %v3520 = vadd.f32 0.0, %v3519
    %v3521 = vpop.f32.mrb[0].mxu0
    %v3522 = vadd.f32 0.0, %v3521
    %3523 = vmatprep.mubr.bf16.mxu0 %v3211
    %3524 = vmatmul.mubr.bf16.gmra.mrb[0].mxu0 %v3210
    %v3525 = vpop.f32.mrb[0].mxu0
    %v3526 = vadd.f32 0.0, %v3525
    %v3527 = vpop.f32.mrb[0].mxu0
    %v3528 = vadd.f32 0.0, %v3527
    %v3529 = vpop.f32.mrb[0].mxu0
    %v3530 = vadd.f32 0.0, %v3529
    %v3531 = vpop.f32.mrb[0].mxu0
    %v3532 = vadd.f32 0.0, %v3531
    %3533 = vmatprep.mubr.bf16.mxu0 %v3213
    %3534 = vmatmul.mubr.bf16.gmra.mrb[0].mxu0 %v3212
    %v3535 = vpop.f32.mrb[0].mxu0
    %v3536 = vadd.f32 0.0, %v3535
    %v3537 = vpop.f32.mrb[0].mxu0
    %v3538 = vadd.f32 0.0, %v3537
    %v3539 = vpop.f32.mrb[0].mxu0
    %v3540 = vadd.f32 0.0, %v3539
    %v3541 = vpop.f32.mrb[0].mxu0
    %v3542 = vadd.f32 0.0, %v3541
    %3543 = vmatprep.mubr.bf16.mxu0 %v3215
    %3544 = vmatmul.mubr.bf16.gmra.mrb[0].mxu0 %v3214
    %v3545 = vpop.f32.mrb[0].mxu0
    %v3546 = vadd.f32 0.0, %v3545
    %v3547 = vpop.f32.mrb[0].mxu0
    %v3548 = vadd.f32 0.0, %v3547
    %v3549 = vpop.f32.mrb[0].mxu0
    %v3550 = vadd.f32 0.0, %v3549
    %v3551 = vpop.f32.mrb[0].mxu0
    %v3552 = vadd.f32 0.0, %v3551
    %3553 = vdwg.mxu0
    %v3554 = vadd.f32 %v3216, %v3476
    %v3555 = vadd.f32 %v3217, %v3478
    %v3556 = vadd.f32 %v3218, %v3480
    %v3557 = vadd.f32 %v3219, %v3482
    %v3558 = vadd.f32 %v3220, %v3486
    %v3559 = vadd.f32 %v3221, %v3488
    %v3560 = vadd.f32 %v3222, %v3490
    %v3561 = vadd.f32 %v3223, %v3492
    %v3562 = vadd.f32 %v3224, %v3496
    %v3563 = vadd.f32 %v3225, %v3498
    %v3564 = vadd.f32 %v3226, %v3500
    %v3565 = vadd.f32 %v3227, %v3502
    %v3566 = vadd.f32 %v3228, %v3506
    %v3567 = vadd.f32 %v3229, %v3508
    %v3568 = vadd.f32 %v3230, %v3510
    %v3569 = vadd.f32 %v3231, %v3512
    %v3570 = vadd.f32 %v3232, %v3516
    %v3571 = vadd.f32 %v3233, %v3518
    %v3572 = vadd.f32 %v3234, %v3520
    %v3573 = vadd.f32 %v3235, %v3522
    %v3574 = vadd.f32 %v3236, %v3526
    %v3575 = vadd.f32 %v3237, %v3528
    %v3576 = vadd.f32 %v3238, %v3530
    %v3577 = vadd.f32 %v3239, %v3532
    %v3578 = vadd.f32 %v3240, %v3536
    %v3579 = vadd.f32 %v3241, %v3538
    %v3580 = vadd.f32 %v3242, %v3540
    %v3581 = vadd.f32 %v3243, %v3542
    %v3582 = vadd.f32 %v3244, %v3546
    %v3583 = vadd.f32 %v3245, %v3548
    %v3584 = vadd.f32 %v3246, %v3550
    %v3585 = vadd.f32 %v3247, %v3552
    %3586 = vst [vmem:[#allocation6] sm:$0xff] %v3554
    %3587 = vst [vmem:[#allocation6 + $0x8] sm:$0xff] %v3555
    %3588 = vst [vmem:[#allocation6 + $0x10] sm:$0xff] %v3556
    %3589 = vst [vmem:[#allocation6 + $0x18] sm:$0xff] %v3557
    %3590 = vst [vmem:[#allocation6 + $0x20] sm:$0xff] %v3558
    %3591 = vst [vmem:[#allocation6 + $0x28] sm:$0xff] %v3559
    %3592 = vst [vmem:[#allocation6 + $0x30] sm:$0xff] %v3560
    %3593 = vst [vmem:[#allocation6 + $0x38] sm:$0xff] %v3561
    %3594 = vst [vmem:[#allocation6 + $0x40] sm:$0xff] %v3562
    %3595 = vst [vmem:[#allocation6 + $0x48] sm:$0xff] %v3563
    %3596 = vst [vmem:[#allocation6 + $0x50] sm:$0xff] %v3564
    %3597 = vst [vmem:[#allocation6 + $0x58] sm:$0xff] %v3565
    %3598 = vst [vmem:[#allocation6 + $0x60] sm:$0xff] %v3566
    %3599 = vst [vmem:[#allocation6 + $0x68] sm:$0xff] %v3567
    %3600 = vst [vmem:[#allocation6 + $0x70] sm:$0xff] %v3568
    %3601 = vst [vmem:[#allocation6 + $0x78] sm:$0xff] %v3569
    %3602 = vst [vmem:[#allocation6 + $0x80] sm:$0xff] %v3570
    %3603 = vst [vmem:[#allocation6 + $0x88] sm:$0xff] %v3571
    %3604 = vst [vmem:[#allocation6 + $0x90] sm:$0xff] %v3572
    %3605 = vst [vmem:[#allocation6 + $0x98] sm:$0xff] %v3573
    %3606 = vst [vmem:[#allocation6 + $0xa0] sm:$0xff] %v3574
    %3607 = vst [vmem:[#allocation6 + $0xa8] sm:$0xff] %v3575
    %3608 = vst [vmem:[#allocation6 + $0xb0] sm:$0xff] %v3576
    %3609 = vst [vmem:[#allocation6 + $0xb8] sm:$0xff] %v3577
    %3610 = vst [vmem:[#allocation6 + $0xc0] sm:$0xff] %v3578
    %3611 = vst [vmem:[#allocation6 + $0xc8] sm:$0xff] %v3579
    %3612 = vst [vmem:[#allocation6 + $0xd0] sm:$0xff] %v3580
    %3613 = vst [vmem:[#allocation6 + $0xd8] sm:$0xff] %v3581
    %3614 = vst [vmem:[#allocation6 + $0xe0] sm:$0xff] %v3582
    %3615 = vst [vmem:[#allocation6 + $0xe8] sm:$0xff] %v3583
    %3616 = vst [vmem:[#allocation6 + $0xf0] sm:$0xff] %v3584
    %3617 = vst [vmem:[#allocation6 + $0xf8] sm:$0xff] %v3585
    %v3618 = vld [vmem:[#allocation2] sm:$0xfc]
    %v3619 = vld [vmem:[#allocation2 + $0x8] sm:$0xfc]
    %v3620 = vld [vmem:[#allocation2 + $0x10] sm:$0x3]
    %v3621 = vld [vmem:[#allocation2 + $0x18] sm:$0x3]
    %v3622 = vld [vmem:[#allocation2 + $0x20] sm:$0xfc]
    %v3623 = vld [vmem:[#allocation2 + $0x28] sm:$0xfc]
    %v3624 = vld [vmem:[#allocation2 + $0x30] sm:$0x3]
    %v3625 = vld [vmem:[#allocation2 + $0x38] sm:$0x3]
    %v3626 = vld [vmem:[#allocation2 + $0x40] sm:$0xfc]
    %v3627 = vld [vmem:[#allocation2 + $0x48] sm:$0xfc]
    %v3628 = vld [vmem:[#allocation2 + $0x50] sm:$0x3]
    %v3629 = vld [vmem:[#allocation2 + $0x58] sm:$0x3]
    %v3630 = vld [vmem:[#allocation2 + $0x60] sm:$0xfc]
    %v3631 = vld [vmem:[#allocation2 + $0x68] sm:$0xfc]
    %v3632 = vld [vmem:[#allocation2 + $0x70] sm:$0x3]
    %v3633 = vld [vmem:[#allocation2 + $0x78] sm:$0x3]
    %v3634 = vld [vmem:[#allocation2 + $0x80] sm:$0xfc]
    %v3635 = vld [vmem:[#allocation2 + $0x88] sm:$0xfc]
    %v3636 = vld [vmem:[#allocation2 + $0x90] sm:$0x3]
    %v3637 = vld [vmem:[#allocation2 + $0x98] sm:$0x3]
    %v3638 = vld [vmem:[#allocation2 + $0xa0] sm:$0xfc]
    %v3639 = vld [vmem:[#allocation2 + $0xa8] sm:$0xfc]
    %v3640 = vld [vmem:[#allocation2 + $0xb0] sm:$0x3]
    %v3641 = vld [vmem:[#allocation2 + $0xb8] sm:$0x3]
    %v3642 = vld [vmem:[#allocation2 + $0xc0] sm:$0xfc]
    %v3643 = vld [vmem:[#allocation2 + $0xc8] sm:$0xfc]
    %v3644 = vld [vmem:[#allocation2 + $0xd0] sm:$0x3]
    %v3645 = vld [vmem:[#allocation2 + $0xd8] sm:$0x3]
    %v3646 = vld [vmem:[#allocation2 + $0xe0] sm:$0xfc]
    %v3647 = vld [vmem:[#allocation2 + $0xe8] sm:$0xfc]
    %v3648 = vld [vmem:[#allocation2 + $0xf0] sm:$0x3]
    %v3649 = vld [vmem:[#allocation2 + $0xf8] sm:$0x3]
    %v3650 = vld [vmem:[#allocation2 + $0x100] sm:$0xfc]
    %v3651 = vld [vmem:[#allocation2 + $0x108] sm:$0xfc]
    %v3652 = vld [vmem:[#allocation2 + $0x110] sm:$0x3]
    %v3653 = vld [vmem:[#allocation2 + $0x118] sm:$0x3]
    %v3654 = vld [vmem:[#allocation2 + $0x120] sm:$0xfc]
    %v3655 = vld [vmem:[#allocation2 + $0x128] sm:$0xfc]
    %v3656 = vld [vmem:[#allocation2 + $0x130] sm:$0x3]
    %v3657 = vld [vmem:[#allocation2 + $0x138] sm:$0x3]
    %v3658 = vld [vmem:[#allocation2 + $0x140] sm:$0xfc]
    %v3659 = vld [vmem:[#allocation2 + $0x148] sm:$0xfc]
    %v3660 = vld [vmem:[#allocation2 + $0x150] sm:$0x3]
    %v3661 = vld [vmem:[#allocation2 + $0x158] sm:$0x3]
    %v3662 = vld [vmem:[#allocation2 + $0x160] sm:$0xfc]
    %v3663 = vld [vmem:[#allocation2 + $0x168] sm:$0xfc]
    %v3664 = vld [vmem:[#allocation2 + $0x170] sm:$0x3]
    %v3665 = vld [vmem:[#allocation2 + $0x178] sm:$0x3]
    %v3666 = vld [vmem:[#allocation2 + $0x180] sm:$0xfc]
    %v3667 = vld [vmem:[#allocation2 + $0x188] sm:$0xfc]
    %v3668 = vld [vmem:[#allocation2 + $0x190] sm:$0x3]
    %v3669 = vld [vmem:[#allocation2 + $0x198] sm:$0x3]
    %v3670 = vld [vmem:[#allocation2 + $0x1a0] sm:$0xfc]
    %v3671 = vld [vmem:[#allocation2 + $0x1a8] sm:$0xfc]
    %v3672 = vld [vmem:[#allocation2 + $0x1b0] sm:$0x3]
    %v3673 = vld [vmem:[#allocation2 + $0x1b8] sm:$0x3]
    %v3674 = vld [vmem:[#allocation2 + $0x1c0] sm:$0xfc]
    %v3675 = vld [vmem:[#allocation2 + $0x1c8] sm:$0xfc]
    %v3676 = vld [vmem:[#allocation2 + $0x1d0] sm:$0x3]
    %v3677 = vld [vmem:[#allocation2 + $0x1d8] sm:$0x3]
    %v3678 = vld [vmem:[#allocation2 + $0x1e0] sm:$0xfc]
    %v3679 = vld [vmem:[#allocation2 + $0x1e8] sm:$0xfc]
    %v3680 = vld [vmem:[#allocation2 + $0x1f0] sm:$0x3]
    %v3681 = vld [vmem:[#allocation2 + $0x1f8] sm:$0x3]
    %v3682 = vld [vmem:[#allocation2 + $0x200] sm:$0xfc]
    %v3683 = vld [vmem:[#allocation2 + $0x208] sm:$0xfc]
    %v3684 = vld [vmem:[#allocation2 + $0x210] sm:$0x3]
    %v3685 = vld [vmem:[#allocation2 + $0x218] sm:$0x3]
    %v3686 = vld [vmem:[#allocation2 + $0x220] sm:$0xfc]
    %v3687 = vld [vmem:[#allocation2 + $0x228] sm:$0xfc]
    %v3688 = vld [vmem:[#allocation2 + $0x230] sm:$0x3]
    %v3689 = vld [vmem:[#allocation2 + $0x238] sm:$0x3]
    %v3690 = vld [vmem:[#allocation2 + $0x240] sm:$0xfc]
    %v3691 = vld [vmem:[#allocation2 + $0x248] sm:$0xfc]
    %v3692 = vld [vmem:[#allocation2 + $0x250] sm:$0x3]
    %v3693 = vld [vmem:[#allocation2 + $0x258] sm:$0x3]
    %v3694 = vld [vmem:[#allocation2 + $0x260] sm:$0xfc]
    %v3695 = vld [vmem:[#allocation2 + $0x268] sm:$0xfc]
    %v3696 = vld [vmem:[#allocation2 + $0x270] sm:$0x3]
    %v3697 = vld [vmem:[#allocation2 + $0x278] sm:$0x3]
    %vm3778 = vcmask 1045504
    %v3779 = vrot.slane %v3618, 2
    %v3780 = vrot.slane %v3620, 2
    %v3781 = vsel %vm3778, %v3779, %v3780
    %v3782 = vrot.slane %v3619, 2
    %v3783 = vrot.slane %v3621, 2
    %v3784 = vsel %vm3778, %v3782, %v3783
    %v3785 = vrot.slane %v3622, 2
    %v3786 = vrot.slane %v3624, 2
    %v3787 = vsel %vm3778, %v3785, %v3786
    %v3788 = vrot.slane %v3623, 2
    %v3789 = vrot.slane %v3625, 2
    %v3790 = vsel %vm3778, %v3788, %v3789
    %v3791 = vrot.slane %v3626, 2
    %v3792 = vrot.slane %v3628, 2
    %v3793 = vsel %vm3778, %v3791, %v3792
    %v3794 = vrot.slane %v3627, 2
    %v3795 = vrot.slane %v3629, 2
    %v3796 = vsel %vm3778, %v3794, %v3795
    %v3797 = vrot.slane %v3630, 2
    %v3798 = vrot.slane %v3632, 2
    %v3799 = vsel %vm3778, %v3797, %v3798
    %v3800 = vrot.slane %v3631, 2
    %v3801 = vrot.slane %v3633, 2
    %v3802 = vsel %vm3778, %v3800, %v3801
    %v3803 = vrot.slane %v3634, 2
    %v3804 = vrot.slane %v3636, 2
    %v3805 = vsel %vm3778, %v3803, %v3804
    %v3806 = vrot.slane %v3635, 2
    %v3807 = vrot.slane %v3637, 2
    %v3808 = vsel %vm3778, %v3806, %v3807
    %v3809 = vrot.slane %v3638, 2
    %v3810 = vrot.slane %v3640, 2
    %v3811 = vsel %vm3778, %v3809, %v3810
    %v3812 = vrot.slane %v3639, 2
    %v3813 = vrot.slane %v3641, 2
    %v3814 = vsel %vm3778, %v3812, %v3813
    %v3815 = vrot.slane %v3642, 2
    %v3816 = vrot.slane %v3644, 2
    %v3817 = vsel %vm3778, %v3815, %v3816
    %v3818 = vrot.slane %v3643, 2
    %v3819 = vrot.slane %v3645, 2
    %v3820 = vsel %vm3778, %v3818, %v3819
    %v3821 = vrot.slane %v3646, 2
    %v3822 = vrot.slane %v3648, 2
    %v3823 = vsel %vm3778, %v3821, %v3822
    %v3824 = vrot.slane %v3647, 2
    %v3825 = vrot.slane %v3649, 2
    %v3826 = vsel %vm3778, %v3824, %v3825
    %v3827 = vrot.slane %v3650, 2
    %v3828 = vrot.slane %v3652, 2
    %v3829 = vsel %vm3778, %v3827, %v3828
    %v3830 = vrot.slane %v3651, 2
    %v3831 = vrot.slane %v3653, 2
    %v3832 = vsel %vm3778, %v3830, %v3831
    %v3833 = vrot.slane %v3654, 2
    %v3834 = vrot.slane %v3656, 2
    %v3835 = vsel %vm3778, %v3833, %v3834
    %v3836 = vrot.slane %v3655, 2
    %v3837 = vrot.slane %v3657, 2
    %v3838 = vsel %vm3778, %v3836, %v3837
    %v3839 = vrot.slane %v3658, 2
    %v3840 = vrot.slane %v3660, 2
    %v3841 = vsel %vm3778, %v3839, %v3840
    %v3842 = vrot.slane %v3659, 2
    %v3843 = vrot.slane %v3661, 2
    %v3844 = vsel %vm3778, %v3842, %v3843
    %v3845 = vrot.slane %v3662, 2
    %v3846 = vrot.slane %v3664, 2
    %v3847 = vsel %vm3778, %v3845, %v3846
    %v3848 = vrot.slane %v3663, 2
    %v3849 = vrot.slane %v3665, 2
    %v3850 = vsel %vm3778, %v3848, %v3849
    %v3851 = vrot.slane %v3666, 2
    %v3852 = vrot.slane %v3668, 2
    %v3853 = vsel %vm3778, %v3851, %v3852
    %v3854 = vrot.slane %v3667, 2
    %v3855 = vrot.slane %v3669, 2
    %v3856 = vsel %vm3778, %v3854, %v3855
    %v3857 = vrot.slane %v3670, 2
    %v3858 = vrot.slane %v3672, 2
    %v3859 = vsel %vm3778, %v3857, %v3858
    %v3860 = vrot.slane %v3671, 2
    %v3861 = vrot.slane %v3673, 2
    %v3862 = vsel %vm3778, %v3860, %v3861
    %v3863 = vrot.slane %v3674, 2
    %v3864 = vrot.slane %v3676, 2
    %v3865 = vsel %vm3778, %v3863, %v3864
    %v3866 = vrot.slane %v3675, 2
    %v3867 = vrot.slane %v3677, 2
    %v3868 = vsel %vm3778, %v3866, %v3867
    %v3869 = vrot.slane %v3678, 2
    %v3870 = vrot.slane %v3680, 2
    %v3871 = vsel %vm3778, %v3869, %v3870
    %v3872 = vrot.slane %v3679, 2
    %v3873 = vrot.slane %v3681, 2
    %v3874 = vsel %vm3778, %v3872, %v3873
    %v3875 = vrot.slane %v3682, 2
    %v3876 = vrot.slane %v3684, 2
    %v3877 = vsel %vm3778, %v3875, %v3876
    %v3878 = vrot.slane %v3683, 2
    %v3879 = vrot.slane %v3685, 2
    %v3880 = vsel %vm3778, %v3878, %v3879
    %v3881 = vrot.slane %v3686, 2
    %v3882 = vrot.slane %v3688, 2
    %v3883 = vsel %vm3778, %v3881, %v3882
    %v3884 = vrot.slane %v3687, 2
    %v3885 = vrot.slane %v3689, 2
    %v3886 = vsel %vm3778, %v3884, %v3885
    %v3887 = vrot.slane %v3690, 2
    %v3888 = vrot.slane %v3692, 2
    %v3889 = vsel %vm3778, %v3887, %v3888
    %v3890 = vrot.slane %v3691, 2
    %v3891 = vrot.slane %v3693, 2
    %v3892 = vsel %vm3778, %v3890, %v3891
    %v3893 = vrot.slane %v3694, 2
    %v3894 = vrot.slane %v3696, 2
    %v3895 = vsel %vm3778, %v3893, %v3894
    %v3896 = vrot.slane %v3695, 2
    %v3897 = vrot.slane %v3697, 2
    %v3898 = vsel %vm3778, %v3896, %v3897
    %3939 = vst [vmem:[#allocation4] sm:$0xff] %v3781
    %3940 = vst [vmem:[#allocation4 + $0x8] sm:$0xff] %v3784
    %3941 = vst [vmem:[#allocation4 + $0x10] sm:$0xff] %v3787
    %3942 = vst [vmem:[#allocation4 + $0x18] sm:$0xff] %v3790
    %3943 = vst [vmem:[#allocation4 + $0x20] sm:$0xff] %v3793
    %3944 = vst [vmem:[#allocation4 + $0x28] sm:$0xff] %v3796
    %3945 = vst [vmem:[#allocation4 + $0x30] sm:$0xff] %v3799
    %3946 = vst [vmem:[#allocation4 + $0x38] sm:$0xff] %v3802
    %3947 = vst [vmem:[#allocation4 + $0x40] sm:$0xff] %v3805
    %3948 = vst [vmem:[#allocation4 + $0x48] sm:$0xff] %v3808
    %3949 = vst [vmem:[#allocation4 + $0x50] sm:$0xff] %v3811
    %3950 = vst [vmem:[#allocation4 + $0x58] sm:$0xff] %v3814
    %3951 = vst [vmem:[#allocation4 + $0x60] sm:$0xff] %v3817
    %3952 = vst [vmem:[#allocation4 + $0x68] sm:$0xff] %v3820
    %3953 = vst [vmem:[#allocation4 + $0x70] sm:$0xff] %v3823
    %3954 = vst [vmem:[#allocation4 + $0x78] sm:$0xff] %v3826
    %3955 = vst [vmem:[#allocation4 + $0x80] sm:$0xff] %v3829
    %3956 = vst [vmem:[#allocation4 + $0x88] sm:$0xff] %v3832
    %3957 = vst [vmem:[#allocation4 + $0x90] sm:$0xff] %v3835
    %3958 = vst [vmem:[#allocation4 + $0x98] sm:$0xff] %v3838
    %3959 = vst [vmem:[#allocation4 + $0xa0] sm:$0xff] %v3841
    %3960 = vst [vmem:[#allocation4 + $0xa8] sm:$0xff] %v3844
    %3961 = vst [vmem:[#allocation4 + $0xb0] sm:$0xff] %v3847
    %3962 = vst [vmem:[#allocation4 + $0xb8] sm:$0xff] %v3850
    %3963 = vst [vmem:[#allocation4 + $0xc0] sm:$0xff] %v3853
    %3964 = vst [vmem:[#allocation4 + $0xc8] sm:$0xff] %v3856
    %3965 = vst [vmem:[#allocation4 + $0xd0] sm:$0xff] %v3859
    %3966 = vst [vmem:[#allocation4 + $0xd8] sm:$0xff] %v3862
    %3967 = vst [vmem:[#allocation4 + $0xe0] sm:$0xff] %v3865
    %3968 = vst [vmem:[#allocation4 + $0xe8] sm:$0xff] %v3868
    %3969 = vst [vmem:[#allocation4 + $0xf0] sm:$0xff] %v3871
    %3970 = vst [vmem:[#allocation4 + $0xf8] sm:$0xff] %v3874
    %3971 = vst [vmem:[#allocation4 + $0x100] sm:$0xff] %v3877
    %3972 = vst [vmem:[#allocation4 + $0x108] sm:$0xff] %v3880
    %3973 = vst [vmem:[#allocation4 + $0x110] sm:$0xff] %v3883
    %3974 = vst [vmem:[#allocation4 + $0x118] sm:$0xff] %v3886
    %3975 = vst [vmem:[#allocation4 + $0x120] sm:$0xff] %v3889
    %3976 = vst [vmem:[#allocation4 + $0x128] sm:$0xff] %v3892
    %3977 = vst [vmem:[#allocation4 + $0x130] sm:$0xff] %v3895
    %3978 = vst [vmem:[#allocation4 + $0x138] sm:$0xff] %v3898
    %v3979 = vld [vmem:[#allocation4] sm:$0xff]
    %v3980 = vld [vmem:[#allocation4 + $0x8] sm:$0xff]
    %v3981 = vld [vmem:[#allocation4 + $0x10] sm:$0xff]
    %v3982 = vld [vmem:[#allocation4 + $0x18] sm:$0xff]
    %v3983 = vld [vmem:[#allocation4 + $0x20] sm:$0xff]
    %v3984 = vld [vmem:[#allocation4 + $0x28] sm:$0xff]
    %v3985 = vld [vmem:[#allocation4 + $0x30] sm:$0xff]
    %v3986 = vld [vmem:[#allocation4 + $0x38] sm:$0xff]
    %v3987 = vld [vmem:[#allocation4 + $0x40] sm:$0xff]
    %v3988 = vld [vmem:[#allocation4 + $0x48] sm:$0xff]
    %v3989 = vld [vmem:[#allocation4 + $0x50] sm:$0xff]
    %v3990 = vld [vmem:[#allocation4 + $0x58] sm:$0xff]
    %v3991 = vld [vmem:[#allocation4 + $0x60] sm:$0xff]
    %v3992 = vld [vmem:[#allocation4 + $0x68] sm:$0xff]
    %v3993 = vld [vmem:[#allocation4 + $0x70] sm:$0xff]
    %v3994 = vld [vmem:[#allocation4 + $0x78] sm:$0xff]
    %v3995 = vld [vmem:[#allocation4 + $0xa0] sm:$0xff]
    %v3996 = vld [vmem:[#allocation4 + $0xa8] sm:$0xff]
    %v3997 = vld [vmem:[#allocation4 + $0xb0] sm:$0xff]
    %v3998 = vld [vmem:[#allocation4 + $0xb8] sm:$0xff]
    %v3999 = vld [vmem:[#allocation4 + $0xc0] sm:$0xff]
    %v4000 = vld [vmem:[#allocation4 + $0xc8] sm:$0xff]
    %v4001 = vld [vmem:[#allocation4 + $0xd0] sm:$0xff]
    %v4002 = vld [vmem:[#allocation4 + $0xd8] sm:$0xff]
    %v4003 = vld [vmem:[#allocation4 + $0xe0] sm:$0xff]
    %v4004 = vld [vmem:[#allocation4 + $0xe8] sm:$0xff]
    %v4005 = vld [vmem:[#allocation4 + $0xf0] sm:$0xff]
    %v4006 = vld [vmem:[#allocation4 + $0xf8] sm:$0xff]
    %v4007 = vld [vmem:[#allocation4 + $0x100] sm:$0xff]
    %v4008 = vld [vmem:[#allocation4 + $0x108] sm:$0xff]
    %v4009 = vld [vmem:[#allocation4 + $0x110] sm:$0xff]
    %v4010 = vld [vmem:[#allocation4 + $0x118] sm:$0xff]
    %v4011 = vpack.c.bf16 %v3981, %v3979
    %v4012 = vpack.c.bf16 %v3982, %v3980
    %v4013 = vpack.c.bf16 %v3985, %v3983
    %v4014 = vpack.c.bf16 %v3986, %v3984
    %v4015 = vpack.c.bf16 %v3989, %v3987
    %v4016 = vpack.c.bf16 %v3990, %v3988
    %v4017 = vpack.c.bf16 %v3993, %v3991
    %v4018 = vpack.c.bf16 %v3994, %v3992
    %v4019 = vpack.c.bf16 %v3997, %v3995
    %v4020 = vpack.c.bf16 %v3998, %v3996
    %v4021 = vpack.c.bf16 %v4001, %v3999
    %v4022 = vpack.c.bf16 %v4002, %v4000
    %v4023 = vpack.c.bf16 %v4005, %v4003
    %v4024 = vpack.c.bf16 %v4006, %v4004
    %v4025 = vpack.c.bf16 %v4009, %v4007
    %v4026 = vpack.c.bf16 %v4010, %v4008
    %v4027 = vld [vmem:[#allocation6] sm:$0xff]
    %v4028 = vld [vmem:[#allocation6 + $0x8] sm:$0xff]
    %v4029 = vld [vmem:[#allocation6 + $0x10] sm:$0xff]
    %v4030 = vld [vmem:[#allocation6 + $0x18] sm:$0xff]
    %v4031 = vld [vmem:[#allocation6 + $0x20] sm:$0xff]
    %v4032 = vld [vmem:[#allocation6 + $0x28] sm:$0xff]
    %v4033 = vld [vmem:[#allocation6 + $0x30] sm:$0xff]
    %v4034 = vld [vmem:[#allocation6 + $0x38] sm:$0xff]
    %v4035 = vld [vmem:[#allocation6 + $0x40] sm:$0xff]
    %v4036 = vld [vmem:[#allocation6 + $0x48] sm:$0xff]
    %v4037 = vld [vmem:[#allocation6 + $0x50] sm:$0xff]
    %v4038 = vld [vmem:[#allocation6 + $0x58] sm:$0xff]
    %v4039 = vld [vmem:[#allocation6 + $0x60] sm:$0xff]
    %v4040 = vld [vmem:[#allocation6 + $0x68] sm:$0xff]
    %v4041 = vld [vmem:[#allocation6 + $0x70] sm:$0xff]
    %v4042 = vld [vmem:[#allocation6 + $0x78] sm:$0xff]
    %v4043 = vld [vmem:[#allocation6 + $0x80] sm:$0xff]
    %v4044 = vld [vmem:[#allocation6 + $0x88] sm:$0xff]
    %v4045 = vld [vmem:[#allocation6 + $0x90] sm:$0xff]
    %v4046 = vld [vmem:[#allocation6 + $0x98] sm:$0xff]
    %v4047 = vld [vmem:[#allocation6 + $0xa0] sm:$0xff]
    %v4048 = vld [vmem:[#allocation6 + $0xa8] sm:$0xff]
    %v4049 = vld [vmem:[#allocation6 + $0xb0] sm:$0xff]
    %v4050 = vld [vmem:[#allocation6 + $0xb8] sm:$0xff]
    %v4051 = vld [vmem:[#allocation6 + $0xc0] sm:$0xff]
    %v4052 = vld [vmem:[#allocation6 + $0xc8] sm:$0xff]
    %v4053 = vld [vmem:[#allocation6 + $0xd0] sm:$0xff]
    %v4054 = vld [vmem:[#allocation6 + $0xd8] sm:$0xff]
    %v4055 = vld [vmem:[#allocation6 + $0xe0] sm:$0xff]
    %v4056 = vld [vmem:[#allocation6 + $0xe8] sm:$0xff]
    %v4057 = vld [vmem:[#allocation6 + $0xf0] sm:$0xff]
    %v4058 = vld [vmem:[#allocation6 + $0xf8] sm:$0xff]
    %s4059 = scalar_lea.vmem %s1, 512
    %v4060 = vld [vmem:[%s4059] sm:$0xff]
    %v4061 = vld [vmem:[%s4059 + $0x8] sm:$0xff]
    %v4062 = vld [vmem:[%s4059 + $0x10] sm:$0xff]
    %v4063 = vld [vmem:[%s4059 + $0x18] sm:$0xff]
    %v4064 = vld [vmem:[%s4059 + $0x20] sm:$0xff]
    %v4065 = vld [vmem:[%s4059 + $0x28] sm:$0xff]
    %v4066 = vld [vmem:[%s4059 + $0x30] sm:$0xff]
    %v4067 = vld [vmem:[%s4059 + $0x38] sm:$0xff]
    %v4068 = vld [vmem:[%s4059 + $0x40] sm:$0xff]
    %v4069 = vld [vmem:[%s4059 + $0x48] sm:$0xff]
    %v4070 = vld [vmem:[%s4059 + $0x50] sm:$0xff]
    %v4071 = vld [vmem:[%s4059 + $0x58] sm:$0xff]
    %v4072 = vld [vmem:[%s4059 + $0x60] sm:$0xff]
    %v4073 = vld [vmem:[%s4059 + $0x68] sm:$0xff]
    %v4074 = vld [vmem:[%s4059 + $0x70] sm:$0xff]
    %v4075 = vld [vmem:[%s4059 + $0x78] sm:$0xff]
    %v4076 = vld [vmem:[%s4059 + $0x80] sm:$0xff]
    %v4077 = vld [vmem:[%s4059 + $0x88] sm:$0xff]
    %v4078 = vld [vmem:[%s4059 + $0x90] sm:$0xff]
    %v4079 = vld [vmem:[%s4059 + $0x98] sm:$0xff]
    %v4080 = vld [vmem:[%s4059 + $0xa0] sm:$0xff]
    %v4081 = vld [vmem:[%s4059 + $0xa8] sm:$0xff]
    %v4082 = vld [vmem:[%s4059 + $0xb0] sm:$0xff]
    %v4083 = vld [vmem:[%s4059 + $0xb8] sm:$0xff]
    %v4084 = vld [vmem:[%s4059 + $0xc0] sm:$0xff]
    %v4085 = vld [vmem:[%s4059 + $0xc8] sm:$0xff]
    %v4086 = vld [vmem:[%s4059 + $0xd0] sm:$0xff]
    %v4087 = vld [vmem:[%s4059 + $0xd8] sm:$0xff]
    %v4088 = vld [vmem:[%s4059 + $0xe0] sm:$0xff]
    %v4089 = vld [vmem:[%s4059 + $0xe8] sm:$0xff]
    %v4090 = vld [vmem:[%s4059 + $0xf0] sm:$0xff]
    %v4091 = vld [vmem:[%s4059 + $0xf8] sm:$0xff]
    %v4124 = vunpack.c.l.b16 %v4060
    %v4125 = vunpack.c.h.b16 %v4060
    %v4126 = vunpack.c.l.b16 %v4061
    %v4127 = vunpack.c.h.b16 %v4061
    %v4128 = vunpack.c.l.b16 %v4062
    %v4129 = vunpack.c.h.b16 %v4062
    %v4130 = vunpack.c.l.b16 %v4063
    %v4131 = vunpack.c.h.b16 %v4063
    %v4132 = vunpack.c.l.b16 %v4064
    %v4133 = vunpack.c.h.b16 %v4064
    %v4134 = vunpack.c.l.b16 %v4065
    %v4135 = vunpack.c.h.b16 %v4065
    %v4136 = vunpack.c.l.b16 %v4066
    %v4137 = vunpack.c.h.b16 %v4066
    %v4138 = vunpack.c.l.b16 %v4067
    %v4139 = vunpack.c.h.b16 %v4067
    %v4140 = vunpack.c.l.b16 %v4068
    %v4141 = vunpack.c.h.b16 %v4068
    %v4142 = vunpack.c.l.b16 %v4069
    %v4143 = vunpack.c.h.b16 %v4069
    %v4144 = vunpack.c.l.b16 %v4070
    %v4145 = vunpack.c.h.b16 %v4070
    %v4146 = vunpack.c.l.b16 %v4071
    %v4147 = vunpack.c.h.b16 %v4071
    %v4148 = vunpack.c.l.b16 %v4072
    %v4149 = vunpack.c.h.b16 %v4072
    %v4150 = vunpack.c.l.b16 %v4073
    %v4151 = vunpack.c.h.b16 %v4073
    %v4152 = vunpack.c.l.b16 %v4074
    %v4153 = vunpack.c.h.b16 %v4074
    %v4154 = vunpack.c.l.b16 %v4075
    %v4155 = vunpack.c.h.b16 %v4075
    %v4156 = vunpack.c.l.b16 %v4076
    %v4157 = vunpack.c.h.b16 %v4076
    %v4158 = vunpack.c.l.b16 %v4077
    %v4159 = vunpack.c.h.b16 %v4077
    %v4160 = vunpack.c.l.b16 %v4078
    %v4161 = vunpack.c.h.b16 %v4078
    %v4162 = vunpack.c.l.b16 %v4079
    %v4163 = vunpack.c.h.b16 %v4079
    %v4164 = vunpack.c.l.b16 %v4080
    %v4165 = vunpack.c.h.b16 %v4080
    %v4166 = vunpack.c.l.b16 %v4081
    %v4167 = vunpack.c.h.b16 %v4081
    %v4168 = vunpack.c.l.b16 %v4082
    %v4169 = vunpack.c.h.b16 %v4082
    %v4170 = vunpack.c.l.b16 %v4083
    %v4171 = vunpack.c.h.b16 %v4083
    %v4172 = vunpack.c.l.b16 %v4084
    %v4173 = vunpack.c.h.b16 %v4084
    %v4174 = vunpack.c.l.b16 %v4085
    %v4175 = vunpack.c.h.b16 %v4085
    %v4176 = vunpack.c.l.b16 %v4086
    %v4177 = vunpack.c.h.b16 %v4086
    %v4178 = vunpack.c.l.b16 %v4087
    %v4179 = vunpack.c.h.b16 %v4087
    %v4180 = vunpack.c.l.b16 %v4088
    %v4181 = vunpack.c.h.b16 %v4088
    %v4182 = vunpack.c.l.b16 %v4089
    %v4183 = vunpack.c.h.b16 %v4089
    %v4184 = vunpack.c.l.b16 %v4090
    %v4185 = vunpack.c.h.b16 %v4090
    %v4186 = vunpack.c.l.b16 %v4091
    %v4187 = vunpack.c.h.b16 %v4091
    %v4188 = vpack.c.b16 %v4126, %v4124
    %v4189 = vpack.c.b16 %v4127, %v4125
    %v4190 = vpack.c.b16 %v4130, %v4128
    %v4191 = vpack.c.b16 %v4131, %v4129
    %v4192 = vpack.c.b16 %v4134, %v4132
    %v4193 = vpack.c.b16 %v4135, %v4133
    %v4194 = vpack.c.b16 %v4138, %v4136
    %v4195 = vpack.c.b16 %v4139, %v4137
    %v4196 = vpack.c.b16 %v4142, %v4140
    %v4197 = vpack.c.b16 %v4143, %v4141
    %v4198 = vpack.c.b16 %v4146, %v4144
    %v4199 = vpack.c.b16 %v4147, %v4145
    %v4200 = vpack.c.b16 %v4150, %v4148
    %v4201 = vpack.c.b16 %v4151, %v4149
    %v4202 = vpack.c.b16 %v4154, %v4152
    %v4203 = vpack.c.b16 %v4155, %v4153
    %v4204 = vpack.c.b16 %v4158, %v4156
    %v4205 = vpack.c.b16 %v4159, %v4157
    %v4206 = vpack.c.b16 %v4162, %v4160
    %v4207 = vpack.c.b16 %v4163, %v4161
    %v4208 = vpack.c.b16 %v4166, %v4164
    %v4209 = vpack.c.b16 %v4167, %v4165
    %v4210 = vpack.c.b16 %v4170, %v4168
    %v4211 = vpack.c.b16 %v4171, %v4169
    %v4212 = vpack.c.b16 %v4174, %v4172
    %v4213 = vpack.c.b16 %v4175, %v4173
    %v4214 = vpack.c.b16 %v4178, %v4176
    %v4215 = vpack.c.b16 %v4179, %v4177
    %v4216 = vpack.c.b16 %v4182, %v4180
    %v4217 = vpack.c.b16 %v4183, %v4181
    %v4218 = vpack.c.b16 %v4186, %v4184
    %v4219 = vpack.c.b16 %v4187, %v4185
    %4252 = vmatprep.subr.bf16.mxu0 %v4189
    %4253 = vmatpush1.bf16.msra.mxu0 %v4188
    %4254 = vmatprep.subr.bf16.mxu0 %v4191
    %4255 = vmatpush1.bf16.msra.mxu0 %v4190
    %4256 = vmatprep.subr.bf16.mxu0 %v4193
    %4257 = vmatpush1.bf16.msra.mxu0 %v4192
    %4258 = vmatprep.subr.bf16.mxu0 %v4195
    %4259 = vmatpush1.bf16.msra.mxu0 %v4194
    %4260 = vmatprep.subr.bf16.mxu0 %v4197
    %4261 = vmatpush1.bf16.msra.mxu0 %v4196
    %4262 = vmatprep.subr.bf16.mxu0 %v4199
    %4263 = vmatpush1.bf16.msra.mxu0 %v4198
    %4264 = vmatprep.subr.bf16.mxu0 %v4201
    %4265 = vmatpush1.bf16.msra.mxu0 %v4200
    %4266 = vmatprep.subr.bf16.mxu0 %v4203
    %4267 = vmatpush1.bf16.msra.mxu0 %v4202
    %4268 = vmatprep.subr.bf16.mxu0 %v4205
    %4269 = vmatpush1.bf16.msra.mxu0 %v4204
    %4270 = vmatprep.subr.bf16.mxu0 %v4207
    %4271 = vmatpush1.bf16.msra.mxu0 %v4206
    %4272 = vmatprep.subr.bf16.mxu0 %v4209
    %4273 = vmatpush1.bf16.msra.mxu0 %v4208
    %4274 = vmatprep.subr.bf16.mxu0 %v4211
    %4275 = vmatpush1.bf16.msra.mxu0 %v4210
    %4276 = vmatprep.subr.bf16.mxu0 %v4213
    %4277 = vmatpush1.bf16.msra.mxu0 %v4212
    %4278 = vmatprep.subr.bf16.mxu0 %v4215
    %4279 = vmatpush1.bf16.msra.mxu0 %v4214
    %4280 = vmatprep.subr.bf16.mxu0 %v4217
    %4281 = vmatpush1.bf16.msra.mxu0 %v4216
    %4282 = vmatprep.subr.bf16.mxu0 %v4219
    %4283 = vmatpush1.bf16.msra.mxu0 %v4218
    %4284 = vmatprep.mubr.bf16.mxu0 %v4012
    %4285 = vmatmul.mubr.bf16.gmra.mrb[0].mxu0 %v4011
    %v4286 = vpop.f32.mrb[0].mxu0
    %v4287 = vadd.f32 0.0, %v4286
    %v4288 = vpop.f32.mrb[0].mxu0
    %v4289 = vadd.f32 0.0, %v4288
    %v4290 = vpop.f32.mrb[0].mxu0
    %v4291 = vadd.f32 0.0, %v4290
    %v4292 = vpop.f32.mrb[0].mxu0
    %v4293 = vadd.f32 0.0, %v4292
    %4294 = vmatprep.mubr.bf16.mxu0 %v4014
    %4295 = vmatmul.mubr.bf16.gmra.mrb[0].mxu0 %v4013
    %v4296 = vpop.f32.mrb[0].mxu0
    %v4297 = vadd.f32 0.0, %v4296
    %v4298 = vpop.f32.mrb[0].mxu0
    %v4299 = vadd.f32 0.0, %v4298
    %v4300 = vpop.f32.mrb[0].mxu0
    %v4301 = vadd.f32 0.0, %v4300
    %v4302 = vpop.f32.mrb[0].mxu0
    %v4303 = vadd.f32 0.0, %v4302
    %4304 = vmatprep.mubr.bf16.mxu0 %v4016
    %4305 = vmatmul.mubr.bf16.gmra.mrb[0].mxu0 %v4015
    %v4306 = vpop.f32.mrb[0].mxu0
    %v4307 = vadd.f32 0.0, %v4306
    %v4308 = vpop.f32.mrb[0].mxu0
    %v4309 = vadd.f32 0.0, %v4308
    %v4310 = vpop.f32.mrb[0].mxu0
    %v4311 = vadd.f32 0.0, %v4310
    %v4312 = vpop.f32.mrb[0].mxu0
    %v4313 = vadd.f32 0.0, %v4312
    %4314 = vmatprep.mubr.bf16.mxu0 %v4018
    %4315 = vmatmul.mubr.bf16.gmra.mrb[0].mxu0 %v4017
    %v4316 = vpop.f32.mrb[0].mxu0
    %v4317 = vadd.f32 0.0, %v4316
    %v4318 = vpop.f32.mrb[0].mxu0
    %v4319 = vadd.f32 0.0, %v4318
    %v4320 = vpop.f32.mrb[0].mxu0
    %v4321 = vadd.f32 0.0, %v4320
    %v4322 = vpop.f32.mrb[0].mxu0
    %v4323 = vadd.f32 0.0, %v4322
    %4324 = vmatprep.mubr.bf16.mxu0 %v4020
    %4325 = vmatmul.mubr.bf16.gmra.mrb[0].mxu0 %v4019
    %v4326 = vpop.f32.mrb[0].mxu0
    %v4327 = vadd.f32 0.0, %v4326
    %v4328 = vpop.f32.mrb[0].mxu0
    %v4329 = vadd.f32 0.0, %v4328
    %v4330 = vpop.f32.mrb[0].mxu0
    %v4331 = vadd.f32 0.0, %v4330
    %v4332 = vpop.f32.mrb[0].mxu0
    %v4333 = vadd.f32 0.0, %v4332
    %4334 = vmatprep.mubr.bf16.mxu0 %v4022
    %4335 = vmatmul.mubr.bf16.gmra.mrb[0].mxu0 %v4021
    %v4336 = vpop.f32.mrb[0].mxu0
    %v4337 = vadd.f32 0.0, %v4336
    %v4338 = vpop.f32.mrb[0].mxu0
    %v4339 = vadd.f32 0.0, %v4338
    %v4340 = vpop.f32.mrb[0].mxu0
    %v4341 = vadd.f32 0.0, %v4340
    %v4342 = vpop.f32.mrb[0].mxu0
    %v4343 = vadd.f32 0.0, %v4342
    %4344 = vmatprep.mubr.bf16.mxu0 %v4024
    %4345 = vmatmul.mubr.bf16.gmra.mrb[0].mxu0 %v4023
    %v4346 = vpop.f32.mrb[0].mxu0
    %v4347 = vadd.f32 0.0, %v4346
    %v4348 = vpop.f32.mrb[0].mxu0
    %v4349 = vadd.f32 0.0, %v4348
    %v4350 = vpop.f32.mrb[0].mxu0
    %v4351 = vadd.f32 0.0, %v4350
    %v4352 = vpop.f32.mrb[0].mxu0
    %v4353 = vadd.f32 0.0, %v4352
    %4354 = vmatprep.mubr.bf16.mxu0 %v4026
    %4355 = vmatmul.mubr.bf16.gmra.mrb[0].mxu0 %v4025
    %v4356 = vpop.f32.mrb[0].mxu0
    %v4357 = vadd.f32 0.0, %v4356
    %v4358 = vpop.f32.mrb[0].mxu0
    %v4359 = vadd.f32 0.0, %v4358
    %v4360 = vpop.f32.mrb[0].mxu0
    %v4361 = vadd.f32 0.0, %v4360
    %v4362 = vpop.f32.mrb[0].mxu0
    %v4363 = vadd.f32 0.0, %v4362
    %4364 = vdwg.mxu0
    %v4365 = vadd.f32 %v4027, %v4287
    %v4366 = vadd.f32 %v4028, %v4289
    %v4367 = vadd.f32 %v4029, %v4291
    %v4368 = vadd.f32 %v4030, %v4293
    %v4369 = vadd.f32 %v4031, %v4297
    %v4370 = vadd.f32 %v4032, %v4299
    %v4371 = vadd.f32 %v4033, %v4301
    %v4372 = vadd.f32 %v4034, %v4303
    %v4373 = vadd.f32 %v4035, %v4307
    %v4374 = vadd.f32 %v4036, %v4309
    %v4375 = vadd.f32 %v4037, %v4311
    %v4376 = vadd.f32 %v4038, %v4313
    %v4377 = vadd.f32 %v4039, %v4317
    %v4378 = vadd.f32 %v4040, %v4319
    %v4379 = vadd.f32 %v4041, %v4321
    %v4380 = vadd.f32 %v4042, %v4323
    %v4381 = vadd.f32 %v4043, %v4327
    %v4382 = vadd.f32 %v4044, %v4329
    %v4383 = vadd.f32 %v4045, %v4331
    %v4384 = vadd.f32 %v4046, %v4333
    %v4385 = vadd.f32 %v4047, %v4337
    %v4386 = vadd.f32 %v4048, %v4339
    %v4387 = vadd.f32 %v4049, %v4341
    %v4388 = vadd.f32 %v4050, %v4343
    %v4389 = vadd.f32 %v4051, %v4347
    %v4390 = vadd.f32 %v4052, %v4349
    %v4391 = vadd.f32 %v4053, %v4351
    %v4392 = vadd.f32 %v4054, %v4353
    %v4393 = vadd.f32 %v4055, %v4357
    %v4394 = vadd.f32 %v4056, %v4359
    %v4395 = vadd.f32 %v4057, %v4361
    %v4396 = vadd.f32 %v4058, %v4363
    %4397 = vst [vmem:[#allocation6] sm:$0xff] %v4365
    %4398 = vst [vmem:[#allocation6 + $0x8] sm:$0xff] %v4366
    %4399 = vst [vmem:[#allocation6 + $0x10] sm:$0xff] %v4367
    %4400 = vst [vmem:[#allocation6 + $0x18] sm:$0xff] %v4368
    %4401 = vst [vmem:[#allocation6 + $0x20] sm:$0xff] %v4369
    %4402 = vst [vmem:[#allocation6 + $0x28] sm:$0xff] %v4370
    %4403 = vst [vmem:[#allocation6 + $0x30] sm:$0xff] %v4371
    %4404 = vst [vmem:[#allocation6 + $0x38] sm:$0xff] %v4372
    %4405 = vst [vmem:[#allocation6 + $0x40] sm:$0xff] %v4373
    %4406 = vst [vmem:[#allocation6 + $0x48] sm:$0xff] %v4374
    %4407 = vst [vmem:[#allocation6 + $0x50] sm:$0xff] %v4375
    %4408 = vst [vmem:[#allocation6 + $0x58] sm:$0xff] %v4376
    %4409 = vst [vmem:[#allocation6 + $0x60] sm:$0xff] %v4377
    %4410 = vst [vmem:[#allocation6 + $0x68] sm:$0xff] %v4378
    %4411 = vst [vmem:[#allocation6 + $0x70] sm:$0xff] %v4379
    %4412 = vst [vmem:[#allocation6 + $0x78] sm:$0xff] %v4380
    %4413 = vst [vmem:[#allocation6 + $0x80] sm:$0xff] %v4381
    %4414 = vst [vmem:[#allocation6 + $0x88] sm:$0xff] %v4382
    %4415 = vst [vmem:[#allocation6 + $0x90] sm:$0xff] %v4383
    %4416 = vst [vmem:[#allocation6 + $0x98] sm:$0xff] %v4384
    %4417 = vst [vmem:[#allocation6 + $0xa0] sm:$0xff] %v4385
    %4418 = vst [vmem:[#allocation6 + $0xa8] sm:$0xff] %v4386
    %4419 = vst [vmem:[#allocation6 + $0xb0] sm:$0xff] %v4387
    %4420 = vst [vmem:[#allocation6 + $0xb8] sm:$0xff] %v4388
    %4421 = vst [vmem:[#allocation6 + $0xc0] sm:$0xff] %v4389
    %4422 = vst [vmem:[#allocation6 + $0xc8] sm:$0xff] %v4390
    %4423 = vst [vmem:[#allocation6 + $0xd0] sm:$0xff] %v4391
    %4424 = vst [vmem:[#allocation6 + $0xd8] sm:$0xff] %v4392
    %4425 = vst [vmem:[#allocation6 + $0xe0] sm:$0xff] %v4393
    %4426 = vst [vmem:[#allocation6 + $0xe8] sm:$0xff] %v4394
    %4427 = vst [vmem:[#allocation6 + $0xf0] sm:$0xff] %v4395
    %4428 = vst [vmem:[#allocation6 + $0xf8] sm:$0xff] %v4396
    %v4429 = vld [vmem:[%s1005] sm:$0xff]
    %v4430 = vld [vmem:[%s1005 + $0x8] sm:$0xff]
    %v4431 = vld [vmem:[%s1005 + $0x10] sm:$0xff]
    %v4432 = vld [vmem:[%s1005 + $0x18] sm:$0xff]
    %v4433 = vld [vmem:[%s1005 + $0x20] sm:$0xff]
    %v4434 = vld [vmem:[%s1005 + $0x28] sm:$0xff]
    %v4435 = vld [vmem:[%s1005 + $0x30] sm:$0xff]
    %v4436 = vld [vmem:[%s1005 + $0x38] sm:$0xff]
    %v4437 = vld [vmem:[%s1005 + $0x40] sm:$0xff]
    %v4438 = vld [vmem:[%s1005 + $0x48] sm:$0xff]
    %v4439 = vld [vmem:[%s1005 + $0x50] sm:$0xff]
    %v4440 = vld [vmem:[%s1005 + $0x58] sm:$0xff]
    %v4441 = vld [vmem:[%s1005 + $0x60] sm:$0xff]
    %v4442 = vld [vmem:[%s1005 + $0x68] sm:$0xff]
    %v4443 = vld [vmem:[%s1005 + $0x70] sm:$0xff]
    %v4444 = vld [vmem:[%s1005 + $0x78] sm:$0xff]
    %v4445 = vld [vmem:[%s1005 + $0xa0] sm:$0xff]
    %v4446 = vld [vmem:[%s1005 + $0xa8] sm:$0xff]
    %v4447 = vld [vmem:[%s1005 + $0xb0] sm:$0xff]
    %v4448 = vld [vmem:[%s1005 + $0xb8] sm:$0xff]
    %v4449 = vld [vmem:[%s1005 + $0xc0] sm:$0xff]
    %v4450 = vld [vmem:[%s1005 + $0xc8] sm:$0xff]
    %v4451 = vld [vmem:[%s1005 + $0xd0] sm:$0xff]
    %v4452 = vld [vmem:[%s1005 + $0xd8] sm:$0xff]
    %v4453 = vld [vmem:[%s1005 + $0xe0] sm:$0xff]
    %v4454 = vld [vmem:[%s1005 + $0xe8] sm:$0xff]
    %v4455 = vld [vmem:[%s1005 + $0xf0] sm:$0xff]
    %v4456 = vld [vmem:[%s1005 + $0xf8] sm:$0xff]
    %v4457 = vld [vmem:[%s1005 + $0x100] sm:$0xff]
    %v4458 = vld [vmem:[%s1005 + $0x108] sm:$0xff]
    %v4459 = vld [vmem:[%s1005 + $0x110] sm:$0xff]
    %v4460 = vld [vmem:[%s1005 + $0x118] sm:$0xff]
    %v4461 = vpack.c.bf16 %v4431, %v4429
    %v4462 = vpack.c.bf16 %v4432, %v4430
    %v4463 = vpack.c.bf16 %v4435, %v4433
    %v4464 = vpack.c.bf16 %v4436, %v4434
    %v4465 = vpack.c.bf16 %v4439, %v4437
    %v4466 = vpack.c.bf16 %v4440, %v4438
    %v4467 = vpack.c.bf16 %v4443, %v4441
    %v4468 = vpack.c.bf16 %v4444, %v4442
    %v4469 = vpack.c.bf16 %v4447, %v4445
    %v4470 = vpack.c.bf16 %v4448, %v4446
    %v4471 = vpack.c.bf16 %v4451, %v4449
    %v4472 = vpack.c.bf16 %v4452, %v4450
    %v4473 = vpack.c.bf16 %v4455, %v4453
    %v4474 = vpack.c.bf16 %v4456, %v4454
    %v4475 = vpack.c.bf16 %v4459, %v4457
    %v4476 = vpack.c.bf16 %v4460, %v4458
    %v4477 = vld [vmem:[#allocation6] sm:$0xff]
    %v4478 = vld [vmem:[#allocation6 + $0x8] sm:$0xff]
    %v4479 = vld [vmem:[#allocation6 + $0x10] sm:$0xff]
    %v4480 = vld [vmem:[#allocation6 + $0x18] sm:$0xff]
    %v4481 = vld [vmem:[#allocation6 + $0x20] sm:$0xff]
    %v4482 = vld [vmem:[#allocation6 + $0x28] sm:$0xff]
    %v4483 = vld [vmem:[#allocation6 + $0x30] sm:$0xff]
    %v4484 = vld [vmem:[#allocation6 + $0x38] sm:$0xff]
    %v4485 = vld [vmem:[#allocation6 + $0x40] sm:$0xff]
    %v4486 = vld [vmem:[#allocation6 + $0x48] sm:$0xff]
    %v4487 = vld [vmem:[#allocation6 + $0x50] sm:$0xff]
    %v4488 = vld [vmem:[#allocation6 + $0x58] sm:$0xff]
    %v4489 = vld [vmem:[#allocation6 + $0x60] sm:$0xff]
    %v4490 = vld [vmem:[#allocation6 + $0x68] sm:$0xff]
    %v4491 = vld [vmem:[#allocation6 + $0x70] sm:$0xff]
    %v4492 = vld [vmem:[#allocation6 + $0x78] sm:$0xff]
    %v4493 = vld [vmem:[#allocation6 + $0x80] sm:$0xff]
    %v4494 = vld [vmem:[#allocation6 + $0x88] sm:$0xff]
    %v4495 = vld [vmem:[#allocation6 + $0x90] sm:$0xff]
    %v4496 = vld [vmem:[#allocation6 + $0x98] sm:$0xff]
    %v4497 = vld [vmem:[#allocation6 + $0xa0] sm:$0xff]
    %v4498 = vld [vmem:[#allocation6 + $0xa8] sm:$0xff]
    %v4499 = vld [vmem:[#allocation6 + $0xb0] sm:$0xff]
    %v4500 = vld [vmem:[#allocation6 + $0xb8] sm:$0xff]
    %v4501 = vld [vmem:[#allocation6 + $0xc0] sm:$0xff]
    %v4502 = vld [vmem:[#allocation6 + $0xc8] sm:$0xff]
    %v4503 = vld [vmem:[#allocation6 + $0xd0] sm:$0xff]
    %v4504 = vld [vmem:[#allocation6 + $0xd8] sm:$0xff]
    %v4505 = vld [vmem:[#allocation6 + $0xe0] sm:$0xff]
    %v4506 = vld [vmem:[#allocation6 + $0xe8] sm:$0xff]
    %v4507 = vld [vmem:[#allocation6 + $0xf0] sm:$0xff]
    %v4508 = vld [vmem:[#allocation6 + $0xf8] sm:$0xff]
    %s4509 = scalar_lea.vmem %s1, 1280
    %v4510 = vld [vmem:[%s4509] sm:$0xff]
    %v4511 = vld [vmem:[%s4509 + $0x8] sm:$0xff]
    %v4512 = vld [vmem:[%s4509 + $0x10] sm:$0xff]
    %v4513 = vld [vmem:[%s4509 + $0x18] sm:$0xff]
    %v4514 = vld [vmem:[%s4509 + $0x20] sm:$0xff]
    %v4515 = vld [vmem:[%s4509 + $0x28] sm:$0xff]
    %v4516 = vld [vmem:[%s4509 + $0x30] sm:$0xff]
    %v4517 = vld [vmem:[%s4509 + $0x38] sm:$0xff]
    %v4518 = vld [vmem:[%s4509 + $0x40] sm:$0xff]
    %v4519 = vld [vmem:[%s4509 + $0x48] sm:$0xff]
    %v4520 = vld [vmem:[%s4509 + $0x50] sm:$0xff]
    %v4521 = vld [vmem:[%s4509 + $0x58] sm:$0xff]
    %v4522 = vld [vmem:[%s4509 + $0x60] sm:$0xff]
    %v4523 = vld [vmem:[%s4509 + $0x68] sm:$0xff]
    %v4524 = vld [vmem:[%s4509 + $0x70] sm:$0xff]
    %v4525 = vld [vmem:[%s4509 + $0x78] sm:$0xff]
    %v4526 = vld [vmem:[%s4509 + $0x80] sm:$0xff]
    %v4527 = vld [vmem:[%s4509 + $0x88] sm:$0xff]
    %v4528 = vld [vmem:[%s4509 + $0x90] sm:$0xff]
    %v4529 = vld [vmem:[%s4509 + $0x98] sm:$0xff]
    %v4530 = vld [vmem:[%s4509 + $0xa0] sm:$0xff]
    %v4531 = vld [vmem:[%s4509 + $0xa8] sm:$0xff]
    %v4532 = vld [vmem:[%s4509 + $0xb0] sm:$0xff]
    %v4533 = vld [vmem:[%s4509 + $0xb8] sm:$0xff]
    %v4534 = vld [vmem:[%s4509 + $0xc0] sm:$0xff]
    %v4535 = vld [vmem:[%s4509 + $0xc8] sm:$0xff]
    %v4536 = vld [vmem:[%s4509 + $0xd0] sm:$0xff]
    %v4537 = vld [vmem:[%s4509 + $0xd8] sm:$0xff]
    %v4538 = vld [vmem:[%s4509 + $0xe0] sm:$0xff]
    %v4539 = vld [vmem:[%s4509 + $0xe8] sm:$0xff]
    %v4540 = vld [vmem:[%s4509 + $0xf0] sm:$0xff]
    %v4541 = vld [vmem:[%s4509 + $0xf8] sm:$0xff]
    %v4574 = vunpack.c.l.b16 %v4510
    %v4575 = vunpack.c.h.b16 %v4510
    %v4576 = vunpack.c.l.b16 %v4511
    %v4577 = vunpack.c.h.b16 %v4511
    %v4578 = vunpack.c.l.b16 %v4512
    %v4579 = vunpack.c.h.b16 %v4512
    %v4580 = vunpack.c.l.b16 %v4513
    %v4581 = vunpack.c.h.b16 %v4513
    %v4582 = vunpack.c.l.b16 %v4514
    %v4583 = vunpack.c.h.b16 %v4514
    %v4584 = vunpack.c.l.b16 %v4515
    %v4585 = vunpack.c.h.b16 %v4515
    %v4586 = vunpack.c.l.b16 %v4516
    %v4587 = vunpack.c.h.b16 %v4516
    %v4588 = vunpack.c.l.b16 %v4517
    %v4589 = vunpack.c.h.b16 %v4517
    %v4590 = vunpack.c.l.b16 %v4518
    %v4591 = vunpack.c.h.b16 %v4518
    %v4592 = vunpack.c.l.b16 %v4519
    %v4593 = vunpack.c.h.b16 %v4519
    %v4594 = vunpack.c.l.b16 %v4520
    %v4595 = vunpack.c.h.b16 %v4520
    %v4596 = vunpack.c.l.b16 %v4521
    %v4597 = vunpack.c.h.b16 %v4521
    %v4598 = vunpack.c.l.b16 %v4522
    %v4599 = vunpack.c.h.b16 %v4522
    %v4600 = vunpack.c.l.b16 %v4523
    %v4601 = vunpack.c.h.b16 %v4523
    %v4602 = vunpack.c.l.b16 %v4524
    %v4603 = vunpack.c.h.b16 %v4524
    %v4604 = vunpack.c.l.b16 %v4525
    %v4605 = vunpack.c.h.b16 %v4525
    %v4606 = vunpack.c.l.b16 %v4526
    %v4607 = vunpack.c.h.b16 %v4526
    %v4608 = vunpack.c.l.b16 %v4527
    %v4609 = vunpack.c.h.b16 %v4527
    %v4610 = vunpack.c.l.b16 %v4528
    %v4611 = vunpack.c.h.b16 %v4528
    %v4612 = vunpack.c.l.b16 %v4529
    %v4613 = vunpack.c.h.b16 %v4529
    %v4614 = vunpack.c.l.b16 %v4530
    %v4615 = vunpack.c.h.b16 %v4530
    %v4616 = vunpack.c.l.b16 %v4531
    %v4617 = vunpack.c.h.b16 %v4531
    %v4618 = vunpack.c.l.b16 %v4532
    %v4619 = vunpack.c.h.b16 %v4532
    %v4620 = vunpack.c.l.b16 %v4533
    %v4621 = vunpack.c.h.b16 %v4533
    %v4622 = vunpack.c.l.b16 %v4534
    %v4623 = vunpack.c.h.b16 %v4534
    %v4624 = vunpack.c.l.b16 %v4535
    %v4625 = vunpack.c.h.b16 %v4535
    %v4626 = vunpack.c.l.b16 %v4536
    %v4627 = vunpack.c.h.b16 %v4536
    %v4628 = vunpack.c.l.b16 %v4537
    %v4629 = vunpack.c.h.b16 %v4537
    %v4630 = vunpack.c.l.b16 %v4538
    %v4631 = vunpack.c.h.b16 %v4538
    %v4632 = vunpack.c.l.b16 %v4539
    %v4633 = vunpack.c.h.b16 %v4539
    %v4634 = vunpack.c.l.b16 %v4540
    %v4635 = vunpack.c.h.b16 %v4540
    %v4636 = vunpack.c.l.b16 %v4541
    %v4637 = vunpack.c.h.b16 %v4541
    %v4638 = vpack.c.b16 %v4576, %v4574
    %v4639 = vpack.c.b16 %v4577, %v4575
    %v4640 = vpack.c.b16 %v4580, %v4578
    %v4641 = vpack.c.b16 %v4581, %v4579
    %v4642 = vpack.c.b16 %v4584, %v4582
    %v4643 = vpack.c.b16 %v4585, %v4583
    %v4644 = vpack.c.b16 %v4588, %v4586
    %v4645 = vpack.c.b16 %v4589, %v4587
    %v4646 = vpack.c.b16 %v4592, %v4590
    %v4647 = vpack.c.b16 %v4593, %v4591
    %v4648 = vpack.c.b16 %v4596, %v4594
    %v4649 = vpack.c.b16 %v4597, %v4595
    %v4650 = vpack.c.b16 %v4600, %v4598
    %v4651 = vpack.c.b16 %v4601, %v4599
    %v4652 = vpack.c.b16 %v4604, %v4602
    %v4653 = vpack.c.b16 %v4605, %v4603
    %v4654 = vpack.c.b16 %v4608, %v4606
    %v4655 = vpack.c.b16 %v4609, %v4607
    %v4656 = vpack.c.b16 %v4612, %v4610
    %v4657 = vpack.c.b16 %v4613, %v4611
    %v4658 = vpack.c.b16 %v4616, %v4614
    %v4659 = vpack.c.b16 %v4617, %v4615
    %v4660 = vpack.c.b16 %v4620, %v4618
    %v4661 = vpack.c.b16 %v4621, %v4619
    %v4662 = vpack.c.b16 %v4624, %v4622
    %v4663 = vpack.c.b16 %v4625, %v4623
    %v4664 = vpack.c.b16 %v4628, %v4626
    %v4665 = vpack.c.b16 %v4629, %v4627
    %v4666 = vpack.c.b16 %v4632, %v4630
    %v4667 = vpack.c.b16 %v4633, %v4631
    %v4668 = vpack.c.b16 %v4636, %v4634
    %v4669 = vpack.c.b16 %v4637, %v4635
    %4702 = vmatprep.subr.bf16.mxu0 %v4639
    %4703 = vmatpush1.bf16.msra.mxu0 %v4638
    %4704 = vmatprep.subr.bf16.mxu0 %v4641
    %4705 = vmatpush1.bf16.msra.mxu0 %v4640
    %4706 = vmatprep.subr.bf16.mxu0 %v4643
    %4707 = vmatpush1.bf16.msra.mxu0 %v4642
    %4708 = vmatprep.subr.bf16.mxu0 %v4645
    %4709 = vmatpush1.bf16.msra.mxu0 %v4644
    %4710 = vmatprep.subr.bf16.mxu0 %v4647
    %4711 = vmatpush1.bf16.msra.mxu0 %v4646
    %4712 = vmatprep.subr.bf16.mxu0 %v4649
    %4713 = vmatpush1.bf16.msra.mxu0 %v4648
    %4714 = vmatprep.subr.bf16.mxu0 %v4651
    %4715 = vmatpush1.bf16.msra.mxu0 %v4650
    %4716 = vmatprep.subr.bf16.mxu0 %v4653
    %4717 = vmatpush1.bf16.msra.mxu0 %v4652
    %4718 = vmatprep.subr.bf16.mxu0 %v4655
    %4719 = vmatpush1.bf16.msra.mxu0 %v4654
    %4720 = vmatprep.subr.bf16.mxu0 %v4657
    %4721 = vmatpush1.bf16.msra.mxu0 %v4656
    %4722 = vmatprep.subr.bf16.mxu0 %v4659
    %4723 = vmatpush1.bf16.msra.mxu0 %v4658
    %4724 = vmatprep.subr.bf16.mxu0 %v4661
    %4725 = vmatpush1.bf16.msra.mxu0 %v4660
    %4726 = vmatprep.subr.bf16.mxu0 %v4663
    %4727 = vmatpush1.bf16.msra.mxu0 %v4662
    %4728 = vmatprep.subr.bf16.mxu0 %v4665
    %4729 = vmatpush1.bf16.msra.mxu0 %v4664
    %4730 = vmatprep.subr.bf16.mxu0 %v4667
    %4731 = vmatpush1.bf16.msra.mxu0 %v4666
    %4732 = vmatprep.subr.bf16.mxu0 %v4669
    %4733 = vmatpush1.bf16.msra.mxu0 %v4668
    %4734 = vmatprep.mubr.bf16.mxu0 %v4462
    %4735 = vmatmul.mubr.bf16.gmra.mrb[0].mxu0 %v4461
    %v4736 = vpop.f32.mrb[0].mxu0
    %v4737 = vadd.f32 0.0, %v4736
    %v4738 = vpop.f32.mrb[0].mxu0
    %v4739 = vadd.f32 0.0, %v4738
    %v4740 = vpop.f32.mrb[0].mxu0
    %v4741 = vadd.f32 0.0, %v4740
    %v4742 = vpop.f32.mrb[0].mxu0
    %v4743 = vadd.f32 0.0, %v4742
    %4744 = vmatprep.mubr.bf16.mxu0 %v4464
    %4745 = vmatmul.mubr.bf16.gmra.mrb[0].mxu0 %v4463
    %v4746 = vpop.f32.mrb[0].mxu0
    %v4747 = vadd.f32 0.0, %v4746
    %v4748 = vpop.f32.mrb[0].mxu0
    %v4749 = vadd.f32 0.0, %v4748
    %v4750 = vpop.f32.mrb[0].mxu0
    %v4751 = vadd.f32 0.0, %v4750
    %v4752 = vpop.f32.mrb[0].mxu0
    %v4753 = vadd.f32 0.0, %v4752
    %4754 = vmatprep.mubr.bf16.mxu0 %v4466
    %4755 = vmatmul.mubr.bf16.gmra.mrb[0].mxu0 %v4465
    %v4756 = vpop.f32.mrb[0].mxu0
    %v4757 = vadd.f32 0.0, %v4756
    %v4758 = vpop.f32.mrb[0].mxu0
    %v4759 = vadd.f32 0.0, %v4758
    %v4760 = vpop.f32.mrb[0].mxu0
    %v4761 = vadd.f32 0.0, %v4760
    %v4762 = vpop.f32.mrb[0].mxu0
    %v4763 = vadd.f32 0.0, %v4762
    %4764 = vmatprep.mubr.bf16.mxu0 %v4468
    %4765 = vmatmul.mubr.bf16.gmra.mrb[0].mxu0 %v4467
    %v4766 = vpop.f32.mrb[0].mxu0
    %v4767 = vadd.f32 0.0, %v4766
    %v4768 = vpop.f32.mrb[0].mxu0
    %v4769 = vadd.f32 0.0, %v4768
    %v4770 = vpop.f32.mrb[0].mxu0
    %v4771 = vadd.f32 0.0, %v4770
    %v4772 = vpop.f32.mrb[0].mxu0
    %v4773 = vadd.f32 0.0, %v4772
    %4774 = vmatprep.mubr.bf16.mxu0 %v4470
    %4775 = vmatmul.mubr.bf16.gmra.mrb[0].mxu0 %v4469
    %v4776 = vpop.f32.mrb[0].mxu0
    %v4777 = vadd.f32 0.0, %v4776
    %v4778 = vpop.f32.mrb[0].mxu0
    %v4779 = vadd.f32 0.0, %v4778
    %v4780 = vpop.f32.mrb[0].mxu0
    %v4781 = vadd.f32 0.0, %v4780
    %v4782 = vpop.f32.mrb[0].mxu0
    %v4783 = vadd.f32 0.0, %v4782
    %4784 = vmatprep.mubr.bf16.mxu0 %v4472
    %4785 = vmatmul.mubr.bf16.gmra.mrb[0].mxu0 %v4471
    %v4786 = vpop.f32.mrb[0].mxu0
    %v4787 = vadd.f32 0.0, %v4786
    %v4788 = vpop.f32.mrb[0].mxu0
    %v4789 = vadd.f32 0.0, %v4788
    %v4790 = vpop.f32.mrb[0].mxu0
    %v4791 = vadd.f32 0.0, %v4790
    %v4792 = vpop.f32.mrb[0].mxu0
    %v4793 = vadd.f32 0.0, %v4792
    %4794 = vmatprep.mubr.bf16.mxu0 %v4474
    %4795 = vmatmul.mubr.bf16.gmra.mrb[0].mxu0 %v4473
    %v4796 = vpop.f32.mrb[0].mxu0
    %v4797 = vadd.f32 0.0, %v4796
    %v4798 = vpop.f32.mrb[0].mxu0
    %v4799 = vadd.f32 0.0, %v4798
    %v4800 = vpop.f32.mrb[0].mxu0
    %v4801 = vadd.f32 0.0, %v4800
    %v4802 = vpop.f32.mrb[0].mxu0
    %v4803 = vadd.f32 0.0, %v4802
    %4804 = vmatprep.mubr.bf16.mxu0 %v4476
    %4805 = vmatmul.mubr.bf16.gmra.mrb[0].mxu0 %v4475
    %v4806 = vpop.f32.mrb[0].mxu0
    %v4807 = vadd.f32 0.0, %v4806
    %v4808 = vpop.f32.mrb[0].mxu0
    %v4809 = vadd.f32 0.0, %v4808
    %v4810 = vpop.f32.mrb[0].mxu0
    %v4811 = vadd.f32 0.0, %v4810
    %v4812 = vpop.f32.mrb[0].mxu0
    %v4813 = vadd.f32 0.0, %v4812
    %4814 = vdwg.mxu0
    %v4815 = vadd.f32 %v4477, %v4737
    %v4816 = vadd.f32 %v4478, %v4739
    %v4817 = vadd.f32 %v4479, %v4741
    %v4818 = vadd.f32 %v4480, %v4743
    %v4819 = vadd.f32 %v4481, %v4747
    %v4820 = vadd.f32 %v4482, %v4749
    %v4821 = vadd.f32 %v4483, %v4751
    %v4822 = vadd.f32 %v4484, %v4753
    %v4823 = vadd.f32 %v4485, %v4757
    %v4824 = vadd.f32 %v4486, %v4759
    %v4825 = vadd.f32 %v4487, %v4761
    %v4826 = vadd.f32 %v4488, %v4763
    %v4827 = vadd.f32 %v4489, %v4767
    %v4828 = vadd.f32 %v4490, %v4769
    %v4829 = vadd.f32 %v4491, %v4771
    %v4830 = vadd.f32 %v4492, %v4773
    %v4831 = vadd.f32 %v4493, %v4777
    %v4832 = vadd.f32 %v4494, %v4779
    %v4833 = vadd.f32 %v4495, %v4781
    %v4834 = vadd.f32 %v4496, %v4783
    %v4835 = vadd.f32 %v4497, %v4787
    %v4836 = vadd.f32 %v4498, %v4789
    %v4837 = vadd.f32 %v4499, %v4791
    %v4838 = vadd.f32 %v4500, %v4793
    %v4839 = vadd.f32 %v4501, %v4797
    %v4840 = vadd.f32 %v4502, %v4799
    %v4841 = vadd.f32 %v4503, %v4801
    %v4842 = vadd.f32 %v4504, %v4803
    %v4843 = vadd.f32 %v4505, %v4807
    %v4844 = vadd.f32 %v4506, %v4809
    %v4845 = vadd.f32 %v4507, %v4811
    %v4846 = vadd.f32 %v4508, %v4813
    %4847 = vst [vmem:[#allocation6] sm:$0xff] %v4815
    %4848 = vst [vmem:[#allocation6 + $0x8] sm:$0xff] %v4816
    %4849 = vst [vmem:[#allocation6 + $0x10] sm:$0xff] %v4817
    %4850 = vst [vmem:[#allocation6 + $0x18] sm:$0xff] %v4818
    %4851 = vst [vmem:[#allocation6 + $0x20] sm:$0xff] %v4819
    %4852 = vst [vmem:[#allocation6 + $0x28] sm:$0xff] %v4820
    %4853 = vst [vmem:[#allocation6 + $0x30] sm:$0xff] %v4821
    %4854 = vst [vmem:[#allocation6 + $0x38] sm:$0xff] %v4822
    %4855 = vst [vmem:[#allocation6 + $0x40] sm:$0xff] %v4823
    %4856 = vst [vmem:[#allocation6 + $0x48] sm:$0xff] %v4824
    %4857 = vst [vmem:[#allocation6 + $0x50] sm:$0xff] %v4825
    %4858 = vst [vmem:[#allocation6 + $0x58] sm:$0xff] %v4826
    %4859 = vst [vmem:[#allocation6 + $0x60] sm:$0xff] %v4827
    %4860 = vst [vmem:[#allocation6 + $0x68] sm:$0xff] %v4828
    %4861 = vst [vmem:[#allocation6 + $0x70] sm:$0xff] %v4829
    %4862 = vst [vmem:[#allocation6 + $0x78] sm:$0xff] %v4830
    %4863 = vst [vmem:[#allocation6 + $0x80] sm:$0xff] %v4831
    %4864 = vst [vmem:[#allocation6 + $0x88] sm:$0xff] %v4832
    %4865 = vst [vmem:[#allocation6 + $0x90] sm:$0xff] %v4833
    %4866 = vst [vmem:[#allocation6 + $0x98] sm:$0xff] %v4834
    %4867 = vst [vmem:[#allocation6 + $0xa0] sm:$0xff] %v4835
    %4868 = vst [vmem:[#allocation6 + $0xa8] sm:$0xff] %v4836
    %4869 = vst [vmem:[#allocation6 + $0xb0] sm:$0xff] %v4837
    %4870 = vst [vmem:[#allocation6 + $0xb8] sm:$0xff] %v4838
    %4871 = vst [vmem:[#allocation6 + $0xc0] sm:$0xff] %v4839
    %4872 = vst [vmem:[#allocation6 + $0xc8] sm:$0xff] %v4840
    %4873 = vst [vmem:[#allocation6 + $0xd0] sm:$0xff] %v4841
    %4874 = vst [vmem:[#allocation6 + $0xd8] sm:$0xff] %v4842
    %4875 = vst [vmem:[#allocation6 + $0xe0] sm:$0xff] %v4843
    %4876 = vst [vmem:[#allocation6 + $0xe8] sm:$0xff] %v4844
    %4877 = vst [vmem:[#allocation6 + $0xf0] sm:$0xff] %v4845
    %4878 = vst [vmem:[#allocation6 + $0xf8] sm:$0xff] %v4846
    %v4879 = vld [vmem:[%s1456] sm:$0xff]
    %v4880 = vld [vmem:[%s1456 + $0x8] sm:$0xff]
    %v4881 = vld [vmem:[%s1456 + $0x10] sm:$0xff]
    %v4882 = vld [vmem:[%s1456 + $0x18] sm:$0xff]
    %v4883 = vld [vmem:[%s1456 + $0x20] sm:$0xff]
    %v4884 = vld [vmem:[%s1456 + $0x28] sm:$0xff]
    %v4885 = vld [vmem:[%s1456 + $0x30] sm:$0xff]
    %v4886 = vld [vmem:[%s1456 + $0x38] sm:$0xff]
    %v4887 = vld [vmem:[%s1456 + $0x40] sm:$0xff]
    %v4888 = vld [vmem:[%s1456 + $0x48] sm:$0xff]
    %v4889 = vld [vmem:[%s1456 + $0x50] sm:$0xff]
    %v4890 = vld [vmem:[%s1456 + $0x58] sm:$0xff]
    %v4891 = vld [vmem:[%s1456 + $0x60] sm:$0xff]
    %v4892 = vld [vmem:[%s1456 + $0x68] sm:$0xff]
    %v4893 = vld [vmem:[%s1456 + $0x70] sm:$0xff]
    %v4894 = vld [vmem:[%s1456 + $0x78] sm:$0xff]
    %v4895 = vld [vmem:[%s1456 + $0xa0] sm:$0xff]
    %v4896 = vld [vmem:[%s1456 + $0xa8] sm:$0xff]
    %v4897 = vld [vmem:[%s1456 + $0xb0] sm:$0xff]
    %v4898 = vld [vmem:[%s1456 + $0xb8] sm:$0xff]
    %v4899 = vld [vmem:[%s1456 + $0xc0] sm:$0xff]
    %v4900 = vld [vmem:[%s1456 + $0xc8] sm:$0xff]
    %v4901 = vld [vmem:[%s1456 + $0xd0] sm:$0xff]
    %v4902 = vld [vmem:[%s1456 + $0xd8] sm:$0xff]
    %v4903 = vld [vmem:[%s1456 + $0xe0] sm:$0xff]
    %v4904 = vld [vmem:[%s1456 + $0xe8] sm:$0xff]
    %v4905 = vld [vmem:[%s1456 + $0xf0] sm:$0xff]
    %v4906 = vld [vmem:[%s1456 + $0xf8] sm:$0xff]
    %v4907 = vld [vmem:[%s1456 + $0x100] sm:$0xff]
    %v4908 = vld [vmem:[%s1456 + $0x108] sm:$0xff]
    %v4909 = vld [vmem:[%s1456 + $0x110] sm:$0xff]
    %v4910 = vld [vmem:[%s1456 + $0x118] sm:$0xff]
    %v4911 = vpack.c.bf16 %v4881, %v4879
    %v4912 = vpack.c.bf16 %v4882, %v4880
    %v4913 = vpack.c.bf16 %v4885, %v4883
    %v4914 = vpack.c.bf16 %v4886, %v4884
    %v4915 = vpack.c.bf16 %v4889, %v4887
    %v4916 = vpack.c.bf16 %v4890, %v4888
    %v4917 = vpack.c.bf16 %v4893, %v4891
    %v4918 = vpack.c.bf16 %v4894, %v4892
    %v4919 = vpack.c.bf16 %v4897, %v4895
    %v4920 = vpack.c.bf16 %v4898, %v4896
    %v4921 = vpack.c.bf16 %v4901, %v4899
    %v4922 = vpack.c.bf16 %v4902, %v4900
    %v4923 = vpack.c.bf16 %v4905, %v4903
    %v4924 = vpack.c.bf16 %v4906, %v4904
    %v4925 = vpack.c.bf16 %v4909, %v4907
    %v4926 = vpack.c.bf16 %v4910, %v4908
    %v4927 = vld [vmem:[#allocation6] sm:$0xff]
    %v4928 = vld [vmem:[#allocation6 + $0x8] sm:$0xff]
    %v4929 = vld [vmem:[#allocation6 + $0x10] sm:$0xff]
    %v4930 = vld [vmem:[#allocation6 + $0x18] sm:$0xff]
    %v4931 = vld [vmem:[#allocation6 + $0x20] sm:$0xff]
    %v4932 = vld [vmem:[#allocation6 + $0x28] sm:$0xff]
    %v4933 = vld [vmem:[#allocation6 + $0x30] sm:$0xff]
    %v4934 = vld [vmem:[#allocation6 + $0x38] sm:$0xff]
    %v4935 = vld [vmem:[#allocation6 + $0x40] sm:$0xff]
    %v4936 = vld [vmem:[#allocation6 + $0x48] sm:$0xff]
    %v4937 = vld [vmem:[#allocation6 + $0x50] sm:$0xff]
    %v4938 = vld [vmem:[#allocation6 + $0x58] sm:$0xff]
    %v4939 = vld [vmem:[#allocation6 + $0x60] sm:$0xff]
    %v4940 = vld [vmem:[#allocation6 + $0x68] sm:$0xff]
    %v4941 = vld [vmem:[#allocation6 + $0x70] sm:$0xff]
    %v4942 = vld [vmem:[#allocation6 + $0x78] sm:$0xff]
    %v4943 = vld [vmem:[#allocation6 + $0x80] sm:$0xff]
    %v4944 = vld [vmem:[#allocation6 + $0x88] sm:$0xff]
    %v4945 = vld [vmem:[#allocation6 + $0x90] sm:$0xff]
    %v4946 = vld [vmem:[#allocation6 + $0x98] sm:$0xff]
    %v4947 = vld [vmem:[#allocation6 + $0xa0] sm:$0xff]
    %v4948 = vld [vmem:[#allocation6 + $0xa8] sm:$0xff]
    %v4949 = vld [vmem:[#allocation6 + $0xb0] sm:$0xff]
    %v4950 = vld [vmem:[#allocation6 + $0xb8] sm:$0xff]
    %v4951 = vld [vmem:[#allocation6 + $0xc0] sm:$0xff]
    %v4952 = vld [vmem:[#allocation6 + $0xc8] sm:$0xff]
    %v4953 = vld [vmem:[#allocation6 + $0xd0] sm:$0xff]
    %v4954 = vld [vmem:[#allocation6 + $0xd8] sm:$0xff]
    %v4955 = vld [vmem:[#allocation6 + $0xe0] sm:$0xff]
    %v4956 = vld [vmem:[#allocation6 + $0xe8] sm:$0xff]
    %v4957 = vld [vmem:[#allocation6 + $0xf0] sm:$0xff]
    %v4958 = vld [vmem:[#allocation6 + $0xf8] sm:$0xff]
    %s4959 = scalar_lea.vmem %s1, 2048
    %v4960 = vld [vmem:[%s4959] sm:$0xff]
    %v4961 = vld [vmem:[%s4959 + $0x8] sm:$0xff]
    %v4962 = vld [vmem:[%s4959 + $0x10] sm:$0xff]
    %v4963 = vld [vmem:[%s4959 + $0x18] sm:$0xff]
    %v4964 = vld [vmem:[%s4959 + $0x20] sm:$0xff]
    %v4965 = vld [vmem:[%s4959 + $0x28] sm:$0xff]
    %v4966 = vld [vmem:[%s4959 + $0x30] sm:$0xff]
    %v4967 = vld [vmem:[%s4959 + $0x38] sm:$0xff]
    %v4968 = vld [vmem:[%s4959 + $0x40] sm:$0xff]
    %v4969 = vld [vmem:[%s4959 + $0x48] sm:$0xff]
    %v4970 = vld [vmem:[%s4959 + $0x50] sm:$0xff]
    %v4971 = vld [vmem:[%s4959 + $0x58] sm:$0xff]
    %v4972 = vld [vmem:[%s4959 + $0x60] sm:$0xff]
    %v4973 = vld [vmem:[%s4959 + $0x68] sm:$0xff]
    %v4974 = vld [vmem:[%s4959 + $0x70] sm:$0xff]
    %v4975 = vld [vmem:[%s4959 + $0x78] sm:$0xff]
    %v4976 = vld [vmem:[%s4959 + $0x80] sm:$0xff]
    %v4977 = vld [vmem:[%s4959 + $0x88] sm:$0xff]
    %v4978 = vld [vmem:[%s4959 + $0x90] sm:$0xff]
    %v4979 = vld [vmem:[%s4959 + $0x98] sm:$0xff]
    %v4980 = vld [vmem:[%s4959 + $0xa0] sm:$0xff]
    %v4981 = vld [vmem:[%s4959 + $0xa8] sm:$0xff]
    %v4982 = vld [vmem:[%s4959 + $0xb0] sm:$0xff]
    %v4983 = vld [vmem:[%s4959 + $0xb8] sm:$0xff]
    %v4984 = vld [vmem:[%s4959 + $0xc0] sm:$0xff]
    %v4985 = vld [vmem:[%s4959 + $0xc8] sm:$0xff]
    %v4986 = vld [vmem:[%s4959 + $0xd0] sm:$0xff]
    %v4987 = vld [vmem:[%s4959 + $0xd8] sm:$0xff]
    %v4988 = vld [vmem:[%s4959 + $0xe0] sm:$0xff]
    %v4989 = vld [vmem:[%s4959 + $0xe8] sm:$0xff]
    %v4990 = vld [vmem:[%s4959 + $0xf0] sm:$0xff]
    %v4991 = vld [vmem:[%s4959 + $0xf8] sm:$0xff]
    %v5024 = vunpack.c.l.b16 %v4960
    %v5025 = vunpack.c.h.b16 %v4960
    %v5026 = vunpack.c.l.b16 %v4961
    %v5027 = vunpack.c.h.b16 %v4961
    %v5028 = vunpack.c.l.b16 %v4962
    %v5029 = vunpack.c.h.b16 %v4962
    %v5030 = vunpack.c.l.b16 %v4963
    %v5031 = vunpack.c.h.b16 %v4963
    %v5032 = vunpack.c.l.b16 %v4964
    %v5033 = vunpack.c.h.b16 %v4964
    %v5034 = vunpack.c.l.b16 %v4965
    %v5035 = vunpack.c.h.b16 %v4965
    %v5036 = vunpack.c.l.b16 %v4966
    %v5037 = vunpack.c.h.b16 %v4966
    %v5038 = vunpack.c.l.b16 %v4967
    %v5039 = vunpack.c.h.b16 %v4967
    %v5040 = vunpack.c.l.b16 %v4968
    %v5041 = vunpack.c.h.b16 %v4968
    %v5042 = vunpack.c.l.b16 %v4969
    %v5043 = vunpack.c.h.b16 %v4969
    %v5044 = vunpack.c.l.b16 %v4970
    %v5045 = vunpack.c.h.b16 %v4970
    %v5046 = vunpack.c.l.b16 %v4971
    %v5047 = vunpack.c.h.b16 %v4971
    %v5048 = vunpack.c.l.b16 %v4972
    %v5049 = vunpack.c.h.b16 %v4972
    %v5050 = vunpack.c.l.b16 %v4973
    %v5051 = vunpack.c.h.b16 %v4973
    %v5052 = vunpack.c.l.b16 %v4974
    %v5053 = vunpack.c.h.b16 %v4974
    %v5054 = vunpack.c.l.b16 %v4975
    %v5055 = vunpack.c.h.b16 %v4975
    %v5056 = vunpack.c.l.b16 %v4976
    %v5057 = vunpack.c.h.b16 %v4976
    %v5058 = vunpack.c.l.b16 %v4977
    %v5059 = vunpack.c.h.b16 %v4977
    %v5060 = vunpack.c.l.b16 %v4978
    %v5061 = vunpack.c.h.b16 %v4978
    %v5062 = vunpack.c.l.b16 %v4979
    %v5063 = vunpack.c.h.b16 %v4979
    %v5064 = vunpack.c.l.b16 %v4980
    %v5065 = vunpack.c.h.b16 %v4980
    %v5066 = vunpack.c.l.b16 %v4981
    %v5067 = vunpack.c.h.b16 %v4981
    %v5068 = vunpack.c.l.b16 %v4982
    %v5069 = vunpack.c.h.b16 %v4982
    %v5070 = vunpack.c.l.b16 %v4983
    %v5071 = vunpack.c.h.b16 %v4983
    %v5072 = vunpack.c.l.b16 %v4984
    %v5073 = vunpack.c.h.b16 %v4984
    %v5074 = vunpack.c.l.b16 %v4985
    %v5075 = vunpack.c.h.b16 %v4985
    %v5076 = vunpack.c.l.b16 %v4986
    %v5077 = vunpack.c.h.b16 %v4986
    %v5078 = vunpack.c.l.b16 %v4987
    %v5079 = vunpack.c.h.b16 %v4987
    %v5080 = vunpack.c.l.b16 %v4988
    %v5081 = vunpack.c.h.b16 %v4988
    %v5082 = vunpack.c.l.b16 %v4989
    %v5083 = vunpack.c.h.b16 %v4989
    %v5084 = vunpack.c.l.b16 %v4990
    %v5085 = vunpack.c.h.b16 %v4990
    %v5086 = vunpack.c.l.b16 %v4991
    %v5087 = vunpack.c.h.b16 %v4991
    %v5088 = vpack.c.b16 %v5026, %v5024
    %v5089 = vpack.c.b16 %v5027, %v5025
    %v5090 = vpack.c.b16 %v5030, %v5028
    %v5091 = vpack.c.b16 %v5031, %v5029
    %v5092 = vpack.c.b16 %v5034, %v5032
    %v5093 = vpack.c.b16 %v5035, %v5033
    %v5094 = vpack.c.b16 %v5038, %v5036
    %v5095 = vpack.c.b16 %v5039, %v5037
    %v5096 = vpack.c.b16 %v5042, %v5040
    %v5097 = vpack.c.b16 %v5043, %v5041
    %v5098 = vpack.c.b16 %v5046, %v5044
    %v5099 = vpack.c.b16 %v5047, %v5045
    %v5100 = vpack.c.b16 %v5050, %v5048
    %v5101 = vpack.c.b16 %v5051, %v5049
    %v5102 = vpack.c.b16 %v5054, %v5052
    %v5103 = vpack.c.b16 %v5055, %v5053
    %v5104 = vpack.c.b16 %v5058, %v5056
    %v5105 = vpack.c.b16 %v5059, %v5057
    %v5106 = vpack.c.b16 %v5062, %v5060
    %v5107 = vpack.c.b16 %v5063, %v5061
    %v5108 = vpack.c.b16 %v5066, %v5064
    %v5109 = vpack.c.b16 %v5067, %v5065
    %v5110 = vpack.c.b16 %v5070, %v5068
    %v5111 = vpack.c.b16 %v5071, %v5069
    %v5112 = vpack.c.b16 %v5074, %v5072
    %v5113 = vpack.c.b16 %v5075, %v5073
    %v5114 = vpack.c.b16 %v5078, %v5076
    %v5115 = vpack.c.b16 %v5079, %v5077
    %v5116 = vpack.c.b16 %v5082, %v5080
    %v5117 = vpack.c.b16 %v5083, %v5081
    %v5118 = vpack.c.b16 %v5086, %v5084
    %v5119 = vpack.c.b16 %v5087, %v5085
    %5152 = vmatprep.subr.bf16.mxu0 %v5089
    %5153 = vmatpush1.bf16.msra.mxu0 %v5088
    %5154 = vmatprep.subr.bf16.mxu0 %v5091
    %5155 = vmatpush1.bf16.msra.mxu0 %v5090
    %5156 = vmatprep.subr.bf16.mxu0 %v5093
    %5157 = vmatpush1.bf16.msra.mxu0 %v5092
    %5158 = vmatprep.subr.bf16.mxu0 %v5095
    %5159 = vmatpush1.bf16.msra.mxu0 %v5094
    %5160 = vmatprep.subr.bf16.mxu0 %v5097
    %5161 = vmatpush1.bf16.msra.mxu0 %v5096
    %5162 = vmatprep.subr.bf16.mxu0 %v5099
    %5163 = vmatpush1.bf16.msra.mxu0 %v5098
    %5164 = vmatprep.subr.bf16.mxu0 %v5101
    %5165 = vmatpush1.bf16.msra.mxu0 %v5100
    %5166 = vmatprep.subr.bf16.mxu0 %v5103
    %5167 = vmatpush1.bf16.msra.mxu0 %v5102
    %5168 = vmatprep.subr.bf16.mxu0 %v5105
    %5169 = vmatpush1.bf16.msra.mxu0 %v5104
    %5170 = vmatprep.subr.bf16.mxu0 %v5107
    %5171 = vmatpush1.bf16.msra.mxu0 %v5106
    %5172 = vmatprep.subr.bf16.mxu0 %v5109
    %5173 = vmatpush1.bf16.msra.mxu0 %v5108
    %5174 = vmatprep.subr.bf16.mxu0 %v5111
    %5175 = vmatpush1.bf16.msra.mxu0 %v5110
    %5176 = vmatprep.subr.bf16.mxu0 %v5113
    %5177 = vmatpush1.bf16.msra.mxu0 %v5112
    %5178 = vmatprep.subr.bf16.mxu0 %v5115
    %5179 = vmatpush1.bf16.msra.mxu0 %v5114
    %5180 = vmatprep.subr.bf16.mxu0 %v5117
    %5181 = vmatpush1.bf16.msra.mxu0 %v5116
    %5182 = vmatprep.subr.bf16.mxu0 %v5119
    %5183 = vmatpush1.bf16.msra.mxu0 %v5118
    %5184 = vmatprep.mubr.bf16.mxu0 %v4912
    %5185 = vmatmul.mubr.bf16.gmra.mrb[0].mxu0 %v4911
    %v5186 = vpop.f32.mrb[0].mxu0
    %v5187 = vadd.f32 0.0, %v5186
    %v5188 = vpop.f32.mrb[0].mxu0
    %v5189 = vadd.f32 0.0, %v5188
    %v5190 = vpop.f32.mrb[0].mxu0
    %v5191 = vadd.f32 0.0, %v5190
    %v5192 = vpop.f32.mrb[0].mxu0
    %v5193 = vadd.f32 0.0, %v5192
    %5194 = vmatprep.mubr.bf16.mxu0 %v4914
    %5195 = vmatmul.mubr.bf16.gmra.mrb[0].mxu0 %v4913
    %v5196 = vpop.f32.mrb[0].mxu0
    %v5197 = vadd.f32 0.0, %v5196
    %v5198 = vpop.f32.mrb[0].mxu0
    %v5199 = vadd.f32 0.0, %v5198
    %v5200 = vpop.f32.mrb[0].mxu0
    %v5201 = vadd.f32 0.0, %v5200
    %v5202 = vpop.f32.mrb[0].mxu0
    %v5203 = vadd.f32 0.0, %v5202
    %5204 = vmatprep.mubr.bf16.mxu0 %v4916
    %5205 = vmatmul.mubr.bf16.gmra.mrb[0].mxu0 %v4915
    %v5206 = vpop.f32.mrb[0].mxu0
    %v5207 = vadd.f32 0.0, %v5206
    %v5208 = vpop.f32.mrb[0].mxu0
    %v5209 = vadd.f32 0.0, %v5208
    %v5210 = vpop.f32.mrb[0].mxu0
    %v5211 = vadd.f32 0.0, %v5210
    %v5212 = vpop.f32.mrb[0].mxu0
    %v5213 = vadd.f32 0.0, %v5212
    %5214 = vmatprep.mubr.bf16.mxu0 %v4918
    %5215 = vmatmul.mubr.bf16.gmra.mrb[0].mxu0 %v4917
    %v5216 = vpop.f32.mrb[0].mxu0
    %v5217 = vadd.f32 0.0, %v5216
    %v5218 = vpop.f32.mrb[0].mxu0
    %v5219 = vadd.f32 0.0, %v5218
    %v5220 = vpop.f32.mrb[0].mxu0
    %v5221 = vadd.f32 0.0, %v5220
    %v5222 = vpop.f32.mrb[0].mxu0
    %v5223 = vadd.f32 0.0, %v5222
    %5224 = vmatprep.mubr.bf16.mxu0 %v4920
    %5225 = vmatmul.mubr.bf16.gmra.mrb[0].mxu0 %v4919
    %v5226 = vpop.f32.mrb[0].mxu0
    %v5227 = vadd.f32 0.0, %v5226
    %v5228 = vpop.f32.mrb[0].mxu0
    %v5229 = vadd.f32 0.0, %v5228
    %v5230 = vpop.f32.mrb[0].mxu0
    %v5231 = vadd.f32 0.0, %v5230
    %v5232 = vpop.f32.mrb[0].mxu0
    %v5233 = vadd.f32 0.0, %v5232
    %5234 = vmatprep.mubr.bf16.mxu0 %v4922
    %5235 = vmatmul.mubr.bf16.gmra.mrb[0].mxu0 %v4921
    %v5236 = vpop.f32.mrb[0].mxu0
    %v5237 = vadd.f32 0.0, %v5236
    %v5238 = vpop.f32.mrb[0].mxu0
    %v5239 = vadd.f32 0.0, %v5238
    %v5240 = vpop.f32.mrb[0].mxu0
    %v5241 = vadd.f32 0.0, %v5240
    %v5242 = vpop.f32.mrb[0].mxu0
    %v5243 = vadd.f32 0.0, %v5242
    %5244 = vmatprep.mubr.bf16.mxu0 %v4924
    %5245 = vmatmul.mubr.bf16.gmra.mrb[0].mxu0 %v4923
    %v5246 = vpop.f32.mrb[0].mxu0
    %v5247 = vadd.f32 0.0, %v5246
    %v5248 = vpop.f32.mrb[0].mxu0
    %v5249 = vadd.f32 0.0, %v5248
    %v5250 = vpop.f32.mrb[0].mxu0
    %v5251 = vadd.f32 0.0, %v5250
    %v5252 = vpop.f32.mrb[0].mxu0
    %v5253 = vadd.f32 0.0, %v5252
    %5254 = vmatprep.mubr.bf16.mxu0 %v4926
    %5255 = vmatmul.mubr.bf16.gmra.mrb[0].mxu0 %v4925
    %v5256 = vpop.f32.mrb[0].mxu0
    %v5257 = vadd.f32 0.0, %v5256
    %v5258 = vpop.f32.mrb[0].mxu0
    %v5259 = vadd.f32 0.0, %v5258
    %v5260 = vpop.f32.mrb[0].mxu0
    %v5261 = vadd.f32 0.0, %v5260
    %v5262 = vpop.f32.mrb[0].mxu0
    %v5263 = vadd.f32 0.0, %v5262
    %5264 = vdwg.mxu0
    %v5265 = vadd.f32 %v4927, %v5187
    %v5266 = vadd.f32 %v4928, %v5189
    %v5267 = vadd.f32 %v4929, %v5191
    %v5268 = vadd.f32 %v4930, %v5193
    %v5269 = vadd.f32 %v4931, %v5197
    %v5270 = vadd.f32 %v4932, %v5199
    %v5271 = vadd.f32 %v4933, %v5201
    %v5272 = vadd.f32 %v4934, %v5203
    %v5273 = vadd.f32 %v4935, %v5207
    %v5274 = vadd.f32 %v4936, %v5209
    %v5275 = vadd.f32 %v4937, %v5211
    %v5276 = vadd.f32 %v4938, %v5213
    %v5277 = vadd.f32 %v4939, %v5217
    %v5278 = vadd.f32 %v4940, %v5219
    %v5279 = vadd.f32 %v4941, %v5221
    %v5280 = vadd.f32 %v4942, %v5223
    %v5281 = vadd.f32 %v4943, %v5227
    %v5282 = vadd.f32 %v4944, %v5229
    %v5283 = vadd.f32 %v4945, %v5231
    %v5284 = vadd.f32 %v4946, %v5233
    %v5285 = vadd.f32 %v4947, %v5237
    %v5286 = vadd.f32 %v4948, %v5239
    %v5287 = vadd.f32 %v4949, %v5241
    %v5288 = vadd.f32 %v4950, %v5243
    %v5289 = vadd.f32 %v4951, %v5247
    %v5290 = vadd.f32 %v4952, %v5249
    %v5291 = vadd.f32 %v4953, %v5251
    %v5292 = vadd.f32 %v4954, %v5253
    %v5293 = vadd.f32 %v4955, %v5257
    %v5294 = vadd.f32 %v4956, %v5259
    %v5295 = vadd.f32 %v4957, %v5261
    %v5296 = vadd.f32 %v4958, %v5263
    %5297 = vst [vmem:[#allocation6] sm:$0xff] %v5265
    %5298 = vst [vmem:[#allocation6 + $0x8] sm:$0xff] %v5266
    %5299 = vst [vmem:[#allocation6 + $0x10] sm:$0xff] %v5267
    %5300 = vst [vmem:[#allocation6 + $0x18] sm:$0xff] %v5268
    %5301 = vst [vmem:[#allocation6 + $0x20] sm:$0xff] %v5269
    %5302 = vst [vmem:[#allocation6 + $0x28] sm:$0xff] %v5270
    %5303 = vst [vmem:[#allocation6 + $0x30] sm:$0xff] %v5271
    %5304 = vst [vmem:[#allocation6 + $0x38] sm:$0xff] %v5272
    %5305 = vst [vmem:[#allocation6 + $0x40] sm:$0xff] %v5273
    %5306 = vst [vmem:[#allocation6 + $0x48] sm:$0xff] %v5274
    %5307 = vst [vmem:[#allocation6 + $0x50] sm:$0xff] %v5275
    %5308 = vst [vmem:[#allocation6 + $0x58] sm:$0xff] %v5276
    %5309 = vst [vmem:[#allocation6 + $0x60] sm:$0xff] %v5277
    %5310 = vst [vmem:[#allocation6 + $0x68] sm:$0xff] %v5278
    %5311 = vst [vmem:[#allocation6 + $0x70] sm:$0xff] %v5279
    %5312 = vst [vmem:[#allocation6 + $0x78] sm:$0xff] %v5280
    %5313 = vst [vmem:[#allocation6 + $0x80] sm:$0xff] %v5281
    %5314 = vst [vmem:[#allocation6 + $0x88] sm:$0xff] %v5282
    %5315 = vst [vmem:[#allocation6 + $0x90] sm:$0xff] %v5283
    %5316 = vst [vmem:[#allocation6 + $0x98] sm:$0xff] %v5284
    %5317 = vst [vmem:[#allocation6 + $0xa0] sm:$0xff] %v5285
    %5318 = vst [vmem:[#allocation6 + $0xa8] sm:$0xff] %v5286
    %5319 = vst [vmem:[#allocation6 + $0xb0] sm:$0xff] %v5287
    %5320 = vst [vmem:[#allocation6 + $0xb8] sm:$0xff] %v5288
    %5321 = vst [vmem:[#allocation6 + $0xc0] sm:$0xff] %v5289
    %5322 = vst [vmem:[#allocation6 + $0xc8] sm:$0xff] %v5290
    %5323 = vst [vmem:[#allocation6 + $0xd0] sm:$0xff] %v5291
    %5324 = vst [vmem:[#allocation6 + $0xd8] sm:$0xff] %v5292
    %5325 = vst [vmem:[#allocation6 + $0xe0] sm:$0xff] %v5293
    %5326 = vst [vmem:[#allocation6 + $0xe8] sm:$0xff] %v5294
    %5327 = vst [vmem:[#allocation6 + $0xf0] sm:$0xff] %v5295
    %5328 = vst [vmem:[#allocation6 + $0xf8] sm:$0xff] %v5296
    %v5329 = vld [vmem:[#allocation6] sm:$0xff]
    %v5330 = vld [vmem:[#allocation6 + $0x8] sm:$0xff]
    %v5331 = vld [vmem:[#allocation6 + $0x10] sm:$0xff]
    %v5332 = vld [vmem:[#allocation6 + $0x18] sm:$0xff]
    %v5333 = vld [vmem:[#allocation6 + $0x20] sm:$0xff]
    %v5334 = vld [vmem:[#allocation6 + $0x28] sm:$0xff]
    %v5335 = vld [vmem:[#allocation6 + $0x30] sm:$0xff]
    %v5336 = vld [vmem:[#allocation6 + $0x38] sm:$0xff]
    %v5337 = vld [vmem:[#allocation6 + $0x40] sm:$0xff]
    %v5338 = vld [vmem:[#allocation6 + $0x48] sm:$0xff]
    %v5339 = vld [vmem:[#allocation6 + $0x50] sm:$0xff]
    %v5340 = vld [vmem:[#allocation6 + $0x58] sm:$0xff]
    %v5341 = vld [vmem:[#allocation6 + $0x60] sm:$0xff]
    %v5342 = vld [vmem:[#allocation6 + $0x68] sm:$0xff]
    %v5343 = vld [vmem:[#allocation6 + $0x70] sm:$0xff]
    %v5344 = vld [vmem:[#allocation6 + $0x78] sm:$0xff]
    %v5345 = vld [vmem:[#allocation6 + $0x80] sm:$0xff]
    %v5346 = vld [vmem:[#allocation6 + $0x88] sm:$0xff]
    %v5347 = vld [vmem:[#allocation6 + $0x90] sm:$0xff]
    %v5348 = vld [vmem:[#allocation6 + $0x98] sm:$0xff]
    %v5349 = vld [vmem:[#allocation6 + $0xa0] sm:$0xff]
    %v5350 = vld [vmem:[#allocation6 + $0xa8] sm:$0xff]
    %v5351 = vld [vmem:[#allocation6 + $0xb0] sm:$0xff]
    %v5352 = vld [vmem:[#allocation6 + $0xb8] sm:$0xff]
    %v5353 = vld [vmem:[#allocation6 + $0xc0] sm:$0xff]
    %v5354 = vld [vmem:[#allocation6 + $0xc8] sm:$0xff]
    %v5355 = vld [vmem:[#allocation6 + $0xd0] sm:$0xff]
    %v5356 = vld [vmem:[#allocation6 + $0xd8] sm:$0xff]
    %v5357 = vld [vmem:[#allocation6 + $0xe0] sm:$0xff]
    %v5358 = vld [vmem:[#allocation6 + $0xe8] sm:$0xff]
    %v5359 = vld [vmem:[#allocation6 + $0xf0] sm:$0xff]
    %v5360 = vld [vmem:[#allocation6 + $0xf8] sm:$0xff]
    %v5361 = vld [vmem:[%s2] sm:$0x3]
    %v5363 = vlaneseq
    %v5364 = vshrl.u32 %v5363, 7
    %v5365 = vsub.s32 0, %v5364
    %v5366 = vrot.slane %v5361, %v5365
    %v5367 = vlaneseq
    %v5368 = vshrl.u32 %v5367, 7
    %v5369 = vsub.s32 1, %v5368
    %v5370 = vrot.slane %v5361, %v5369
    %v5373 = vadd.f32 %v5329, %v5366
    %v5374 = vadd.f32 %v5330, %v5370
    %v5375 = vadd.f32 %v5331, %v5366
    %v5376 = vadd.f32 %v5332, %v5370
    %v5377 = vadd.f32 %v5333, %v5366
    %v5378 = vadd.f32 %v5334, %v5370
    %v5379 = vadd.f32 %v5335, %v5366
    %v5380 = vadd.f32 %v5336, %v5370
    %v5381 = vadd.f32 %v5337, %v5366
    %v5382 = vadd.f32 %v5338, %v5370
    %v5383 = vadd.f32 %v5339, %v5366
    %v5384 = vadd.f32 %v5340, %v5370
    %v5385 = vadd.f32 %v5341, %v5366
    %v5386 = vadd.f32 %v5342, %v5370
    %v5387 = vadd.f32 %v5343, %v5366
    %v5388 = vadd.f32 %v5344, %v5370
    %v5389 = vadd.f32 %v5345, %v5366
    %v5390 = vadd.f32 %v5346, %v5370
    %v5391 = vadd.f32 %v5347, %v5366
    %v5392 = vadd.f32 %v5348, %v5370
    %v5393 = vadd.f32 %v5349, %v5366
    %v5394 = vadd.f32 %v5350, %v5370
    %v5395 = vadd.f32 %v5351, %v5366
    %v5396 = vadd.f32 %v5352, %v5370
    %v5397 = vadd.f32 %v5353, %v5366
    %v5398 = vadd.f32 %v5354, %v5370
    %v5399 = vadd.f32 %v5355, %v5366
    %v5400 = vadd.f32 %v5356, %v5370
    %v5401 = vadd.f32 %v5357, %v5366
    %v5402 = vadd.f32 %v5358, %v5370
    %v5403 = vadd.f32 %v5359, %v5366
    %v5404 = vadd.f32 %v5360, %v5370
    %v5405 = vmax.f32 %v5373, 0.0
    %v5406 = vmax.f32 %v5374, 0.0
    %v5407 = vmax.f32 %v5375, 0.0
    %v5408 = vmax.f32 %v5376, 0.0
    %v5409 = vmax.f32 %v5377, 0.0
    %v5410 = vmax.f32 %v5378, 0.0
    %v5411 = vmax.f32 %v5379, 0.0
    %v5412 = vmax.f32 %v5380, 0.0
    %v5413 = vmax.f32 %v5381, 0.0
    %v5414 = vmax.f32 %v5382, 0.0
    %v5415 = vmax.f32 %v5383, 0.0
    %v5416 = vmax.f32 %v5384, 0.0
    %v5417 = vmax.f32 %v5385, 0.0
    %v5418 = vmax.f32 %v5386, 0.0
    %v5419 = vmax.f32 %v5387, 0.0
    %v5420 = vmax.f32 %v5388, 0.0
    %v5421 = vmax.f32 %v5389, 0.0
    %v5422 = vmax.f32 %v5390, 0.0
    %v5423 = vmax.f32 %v5391, 0.0
    %v5424 = vmax.f32 %v5392, 0.0
    %v5425 = vmax.f32 %v5393, 0.0
    %v5426 = vmax.f32 %v5394, 0.0
    %v5427 = vmax.f32 %v5395, 0.0
    %v5428 = vmax.f32 %v5396, 0.0
    %v5429 = vmax.f32 %v5397, 0.0
    %v5430 = vmax.f32 %v5398, 0.0
    %v5431 = vmax.f32 %v5399, 0.0
    %v5432 = vmax.f32 %v5400, 0.0
    %v5433 = vmax.f32 %v5401, 0.0
    %v5434 = vmax.f32 %v5402, 0.0
    %v5435 = vmax.f32 %v5403, 0.0
    %v5436 = vmax.f32 %v5404, 0.0
    %v5469 = vrot.slane %v5405, 7
    %v5470 = vrot.slane %v5406, 7
    %v5471 = vrot.slane %v5407, 7
    %v5472 = vrot.slane %v5408, 7
    %v5473 = vrot.slane %v5409, 7
    %v5474 = vrot.slane %v5410, 7
    %v5475 = vrot.slane %v5411, 7
    %v5476 = vrot.slane %v5412, 7
    %v5477 = vrot.slane %v5413, 7
    %v5478 = vrot.slane %v5414, 7
    %v5479 = vrot.slane %v5415, 7
    %v5480 = vrot.slane %v5416, 7
    %v5481 = vrot.slane %v5417, 7
    %v5482 = vrot.slane %v5418, 7
    %v5483 = vrot.slane %v5419, 7
    %v5484 = vrot.slane %v5420, 7
    %v5485 = vrot.slane %v5421, 7
    %v5486 = vrot.slane %v5422, 7
    %v5487 = vrot.slane %v5423, 7
    %v5488 = vrot.slane %v5424, 7
    %v5489 = vrot.slane %v5425, 7
    %v5490 = vrot.slane %v5426, 7
    %v5491 = vrot.slane %v5427, 7
    %v5492 = vrot.slane %v5428, 7
    %v5493 = vrot.slane %v5429, 7
    %v5494 = vrot.slane %v5430, 7
    %v5495 = vrot.slane %v5431, 7
    %v5496 = vrot.slane %v5432, 7
    %v5497 = vrot.slane %v5433, 7
    %v5498 = vrot.slane %v5434, 7
    %v5499 = vrot.slane %v5435, 7
    %v5500 = vrot.slane %v5436, 7
    %5533 = vst [vmem:[%s156] sm:$0xfe] %v5469
    %5534 = vst [vmem:[%s156 + $0x8] sm:$0xfe] %v5470
    %5535 = vst [vmem:[%s156 + $0x10] sm:$0x1] %v5469
    %5536 = vst [vmem:[%s156 + $0x18] sm:$0x1] %v5470
    %5537 = vst [vmem:[%s156 + $0x20] sm:$0xfe] %v5471
    %5538 = vst [vmem:[%s156 + $0x28] sm:$0xfe] %v5472
    %5539 = vst [vmem:[%s156 + $0x30] sm:$0x1] %v5471
    %5540 = vst [vmem:[%s156 + $0x38] sm:$0x1] %v5472
    %5541 = vst [vmem:[%s156 + $0x40] sm:$0xfe] %v5473
    %5542 = vst [vmem:[%s156 + $0x48] sm:$0xfe] %v5474
    %5543 = vst [vmem:[%s156 + $0x50] sm:$0x1] %v5473
    %5544 = vst [vmem:[%s156 + $0x58] sm:$0x1] %v5474
    %5545 = vst [vmem:[%s156 + $0x60] sm:$0xfe] %v5475
    %5546 = vst [vmem:[%s156 + $0x68] sm:$0xfe] %v5476
    %5547 = vst [vmem:[%s156 + $0x70] sm:$0x1] %v5475
    %5548 = vst [vmem:[%s156 + $0x78] sm:$0x1] %v5476
    %5549 = vst [vmem:[%s156 + $0x80] sm:$0xfe] %v5477
    %5550 = vst [vmem:[%s156 + $0x88] sm:$0xfe] %v5478
    %5551 = vst [vmem:[%s156 + $0x90] sm:$0x1] %v5477
    %5552 = vst [vmem:[%s156 + $0x98] sm:$0x1] %v5478
    %5553 = vst [vmem:[%s156 + $0xa0] sm:$0xfe] %v5479
    %5554 = vst [vmem:[%s156 + $0xa8] sm:$0xfe] %v5480
    %5555 = vst [vmem:[%s156 + $0xb0] sm:$0x1] %v5479
    %5556 = vst [vmem:[%s156 + $0xb8] sm:$0x1] %v5480
    %5557 = vst [vmem:[%s156 + $0xc0] sm:$0xfe] %v5481
    %5558 = vst [vmem:[%s156 + $0xc8] sm:$0xfe] %v5482
    %5559 = vst [vmem:[%s156 + $0xd0] sm:$0x1] %v5481
    %5560 = vst [vmem:[%s156 + $0xd8] sm:$0x1] %v5482
    %5561 = vst [vmem:[%s156 + $0xe0] sm:$0xfe] %v5483
    %5562 = vst [vmem:[%s156 + $0xe8] sm:$0xfe] %v5484
    %5563 = vst [vmem:[%s156 + $0xf0] sm:$0x1] %v5483
    %5564 = vst [vmem:[%s156 + $0xf8] sm:$0x1] %v5484
    %5565 = vst [vmem:[%s156 + $0x140] sm:$0xfe] %v5485
    %5566 = vst [vmem:[%s156 + $0x148] sm:$0xfe] %v5486
    %5567 = vst [vmem:[%s156 + $0x150] sm:$0x1] %v5485
    %5568 = vst [vmem:[%s156 + $0x158] sm:$0x1] %v5486
    %5569 = vst [vmem:[%s156 + $0x160] sm:$0xfe] %v5487
    %5570 = vst [vmem:[%s156 + $0x168] sm:$0xfe] %v5488
    %5571 = vst [vmem:[%s156 + $0x170] sm:$0x1] %v5487
    %5572 = vst [vmem:[%s156 + $0x178] sm:$0x1] %v5488
    %5573 = vst [vmem:[%s156 + $0x180] sm:$0xfe] %v5489
    %5574 = vst [vmem:[%s156 + $0x188] sm:$0xfe] %v5490
    %5575 = vst [vmem:[%s156 + $0x190] sm:$0x1] %v5489
    %5576 = vst [vmem:[%s156 + $0x198] sm:$0x1] %v5490
    %5577 = vst [vmem:[%s156 + $0x1a0] sm:$0xfe] %v5491
    %5578 = vst [vmem:[%s156 + $0x1a8] sm:$0xfe] %v5492
    %5579 = vst [vmem:[%s156 + $0x1b0] sm:$0x1] %v5491
    %5580 = vst [vmem:[%s156 + $0x1b8] sm:$0x1] %v5492
    %5581 = vst [vmem:[%s156 + $0x1c0] sm:$0xfe] %v5493
    %5582 = vst [vmem:[%s156 + $0x1c8] sm:$0xfe] %v5494
    %5583 = vst [vmem:[%s156 + $0x1d0] sm:$0x1] %v5493
    %5584 = vst [vmem:[%s156 + $0x1d8] sm:$0x1] %v5494
    %5585 = vst [vmem:[%s156 + $0x1e0] sm:$0xfe] %v5495
    %5586 = vst [vmem:[%s156 + $0x1e8] sm:$0xfe] %v5496
    %5587 = vst [vmem:[%s156 + $0x1f0] sm:$0x1] %v5495
    %5588 = vst [vmem:[%s156 + $0x1f8] sm:$0x1] %v5496
    %5589 = vst [vmem:[%s156 + $0x200] sm:$0xfe] %v5497
    %5590 = vst [vmem:[%s156 + $0x208] sm:$0xfe] %v5498
    %5591 = vst [vmem:[%s156 + $0x210] sm:$0x1] %v5497
    %5592 = vst [vmem:[%s156 + $0x218] sm:$0x1] %v5498
    %5593 = vst [vmem:[%s156 + $0x220] sm:$0xfe] %v5499
    %5594 = vst [vmem:[%s156 + $0x228] sm:$0xfe] %v5500
    %5595 = vst [vmem:[%s156 + $0x230] sm:$0x1] %v5499
    %5596 = vst [vmem:[%s156 + $0x238] sm:$0x1] %v5500
    %vm5597 = vcmask 64512
    %5598 = vst.msk [vmem:[#allocation7] sm:$0xff] %vm5597, 0.0
    %5599 = vst.msk [vmem:[#allocation7 + $0x8] sm:$0xff] %vm5597, 0.0
    %5600 = vst.msk [vmem:[#allocation7 + $0x10] sm:$0xff] %vm5597, 0.0
    %5601 = vst.msk [vmem:[#allocation7 + $0x18] sm:$0xff] %vm5597, 0.0
    %5602 = vst.msk [vmem:[#allocation7 + $0x20] sm:$0xff] %vm5597, 0.0
    %5603 = vst.msk [vmem:[#allocation7 + $0x28] sm:$0xff] %vm5597, 0.0
    %5604 = vst.msk [vmem:[#allocation7 + $0x30] sm:$0xff] %vm5597, 0.0
    %5605 = vst.msk [vmem:[#allocation7 + $0x38] sm:$0xff] %vm5597, 0.0
    %5606 = vst.msk [vmem:[#allocation7 + $0x40] sm:$0xff] %vm5597, 0.0
    %5607 = vst.msk [vmem:[#allocation7 + $0x48] sm:$0xff] %vm5597, 0.0
    %5608 = vst.msk [vmem:[#allocation7 + $0x50] sm:$0xff] %vm5597, 0.0
    %5609 = vst.msk [vmem:[#allocation7 + $0x58] sm:$0xff] %vm5597, 0.0
    %5610 = vst.msk [vmem:[#allocation7 + $0x60] sm:$0xff] %vm5597, 0.0
    %5611 = vst.msk [vmem:[#allocation7 + $0x68] sm:$0xff] %vm5597, 0.0
    %5612 = vst.msk [vmem:[#allocation7 + $0x70] sm:$0xff] %vm5597, 0.0
    %5613 = vst.msk [vmem:[#allocation7 + $0x78] sm:$0xff] %vm5597, 0.0
    %v5614 = vld [vmem:[#allocation3] sm:$0xff]
    %v5615 = vld [vmem:[#allocation3 + $0x8] sm:$0xff]
    %v5616 = vld [vmem:[#allocation3 + $0x20] sm:$0xff]
    %v5617 = vld [vmem:[#allocation3 + $0x28] sm:$0xff]
    %v5618 = vld [vmem:[#allocation3 + $0x40] sm:$0xff]
    %v5619 = vld [vmem:[#allocation3 + $0x48] sm:$0xff]
    %v5620 = vld [vmem:[#allocation3 + $0x60] sm:$0xff]
    %v5621 = vld [vmem:[#allocation3 + $0x68] sm:$0xff]
    %v5622 = vld [vmem:[#allocation3 + $0x80] sm:$0xff]
    %v5623 = vld [vmem:[#allocation3 + $0x88] sm:$0xff]
    %v5624 = vld [vmem:[#allocation3 + $0xa0] sm:$0xff]
    %v5625 = vld [vmem:[#allocation3 + $0xa8] sm:$0xff]
    %v5626 = vld [vmem:[#allocation3 + $0xc0] sm:$0xff]
    %v5627 = vld [vmem:[#allocation3 + $0xc8] sm:$0xff]
    %v5628 = vld [vmem:[#allocation3 + $0xe0] sm:$0xff]
    %v5629 = vld [vmem:[#allocation3 + $0xe8] sm:$0xff]
    %v5630 = vld [vmem:[#allocation3 + $0x100] sm:$0xff]
    %v5631 = vld [vmem:[#allocation3 + $0x108] sm:$0xff]
    %v5632 = vld [vmem:[#allocation3 + $0x120] sm:$0xff]
    %v5633 = vld [vmem:[#allocation3 + $0x128] sm:$0xff]
    %v5634 = vld [vmem:[#allocation3 + $0x140] sm:$0xff]
    %v5635 = vld [vmem:[#allocation3 + $0x148] sm:$0xff]
    %v5636 = vld [vmem:[#allocation3 + $0x160] sm:$0xff]
    %v5637 = vld [vmem:[#allocation3 + $0x168] sm:$0xff]
    %v5638 = vld [vmem:[#allocation3 + $0x180] sm:$0xff]
    %v5639 = vld [vmem:[#allocation3 + $0x188] sm:$0xff]
    %v5640 = vld [vmem:[#allocation3 + $0x1a0] sm:$0xff]
    %v5641 = vld [vmem:[#allocation3 + $0x1a8] sm:$0xff]
    %v5642 = vld [vmem:[#allocation3 + $0x1c0] sm:$0xff]
    %v5643 = vld [vmem:[#allocation3 + $0x1c8] sm:$0xff]
    %v5644 = vld [vmem:[#allocation3 + $0x1e0] sm:$0xff]
    %v5645 = vld [vmem:[#allocation3 + $0x1e8] sm:$0xff]
    %v5646 = vld [vmem:[#allocation3 + $0x200] sm:$0xff]
    %v5647 = vld [vmem:[#allocation3 + $0x208] sm:$0xff]
    %v5648 = vld [vmem:[#allocation3 + $0x220] sm:$0xff]
    %v5649 = vld [vmem:[#allocation3 + $0x228] sm:$0xff]
    %v5650 = vld [vmem:[#allocation3 + $0x240] sm:$0xff]
    %v5651 = vld [vmem:[#allocation3 + $0x248] sm:$0xff]
    %v5652 = vld [vmem:[#allocation3 + $0x260] sm:$0xff]
    %v5653 = vld [vmem:[#allocation3 + $0x268] sm:$0xff]
    %5654 = vst [vmem:[#allocation5] sm:$0xff] %v5614
    %5655 = vst [vmem:[#allocation5 + $0x8] sm:$0xff] %v5615
    %5656 = vst [vmem:[#allocation5 + $0x10] sm:$0xff] %v5616
    %5657 = vst [vmem:[#allocation5 + $0x18] sm:$0xff] %v5617
    %5658 = vst [vmem:[#allocation5 + $0x20] sm:$0xff] %v5618
    %5659 = vst [vmem:[#allocation5 + $0x28] sm:$0xff] %v5619
    %5660 = vst [vmem:[#allocation5 + $0x30] sm:$0xff] %v5620
    %5661 = vst [vmem:[#allocation5 + $0x38] sm:$0xff] %v5621
    %5662 = vst [vmem:[#allocation5 + $0x40] sm:$0xff] %v5622
    %5663 = vst [vmem:[#allocation5 + $0x48] sm:$0xff] %v5623
    %5664 = vst [vmem:[#allocation5 + $0x50] sm:$0xff] %v5624
    %5665 = vst [vmem:[#allocation5 + $0x58] sm:$0xff] %v5625
    %5666 = vst [vmem:[#allocation5 + $0x60] sm:$0xff] %v5626
    %5667 = vst [vmem:[#allocation5 + $0x68] sm:$0xff] %v5627
    %5668 = vst [vmem:[#allocation5 + $0x70] sm:$0xff] %v5628
    %5669 = vst [vmem:[#allocation5 + $0x78] sm:$0xff] %v5629
    %5670 = vst [vmem:[#allocation5 + $0x80] sm:$0xff] %v5630
    %5671 = vst [vmem:[#allocation5 + $0x88] sm:$0xff] %v5631
    %5672 = vst [vmem:[#allocation5 + $0x90] sm:$0xff] %v5632
    %5673 = vst [vmem:[#allocation5 + $0x98] sm:$0xff] %v5633
    %5674 = vst [vmem:[#allocation5 + $0xa0] sm:$0xff] %v5634
    %5675 = vst [vmem:[#allocation5 + $0xa8] sm:$0xff] %v5635
    %5676 = vst [vmem:[#allocation5 + $0xb0] sm:$0xff] %v5636
    %5677 = vst [vmem:[#allocation5 + $0xb8] sm:$0xff] %v5637
    %5678 = vst [vmem:[#allocation5 + $0xc0] sm:$0xff] %v5638
    %5679 = vst [vmem:[#allocation5 + $0xc8] sm:$0xff] %v5639
    %5680 = vst [vmem:[#allocation5 + $0xd0] sm:$0xff] %v5640
    %5681 = vst [vmem:[#allocation5 + $0xd8] sm:$0xff] %v5641
    %5682 = vst [vmem:[#allocation5 + $0xe0] sm:$0xff] %v5642
    %5683 = vst [vmem:[#allocation5 + $0xe8] sm:$0xff] %v5643
    %5684 = vst [vmem:[#allocation5 + $0xf0] sm:$0xff] %v5644
    %5685 = vst [vmem:[#allocation5 + $0xf8] sm:$0xff] %v5645
    %5686 = vst [vmem:[#allocation5 + $0x100] sm:$0xff] %v5646
    %5687 = vst [vmem:[#allocation5 + $0x108] sm:$0xff] %v5647
    %5688 = vst [vmem:[#allocation5 + $0x110] sm:$0xff] %v5648
    %5689 = vst [vmem:[#allocation5 + $0x118] sm:$0xff] %v5649
    %5690 = vst [vmem:[#allocation5 + $0x120] sm:$0xff] %v5650
    %5691 = vst [vmem:[#allocation5 + $0x128] sm:$0xff] %v5651
    %5692 = vst [vmem:[#allocation5 + $0x130] sm:$0xff] %v5652
    %5693 = vst [vmem:[#allocation5 + $0x138] sm:$0xff] %v5653
    %v5694 = vld [vmem:[#allocation5] sm:$0xff]
    %v5695 = vld [vmem:[#allocation5 + $0x8] sm:$0xff]
    %v5696 = vld [vmem:[#allocation5 + $0x10] sm:$0xff]
    %v5697 = vld [vmem:[#allocation5 + $0x18] sm:$0xff]
    %v5698 = vld [vmem:[#allocation5 + $0x20] sm:$0xff]
    %v5699 = vld [vmem:[#allocation5 + $0x28] sm:$0xff]
    %v5700 = vld [vmem:[#allocation5 + $0x30] sm:$0xff]
    %v5701 = vld [vmem:[#allocation5 + $0x38] sm:$0xff]
    %v5702 = vld [vmem:[#allocation5 + $0x40] sm:$0xff]
    %v5703 = vld [vmem:[#allocation5 + $0x48] sm:$0xff]
    %v5704 = vld [vmem:[#allocation5 + $0x50] sm:$0xff]
    %v5705 = vld [vmem:[#allocation5 + $0x58] sm:$0xff]
    %v5706 = vld [vmem:[#allocation5 + $0x60] sm:$0xff]
    %v5707 = vld [vmem:[#allocation5 + $0x68] sm:$0xff]
    %v5708 = vld [vmem:[#allocation5 + $0x70] sm:$0xff]
    %v5709 = vld [vmem:[#allocation5 + $0x78] sm:$0xff]
    %v5710 = vld [vmem:[#allocation5 + $0xa0] sm:$0xff]
    %v5711 = vld [vmem:[#allocation5 + $0xa8] sm:$0xff]
    %v5712 = vld [vmem:[#allocation5 + $0xb0] sm:$0xff]
    %v5713 = vld [vmem:[#allocation5 + $0xb8] sm:$0xff]
    %v5714 = vld [vmem:[#allocation5 + $0xc0] sm:$0xff]
    %v5715 = vld [vmem:[#allocation5 + $0xc8] sm:$0xff]
    %v5716 = vld [vmem:[#allocation5 + $0xd0] sm:$0xff]
    %v5717 = vld [vmem:[#allocation5 + $0xd8] sm:$0xff]
    %v5718 = vld [vmem:[#allocation5 + $0xe0] sm:$0xff]
    %v5719 = vld [vmem:[#allocation5 + $0xe8] sm:$0xff]
    %v5720 = vld [vmem:[#allocation5 + $0xf0] sm:$0xff]
    %v5721 = vld [vmem:[#allocation5 + $0xf8] sm:$0xff]
    %v5722 = vld [vmem:[#allocation5 + $0x100] sm:$0xff]
    %v5723 = vld [vmem:[#allocation5 + $0x108] sm:$0xff]
    %v5724 = vld [vmem:[#allocation5 + $0x110] sm:$0xff]
    %v5725 = vld [vmem:[#allocation5 + $0x118] sm:$0xff]
    %v5726 = vpack.c.bf16 %v5696, %v5694
    %v5727 = vpack.c.bf16 %v5697, %v5695
    %v5728 = vpack.c.bf16 %v5700, %v5698
    %v5729 = vpack.c.bf16 %v5701, %v5699
    %v5730 = vpack.c.bf16 %v5704, %v5702
    %v5731 = vpack.c.bf16 %v5705, %v5703
    %v5732 = vpack.c.bf16 %v5708, %v5706
    %v5733 = vpack.c.bf16 %v5709, %v5707
    %v5734 = vpack.c.bf16 %v5712, %v5710
    %v5735 = vpack.c.bf16 %v5713, %v5711
    %v5736 = vpack.c.bf16 %v5716, %v5714
    %v5737 = vpack.c.bf16 %v5717, %v5715
    %v5738 = vpack.c.bf16 %v5720, %v5718
    %v5739 = vpack.c.bf16 %v5721, %v5719
    %v5740 = vpack.c.bf16 %v5724, %v5722
    %v5741 = vpack.c.bf16 %v5725, %v5723
    %v5742 = vld [vmem:[#allocation7] sm:$0xff]
    %v5743 = vld [vmem:[#allocation7 + $0x8] sm:$0xff]
    %v5744 = vld [vmem:[#allocation7 + $0x10] sm:$0xff]
    %v5745 = vld [vmem:[#allocation7 + $0x18] sm:$0xff]
    %v5746 = vld [vmem:[#allocation7 + $0x20] sm:$0xff]
    %v5747 = vld [vmem:[#allocation7 + $0x28] sm:$0xff]
    %v5748 = vld [vmem:[#allocation7 + $0x30] sm:$0xff]
    %v5749 = vld [vmem:[#allocation7 + $0x38] sm:$0xff]
    %v5750 = vld [vmem:[#allocation7 + $0x40] sm:$0xff]
    %v5751 = vld [vmem:[#allocation7 + $0x48] sm:$0xff]
    %v5752 = vld [vmem:[#allocation7 + $0x50] sm:$0xff]
    %v5753 = vld [vmem:[#allocation7 + $0x58] sm:$0xff]
    %v5754 = vld [vmem:[#allocation7 + $0x60] sm:$0xff]
    %v5755 = vld [vmem:[#allocation7 + $0x68] sm:$0xff]
    %v5756 = vld [vmem:[#allocation7 + $0x70] sm:$0xff]
    %v5757 = vld [vmem:[#allocation7 + $0x78] sm:$0xff]
    %v5758 = vld [vmem:[%s3] sm:$0xf]
    %v5759 = vld [vmem:[%s3 + $0x4] sm:$0xf]
    %v5760 = vld [vmem:[%s3 + $0x8] sm:$0xf]
    %v5761 = vld [vmem:[%s3 + $0xc] sm:$0xf]
    %v5762 = vld [vmem:[%s3 + $0x10] sm:$0xf]
    %v5763 = vld [vmem:[%s3 + $0x14] sm:$0xf]
    %v5764 = vld [vmem:[%s3 + $0x18] sm:$0xf]
    %v5765 = vld [vmem:[%s3 + $0x1c] sm:$0xf]
    %v5766 = vld [vmem:[%s3 + $0x20] sm:$0xf]
    %v5767 = vld [vmem:[%s3 + $0x24] sm:$0xf]
    %v5768 = vld [vmem:[%s3 + $0x28] sm:$0xf]
    %v5769 = vld [vmem:[%s3 + $0x2c] sm:$0xf]
    %v5770 = vld [vmem:[%s3 + $0x30] sm:$0xf]
    %v5771 = vld [vmem:[%s3 + $0x34] sm:$0xf]
    %v5772 = vld [vmem:[%s3 + $0x38] sm:$0xf]
    %v5773 = vld [vmem:[%s3 + $0x3c] sm:$0xf]
    %v5774 = vld [vmem:[%s3 + $0x40] sm:$0xf]
    %v5775 = vld [vmem:[%s3 + $0x44] sm:$0xf]
    %v5776 = vld [vmem:[%s3 + $0x48] sm:$0xf]
    %v5777 = vld [vmem:[%s3 + $0x4c] sm:$0xf]
    %v5778 = vld [vmem:[%s3 + $0x50] sm:$0xf]
    %v5779 = vld [vmem:[%s3 + $0x54] sm:$0xf]
    %v5780 = vld [vmem:[%s3 + $0x58] sm:$0xf]
    %v5781 = vld [vmem:[%s3 + $0x5c] sm:$0xf]
    %v5782 = vld [vmem:[%s3 + $0x60] sm:$0xf]
    %v5783 = vld [vmem:[%s3 + $0x64] sm:$0xf]
    %v5784 = vld [vmem:[%s3 + $0x68] sm:$0xf]
    %v5785 = vld [vmem:[%s3 + $0x6c] sm:$0xf]
    %v5786 = vld [vmem:[%s3 + $0x70] sm:$0xf]
    %v5787 = vld [vmem:[%s3 + $0x74] sm:$0xf]
    %v5788 = vld [vmem:[%s3 + $0x78] sm:$0xf]
    %v5789 = vld [vmem:[%s3 + $0x7c] sm:$0xf]
    %v5822 = vunpack.c.l.b16 %v5758
    %v5823 = vunpack.c.l.b16 %v5759
    %v5824 = vunpack.c.l.b16 %v5760
    %v5825 = vunpack.c.l.b16 %v5761
    %v5826 = vunpack.c.l.b16 %v5762
    %v5827 = vunpack.c.l.b16 %v5763
    %v5828 = vunpack.c.l.b16 %v5764
    %v5829 = vunpack.c.l.b16 %v5765
    %v5830 = vunpack.c.l.b16 %v5766
    %v5831 = vunpack.c.l.b16 %v5767
    %v5832 = vunpack.c.l.b16 %v5768
    %v5833 = vunpack.c.l.b16 %v5769
    %v5834 = vunpack.c.l.b16 %v5770
    %v5835 = vunpack.c.l.b16 %v5771
    %v5836 = vunpack.c.l.b16 %v5772
    %v5837 = vunpack.c.l.b16 %v5773
    %v5838 = vunpack.c.l.b16 %v5774
    %v5839 = vunpack.c.l.b16 %v5775
    %v5840 = vunpack.c.l.b16 %v5776
    %v5841 = vunpack.c.l.b16 %v5777
    %v5842 = vunpack.c.l.b16 %v5778
    %v5843 = vunpack.c.l.b16 %v5779
    %v5844 = vunpack.c.l.b16 %v5780
    %v5845 = vunpack.c.l.b16 %v5781
    %v5846 = vunpack.c.l.b16 %v5782
    %v5847 = vunpack.c.l.b16 %v5783
    %v5848 = vunpack.c.l.b16 %v5784
    %v5849 = vunpack.c.l.b16 %v5785
    %v5850 = vunpack.c.l.b16 %v5786
    %v5851 = vunpack.c.l.b16 %v5787
    %v5852 = vunpack.c.l.b16 %v5788
    %v5853 = vunpack.c.l.b16 %v5789
    %v5854 = vpack.c.b16 %v5823, %v5822
    %v5855 = vpack.c.b16 %v5825, %v5824
    %v5856 = vpack.c.b16 %v5827, %v5826
    %v5857 = vpack.c.b16 %v5829, %v5828
    %v5858 = vpack.c.b16 %v5831, %v5830
    %v5859 = vpack.c.b16 %v5833, %v5832
    %v5860 = vpack.c.b16 %v5835, %v5834
    %v5861 = vpack.c.b16 %v5837, %v5836
    %v5862 = vpack.c.b16 %v5839, %v5838
    %v5863 = vpack.c.b16 %v5841, %v5840
    %v5864 = vpack.c.b16 %v5843, %v5842
    %v5865 = vpack.c.b16 %v5845, %v5844
    %v5866 = vpack.c.b16 %v5847, %v5846
    %v5867 = vpack.c.b16 %v5849, %v5848
    %v5868 = vpack.c.b16 %v5851, %v5850
    %v5869 = vpack.c.b16 %v5853, %v5852
    %5886 = vmatprep.subr.bf16.mxu0 0
    %5887 = vmatpush1.bf16.msra.mxu0 %v5854
    %5888 = vmatprep.subr.bf16.mxu0 0
    %5889 = vmatpush1.bf16.msra.mxu0 %v5855
    %5890 = vmatprep.subr.bf16.mxu0 0
    %5891 = vmatpush1.bf16.msra.mxu0 %v5856
    %5892 = vmatprep.subr.bf16.mxu0 0
    %5893 = vmatpush1.bf16.msra.mxu0 %v5857
    %5894 = vmatprep.subr.bf16.mxu0 0
    %5895 = vmatpush1.bf16.msra.mxu0 %v5858
    %5896 = vmatprep.subr.bf16.mxu0 0
    %5897 = vmatpush1.bf16.msra.mxu0 %v5859
    %5898 = vmatprep.subr.bf16.mxu0 0
    %5899 = vmatpush1.bf16.msra.mxu0 %v5860
    %5900 = vmatprep.subr.bf16.mxu0 0
    %5901 = vmatpush1.bf16.msra.mxu0 %v5861
    %5902 = vmatprep.subr.bf16.mxu0 0
    %5903 = vmatpush1.bf16.msra.mxu0 %v5862
    %5904 = vmatprep.subr.bf16.mxu0 0
    %5905 = vmatpush1.bf16.msra.mxu0 %v5863
    %5906 = vmatprep.subr.bf16.mxu0 0
    %5907 = vmatpush1.bf16.msra.mxu0 %v5864
    %5908 = vmatprep.subr.bf16.mxu0 0
    %5909 = vmatpush1.bf16.msra.mxu0 %v5865
    %5910 = vmatprep.subr.bf16.mxu0 0
    %5911 = vmatpush1.bf16.msra.mxu0 %v5866
    %5912 = vmatprep.subr.bf16.mxu0 0
    %5913 = vmatpush1.bf16.msra.mxu0 %v5867
    %5914 = vmatprep.subr.bf16.mxu0 0
    %5915 = vmatpush1.bf16.msra.mxu0 %v5868
    %5916 = vmatprep.subr.bf16.mxu0 0
    %5917 = vmatpush1.bf16.msra.mxu0 %v5869
    %5918 = vmatprep.mubr.bf16.mxu0 %v5727
    %5919 = vmatmul.mubr.bf16.gmra.mrb[0].mxu0 %v5726
    %v5920 = vpop.f32.mrb[0].mxu0
    %v5921 = vadd.f32 0.0, %v5920
    %v5922 = vpop.f32.mrb[0].mxu0
    %v5923 = vpop.f32.mrb[0].mxu0
    %v5924 = vadd.f32 0.0, %v5923
    %v5925 = vpop.f32.mrb[0].mxu0
    %5926 = vmatprep.mubr.bf16.mxu0 %v5729
    %5927 = vmatmul.mubr.bf16.gmra.mrb[0].mxu0 %v5728
    %v5928 = vpop.f32.mrb[0].mxu0
    %v5929 = vadd.f32 0.0, %v5928
    %v5930 = vpop.f32.mrb[0].mxu0
    %v5931 = vpop.f32.mrb[0].mxu0
    %v5932 = vadd.f32 0.0, %v5931
    %v5933 = vpop.f32.mrb[0].mxu0
    %5934 = vmatprep.mubr.bf16.mxu0 %v5731
    %5935 = vmatmul.mubr.bf16.gmra.mrb[0].mxu0 %v5730
    %v5936 = vpop.f32.mrb[0].mxu0
    %v5937 = vadd.f32 0.0, %v5936
    %v5938 = vpop.f32.mrb[0].mxu0
    %v5939 = vpop.f32.mrb[0].mxu0
    %v5940 = vadd.f32 0.0, %v5939
    %v5941 = vpop.f32.mrb[0].mxu0
    %5942 = vmatprep.mubr.bf16.mxu0 %v5733
    %5943 = vmatmul.mubr.bf16.gmra.mrb[0].mxu0 %v5732
    %v5944 = vpop.f32.mrb[0].mxu0
    %v5945 = vadd.f32 0.0, %v5944
    %v5946 = vpop.f32.mrb[0].mxu0
    %v5947 = vpop.f32.mrb[0].mxu0
    %v5948 = vadd.f32 0.0, %v5947
    %v5949 = vpop.f32.mrb[0].mxu0
    %5950 = vmatprep.mubr.bf16.mxu0 %v5735
    %5951 = vmatmul.mubr.bf16.gmra.mrb[0].mxu0 %v5734
    %v5952 = vpop.f32.mrb[0].mxu0
    %v5953 = vadd.f32 0.0, %v5952
    %v5954 = vpop.f32.mrb[0].mxu0
    %v5955 = vpop.f32.mrb[0].mxu0
    %v5956 = vadd.f32 0.0, %v5955
    %v5957 = vpop.f32.mrb[0].mxu0
    %5958 = vmatprep.mubr.bf16.mxu0 %v5737
    %5959 = vmatmul.mubr.bf16.gmra.mrb[0].mxu0 %v5736
    %v5960 = vpop.f32.mrb[0].mxu0
    %v5961 = vadd.f32 0.0, %v5960
    %v5962 = vpop.f32.mrb[0].mxu0
    %v5963 = vpop.f32.mrb[0].mxu0
    %v5964 = vadd.f32 0.0, %v5963
    %v5965 = vpop.f32.mrb[0].mxu0
    %5966 = vmatprep.mubr.bf16.mxu0 %v5739
    %5967 = vmatmul.mubr.bf16.gmra.mrb[0].mxu0 %v5738
    %v5968 = vpop.f32.mrb[0].mxu0
    %v5969 = vadd.f32 0.0, %v5968
    %v5970 = vpop.f32.mrb[0].mxu0
    %v5971 = vpop.f32.mrb[0].mxu0
    %v5972 = vadd.f32 0.0, %v5971
    %v5973 = vpop.f32.mrb[0].mxu0
    %5974 = vmatprep.mubr.bf16.mxu0 %v5741
    %5975 = vmatmul.mubr.bf16.gmra.mrb[0].mxu0 %v5740
    %v5976 = vpop.f32.mrb[0].mxu0
    %v5977 = vadd.f32 0.0, %v5976
    %v5978 = vpop.f32.mrb[0].mxu0
    %v5979 = vpop.f32.mrb[0].mxu0
    %v5980 = vadd.f32 0.0, %v5979
    %v5981 = vpop.f32.mrb[0].mxu0
    %5982 = vdwg.mxu0
    %v5983 = vadd.f32 %v5742, %v5921
    %v5984 = vadd.f32 %v5743, %v5924
    %v5985 = vadd.f32 %v5744, %v5929
    %v5986 = vadd.f32 %v5745, %v5932
    %v5987 = vadd.f32 %v5746, %v5937
    %v5988 = vadd.f32 %v5747, %v5940
    %v5989 = vadd.f32 %v5748, %v5945
    %v5990 = vadd.f32 %v5749, %v5948
    %v5991 = vadd.f32 %v5750, %v5953
    %v5992 = vadd.f32 %v5751, %v5956
    %v5993 = vadd.f32 %v5752, %v5961
    %v5994 = vadd.f32 %v5753, %v5964
    %v5995 = vadd.f32 %v5754, %v5969
    %v5996 = vadd.f32 %v5755, %v5972
    %v5997 = vadd.f32 %v5756, %v5977
    %v5998 = vadd.f32 %v5757, %v5980
    %5999 = vst.msk [vmem:[#allocation7] sm:$0xff] %vm5597, %v5983
    %6000 = vst.msk [vmem:[#allocation7 + $0x8] sm:$0xff] %vm5597, %v5984
    %6001 = vst.msk [vmem:[#allocation7 + $0x10] sm:$0xff] %vm5597, %v5985
    %6002 = vst.msk [vmem:[#allocation7 + $0x18] sm:$0xff] %vm5597, %v5986
    %6003 = vst.msk [vmem:[#allocation7 + $0x20] sm:$0xff] %vm5597, %v5987
    %6004 = vst.msk [vmem:[#allocation7 + $0x28] sm:$0xff] %vm5597, %v5988
    %6005 = vst.msk [vmem:[#allocation7 + $0x30] sm:$0xff] %vm5597, %v5989
    %6006 = vst.msk [vmem:[#allocation7 + $0x38] sm:$0xff] %vm5597, %v5990
    %6007 = vst.msk [vmem:[#allocation7 + $0x40] sm:$0xff] %vm5597, %v5991
    %6008 = vst.msk [vmem:[#allocation7 + $0x48] sm:$0xff] %vm5597, %v5992
    %6009 = vst.msk [vmem:[#allocation7 + $0x50] sm:$0xff] %vm5597, %v5993
    %6010 = vst.msk [vmem:[#allocation7 + $0x58] sm:$0xff] %vm5597, %v5994
    %6011 = vst.msk [vmem:[#allocation7 + $0x60] sm:$0xff] %vm5597, %v5995
    %6012 = vst.msk [vmem:[#allocation7 + $0x68] sm:$0xff] %vm5597, %v5996
    %6013 = vst.msk [vmem:[#allocation7 + $0x70] sm:$0xff] %vm5597, %v5997
    %6014 = vst.msk [vmem:[#allocation7 + $0x78] sm:$0xff] %vm5597, %v5998
    %s6015 = scalar_lea.vmem [#allocation5], 16
    %v6016 = vld [vmem:[%s6015] sm:$0xff]
    %v6017 = vld [vmem:[%s6015 + $0x8] sm:$0xff]
    %v6018 = vld [vmem:[%s6015 + $0x10] sm:$0xff]
    %v6019 = vld [vmem:[%s6015 + $0x18] sm:$0xff]
    %v6020 = vld [vmem:[%s6015 + $0x20] sm:$0xff]
    %v6021 = vld [vmem:[%s6015 + $0x28] sm:$0xff]
    %v6022 = vld [vmem:[%s6015 + $0x30] sm:$0xff]
    %v6023 = vld [vmem:[%s6015 + $0x38] sm:$0xff]
    %v6024 = vld [vmem:[%s6015 + $0x40] sm:$0xff]
    %v6025 = vld [vmem:[%s6015 + $0x48] sm:$0xff]
    %v6026 = vld [vmem:[%s6015 + $0x50] sm:$0xff]
    %v6027 = vld [vmem:[%s6015 + $0x58] sm:$0xff]
    %v6028 = vld [vmem:[%s6015 + $0x60] sm:$0xff]
    %v6029 = vld [vmem:[%s6015 + $0x68] sm:$0xff]
    %v6030 = vld [vmem:[%s6015 + $0x70] sm:$0xff]
    %v6031 = vld [vmem:[%s6015 + $0x78] sm:$0xff]
    %v6032 = vld [vmem:[%s6015 + $0xa0] sm:$0xff]
    %v6033 = vld [vmem:[%s6015 + $0xa8] sm:$0xff]
    %v6034 = vld [vmem:[%s6015 + $0xb0] sm:$0xff]
    %v6035 = vld [vmem:[%s6015 + $0xb8] sm:$0xff]
    %v6036 = vld [vmem:[%s6015 + $0xc0] sm:$0xff]
    %v6037 = vld [vmem:[%s6015 + $0xc8] sm:$0xff]
    %v6038 = vld [vmem:[%s6015 + $0xd0] sm:$0xff]
    %v6039 = vld [vmem:[%s6015 + $0xd8] sm:$0xff]
    %v6040 = vld [vmem:[%s6015 + $0xe0] sm:$0xff]
    %v6041 = vld [vmem:[%s6015 + $0xe8] sm:$0xff]
    %v6042 = vld [vmem:[%s6015 + $0xf0] sm:$0xff]
    %v6043 = vld [vmem:[%s6015 + $0xf8] sm:$0xff]
    %v6044 = vld [vmem:[%s6015 + $0x100] sm:$0xff]
    %v6045 = vld [vmem:[%s6015 + $0x108] sm:$0xff]
    %v6046 = vld [vmem:[%s6015 + $0x110] sm:$0xff]
    %v6047 = vld [vmem:[%s6015 + $0x118] sm:$0xff]
    %v6048 = vpack.c.bf16 %v6018, %v6016
    %v6049 = vpack.c.bf16 %v6019, %v6017
    %v6050 = vpack.c.bf16 %v6022, %v6020
    %v6051 = vpack.c.bf16 %v6023, %v6021
    %v6052 = vpack.c.bf16 %v6026, %v6024
    %v6053 = vpack.c.bf16 %v6027, %v6025
    %v6054 = vpack.c.bf16 %v6030, %v6028
    %v6055 = vpack.c.bf16 %v6031, %v6029
    %v6056 = vpack.c.bf16 %v6034, %v6032
    %v6057 = vpack.c.bf16 %v6035, %v6033
    %v6058 = vpack.c.bf16 %v6038, %v6036
    %v6059 = vpack.c.bf16 %v6039, %v6037
    %v6060 = vpack.c.bf16 %v6042, %v6040
    %v6061 = vpack.c.bf16 %v6043, %v6041
    %v6062 = vpack.c.bf16 %v6046, %v6044
    %v6063 = vpack.c.bf16 %v6047, %v6045
    %v6064 = vld [vmem:[#allocation7] sm:$0xff]
    %v6065 = vld [vmem:[#allocation7 + $0x8] sm:$0xff]
    %v6066 = vld [vmem:[#allocation7 + $0x10] sm:$0xff]
    %v6067 = vld [vmem:[#allocation7 + $0x18] sm:$0xff]
    %v6068 = vld [vmem:[#allocation7 + $0x20] sm:$0xff]
    %v6069 = vld [vmem:[#allocation7 + $0x28] sm:$0xff]
    %v6070 = vld [vmem:[#allocation7 + $0x30] sm:$0xff]
    %v6071 = vld [vmem:[#allocation7 + $0x38] sm:$0xff]
    %v6072 = vld [vmem:[#allocation7 + $0x40] sm:$0xff]
    %v6073 = vld [vmem:[#allocation7 + $0x48] sm:$0xff]
    %v6074 = vld [vmem:[#allocation7 + $0x50] sm:$0xff]
    %v6075 = vld [vmem:[#allocation7 + $0x58] sm:$0xff]
    %v6076 = vld [vmem:[#allocation7 + $0x60] sm:$0xff]
    %v6077 = vld [vmem:[#allocation7 + $0x68] sm:$0xff]
    %v6078 = vld [vmem:[#allocation7 + $0x70] sm:$0xff]
    %v6079 = vld [vmem:[#allocation7 + $0x78] sm:$0xff]
    %s6080 = scalar_lea.vmem %s3, 384
    %v6081 = vld [vmem:[%s6080] sm:$0xf]
    %v6082 = vld [vmem:[%s6080 + $0x4] sm:$0xf]
    %v6083 = vld [vmem:[%s6080 + $0x8] sm:$0xf]
    %v6084 = vld [vmem:[%s6080 + $0xc] sm:$0xf]
    %v6085 = vld [vmem:[%s6080 + $0x10] sm:$0xf]
    %v6086 = vld [vmem:[%s6080 + $0x14] sm:$0xf]
    %v6087 = vld [vmem:[%s6080 + $0x18] sm:$0xf]
    %v6088 = vld [vmem:[%s6080 + $0x1c] sm:$0xf]
    %v6089 = vld [vmem:[%s6080 + $0x20] sm:$0xf]
    %v6090 = vld [vmem:[%s6080 + $0x24] sm:$0xf]
    %v6091 = vld [vmem:[%s6080 + $0x28] sm:$0xf]
    %v6092 = vld [vmem:[%s6080 + $0x2c] sm:$0xf]
    %v6093 = vld [vmem:[%s6080 + $0x30] sm:$0xf]
    %v6094 = vld [vmem:[%s6080 + $0x34] sm:$0xf]
    %v6095 = vld [vmem:[%s6080 + $0x38] sm:$0xf]
    %v6096 = vld [vmem:[%s6080 + $0x3c] sm:$0xf]
    %v6097 = vld [vmem:[%s6080 + $0x40] sm:$0xf]
    %v6098 = vld [vmem:[%s6080 + $0x44] sm:$0xf]
    %v6099 = vld [vmem:[%s6080 + $0x48] sm:$0xf]
    %v6100 = vld [vmem:[%s6080 + $0x4c] sm:$0xf]
    %v6101 = vld [vmem:[%s6080 + $0x50] sm:$0xf]
    %v6102 = vld [vmem:[%s6080 + $0x54] sm:$0xf]
    %v6103 = vld [vmem:[%s6080 + $0x58] sm:$0xf]
    %v6104 = vld [vmem:[%s6080 + $0x5c] sm:$0xf]
    %v6105 = vld [vmem:[%s6080 + $0x60] sm:$0xf]
    %v6106 = vld [vmem:[%s6080 + $0x64] sm:$0xf]
    %v6107 = vld [vmem:[%s6080 + $0x68] sm:$0xf]
    %v6108 = vld [vmem:[%s6080 + $0x6c] sm:$0xf]
    %v6109 = vld [vmem:[%s6080 + $0x70] sm:$0xf]
    %v6110 = vld [vmem:[%s6080 + $0x74] sm:$0xf]
    %v6111 = vld [vmem:[%s6080 + $0x78] sm:$0xf]
    %v6112 = vld [vmem:[%s6080 + $0x7c] sm:$0xf]
    %v6145 = vunpack.c.l.b16 %v6081
    %v6146 = vunpack.c.l.b16 %v6082
    %v6147 = vunpack.c.l.b16 %v6083
    %v6148 = vunpack.c.l.b16 %v6084
    %v6149 = vunpack.c.l.b16 %v6085
    %v6150 = vunpack.c.l.b16 %v6086
    %v6151 = vunpack.c.l.b16 %v6087
    %v6152 = vunpack.c.l.b16 %v6088
    %v6153 = vunpack.c.l.b16 %v6089
    %v6154 = vunpack.c.l.b16 %v6090
    %v6155 = vunpack.c.l.b16 %v6091
    %v6156 = vunpack.c.l.b16 %v6092
    %v6157 = vunpack.c.l.b16 %v6093
    %v6158 = vunpack.c.l.b16 %v6094
    %v6159 = vunpack.c.l.b16 %v6095
    %v6160 = vunpack.c.l.b16 %v6096
    %v6161 = vunpack.c.l.b16 %v6097
    %v6162 = vunpack.c.l.b16 %v6098
    %v6163 = vunpack.c.l.b16 %v6099
    %v6164 = vunpack.c.l.b16 %v6100
    %v6165 = vunpack.c.l.b16 %v6101
    %v6166 = vunpack.c.l.b16 %v6102
    %v6167 = vunpack.c.l.b16 %v6103
    %v6168 = vunpack.c.l.b16 %v6104
    %v6169 = vunpack.c.l.b16 %v6105
    %v6170 = vunpack.c.l.b16 %v6106
    %v6171 = vunpack.c.l.b16 %v6107
    %v6172 = vunpack.c.l.b16 %v6108
    %v6173 = vunpack.c.l.b16 %v6109
    %v6174 = vunpack.c.l.b16 %v6110
    %v6175 = vunpack.c.l.b16 %v6111
    %v6176 = vunpack.c.l.b16 %v6112
    %v6177 = vpack.c.b16 %v6146, %v6145
    %v6178 = vpack.c.b16 %v6148, %v6147
    %v6179 = vpack.c.b16 %v6150, %v6149
    %v6180 = vpack.c.b16 %v6152, %v6151
    %v6181 = vpack.c.b16 %v6154, %v6153
    %v6182 = vpack.c.b16 %v6156, %v6155
    %v6183 = vpack.c.b16 %v6158, %v6157
    %v6184 = vpack.c.b16 %v6160, %v6159
    %v6185 = vpack.c.b16 %v6162, %v6161
    %v6186 = vpack.c.b16 %v6164, %v6163
    %v6187 = vpack.c.b16 %v6166, %v6165
    %v6188 = vpack.c.b16 %v6168, %v6167
    %v6189 = vpack.c.b16 %v6170, %v6169
    %v6190 = vpack.c.b16 %v6172, %v6171
    %v6191 = vpack.c.b16 %v6174, %v6173
    %v6192 = vpack.c.b16 %v6176, %v6175
    %6209 = vmatprep.subr.bf16.mxu0 0
    %6210 = vmatpush1.bf16.msra.mxu0 %v6177
    %6211 = vmatprep.subr.bf16.mxu0 0
    %6212 = vmatpush1.bf16.msra.mxu0 %v6178
    %6213 = vmatprep.subr.bf16.mxu0 0
    %6214 = vmatpush1.bf16.msra.mxu0 %v6179
    %6215 = vmatprep.subr.bf16.mxu0 0
    %6216 = vmatpush1.bf16.msra.mxu0 %v6180
    %6217 = vmatprep.subr.bf16.mxu0 0
    %6218 = vmatpush1.bf16.msra.mxu0 %v6181
    %6219 = vmatprep.subr.bf16.mxu0 0
    %6220 = vmatpush1.bf16.msra.mxu0 %v6182
    %6221 = vmatprep.subr.bf16.mxu0 0
    %6222 = vmatpush1.bf16.msra.mxu0 %v6183
    %6223 = vmatprep.subr.bf16.mxu0 0
    %6224 = vmatpush1.bf16.msra.mxu0 %v6184
    %6225 = vmatprep.subr.bf16.mxu0 0
    %6226 = vmatpush1.bf16.msra.mxu0 %v6185
    %6227 = vmatprep.subr.bf16.mxu0 0
    %6228 = vmatpush1.bf16.msra.mxu0 %v6186
    %6229 = vmatprep.subr.bf16.mxu0 0
    %6230 = vmatpush1.bf16.msra.mxu0 %v6187
    %6231 = vmatprep.subr.bf16.mxu0 0
    %6232 = vmatpush1.bf16.msra.mxu0 %v6188
    %6233 = vmatprep.subr.bf16.mxu0 0
    %6234 = vmatpush1.bf16.msra.mxu0 %v6189
    %6235 = vmatprep.subr.bf16.mxu0 0
    %6236 = vmatpush1.bf16.msra.mxu0 %v6190
    %6237 = vmatprep.subr.bf16.mxu0 0
    %6238 = vmatpush1.bf16.msra.mxu0 %v6191
    %6239 = vmatprep.subr.bf16.mxu0 0
    %6240 = vmatpush1.bf16.msra.mxu0 %v6192
    %6241 = vmatprep.mubr.bf16.mxu0 %v6049
    %6242 = vmatmul.mubr.bf16.gmra.mrb[0].mxu0 %v6048
    %v6243 = vpop.f32.mrb[0].mxu0
    %v6244 = vadd.f32 0.0, %v6243
    %v6245 = vpop.f32.mrb[0].mxu0
    %v6246 = vpop.f32.mrb[0].mxu0
    %v6247 = vadd.f32 0.0, %v6246
    %v6248 = vpop.f32.mrb[0].mxu0
    %6249 = vmatprep.mubr.bf16.mxu0 %v6051
    %6250 = vmatmul.mubr.bf16.gmra.mrb[0].mxu0 %v6050
    %v6251 = vpop.f32.mrb[0].mxu0
    %v6252 = vadd.f32 0.0, %v6251
    %v6253 = vpop.f32.mrb[0].mxu0
    %v6254 = vpop.f32.mrb[0].mxu0
    %v6255 = vadd.f32 0.0, %v6254
    %v6256 = vpop.f32.mrb[0].mxu0
    %6257 = vmatprep.mubr.bf16.mxu0 %v6053
    %6258 = vmatmul.mubr.bf16.gmra.mrb[0].mxu0 %v6052
    %v6259 = vpop.f32.mrb[0].mxu0
    %v6260 = vadd.f32 0.0, %v6259
    %v6261 = vpop.f32.mrb[0].mxu0
    %v6262 = vpop.f32.mrb[0].mxu0
    %v6263 = vadd.f32 0.0, %v6262
    %v6264 = vpop.f32.mrb[0].mxu0
    %6265 = vmatprep.mubr.bf16.mxu0 %v6055
    %6266 = vmatmul.mubr.bf16.gmra.mrb[0].mxu0 %v6054
    %v6267 = vpop.f32.mrb[0].mxu0
    %v6268 = vadd.f32 0.0, %v6267
    %v6269 = vpop.f32.mrb[0].mxu0
    %v6270 = vpop.f32.mrb[0].mxu0
    %v6271 = vadd.f32 0.0, %v6270
    %v6272 = vpop.f32.mrb[0].mxu0
    %6273 = vmatprep.mubr.bf16.mxu0 %v6057
    %6274 = vmatmul.mubr.bf16.gmra.mrb[0].mxu0 %v6056
    %v6275 = vpop.f32.mrb[0].mxu0
    %v6276 = vadd.f32 0.0, %v6275
    %v6277 = vpop.f32.mrb[0].mxu0
    %v6278 = vpop.f32.mrb[0].mxu0
    %v6279 = vadd.f32 0.0, %v6278
    %v6280 = vpop.f32.mrb[0].mxu0
    %6281 = vmatprep.mubr.bf16.mxu0 %v6059
    %6282 = vmatmul.mubr.bf16.gmra.mrb[0].mxu0 %v6058
    %v6283 = vpop.f32.mrb[0].mxu0
    %v6284 = vadd.f32 0.0, %v6283
    %v6285 = vpop.f32.mrb[0].mxu0
    %v6286 = vpop.f32.mrb[0].mxu0
    %v6287 = vadd.f32 0.0, %v6286
    %v6288 = vpop.f32.mrb[0].mxu0
    %6289 = vmatprep.mubr.bf16.mxu0 %v6061
    %6290 = vmatmul.mubr.bf16.gmra.mrb[0].mxu0 %v6060
    %v6291 = vpop.f32.mrb[0].mxu0
    %v6292 = vadd.f32 0.0, %v6291
    %v6293 = vpop.f32.mrb[0].mxu0
    %v6294 = vpop.f32.mrb[0].mxu0
    %v6295 = vadd.f32 0.0, %v6294
    %v6296 = vpop.f32.mrb[0].mxu0
    %6297 = vmatprep.mubr.bf16.mxu0 %v6063
    %6298 = vmatmul.mubr.bf16.gmra.mrb[0].mxu0 %v6062
    %v6299 = vpop.f32.mrb[0].mxu0
    %v6300 = vadd.f32 0.0, %v6299
    %v6301 = vpop.f32.mrb[0].mxu0
    %v6302 = vpop.f32.mrb[0].mxu0
    %v6303 = vadd.f32 0.0, %v6302
    %v6304 = vpop.f32.mrb[0].mxu0
    %6305 = vdwg.mxu0
    %v6306 = vadd.f32 %v6064, %v6244
    %v6307 = vadd.f32 %v6065, %v6247
    %v6308 = vadd.f32 %v6066, %v6252
    %v6309 = vadd.f32 %v6067, %v6255
    %v6310 = vadd.f32 %v6068, %v6260
    %v6311 = vadd.f32 %v6069, %v6263
    %v6312 = vadd.f32 %v6070, %v6268
    %v6313 = vadd.f32 %v6071, %v6271
    %v6314 = vadd.f32 %v6072, %v6276
    %v6315 = vadd.f32 %v6073, %v6279
    %v6316 = vadd.f32 %v6074, %v6284
    %v6317 = vadd.f32 %v6075, %v6287
    %v6318 = vadd.f32 %v6076, %v6292
    %v6319 = vadd.f32 %v6077, %v6295
    %v6320 = vadd.f32 %v6078, %v6300
    %v6321 = vadd.f32 %v6079, %v6303
    %6322 = vst.msk [vmem:[#allocation7] sm:$0xff] %vm5597, %v6306
    %6323 = vst.msk [vmem:[#allocation7 + $0x8] sm:$0xff] %vm5597, %v6307
    %6324 = vst.msk [vmem:[#allocation7 + $0x10] sm:$0xff] %vm5597, %v6308
    %6325 = vst.msk [vmem:[#allocation7 + $0x18] sm:$0xff] %vm5597, %v6309
    %6326 = vst.msk [vmem:[#allocation7 + $0x20] sm:$0xff] %vm5597, %v6310
    %6327 = vst.msk [vmem:[#allocation7 + $0x28] sm:$0xff] %vm5597, %v6311
    %6328 = vst.msk [vmem:[#allocation7 + $0x30] sm:$0xff] %vm5597, %v6312
    %6329 = vst.msk [vmem:[#allocation7 + $0x38] sm:$0xff] %vm5597, %v6313
    %6330 = vst.msk [vmem:[#allocation7 + $0x40] sm:$0xff] %vm5597, %v6314
    %6331 = vst.msk [vmem:[#allocation7 + $0x48] sm:$0xff] %vm5597, %v6315
    %6332 = vst.msk [vmem:[#allocation7 + $0x50] sm:$0xff] %vm5597, %v6316
    %6333 = vst.msk [vmem:[#allocation7 + $0x58] sm:$0xff] %vm5597, %v6317
    %6334 = vst.msk [vmem:[#allocation7 + $0x60] sm:$0xff] %vm5597, %v6318
    %6335 = vst.msk [vmem:[#allocation7 + $0x68] sm:$0xff] %vm5597, %v6319
    %6336 = vst.msk [vmem:[#allocation7 + $0x70] sm:$0xff] %vm5597, %v6320
    %6337 = vst.msk [vmem:[#allocation7 + $0x78] sm:$0xff] %vm5597, %v6321
    %s6338 = scalar_lea.vmem [#allocation5], 32
    %v6339 = vld [vmem:[%s6338] sm:$0xff]
    %v6340 = vld [vmem:[%s6338 + $0x8] sm:$0xff]
    %v6341 = vld [vmem:[%s6338 + $0x10] sm:$0xff]
    %v6342 = vld [vmem:[%s6338 + $0x18] sm:$0xff]
    %v6343 = vld [vmem:[%s6338 + $0x20] sm:$0xff]
    %v6344 = vld [vmem:[%s6338 + $0x28] sm:$0xff]
    %v6345 = vld [vmem:[%s6338 + $0x30] sm:$0xff]
    %v6346 = vld [vmem:[%s6338 + $0x38] sm:$0xff]
    %v6347 = vld [vmem:[%s6338 + $0x40] sm:$0xff]
    %v6348 = vld [vmem:[%s6338 + $0x48] sm:$0xff]
    %v6349 = vld [vmem:[%s6338 + $0x50] sm:$0xff]
    %v6350 = vld [vmem:[%s6338 + $0x58] sm:$0xff]
    %v6351 = vld [vmem:[%s6338 + $0x60] sm:$0xff]
    %v6352 = vld [vmem:[%s6338 + $0x68] sm:$0xff]
    %v6353 = vld [vmem:[%s6338 + $0x70] sm:$0xff]
    %v6354 = vld [vmem:[%s6338 + $0x78] sm:$0xff]
    %v6355 = vld [vmem:[%s6338 + $0xa0] sm:$0xff]
    %v6356 = vld [vmem:[%s6338 + $0xa8] sm:$0xff]
    %v6357 = vld [vmem:[%s6338 + $0xb0] sm:$0xff]
    %v6358 = vld [vmem:[%s6338 + $0xb8] sm:$0xff]
    %v6359 = vld [vmem:[%s6338 + $0xc0] sm:$0xff]
    %v6360 = vld [vmem:[%s6338 + $0xc8] sm:$0xff]
    %v6361 = vld [vmem:[%s6338 + $0xd0] sm:$0xff]
    %v6362 = vld [vmem:[%s6338 + $0xd8] sm:$0xff]
    %v6363 = vld [vmem:[%s6338 + $0xe0] sm:$0xff]
    %v6364 = vld [vmem:[%s6338 + $0xe8] sm:$0xff]
    %v6365 = vld [vmem:[%s6338 + $0xf0] sm:$0xff]
    %v6366 = vld [vmem:[%s6338 + $0xf8] sm:$0xff]
    %v6367 = vld [vmem:[%s6338 + $0x100] sm:$0xff]
    %v6368 = vld [vmem:[%s6338 + $0x108] sm:$0xff]
    %v6369 = vld [vmem:[%s6338 + $0x110] sm:$0xff]
    %v6370 = vld [vmem:[%s6338 + $0x118] sm:$0xff]
    %v6371 = vpack.c.bf16 %v6341, %v6339
    %v6372 = vpack.c.bf16 %v6342, %v6340
    %v6373 = vpack.c.bf16 %v6345, %v6343
    %v6374 = vpack.c.bf16 %v6346, %v6344
    %v6375 = vpack.c.bf16 %v6349, %v6347
    %v6376 = vpack.c.bf16 %v6350, %v6348
    %v6377 = vpack.c.bf16 %v6353, %v6351
    %v6378 = vpack.c.bf16 %v6354, %v6352
    %v6379 = vpack.c.bf16 %v6357, %v6355
    %v6380 = vpack.c.bf16 %v6358, %v6356
    %v6381 = vpack.c.bf16 %v6361, %v6359
    %v6382 = vpack.c.bf16 %v6362, %v6360
    %v6383 = vpack.c.bf16 %v6365, %v6363
    %v6384 = vpack.c.bf16 %v6366, %v6364
    %v6385 = vpack.c.bf16 %v6369, %v6367
    %v6386 = vpack.c.bf16 %v6370, %v6368
    %v6387 = vld [vmem:[#allocation7] sm:$0xff]
    %v6388 = vld [vmem:[#allocation7 + $0x8] sm:$0xff]
    %v6389 = vld [vmem:[#allocation7 + $0x10] sm:$0xff]
    %v6390 = vld [vmem:[#allocation7 + $0x18] sm:$0xff]
    %v6391 = vld [vmem:[#allocation7 + $0x20] sm:$0xff]
    %v6392 = vld [vmem:[#allocation7 + $0x28] sm:$0xff]
    %v6393 = vld [vmem:[#allocation7 + $0x30] sm:$0xff]
    %v6394 = vld [vmem:[#allocation7 + $0x38] sm:$0xff]
    %v6395 = vld [vmem:[#allocation7 + $0x40] sm:$0xff]
    %v6396 = vld [vmem:[#allocation7 + $0x48] sm:$0xff]
    %v6397 = vld [vmem:[#allocation7 + $0x50] sm:$0xff]
    %v6398 = vld [vmem:[#allocation7 + $0x58] sm:$0xff]
    %v6399 = vld [vmem:[#allocation7 + $0x60] sm:$0xff]
    %v6400 = vld [vmem:[#allocation7 + $0x68] sm:$0xff]
    %v6401 = vld [vmem:[#allocation7 + $0x70] sm:$0xff]
    %v6402 = vld [vmem:[#allocation7 + $0x78] sm:$0xff]
    %s6403 = scalar_lea.vmem %s3, 768
    %v6404 = vld [vmem:[%s6403] sm:$0xf]
    %v6405 = vld [vmem:[%s6403 + $0x4] sm:$0xf]
    %v6406 = vld [vmem:[%s6403 + $0x8] sm:$0xf]
    %v6407 = vld [vmem:[%s6403 + $0xc] sm:$0xf]
    %v6408 = vld [vmem:[%s6403 + $0x10] sm:$0xf]
    %v6409 = vld [vmem:[%s6403 + $0x14] sm:$0xf]
    %v6410 = vld [vmem:[%s6403 + $0x18] sm:$0xf]
    %v6411 = vld [vmem:[%s6403 + $0x1c] sm:$0xf]
    %v6412 = vld [vmem:[%s6403 + $0x20] sm:$0xf]
    %v6413 = vld [vmem:[%s6403 + $0x24] sm:$0xf]
    %v6414 = vld [vmem:[%s6403 + $0x28] sm:$0xf]
    %v6415 = vld [vmem:[%s6403 + $0x2c] sm:$0xf]
    %v6416 = vld [vmem:[%s6403 + $0x30] sm:$0xf]
    %v6417 = vld [vmem:[%s6403 + $0x34] sm:$0xf]
    %v6418 = vld [vmem:[%s6403 + $0x38] sm:$0xf]
    %v6419 = vld [vmem:[%s6403 + $0x3c] sm:$0xf]
    %v6420 = vld [vmem:[%s6403 + $0x40] sm:$0xf]
    %v6421 = vld [vmem:[%s6403 + $0x44] sm:$0xf]
    %v6422 = vld [vmem:[%s6403 + $0x48] sm:$0xf]
    %v6423 = vld [vmem:[%s6403 + $0x4c] sm:$0xf]
    %v6424 = vld [vmem:[%s6403 + $0x50] sm:$0xf]
    %v6425 = vld [vmem:[%s6403 + $0x54] sm:$0xf]
    %v6426 = vld [vmem:[%s6403 + $0x58] sm:$0xf]
    %v6427 = vld [vmem:[%s6403 + $0x5c] sm:$0xf]
    %v6428 = vld [vmem:[%s6403 + $0x60] sm:$0xf]
    %v6429 = vld [vmem:[%s6403 + $0x64] sm:$0xf]
    %v6430 = vld [vmem:[%s6403 + $0x68] sm:$0xf]
    %v6431 = vld [vmem:[%s6403 + $0x6c] sm:$0xf]
    %v6432 = vld [vmem:[%s6403 + $0x70] sm:$0xf]
    %v6433 = vld [vmem:[%s6403 + $0x74] sm:$0xf]
    %v6434 = vld [vmem:[%s6403 + $0x78] sm:$0xf]
    %v6435 = vld [vmem:[%s6403 + $0x7c] sm:$0xf]
    %v6468 = vunpack.c.l.b16 %v6404
    %v6469 = vunpack.c.l.b16 %v6405
    %v6470 = vunpack.c.l.b16 %v6406
    %v6471 = vunpack.c.l.b16 %v6407
    %v6472 = vunpack.c.l.b16 %v6408
    %v6473 = vunpack.c.l.b16 %v6409
    %v6474 = vunpack.c.l.b16 %v6410
    %v6475 = vunpack.c.l.b16 %v6411
    %v6476 = vunpack.c.l.b16 %v6412
    %v6477 = vunpack.c.l.b16 %v6413
    %v6478 = vunpack.c.l.b16 %v6414
    %v6479 = vunpack.c.l.b16 %v6415
    %v6480 = vunpack.c.l.b16 %v6416
    %v6481 = vunpack.c.l.b16 %v6417
    %v6482 = vunpack.c.l.b16 %v6418
    %v6483 = vunpack.c.l.b16 %v6419
    %v6484 = vunpack.c.l.b16 %v6420
    %v6485 = vunpack.c.l.b16 %v6421
    %v6486 = vunpack.c.l.b16 %v6422
    %v6487 = vunpack.c.l.b16 %v6423
    %v6488 = vunpack.c.l.b16 %v6424
    %v6489 = vunpack.c.l.b16 %v6425
    %v6490 = vunpack.c.l.b16 %v6426
    %v6491 = vunpack.c.l.b16 %v6427
    %v6492 = vunpack.c.l.b16 %v6428
    %v6493 = vunpack.c.l.b16 %v6429
    %v6494 = vunpack.c.l.b16 %v6430
    %v6495 = vunpack.c.l.b16 %v6431
    %v6496 = vunpack.c.l.b16 %v6432
    %v6497 = vunpack.c.l.b16 %v6433
    %v6498 = vunpack.c.l.b16 %v6434
    %v6499 = vunpack.c.l.b16 %v6435
    %v6500 = vpack.c.b16 %v6469, %v6468
    %v6501 = vpack.c.b16 %v6471, %v6470
    %v6502 = vpack.c.b16 %v6473, %v6472
    %v6503 = vpack.c.b16 %v6475, %v6474
    %v6504 = vpack.c.b16 %v6477, %v6476
    %v6505 = vpack.c.b16 %v6479, %v6478
    %v6506 = vpack.c.b16 %v6481, %v6480
    %v6507 = vpack.c.b16 %v6483, %v6482
    %v6508 = vpack.c.b16 %v6485, %v6484
    %v6509 = vpack.c.b16 %v6487, %v6486
    %v6510 = vpack.c.b16 %v6489, %v6488
    %v6511 = vpack.c.b16 %v6491, %v6490
    %v6512 = vpack.c.b16 %v6493, %v6492
    %v6513 = vpack.c.b16 %v6495, %v6494
    %v6514 = vpack.c.b16 %v6497, %v6496
    %v6515 = vpack.c.b16 %v6499, %v6498
    %6532 = vmatprep.subr.bf16.mxu0 0
    %6533 = vmatpush1.bf16.msra.mxu0 %v6500
    %6534 = vmatprep.subr.bf16.mxu0 0
    %6535 = vmatpush1.bf16.msra.mxu0 %v6501
    %6536 = vmatprep.subr.bf16.mxu0 0
    %6537 = vmatpush1.bf16.msra.mxu0 %v6502
    %6538 = vmatprep.subr.bf16.mxu0 0
    %6539 = vmatpush1.bf16.msra.mxu0 %v6503
    %6540 = vmatprep.subr.bf16.mxu0 0
    %6541 = vmatpush1.bf16.msra.mxu0 %v6504
    %6542 = vmatprep.subr.bf16.mxu0 0
    %6543 = vmatpush1.bf16.msra.mxu0 %v6505
    %6544 = vmatprep.subr.bf16.mxu0 0
    %6545 = vmatpush1.bf16.msra.mxu0 %v6506
    %6546 = vmatprep.subr.bf16.mxu0 0
    %6547 = vmatpush1.bf16.msra.mxu0 %v6507
    %6548 = vmatprep.subr.bf16.mxu0 0
    %6549 = vmatpush1.bf16.msra.mxu0 %v6508
    %6550 = vmatprep.subr.bf16.mxu0 0
    %6551 = vmatpush1.bf16.msra.mxu0 %v6509
    %6552 = vmatprep.subr.bf16.mxu0 0
    %6553 = vmatpush1.bf16.msra.mxu0 %v6510
    %6554 = vmatprep.subr.bf16.mxu0 0
    %6555 = vmatpush1.bf16.msra.mxu0 %v6511
    %6556 = vmatprep.subr.bf16.mxu0 0
    %6557 = vmatpush1.bf16.msra.mxu0 %v6512
    %6558 = vmatprep.subr.bf16.mxu0 0
    %6559 = vmatpush1.bf16.msra.mxu0 %v6513
    %6560 = vmatprep.subr.bf16.mxu0 0
    %6561 = vmatpush1.bf16.msra.mxu0 %v6514
    %6562 = vmatprep.subr.bf16.mxu0 0
    %6563 = vmatpush1.bf16.msra.mxu0 %v6515
    %6564 = vmatprep.mubr.bf16.mxu0 %v6372
    %6565 = vmatmul.mubr.bf16.gmra.mrb[0].mxu0 %v6371
    %v6566 = vpop.f32.mrb[0].mxu0
    %v6567 = vadd.f32 0.0, %v6566
    %v6568 = vpop.f32.mrb[0].mxu0
    %v6569 = vpop.f32.mrb[0].mxu0
    %v6570 = vadd.f32 0.0, %v6569
    %v6571 = vpop.f32.mrb[0].mxu0
    %6572 = vmatprep.mubr.bf16.mxu0 %v6374
    %6573 = vmatmul.mubr.bf16.gmra.mrb[0].mxu0 %v6373
    %v6574 = vpop.f32.mrb[0].mxu0
    %v6575 = vadd.f32 0.0, %v6574
    %v6576 = vpop.f32.mrb[0].mxu0
    %v6577 = vpop.f32.mrb[0].mxu0
    %v6578 = vadd.f32 0.0, %v6577
    %v6579 = vpop.f32.mrb[0].mxu0
    %6580 = vmatprep.mubr.bf16.mxu0 %v6376
    %6581 = vmatmul.mubr.bf16.gmra.mrb[0].mxu0 %v6375
    %v6582 = vpop.f32.mrb[0].mxu0
    %v6583 = vadd.f32 0.0, %v6582
    %v6584 = vpop.f32.mrb[0].mxu0
    %v6585 = vpop.f32.mrb[0].mxu0
    %v6586 = vadd.f32 0.0, %v6585
    %v6587 = vpop.f32.mrb[0].mxu0
    %6588 = vmatprep.mubr.bf16.mxu0 %v6378
    %6589 = vmatmul.mubr.bf16.gmra.mrb[0].mxu0 %v6377
    %v6590 = vpop.f32.mrb[0].mxu0
    %v6591 = vadd.f32 0.0, %v6590
    %v6592 = vpop.f32.mrb[0].mxu0
    %v6593 = vpop.f32.mrb[0].mxu0
    %v6594 = vadd.f32 0.0, %v6593
    %v6595 = vpop.f32.mrb[0].mxu0
    %6596 = vmatprep.mubr.bf16.mxu0 %v6380
    %6597 = vmatmul.mubr.bf16.gmra.mrb[0].mxu0 %v6379
    %v6598 = vpop.f32.mrb[0].mxu0
    %v6599 = vadd.f32 0.0, %v6598
    %v6600 = vpop.f32.mrb[0].mxu0
    %v6601 = vpop.f32.mrb[0].mxu0
    %v6602 = vadd.f32 0.0, %v6601
    %v6603 = vpop.f32.mrb[0].mxu0
    %6604 = vmatprep.mubr.bf16.mxu0 %v6382
    %6605 = vmatmul.mubr.bf16.gmra.mrb[0].mxu0 %v6381
    %v6606 = vpop.f32.mrb[0].mxu0
    %v6607 = vadd.f32 0.0, %v6606
    %v6608 = vpop.f32.mrb[0].mxu0
    %v6609 = vpop.f32.mrb[0].mxu0
    %v6610 = vadd.f32 0.0, %v6609
    %v6611 = vpop.f32.mrb[0].mxu0
    %6612 = vmatprep.mubr.bf16.mxu0 %v6384
    %6613 = vmatmul.mubr.bf16.gmra.mrb[0].mxu0 %v6383
    %v6614 = vpop.f32.mrb[0].mxu0
    %v6615 = vadd.f32 0.0, %v6614
    %v6616 = vpop.f32.mrb[0].mxu0
    %v6617 = vpop.f32.mrb[0].mxu0
    %v6618 = vadd.f32 0.0, %v6617
    %v6619 = vpop.f32.mrb[0].mxu0
    %6620 = vmatprep.mubr.bf16.mxu0 %v6386
    %6621 = vmatmul.mubr.bf16.gmra.mrb[0].mxu0 %v6385
    %v6622 = vpop.f32.mrb[0].mxu0
    %v6623 = vadd.f32 0.0, %v6622
    %v6624 = vpop.f32.mrb[0].mxu0
    %v6625 = vpop.f32.mrb[0].mxu0
    %v6626 = vadd.f32 0.0, %v6625
    %v6627 = vpop.f32.mrb[0].mxu0
    %6628 = vdwg.mxu0
    %v6629 = vadd.f32 %v6387, %v6567
    %v6630 = vadd.f32 %v6388, %v6570
    %v6631 = vadd.f32 %v6389, %v6575
    %v6632 = vadd.f32 %v6390, %v6578
    %v6633 = vadd.f32 %v6391, %v6583
    %v6634 = vadd.f32 %v6392, %v6586
    %v6635 = vadd.f32 %v6393, %v6591
    %v6636 = vadd.f32 %v6394, %v6594
    %v6637 = vadd.f32 %v6395, %v6599
    %v6638 = vadd.f32 %v6396, %v6602
    %v6639 = vadd.f32 %v6397, %v6607
    %v6640 = vadd.f32 %v6398, %v6610
    %v6641 = vadd.f32 %v6399, %v6615
    %v6642 = vadd.f32 %v6400, %v6618
    %v6643 = vadd.f32 %v6401, %v6623
    %v6644 = vadd.f32 %v6402, %v6626
    %6645 = vst.msk [vmem:[#allocation7] sm:$0xff] %vm5597, %v6629
    %6646 = vst.msk [vmem:[#allocation7 + $0x8] sm:$0xff] %vm5597, %v6630
    %6647 = vst.msk [vmem:[#allocation7 + $0x10] sm:$0xff] %vm5597, %v6631
    %6648 = vst.msk [vmem:[#allocation7 + $0x18] sm:$0xff] %vm5597, %v6632
    %6649 = vst.msk [vmem:[#allocation7 + $0x20] sm:$0xff] %vm5597, %v6633
    %6650 = vst.msk [vmem:[#allocation7 + $0x28] sm:$0xff] %vm5597, %v6634
    %6651 = vst.msk [vmem:[#allocation7 + $0x30] sm:$0xff] %vm5597, %v6635
    %6652 = vst.msk [vmem:[#allocation7 + $0x38] sm:$0xff] %vm5597, %v6636
    %6653 = vst.msk [vmem:[#allocation7 + $0x40] sm:$0xff] %vm5597, %v6637
    %6654 = vst.msk [vmem:[#allocation7 + $0x48] sm:$0xff] %vm5597, %v6638
    %6655 = vst.msk [vmem:[#allocation7 + $0x50] sm:$0xff] %vm5597, %v6639
    %6656 = vst.msk [vmem:[#allocation7 + $0x58] sm:$0xff] %vm5597, %v6640
    %6657 = vst.msk [vmem:[#allocation7 + $0x60] sm:$0xff] %vm5597, %v6641
    %6658 = vst.msk [vmem:[#allocation7 + $0x68] sm:$0xff] %vm5597, %v6642
    %6659 = vst.msk [vmem:[#allocation7 + $0x70] sm:$0xff] %vm5597, %v6643
    %6660 = vst.msk [vmem:[#allocation7 + $0x78] sm:$0xff] %vm5597, %v6644
    %v6661 = vld [vmem:[#allocation3] sm:$0xfe]
    %v6662 = vld [vmem:[#allocation3 + $0x8] sm:$0xfe]
    %v6663 = vld [vmem:[#allocation3 + $0x10] sm:$0x1]
    %v6664 = vld [vmem:[#allocation3 + $0x18] sm:$0x1]
    %v6665 = vld [vmem:[#allocation3 + $0x20] sm:$0xfe]
    %v6666 = vld [vmem:[#allocation3 + $0x28] sm:$0xfe]
    %v6667 = vld [vmem:[#allocation3 + $0x30] sm:$0x1]
    %v6668 = vld [vmem:[#allocation3 + $0x38] sm:$0x1]
    %v6669 = vld [vmem:[#allocation3 + $0x40] sm:$0xfe]
    %v6670 = vld [vmem:[#allocation3 + $0x48] sm:$0xfe]
    %v6671 = vld [vmem:[#allocation3 + $0x50] sm:$0x1]
    %v6672 = vld [vmem:[#allocation3 + $0x58] sm:$0x1]
    %v6673 = vld [vmem:[#allocation3 + $0x60] sm:$0xfe]
    %v6674 = vld [vmem:[#allocation3 + $0x68] sm:$0xfe]
    %v6675 = vld [vmem:[#allocation3 + $0x70] sm:$0x1]
    %v6676 = vld [vmem:[#allocation3 + $0x78] sm:$0x1]
    %v6677 = vld [vmem:[#allocation3 + $0x80] sm:$0xfe]
    %v6678 = vld [vmem:[#allocation3 + $0x88] sm:$0xfe]
    %v6679 = vld [vmem:[#allocation3 + $0x90] sm:$0x1]
    %v6680 = vld [vmem:[#allocation3 + $0x98] sm:$0x1]
    %v6681 = vld [vmem:[#allocation3 + $0xa0] sm:$0xfe]
    %v6682 = vld [vmem:[#allocation3 + $0xa8] sm:$0xfe]
    %v6683 = vld [vmem:[#allocation3 + $0xb0] sm:$0x1]
    %v6684 = vld [vmem:[#allocation3 + $0xb8] sm:$0x1]
    %v6685 = vld [vmem:[#allocation3 + $0xc0] sm:$0xfe]
    %v6686 = vld [vmem:[#allocation3 + $0xc8] sm:$0xfe]
    %v6687 = vld [vmem:[#allocation3 + $0xd0] sm:$0x1]
    %v6688 = vld [vmem:[#allocation3 + $0xd8] sm:$0x1]
    %v6689 = vld [vmem:[#allocation3 + $0xe0] sm:$0xfe]
    %v6690 = vld [vmem:[#allocation3 + $0xe8] sm:$0xfe]
    %v6691 = vld [vmem:[#allocation3 + $0xf0] sm:$0x1]
    %v6692 = vld [vmem:[#allocation3 + $0xf8] sm:$0x1]
    %v6693 = vld [vmem:[#allocation3 + $0x100] sm:$0xfe]
    %v6694 = vld [vmem:[#allocation3 + $0x108] sm:$0xfe]
    %v6695 = vld [vmem:[#allocation3 + $0x110] sm:$0x1]
    %v6696 = vld [vmem:[#allocation3 + $0x118] sm:$0x1]
    %v6697 = vld [vmem:[#allocation3 + $0x120] sm:$0xfe]
    %v6698 = vld [vmem:[#allocation3 + $0x128] sm:$0xfe]
    %v6699 = vld [vmem:[#allocation3 + $0x130] sm:$0x1]
    %v6700 = vld [vmem:[#allocation3 + $0x138] sm:$0x1]
    %v6701 = vld [vmem:[#allocation3 + $0x140] sm:$0xfe]
    %v6702 = vld [vmem:[#allocation3 + $0x148] sm:$0xfe]
    %v6703 = vld [vmem:[#allocation3 + $0x150] sm:$0x1]
    %v6704 = vld [vmem:[#allocation3 + $0x158] sm:$0x1]
    %v6705 = vld [vmem:[#allocation3 + $0x160] sm:$0xfe]
    %v6706 = vld [vmem:[#allocation3 + $0x168] sm:$0xfe]
    %v6707 = vld [vmem:[#allocation3 + $0x170] sm:$0x1]
    %v6708 = vld [vmem:[#allocation3 + $0x178] sm:$0x1]
    %v6709 = vld [vmem:[#allocation3 + $0x180] sm:$0xfe]
    %v6710 = vld [vmem:[#allocation3 + $0x188] sm:$0xfe]
    %v6711 = vld [vmem:[#allocation3 + $0x190] sm:$0x1]
    %v6712 = vld [vmem:[#allocation3 + $0x198] sm:$0x1]
    %v6713 = vld [vmem:[#allocation3 + $0x1a0] sm:$0xfe]
    %v6714 = vld [vmem:[#allocation3 + $0x1a8] sm:$0xfe]
    %v6715 = vld [vmem:[#allocation3 + $0x1b0] sm:$0x1]
    %v6716 = vld [vmem:[#allocation3 + $0x1b8] sm:$0x1]
    %v6717 = vld [vmem:[#allocation3 + $0x1c0] sm:$0xfe]
    %v6718 = vld [vmem:[#allocation3 + $0x1c8] sm:$0xfe]
    %v6719 = vld [vmem:[#allocation3 + $0x1d0] sm:$0x1]
    %v6720 = vld [vmem:[#allocation3 + $0x1d8] sm:$0x1]
    %v6721 = vld [vmem:[#allocation3 + $0x1e0] sm:$0xfe]
    %v6722 = vld [vmem:[#allocation3 + $0x1e8] sm:$0xfe]
    %v6723 = vld [vmem:[#allocation3 + $0x1f0] sm:$0x1]
    %v6724 = vld [vmem:[#allocation3 + $0x1f8] sm:$0x1]
    %v6725 = vld [vmem:[#allocation3 + $0x200] sm:$0xfe]
    %v6726 = vld [vmem:[#allocation3 + $0x208] sm:$0xfe]
    %v6727 = vld [vmem:[#allocation3 + $0x210] sm:$0x1]
    %v6728 = vld [vmem:[#allocation3 + $0x218] sm:$0x1]
    %v6729 = vld [vmem:[#allocation3 + $0x220] sm:$0xfe]
    %v6730 = vld [vmem:[#allocation3 + $0x228] sm:$0xfe]
    %v6731 = vld [vmem:[#allocation3 + $0x230] sm:$0x1]
    %v6732 = vld [vmem:[#allocation3 + $0x238] sm:$0x1]
    %v6733 = vld [vmem:[#allocation3 + $0x240] sm:$0xfe]
    %v6734 = vld [vmem:[#allocation3 + $0x248] sm:$0xfe]
    %v6735 = vld [vmem:[#allocation3 + $0x250] sm:$0x1]
    %v6736 = vld [vmem:[#allocation3 + $0x258] sm:$0x1]
    %v6737 = vld [vmem:[#allocation3 + $0x260] sm:$0xfe]
    %v6738 = vld [vmem:[#allocation3 + $0x268] sm:$0xfe]
    %v6739 = vld [vmem:[#allocation3 + $0x270] sm:$0x1]
    %v6740 = vld [vmem:[#allocation3 + $0x278] sm:$0x1]
    %v6821 = vrot.slane %v6661, 1
    %v6822 = vrot.slane %v6663, 1
    %v6823 = vsel %vm2067, %v6821, %v6822
    %v6824 = vrot.slane %v6662, 1
    %v6825 = vrot.slane %v6664, 1
    %v6826 = vsel %vm2067, %v6824, %v6825
    %v6827 = vrot.slane %v6665, 1
    %v6828 = vrot.slane %v6667, 1
    %v6829 = vsel %vm2067, %v6827, %v6828
    %v6830 = vrot.slane %v6666, 1
    %v6831 = vrot.slane %v6668, 1
    %v6832 = vsel %vm2067, %v6830, %v6831
    %v6833 = vrot.slane %v6669, 1
    %v6834 = vrot.slane %v6671, 1
    %v6835 = vsel %vm2067, %v6833, %v6834
    %v6836 = vrot.slane %v6670, 1
    %v6837 = vrot.slane %v6672, 1
    %v6838 = vsel %vm2067, %v6836, %v6837
    %v6839 = vrot.slane %v6673, 1
    %v6840 = vrot.slane %v6675, 1
    %v6841 = vsel %vm2067, %v6839, %v6840
    %v6842 = vrot.slane %v6674, 1
    %v6843 = vrot.slane %v6676, 1
    %v6844 = vsel %vm2067, %v6842, %v6843
    %v6845 = vrot.slane %v6677, 1
    %v6846 = vrot.slane %v6679, 1
    %v6847 = vsel %vm2067, %v6845, %v6846
    %v6848 = vrot.slane %v6678, 1
    %v6849 = vrot.slane %v6680, 1
    %v6850 = vsel %vm2067, %v6848, %v6849
    %v6851 = vrot.slane %v6681, 1
    %v6852 = vrot.slane %v6683, 1
    %v6853 = vsel %vm2067, %v6851, %v6852
    %v6854 = vrot.slane %v6682, 1
    %v6855 = vrot.slane %v6684, 1
    %v6856 = vsel %vm2067, %v6854, %v6855
    %v6857 = vrot.slane %v6685, 1
    %v6858 = vrot.slane %v6687, 1
    %v6859 = vsel %vm2067, %v6857, %v6858
    %v6860 = vrot.slane %v6686, 1
    %v6861 = vrot.slane %v6688, 1
    %v6862 = vsel %vm2067, %v6860, %v6861
    %v6863 = vrot.slane %v6689, 1
    %v6864 = vrot.slane %v6691, 1
    %v6865 = vsel %vm2067, %v6863, %v6864
    %v6866 = vrot.slane %v6690, 1
    %v6867 = vrot.slane %v6692, 1
    %v6868 = vsel %vm2067, %v6866, %v6867
    %v6869 = vrot.slane %v6693, 1
    %v6870 = vrot.slane %v6695, 1
    %v6871 = vsel %vm2067, %v6869, %v6870
    %v6872 = vrot.slane %v6694, 1
    %v6873 = vrot.slane %v6696, 1
    %v6874 = vsel %vm2067, %v6872, %v6873
    %v6875 = vrot.slane %v6697, 1
    %v6876 = vrot.slane %v6699, 1
    %v6877 = vsel %vm2067, %v6875, %v6876
    %v6878 = vrot.slane %v6698, 1
    %v6879 = vrot.slane %v6700, 1
    %v6880 = vsel %vm2067, %v6878, %v6879
    %v6881 = vrot.slane %v6701, 1
    %v6882 = vrot.slane %v6703, 1
    %v6883 = vsel %vm2067, %v6881, %v6882
    %v6884 = vrot.slane %v6702, 1
    %v6885 = vrot.slane %v6704, 1
    %v6886 = vsel %vm2067, %v6884, %v6885
    %v6887 = vrot.slane %v6705, 1
    %v6888 = vrot.slane %v6707, 1
    %v6889 = vsel %vm2067, %v6887, %v6888
    %v6890 = vrot.slane %v6706, 1
    %v6891 = vrot.slane %v6708, 1
    %v6892 = vsel %vm2067, %v6890, %v6891
    %v6893 = vrot.slane %v6709, 1
    %v6894 = vrot.slane %v6711, 1
    %v6895 = vsel %vm2067, %v6893, %v6894
    %v6896 = vrot.slane %v6710, 1
    %v6897 = vrot.slane %v6712, 1
    %v6898 = vsel %vm2067, %v6896, %v6897
    %v6899 = vrot.slane %v6713, 1
    %v6900 = vrot.slane %v6715, 1
    %v6901 = vsel %vm2067, %v6899, %v6900
    %v6902 = vrot.slane %v6714, 1
    %v6903 = vrot.slane %v6716, 1
    %v6904 = vsel %vm2067, %v6902, %v6903
    %v6905 = vrot.slane %v6717, 1
    %v6906 = vrot.slane %v6719, 1
    %v6907 = vsel %vm2067, %v6905, %v6906
    %v6908 = vrot.slane %v6718, 1
    %v6909 = vrot.slane %v6720, 1
    %v6910 = vsel %vm2067, %v6908, %v6909
    %v6911 = vrot.slane %v6721, 1
    %v6912 = vrot.slane %v6723, 1
    %v6913 = vsel %vm2067, %v6911, %v6912
    %v6914 = vrot.slane %v6722, 1
    %v6915 = vrot.slane %v6724, 1
    %v6916 = vsel %vm2067, %v6914, %v6915
    %v6917 = vrot.slane %v6725, 1
    %v6918 = vrot.slane %v6727, 1
    %v6919 = vsel %vm2067, %v6917, %v6918
    %v6920 = vrot.slane %v6726, 1
    %v6921 = vrot.slane %v6728, 1
    %v6922 = vsel %vm2067, %v6920, %v6921
    %v6923 = vrot.slane %v6729, 1
    %v6924 = vrot.slane %v6731, 1
    %v6925 = vsel %vm2067, %v6923, %v6924
    %v6926 = vrot.slane %v6730, 1
    %v6927 = vrot.slane %v6732, 1
    %v6928 = vsel %vm2067, %v6926, %v6927
    %v6929 = vrot.slane %v6733, 1
    %v6930 = vrot.slane %v6735, 1
    %v6931 = vsel %vm2067, %v6929, %v6930
    %v6932 = vrot.slane %v6734, 1
    %v6933 = vrot.slane %v6736, 1
    %v6934 = vsel %vm2067, %v6932, %v6933
    %v6935 = vrot.slane %v6737, 1
    %v6936 = vrot.slane %v6739, 1
    %v6937 = vsel %vm2067, %v6935, %v6936
    %v6938 = vrot.slane %v6738, 1
    %v6939 = vrot.slane %v6740, 1
    %v6940 = vsel %vm2067, %v6938, %v6939
    %6981 = vst [vmem:[#allocation5] sm:$0xff] %v6823
    %6982 = vst [vmem:[#allocation5 + $0x8] sm:$0xff] %v6826
    %6983 = vst [vmem:[#allocation5 + $0x10] sm:$0xff] %v6829
    %6984 = vst [vmem:[#allocation5 + $0x18] sm:$0xff] %v6832
    %6985 = vst [vmem:[#allocation5 + $0x20] sm:$0xff] %v6835
    %6986 = vst [vmem:[#allocation5 + $0x28] sm:$0xff] %v6838
    %6987 = vst [vmem:[#allocation5 + $0x30] sm:$0xff] %v6841
    %6988 = vst [vmem:[#allocation5 + $0x38] sm:$0xff] %v6844
    %6989 = vst [vmem:[#allocation5 + $0x40] sm:$0xff] %v6847
    %6990 = vst [vmem:[#allocation5 + $0x48] sm:$0xff] %v6850
    %6991 = vst [vmem:[#allocation5 + $0x50] sm:$0xff] %v6853
    %6992 = vst [vmem:[#allocation5 + $0x58] sm:$0xff] %v6856
    %6993 = vst [vmem:[#allocation5 + $0x60] sm:$0xff] %v6859
    %6994 = vst [vmem:[#allocation5 + $0x68] sm:$0xff] %v6862
    %6995 = vst [vmem:[#allocation5 + $0x70] sm:$0xff] %v6865
    %6996 = vst [vmem:[#allocation5 + $0x78] sm:$0xff] %v6868
    %6997 = vst [vmem:[#allocation5 + $0x80] sm:$0xff] %v6871
    %6998 = vst [vmem:[#allocation5 + $0x88] sm:$0xff] %v6874
    %6999 = vst [vmem:[#allocation5 + $0x90] sm:$0xff] %v6877
    %7000 = vst [vmem:[#allocation5 + $0x98] sm:$0xff] %v6880
    %7001 = vst [vmem:[#allocation5 + $0xa0] sm:$0xff] %v6883
    %7002 = vst [vmem:[#allocation5 + $0xa8] sm:$0xff] %v6886
    %7003 = vst [vmem:[#allocation5 + $0xb0] sm:$0xff] %v6889
    %7004 = vst [vmem:[#allocation5 + $0xb8] sm:$0xff] %v6892
    %7005 = vst [vmem:[#allocation5 + $0xc0] sm:$0xff] %v6895
    %7006 = vst [vmem:[#allocation5 + $0xc8] sm:$0xff] %v6898
    %7007 = vst [vmem:[#allocation5 + $0xd0] sm:$0xff] %v6901
    %7008 = vst [vmem:[#allocation5 + $0xd8] sm:$0xff] %v6904
    %7009 = vst [vmem:[#allocation5 + $0xe0] sm:$0xff] %v6907
    %7010 = vst [vmem:[#allocation5 + $0xe8] sm:$0xff] %v6910
    %7011 = vst [vmem:[#allocation5 + $0xf0] sm:$0xff] %v6913
    %7012 = vst [vmem:[#allocation5 + $0xf8] sm:$0xff] %v6916
    %7013 = vst [vmem:[#allocation5 + $0x100] sm:$0xff] %v6919
    %7014 = vst [vmem:[#allocation5 + $0x108] sm:$0xff] %v6922
    %7015 = vst [vmem:[#allocation5 + $0x110] sm:$0xff] %v6925
    %7016 = vst [vmem:[#allocation5 + $0x118] sm:$0xff] %v6928
    %7017 = vst [vmem:[#allocation5 + $0x120] sm:$0xff] %v6931
    %7018 = vst [vmem:[#allocation5 + $0x128] sm:$0xff] %v6934
    %7019 = vst [vmem:[#allocation5 + $0x130] sm:$0xff] %v6937
    %7020 = vst [vmem:[#allocation5 + $0x138] sm:$0xff] %v6940
    %v7021 = vld [vmem:[#allocation5] sm:$0xff]
    %v7022 = vld [vmem:[#allocation5 + $0x8] sm:$0xff]
    %v7023 = vld [vmem:[#allocation5 + $0x10] sm:$0xff]
    %v7024 = vld [vmem:[#allocation5 + $0x18] sm:$0xff]
    %v7025 = vld [vmem:[#allocation5 + $0x20] sm:$0xff]
    %v7026 = vld [vmem:[#allocation5 + $0x28] sm:$0xff]
    %v7027 = vld [vmem:[#allocation5 + $0x30] sm:$0xff]
    %v7028 = vld [vmem:[#allocation5 + $0x38] sm:$0xff]
    %v7029 = vld [vmem:[#allocation5 + $0x40] sm:$0xff]
    %v7030 = vld [vmem:[#allocation5 + $0x48] sm:$0xff]
    %v7031 = vld [vmem:[#allocation5 + $0x50] sm:$0xff]
    %v7032 = vld [vmem:[#allocation5 + $0x58] sm:$0xff]
    %v7033 = vld [vmem:[#allocation5 + $0x60] sm:$0xff]
    %v7034 = vld [vmem:[#allocation5 + $0x68] sm:$0xff]
    %v7035 = vld [vmem:[#allocation5 + $0x70] sm:$0xff]
    %v7036 = vld [vmem:[#allocation5 + $0x78] sm:$0xff]
    %v7037 = vld [vmem:[#allocation5 + $0xa0] sm:$0xff]
    %v7038 = vld [vmem:[#allocation5 + $0xa8] sm:$0xff]
    %v7039 = vld [vmem:[#allocation5 + $0xb0] sm:$0xff]
    %v7040 = vld [vmem:[#allocation5 + $0xb8] sm:$0xff]
    %v7041 = vld [vmem:[#allocation5 + $0xc0] sm:$0xff]
    %v7042 = vld [vmem:[#allocation5 + $0xc8] sm:$0xff]
    %v7043 = vld [vmem:[#allocation5 + $0xd0] sm:$0xff]
    %v7044 = vld [vmem:[#allocation5 + $0xd8] sm:$0xff]
    %v7045 = vld [vmem:[#allocation5 + $0xe0] sm:$0xff]
    %v7046 = vld [vmem:[#allocation5 + $0xe8] sm:$0xff]
    %v7047 = vld [vmem:[#allocation5 + $0xf0] sm:$0xff]
    %v7048 = vld [vmem:[#allocation5 + $0xf8] sm:$0xff]
    %v7049 = vld [vmem:[#allocation5 + $0x100] sm:$0xff]
    %v7050 = vld [vmem:[#allocation5 + $0x108] sm:$0xff]
    %v7051 = vld [vmem:[#allocation5 + $0x110] sm:$0xff]
    %v7052 = vld [vmem:[#allocation5 + $0x118] sm:$0xff]
    %v7053 = vpack.c.bf16 %v7023, %v7021
    %v7054 = vpack.c.bf16 %v7024, %v7022
    %v7055 = vpack.c.bf16 %v7027, %v7025
    %v7056 = vpack.c.bf16 %v7028, %v7026
    %v7057 = vpack.c.bf16 %v7031, %v7029
    %v7058 = vpack.c.bf16 %v7032, %v7030
    %v7059 = vpack.c.bf16 %v7035, %v7033
    %v7060 = vpack.c.bf16 %v7036, %v7034
    %v7061 = vpack.c.bf16 %v7039, %v7037
    %v7062 = vpack.c.bf16 %v7040, %v7038
    %v7063 = vpack.c.bf16 %v7043, %v7041
    %v7064 = vpack.c.bf16 %v7044, %v7042
    %v7065 = vpack.c.bf16 %v7047, %v7045
    %v7066 = vpack.c.bf16 %v7048, %v7046
    %v7067 = vpack.c.bf16 %v7051, %v7049
    %v7068 = vpack.c.bf16 %v7052, %v7050
    %v7069 = vld [vmem:[#allocation7] sm:$0xff]
    %v7070 = vld [vmem:[#allocation7 + $0x8] sm:$0xff]
    %v7071 = vld [vmem:[#allocation7 + $0x10] sm:$0xff]
    %v7072 = vld [vmem:[#allocation7 + $0x18] sm:$0xff]
    %v7073 = vld [vmem:[#allocation7 + $0x20] sm:$0xff]
    %v7074 = vld [vmem:[#allocation7 + $0x28] sm:$0xff]
    %v7075 = vld [vmem:[#allocation7 + $0x30] sm:$0xff]
    %v7076 = vld [vmem:[#allocation7 + $0x38] sm:$0xff]
    %v7077 = vld [vmem:[#allocation7 + $0x40] sm:$0xff]
    %v7078 = vld [vmem:[#allocation7 + $0x48] sm:$0xff]
    %v7079 = vld [vmem:[#allocation7 + $0x50] sm:$0xff]
    %v7080 = vld [vmem:[#allocation7 + $0x58] sm:$0xff]
    %v7081 = vld [vmem:[#allocation7 + $0x60] sm:$0xff]
    %v7082 = vld [vmem:[#allocation7 + $0x68] sm:$0xff]
    %v7083 = vld [vmem:[#allocation7 + $0x70] sm:$0xff]
    %v7084 = vld [vmem:[#allocation7 + $0x78] sm:$0xff]
    %s7085 = scalar_lea.vmem %s3, 128
    %v7086 = vld [vmem:[%s7085] sm:$0xf]
    %v7087 = vld [vmem:[%s7085 + $0x4] sm:$0xf]
    %v7088 = vld [vmem:[%s7085 + $0x8] sm:$0xf]
    %v7089 = vld [vmem:[%s7085 + $0xc] sm:$0xf]
    %v7090 = vld [vmem:[%s7085 + $0x10] sm:$0xf]
    %v7091 = vld [vmem:[%s7085 + $0x14] sm:$0xf]
    %v7092 = vld [vmem:[%s7085 + $0x18] sm:$0xf]
    %v7093 = vld [vmem:[%s7085 + $0x1c] sm:$0xf]
    %v7094 = vld [vmem:[%s7085 + $0x20] sm:$0xf]
    %v7095 = vld [vmem:[%s7085 + $0x24] sm:$0xf]
    %v7096 = vld [vmem:[%s7085 + $0x28] sm:$0xf]
    %v7097 = vld [vmem:[%s7085 + $0x2c] sm:$0xf]
    %v7098 = vld [vmem:[%s7085 + $0x30] sm:$0xf]
    %v7099 = vld [vmem:[%s7085 + $0x34] sm:$0xf]
    %v7100 = vld [vmem:[%s7085 + $0x38] sm:$0xf]
    %v7101 = vld [vmem:[%s7085 + $0x3c] sm:$0xf]
    %v7102 = vld [vmem:[%s7085 + $0x40] sm:$0xf]
    %v7103 = vld [vmem:[%s7085 + $0x44] sm:$0xf]
    %v7104 = vld [vmem:[%s7085 + $0x48] sm:$0xf]
    %v7105 = vld [vmem:[%s7085 + $0x4c] sm:$0xf]
    %v7106 = vld [vmem:[%s7085 + $0x50] sm:$0xf]
    %v7107 = vld [vmem:[%s7085 + $0x54] sm:$0xf]
    %v7108 = vld [vmem:[%s7085 + $0x58] sm:$0xf]
    %v7109 = vld [vmem:[%s7085 + $0x5c] sm:$0xf]
    %v7110 = vld [vmem:[%s7085 + $0x60] sm:$0xf]
    %v7111 = vld [vmem:[%s7085 + $0x64] sm:$0xf]
    %v7112 = vld [vmem:[%s7085 + $0x68] sm:$0xf]
    %v7113 = vld [vmem:[%s7085 + $0x6c] sm:$0xf]
    %v7114 = vld [vmem:[%s7085 + $0x70] sm:$0xf]
    %v7115 = vld [vmem:[%s7085 + $0x74] sm:$0xf]
    %v7116 = vld [vmem:[%s7085 + $0x78] sm:$0xf]
    %v7117 = vld [vmem:[%s7085 + $0x7c] sm:$0xf]
    %v7150 = vunpack.c.l.b16 %v7086
    %v7151 = vunpack.c.l.b16 %v7087
    %v7152 = vunpack.c.l.b16 %v7088
    %v7153 = vunpack.c.l.b16 %v7089
    %v7154 = vunpack.c.l.b16 %v7090
    %v7155 = vunpack.c.l.b16 %v7091
    %v7156 = vunpack.c.l.b16 %v7092
    %v7157 = vunpack.c.l.b16 %v7093
    %v7158 = vunpack.c.l.b16 %v7094
    %v7159 = vunpack.c.l.b16 %v7095
    %v7160 = vunpack.c.l.b16 %v7096
    %v7161 = vunpack.c.l.b16 %v7097
    %v7162 = vunpack.c.l.b16 %v7098
    %v7163 = vunpack.c.l.b16 %v7099
    %v7164 = vunpack.c.l.b16 %v7100
    %v7165 = vunpack.c.l.b16 %v7101
    %v7166 = vunpack.c.l.b16 %v7102
    %v7167 = vunpack.c.l.b16 %v7103
    %v7168 = vunpack.c.l.b16 %v7104
    %v7169 = vunpack.c.l.b16 %v7105
    %v7170 = vunpack.c.l.b16 %v7106
    %v7171 = vunpack.c.l.b16 %v7107
    %v7172 = vunpack.c.l.b16 %v7108
    %v7173 = vunpack.c.l.b16 %v7109
    %v7174 = vunpack.c.l.b16 %v7110
    %v7175 = vunpack.c.l.b16 %v7111
    %v7176 = vunpack.c.l.b16 %v7112
    %v7177 = vunpack.c.l.b16 %v7113
    %v7178 = vunpack.c.l.b16 %v7114
    %v7179 = vunpack.c.l.b16 %v7115
    %v7180 = vunpack.c.l.b16 %v7116
    %v7181 = vunpack.c.l.b16 %v7117
    %v7182 = vpack.c.b16 %v7151, %v7150
    %v7183 = vpack.c.b16 %v7153, %v7152
    %v7184 = vpack.c.b16 %v7155, %v7154
    %v7185 = vpack.c.b16 %v7157, %v7156
    %v7186 = vpack.c.b16 %v7159, %v7158
    %v7187 = vpack.c.b16 %v7161, %v7160
    %v7188 = vpack.c.b16 %v7163, %v7162
    %v7189 = vpack.c.b16 %v7165, %v7164
    %v7190 = vpack.c.b16 %v7167, %v7166
    %v7191 = vpack.c.b16 %v7169, %v7168
    %v7192 = vpack.c.b16 %v7171, %v7170
    %v7193 = vpack.c.b16 %v7173, %v7172
    %v7194 = vpack.c.b16 %v7175, %v7174
    %v7195 = vpack.c.b16 %v7177, %v7176
    %v7196 = vpack.c.b16 %v7179, %v7178
    %v7197 = vpack.c.b16 %v7181, %v7180
    %7214 = vmatprep.subr.bf16.mxu0 0
    %7215 = vmatpush1.bf16.msra.mxu0 %v7182
    %7216 = vmatprep.subr.bf16.mxu0 0
    %7217 = vmatpush1.bf16.msra.mxu0 %v7183
    %7218 = vmatprep.subr.bf16.mxu0 0
    %7219 = vmatpush1.bf16.msra.mxu0 %v7184
    %7220 = vmatprep.subr.bf16.mxu0 0
    %7221 = vmatpush1.bf16.msra.mxu0 %v7185
    %7222 = vmatprep.subr.bf16.mxu0 0
    %7223 = vmatpush1.bf16.msra.mxu0 %v7186
    %7224 = vmatprep.subr.bf16.mxu0 0
    %7225 = vmatpush1.bf16.msra.mxu0 %v7187
    %7226 = vmatprep.subr.bf16.mxu0 0
    %7227 = vmatpush1.bf16.msra.mxu0 %v7188
    %7228 = vmatprep.subr.bf16.mxu0 0
    %7229 = vmatpush1.bf16.msra.mxu0 %v7189
    %7230 = vmatprep.subr.bf16.mxu0 0
    %7231 = vmatpush1.bf16.msra.mxu0 %v7190
    %7232 = vmatprep.subr.bf16.mxu0 0
    %7233 = vmatpush1.bf16.msra.mxu0 %v7191
    %7234 = vmatprep.subr.bf16.mxu0 0
    %7235 = vmatpush1.bf16.msra.mxu0 %v7192
    %7236 = vmatprep.subr.bf16.mxu0 0
    %7237 = vmatpush1.bf16.msra.mxu0 %v7193
    %7238 = vmatprep.subr.bf16.mxu0 0
    %7239 = vmatpush1.bf16.msra.mxu0 %v7194
    %7240 = vmatprep.subr.bf16.mxu0 0
    %7241 = vmatpush1.bf16.msra.mxu0 %v7195
    %7242 = vmatprep.subr.bf16.mxu0 0
    %7243 = vmatpush1.bf16.msra.mxu0 %v7196
    %7244 = vmatprep.subr.bf16.mxu0 0
    %7245 = vmatpush1.bf16.msra.mxu0 %v7197
    %7246 = vmatprep.mubr.bf16.mxu0 %v7054
    %7247 = vmatmul.mubr.bf16.gmra.mrb[0].mxu0 %v7053
    %v7248 = vpop.f32.mrb[0].mxu0
    %v7249 = vadd.f32 0.0, %v7248
    %v7250 = vpop.f32.mrb[0].mxu0
    %v7251 = vpop.f32.mrb[0].mxu0
    %v7252 = vadd.f32 0.0, %v7251
    %v7253 = vpop.f32.mrb[0].mxu0
    %7254 = vmatprep.mubr.bf16.mxu0 %v7056
    %7255 = vmatmul.mubr.bf16.gmra.mrb[0].mxu0 %v7055
    %v7256 = vpop.f32.mrb[0].mxu0
    %v7257 = vadd.f32 0.0, %v7256
    %v7258 = vpop.f32.mrb[0].mxu0
    %v7259 = vpop.f32.mrb[0].mxu0
    %v7260 = vadd.f32 0.0, %v7259
    %v7261 = vpop.f32.mrb[0].mxu0
    %7262 = vmatprep.mubr.bf16.mxu0 %v7058
    %7263 = vmatmul.mubr.bf16.gmra.mrb[0].mxu0 %v7057
    %v7264 = vpop.f32.mrb[0].mxu0
    %v7265 = vadd.f32 0.0, %v7264
    %v7266 = vpop.f32.mrb[0].mxu0
    %v7267 = vpop.f32.mrb[0].mxu0
    %v7268 = vadd.f32 0.0, %v7267
    %v7269 = vpop.f32.mrb[0].mxu0
    %7270 = vmatprep.mubr.bf16.mxu0 %v7060
    %7271 = vmatmul.mubr.bf16.gmra.mrb[0].mxu0 %v7059
    %v7272 = vpop.f32.mrb[0].mxu0
    %v7273 = vadd.f32 0.0, %v7272
    %v7274 = vpop.f32.mrb[0].mxu0
    %v7275 = vpop.f32.mrb[0].mxu0
    %v7276 = vadd.f32 0.0, %v7275
    %v7277 = vpop.f32.mrb[0].mxu0
    %7278 = vmatprep.mubr.bf16.mxu0 %v7062
    %7279 = vmatmul.mubr.bf16.gmra.mrb[0].mxu0 %v7061
    %v7280 = vpop.f32.mrb[0].mxu0
    %v7281 = vadd.f32 0.0, %v7280
    %v7282 = vpop.f32.mrb[0].mxu0
    %v7283 = vpop.f32.mrb[0].mxu0
    %v7284 = vadd.f32 0.0, %v7283
    %v7285 = vpop.f32.mrb[0].mxu0
    %7286 = vmatprep.mubr.bf16.mxu0 %v7064
    %7287 = vmatmul.mubr.bf16.gmra.mrb[0].mxu0 %v7063
    %v7288 = vpop.f32.mrb[0].mxu0
    %v7289 = vadd.f32 0.0, %v7288
    %v7290 = vpop.f32.mrb[0].mxu0
    %v7291 = vpop.f32.mrb[0].mxu0
    %v7292 = vadd.f32 0.0, %v7291
    %v7293 = vpop.f32.mrb[0].mxu0
    %7294 = vmatprep.mubr.bf16.mxu0 %v7066
    %7295 = vmatmul.mubr.bf16.gmra.mrb[0].mxu0 %v7065
    %v7296 = vpop.f32.mrb[0].mxu0
    %v7297 = vadd.f32 0.0, %v7296
    %v7298 = vpop.f32.mrb[0].mxu0
    %v7299 = vpop.f32.mrb[0].mxu0
    %v7300 = vadd.f32 0.0, %v7299
    %v7301 = vpop.f32.mrb[0].mxu0
    %7302 = vmatprep.mubr.bf16.mxu0 %v7068
    %7303 = vmatmul.mubr.bf16.gmra.mrb[0].mxu0 %v7067
    %v7304 = vpop.f32.mrb[0].mxu0
    %v7305 = vadd.f32 0.0, %v7304
    %v7306 = vpop.f32.mrb[0].mxu0
    %v7307 = vpop.f32.mrb[0].mxu0
    %v7308 = vadd.f32 0.0, %v7307
    %v7309 = vpop.f32.mrb[0].mxu0
    %7310 = vdwg.mxu0
    %v7311 = vadd.f32 %v7069, %v7249
    %v7312 = vadd.f32 %v7070, %v7252
    %v7313 = vadd.f32 %v7071, %v7257
    %v7314 = vadd.f32 %v7072, %v7260
    %v7315 = vadd.f32 %v7073, %v7265
    %v7316 = vadd.f32 %v7074, %v7268
    %v7317 = vadd.f32 %v7075, %v7273
    %v7318 = vadd.f32 %v7076, %v7276
    %v7319 = vadd.f32 %v7077, %v7281
    %v7320 = vadd.f32 %v7078, %v7284
    %v7321 = vadd.f32 %v7079, %v7289
    %v7322 = vadd.f32 %v7080, %v7292
    %v7323 = vadd.f32 %v7081, %v7297
    %v7324 = vadd.f32 %v7082, %v7300
    %v7325 = vadd.f32 %v7083, %v7305
    %v7326 = vadd.f32 %v7084, %v7308
    %7327 = vst.msk [vmem:[#allocation7] sm:$0xff] %vm5597, %v7311
    %7328 = vst.msk [vmem:[#allocation7 + $0x8] sm:$0xff] %vm5597, %v7312
    %7329 = vst.msk [vmem:[#allocation7 + $0x10] sm:$0xff] %vm5597, %v7313
    %7330 = vst.msk [vmem:[#allocation7 + $0x18] sm:$0xff] %vm5597, %v7314
    %7331 = vst.msk [vmem:[#allocation7 + $0x20] sm:$0xff] %vm5597, %v7315
    %7332 = vst.msk [vmem:[#allocation7 + $0x28] sm:$0xff] %vm5597, %v7316
    %7333 = vst.msk [vmem:[#allocation7 + $0x30] sm:$0xff] %vm5597, %v7317
    %7334 = vst.msk [vmem:[#allocation7 + $0x38] sm:$0xff] %vm5597, %v7318
    %7335 = vst.msk [vmem:[#allocation7 + $0x40] sm:$0xff] %vm5597, %v7319
    %7336 = vst.msk [vmem:[#allocation7 + $0x48] sm:$0xff] %vm5597, %v7320
    %7337 = vst.msk [vmem:[#allocation7 + $0x50] sm:$0xff] %vm5597, %v7321
    %7338 = vst.msk [vmem:[#allocation7 + $0x58] sm:$0xff] %vm5597, %v7322
    %7339 = vst.msk [vmem:[#allocation7 + $0x60] sm:$0xff] %vm5597, %v7323
    %7340 = vst.msk [vmem:[#allocation7 + $0x68] sm:$0xff] %vm5597, %v7324
    %7341 = vst.msk [vmem:[#allocation7 + $0x70] sm:$0xff] %vm5597, %v7325
    %7342 = vst.msk [vmem:[#allocation7 + $0x78] sm:$0xff] %vm5597, %v7326
    %v7343 = vld [vmem:[%s6015] sm:$0xff]
    %v7344 = vld [vmem:[%s6015 + $0x8] sm:$0xff]
    %v7345 = vld [vmem:[%s6015 + $0x10] sm:$0xff]
    %v7346 = vld [vmem:[%s6015 + $0x18] sm:$0xff]
    %v7347 = vld [vmem:[%s6015 + $0x20] sm:$0xff]
    %v7348 = vld [vmem:[%s6015 + $0x28] sm:$0xff]
    %v7349 = vld [vmem:[%s6015 + $0x30] sm:$0xff]
    %v7350 = vld [vmem:[%s6015 + $0x38] sm:$0xff]
    %v7351 = vld [vmem:[%s6015 + $0x40] sm:$0xff]
    %v7352 = vld [vmem:[%s6015 + $0x48] sm:$0xff]
    %v7353 = vld [vmem:[%s6015 + $0x50] sm:$0xff]
    %v7354 = vld [vmem:[%s6015 + $0x58] sm:$0xff]
    %v7355 = vld [vmem:[%s6015 + $0x60] sm:$0xff]
    %v7356 = vld [vmem:[%s6015 + $0x68] sm:$0xff]
    %v7357 = vld [vmem:[%s6015 + $0x70] sm:$0xff]
    %v7358 = vld [vmem:[%s6015 + $0x78] sm:$0xff]
    %v7359 = vld [vmem:[%s6015 + $0xa0] sm:$0xff]
    %v7360 = vld [vmem:[%s6015 + $0xa8] sm:$0xff]
    %v7361 = vld [vmem:[%s6015 + $0xb0] sm:$0xff]
    %v7362 = vld [vmem:[%s6015 + $0xb8] sm:$0xff]
    %v7363 = vld [vmem:[%s6015 + $0xc0] sm:$0xff]
    %v7364 = vld [vmem:[%s6015 + $0xc8] sm:$0xff]
    %v7365 = vld [vmem:[%s6015 + $0xd0] sm:$0xff]
    %v7366 = vld [vmem:[%s6015 + $0xd8] sm:$0xff]
    %v7367 = vld [vmem:[%s6015 + $0xe0] sm:$0xff]
    %v7368 = vld [vmem:[%s6015 + $0xe8] sm:$0xff]
    %v7369 = vld [vmem:[%s6015 + $0xf0] sm:$0xff]
    %v7370 = vld [vmem:[%s6015 + $0xf8] sm:$0xff]
    %v7371 = vld [vmem:[%s6015 + $0x100] sm:$0xff]
    %v7372 = vld [vmem:[%s6015 + $0x108] sm:$0xff]
    %v7373 = vld [vmem:[%s6015 + $0x110] sm:$0xff]
    %v7374 = vld [vmem:[%s6015 + $0x118] sm:$0xff]
    %v7375 = vpack.c.bf16 %v7345, %v7343
    %v7376 = vpack.c.bf16 %v7346, %v7344
    %v7377 = vpack.c.bf16 %v7349, %v7347
    %v7378 = vpack.c.bf16 %v7350, %v7348
    %v7379 = vpack.c.bf16 %v7353, %v7351
    %v7380 = vpack.c.bf16 %v7354, %v7352
    %v7381 = vpack.c.bf16 %v7357, %v7355
    %v7382 = vpack.c.bf16 %v7358, %v7356
    %v7383 = vpack.c.bf16 %v7361, %v7359
    %v7384 = vpack.c.bf16 %v7362, %v7360
    %v7385 = vpack.c.bf16 %v7365, %v7363
    %v7386 = vpack.c.bf16 %v7366, %v7364
    %v7387 = vpack.c.bf16 %v7369, %v7367
    %v7388 = vpack.c.bf16 %v7370, %v7368
    %v7389 = vpack.c.bf16 %v7373, %v7371
    %v7390 = vpack.c.bf16 %v7374, %v7372
    %v7391 = vld [vmem:[#allocation7] sm:$0xff]
    %v7392 = vld [vmem:[#allocation7 + $0x8] sm:$0xff]
    %v7393 = vld [vmem:[#allocation7 + $0x10] sm:$0xff]
    %v7394 = vld [vmem:[#allocation7 + $0x18] sm:$0xff]
    %v7395 = vld [vmem:[#allocation7 + $0x20] sm:$0xff]
    %v7396 = vld [vmem:[#allocation7 + $0x28] sm:$0xff]
    %v7397 = vld [vmem:[#allocation7 + $0x30] sm:$0xff]
    %v7398 = vld [vmem:[#allocation7 + $0x38] sm:$0xff]
    %v7399 = vld [vmem:[#allocation7 + $0x40] sm:$0xff]
    %v7400 = vld [vmem:[#allocation7 + $0x48] sm:$0xff]
    %v7401 = vld [vmem:[#allocation7 + $0x50] sm:$0xff]
    %v7402 = vld [vmem:[#allocation7 + $0x58] sm:$0xff]
    %v7403 = vld [vmem:[#allocation7 + $0x60] sm:$0xff]
    %v7404 = vld [vmem:[#allocation7 + $0x68] sm:$0xff]
    %v7405 = vld [vmem:[#allocation7 + $0x70] sm:$0xff]
    %v7406 = vld [vmem:[#allocation7 + $0x78] sm:$0xff]
    %s7407 = scalar_lea.vmem %s3, 512
    %v7408 = vld [vmem:[%s7407] sm:$0xf]
    %v7409 = vld [vmem:[%s7407 + $0x4] sm:$0xf]
    %v7410 = vld [vmem:[%s7407 + $0x8] sm:$0xf]
    %v7411 = vld [vmem:[%s7407 + $0xc] sm:$0xf]
    %v7412 = vld [vmem:[%s7407 + $0x10] sm:$0xf]
    %v7413 = vld [vmem:[%s7407 + $0x14] sm:$0xf]
    %v7414 = vld [vmem:[%s7407 + $0x18] sm:$0xf]
    %v7415 = vld [vmem:[%s7407 + $0x1c] sm:$0xf]
    %v7416 = vld [vmem:[%s7407 + $0x20] sm:$0xf]
    %v7417 = vld [vmem:[%s7407 + $0x24] sm:$0xf]
    %v7418 = vld [vmem:[%s7407 + $0x28] sm:$0xf]
    %v7419 = vld [vmem:[%s7407 + $0x2c] sm:$0xf]
    %v7420 = vld [vmem:[%s7407 + $0x30] sm:$0xf]
    %v7421 = vld [vmem:[%s7407 + $0x34] sm:$0xf]
    %v7422 = vld [vmem:[%s7407 + $0x38] sm:$0xf]
    %v7423 = vld [vmem:[%s7407 + $0x3c] sm:$0xf]
    %v7424 = vld [vmem:[%s7407 + $0x40] sm:$0xf]
    %v7425 = vld [vmem:[%s7407 + $0x44] sm:$0xf]
    %v7426 = vld [vmem:[%s7407 + $0x48] sm:$0xf]
    %v7427 = vld [vmem:[%s7407 + $0x4c] sm:$0xf]
    %v7428 = vld [vmem:[%s7407 + $0x50] sm:$0xf]
    %v7429 = vld [vmem:[%s7407 + $0x54] sm:$0xf]
    %v7430 = vld [vmem:[%s7407 + $0x58] sm:$0xf]
    %v7431 = vld [vmem:[%s7407 + $0x5c] sm:$0xf]
    %v7432 = vld [vmem:[%s7407 + $0x60] sm:$0xf]
    %v7433 = vld [vmem:[%s7407 + $0x64] sm:$0xf]
    %v7434 = vld [vmem:[%s7407 + $0x68] sm:$0xf]
    %v7435 = vld [vmem:[%s7407 + $0x6c] sm:$0xf]
    %v7436 = vld [vmem:[%s7407 + $0x70] sm:$0xf]
    %v7437 = vld [vmem:[%s7407 + $0x74] sm:$0xf]
    %v7438 = vld [vmem:[%s7407 + $0x78] sm:$0xf]
    %v7439 = vld [vmem:[%s7407 + $0x7c] sm:$0xf]
    %v7472 = vunpack.c.l.b16 %v7408
    %v7473 = vunpack.c.l.b16 %v7409
    %v7474 = vunpack.c.l.b16 %v7410
    %v7475 = vunpack.c.l.b16 %v7411
    %v7476 = vunpack.c.l.b16 %v7412
    %v7477 = vunpack.c.l.b16 %v7413
    %v7478 = vunpack.c.l.b16 %v7414
    %v7479 = vunpack.c.l.b16 %v7415
    %v7480 = vunpack.c.l.b16 %v7416
    %v7481 = vunpack.c.l.b16 %v7417
    %v7482 = vunpack.c.l.b16 %v7418
    %v7483 = vunpack.c.l.b16 %v7419
    %v7484 = vunpack.c.l.b16 %v7420
    %v7485 = vunpack.c.l.b16 %v7421
    %v7486 = vunpack.c.l.b16 %v7422
    %v7487 = vunpack.c.l.b16 %v7423
    %v7488 = vunpack.c.l.b16 %v7424
    %v7489 = vunpack.c.l.b16 %v7425
    %v7490 = vunpack.c.l.b16 %v7426
    %v7491 = vunpack.c.l.b16 %v7427
    %v7492 = vunpack.c.l.b16 %v7428
    %v7493 = vunpack.c.l.b16 %v7429
    %v7494 = vunpack.c.l.b16 %v7430
    %v7495 = vunpack.c.l.b16 %v7431
    %v7496 = vunpack.c.l.b16 %v7432
    %v7497 = vunpack.c.l.b16 %v7433
    %v7498 = vunpack.c.l.b16 %v7434
    %v7499 = vunpack.c.l.b16 %v7435
    %v7500 = vunpack.c.l.b16 %v7436
    %v7501 = vunpack.c.l.b16 %v7437
    %v7502 = vunpack.c.l.b16 %v7438
    %v7503 = vunpack.c.l.b16 %v7439
    %v7504 = vpack.c.b16 %v7473, %v7472
    %v7505 = vpack.c.b16 %v7475, %v7474
    %v7506 = vpack.c.b16 %v7477, %v7476
    %v7507 = vpack.c.b16 %v7479, %v7478
    %v7508 = vpack.c.b16 %v7481, %v7480
    %v7509 = vpack.c.b16 %v7483, %v7482
    %v7510 = vpack.c.b16 %v7485, %v7484
    %v7511 = vpack.c.b16 %v7487, %v7486
    %v7512 = vpack.c.b16 %v7489, %v7488
    %v7513 = vpack.c.b16 %v7491, %v7490
    %v7514 = vpack.c.b16 %v7493, %v7492
    %v7515 = vpack.c.b16 %v7495, %v7494
    %v7516 = vpack.c.b16 %v7497, %v7496
    %v7517 = vpack.c.b16 %v7499, %v7498
    %v7518 = vpack.c.b16 %v7501, %v7500
    %v7519 = vpack.c.b16 %v7503, %v7502
    %7536 = vmatprep.subr.bf16.mxu0 0
    %7537 = vmatpush1.bf16.msra.mxu0 %v7504
    %7538 = vmatprep.subr.bf16.mxu0 0
    %7539 = vmatpush1.bf16.msra.mxu0 %v7505
    %7540 = vmatprep.subr.bf16.mxu0 0
    %7541 = vmatpush1.bf16.msra.mxu0 %v7506
    %7542 = vmatprep.subr.bf16.mxu0 0
    %7543 = vmatpush1.bf16.msra.mxu0 %v7507
    %7544 = vmatprep.subr.bf16.mxu0 0
    %7545 = vmatpush1.bf16.msra.mxu0 %v7508
    %7546 = vmatprep.subr.bf16.mxu0 0
    %7547 = vmatpush1.bf16.msra.mxu0 %v7509
    %7548 = vmatprep.subr.bf16.mxu0 0
    %7549 = vmatpush1.bf16.msra.mxu0 %v7510
    %7550 = vmatprep.subr.bf16.mxu0 0
    %7551 = vmatpush1.bf16.msra.mxu0 %v7511
    %7552 = vmatprep.subr.bf16.mxu0 0
    %7553 = vmatpush1.bf16.msra.mxu0 %v7512
    %7554 = vmatprep.subr.bf16.mxu0 0
    %7555 = vmatpush1.bf16.msra.mxu0 %v7513
    %7556 = vmatprep.subr.bf16.mxu0 0
    %7557 = vmatpush1.bf16.msra.mxu0 %v7514
    %7558 = vmatprep.subr.bf16.mxu0 0
    %7559 = vmatpush1.bf16.msra.mxu0 %v7515
    %7560 = vmatprep.subr.bf16.mxu0 0
    %7561 = vmatpush1.bf16.msra.mxu0 %v7516
    %7562 = vmatprep.subr.bf16.mxu0 0
    %7563 = vmatpush1.bf16.msra.mxu0 %v7517
    %7564 = vmatprep.subr.bf16.mxu0 0
    %7565 = vmatpush1.bf16.msra.mxu0 %v7518
    %7566 = vmatprep.subr.bf16.mxu0 0
    %7567 = vmatpush1.bf16.msra.mxu0 %v7519
    %7568 = vmatprep.mubr.bf16.mxu0 %v7376
    %7569 = vmatmul.mubr.bf16.gmra.mrb[0].mxu0 %v7375
    %v7570 = vpop.f32.mrb[0].mxu0
    %v7571 = vadd.f32 0.0, %v7570
    %v7572 = vpop.f32.mrb[0].mxu0
    %v7573 = vpop.f32.mrb[0].mxu0
    %v7574 = vadd.f32 0.0, %v7573
    %v7575 = vpop.f32.mrb[0].mxu0
    %7576 = vmatprep.mubr.bf16.mxu0 %v7378
    %7577 = vmatmul.mubr.bf16.gmra.mrb[0].mxu0 %v7377
    %v7578 = vpop.f32.mrb[0].mxu0
    %v7579 = vadd.f32 0.0, %v7578
    %v7580 = vpop.f32.mrb[0].mxu0
    %v7581 = vpop.f32.mrb[0].mxu0
    %v7582 = vadd.f32 0.0, %v7581
    %v7583 = vpop.f32.mrb[0].mxu0
    %7584 = vmatprep.mubr.bf16.mxu0 %v7380
    %7585 = vmatmul.mubr.bf16.gmra.mrb[0].mxu0 %v7379
    %v7586 = vpop.f32.mrb[0].mxu0
    %v7587 = vadd.f32 0.0, %v7586
    %v7588 = vpop.f32.mrb[0].mxu0
    %v7589 = vpop.f32.mrb[0].mxu0
    %v7590 = vadd.f32 0.0, %v7589
    %v7591 = vpop.f32.mrb[0].mxu0
    %7592 = vmatprep.mubr.bf16.mxu0 %v7382
    %7593 = vmatmul.mubr.bf16.gmra.mrb[0].mxu0 %v7381
    %v7594 = vpop.f32.mrb[0].mxu0
    %v7595 = vadd.f32 0.0, %v7594
    %v7596 = vpop.f32.mrb[0].mxu0
    %v7597 = vpop.f32.mrb[0].mxu0
    %v7598 = vadd.f32 0.0, %v7597
    %v7599 = vpop.f32.mrb[0].mxu0
    %7600 = vmatprep.mubr.bf16.mxu0 %v7384
    %7601 = vmatmul.mubr.bf16.gmra.mrb[0].mxu0 %v7383
    %v7602 = vpop.f32.mrb[0].mxu0
    %v7603 = vadd.f32 0.0, %v7602
    %v7604 = vpop.f32.mrb[0].mxu0
    %v7605 = vpop.f32.mrb[0].mxu0
    %v7606 = vadd.f32 0.0, %v7605
    %v7607 = vpop.f32.mrb[0].mxu0
    %7608 = vmatprep.mubr.bf16.mxu0 %v7386
    %7609 = vmatmul.mubr.bf16.gmra.mrb[0].mxu0 %v7385
    %v7610 = vpop.f32.mrb[0].mxu0
    %v7611 = vadd.f32 0.0, %v7610
    %v7612 = vpop.f32.mrb[0].mxu0
    %v7613 = vpop.f32.mrb[0].mxu0
    %v7614 = vadd.f32 0.0, %v7613
    %v7615 = vpop.f32.mrb[0].mxu0
    %7616 = vmatprep.mubr.bf16.mxu0 %v7388
    %7617 = vmatmul.mubr.bf16.gmra.mrb[0].mxu0 %v7387
    %v7618 = vpop.f32.mrb[0].mxu0
    %v7619 = vadd.f32 0.0, %v7618
    %v7620 = vpop.f32.mrb[0].mxu0
    %v7621 = vpop.f32.mrb[0].mxu0
    %v7622 = vadd.f32 0.0, %v7621
    %v7623 = vpop.f32.mrb[0].mxu0
    %7624 = vmatprep.mubr.bf16.mxu0 %v7390
    %7625 = vmatmul.mubr.bf16.gmra.mrb[0].mxu0 %v7389
    %v7626 = vpop.f32.mrb[0].mxu0
    %v7627 = vadd.f32 0.0, %v7626
    %v7628 = vpop.f32.mrb[0].mxu0
    %v7629 = vpop.f32.mrb[0].mxu0
    %v7630 = vadd.f32 0.0, %v7629
    %v7631 = vpop.f32.mrb[0].mxu0
    %7632 = vdwg.mxu0
    %v7633 = vadd.f32 %v7391, %v7571
    %v7634 = vadd.f32 %v7392, %v7574
    %v7635 = vadd.f32 %v7393, %v7579
    %v7636 = vadd.f32 %v7394, %v7582
    %v7637 = vadd.f32 %v7395, %v7587
    %v7638 = vadd.f32 %v7396, %v7590
    %v7639 = vadd.f32 %v7397, %v7595
    %v7640 = vadd.f32 %v7398, %v7598
    %v7641 = vadd.f32 %v7399, %v7603
    %v7642 = vadd.f32 %v7400, %v7606
    %v7643 = vadd.f32 %v7401, %v7611
    %v7644 = vadd.f32 %v7402, %v7614
    %v7645 = vadd.f32 %v7403, %v7619
    %v7646 = vadd.f32 %v7404, %v7622
    %v7647 = vadd.f32 %v7405, %v7627
    %v7648 = vadd.f32 %v7406, %v7630
    %7649 = vst.msk [vmem:[#allocation7] sm:$0xff] %vm5597, %v7633
    %7650 = vst.msk [vmem:[#allocation7 + $0x8] sm:$0xff] %vm5597, %v7634
    %7651 = vst.msk [vmem:[#allocation7 + $0x10] sm:$0xff] %vm5597, %v7635
    %7652 = vst.msk [vmem:[#allocation7 + $0x18] sm:$0xff] %vm5597, %v7636
    %7653 = vst.msk [vmem:[#allocation7 + $0x20] sm:$0xff] %vm5597, %v7637
    %7654 = vst.msk [vmem:[#allocation7 + $0x28] sm:$0xff] %vm5597, %v7638
    %7655 = vst.msk [vmem:[#allocation7 + $0x30] sm:$0xff] %vm5597, %v7639
    %7656 = vst.msk [vmem:[#allocation7 + $0x38] sm:$0xff] %vm5597, %v7640
    %7657 = vst.msk [vmem:[#allocation7 + $0x40] sm:$0xff] %vm5597, %v7641
    %7658 = vst.msk [vmem:[#allocation7 + $0x48] sm:$0xff] %vm5597, %v7642
    %7659 = vst.msk [vmem:[#allocation7 + $0x50] sm:$0xff] %vm5597, %v7643
    %7660 = vst.msk [vmem:[#allocation7 + $0x58] sm:$0xff] %vm5597, %v7644
    %7661 = vst.msk [vmem:[#allocation7 + $0x60] sm:$0xff] %vm5597, %v7645
    %7662 = vst.msk [vmem:[#allocation7 + $0x68] sm:$0xff] %vm5597, %v7646
    %7663 = vst.msk [vmem:[#allocation7 + $0x70] sm:$0xff] %vm5597, %v7647
    %7664 = vst.msk [vmem:[#allocation7 + $0x78] sm:$0xff] %vm5597, %v7648
    %v7665 = vld [vmem:[%s6338] sm:$0xff]
    %v7666 = vld [vmem:[%s6338 + $0x8] sm:$0xff]
    %v7667 = vld [vmem:[%s6338 + $0x10] sm:$0xff]
    %v7668 = vld [vmem:[%s6338 + $0x18] sm:$0xff]
    %v7669 = vld [vmem:[%s6338 + $0x20] sm:$0xff]
    %v7670 = vld [vmem:[%s6338 + $0x28] sm:$0xff]
    %v7671 = vld [vmem:[%s6338 + $0x30] sm:$0xff]
    %v7672 = vld [vmem:[%s6338 + $0x38] sm:$0xff]
    %v7673 = vld [vmem:[%s6338 + $0x40] sm:$0xff]
    %v7674 = vld [vmem:[%s6338 + $0x48] sm:$0xff]
    %v7675 = vld [vmem:[%s6338 + $0x50] sm:$0xff]
    %v7676 = vld [vmem:[%s6338 + $0x58] sm:$0xff]
    %v7677 = vld [vmem:[%s6338 + $0x60] sm:$0xff]
    %v7678 = vld [vmem:[%s6338 + $0x68] sm:$0xff]
    %v7679 = vld [vmem:[%s6338 + $0x70] sm:$0xff]
    %v7680 = vld [vmem:[%s6338 + $0x78] sm:$0xff]
    %v7681 = vld [vmem:[%s6338 + $0xa0] sm:$0xff]
    %v7682 = vld [vmem:[%s6338 + $0xa8] sm:$0xff]
    %v7683 = vld [vmem:[%s6338 + $0xb0] sm:$0xff]
    %v7684 = vld [vmem:[%s6338 + $0xb8] sm:$0xff]
    %v7685 = vld [vmem:[%s6338 + $0xc0] sm:$0xff]
    %v7686 = vld [vmem:[%s6338 + $0xc8] sm:$0xff]
    %v7687 = vld [vmem:[%s6338 + $0xd0] sm:$0xff]
    %v7688 = vld [vmem:[%s6338 + $0xd8] sm:$0xff]
    %v7689 = vld [vmem:[%s6338 + $0xe0] sm:$0xff]
    %v7690 = vld [vmem:[%s6338 + $0xe8] sm:$0xff]
    %v7691 = vld [vmem:[%s6338 + $0xf0] sm:$0xff]
    %v7692 = vld [vmem:[%s6338 + $0xf8] sm:$0xff]
    %v7693 = vld [vmem:[%s6338 + $0x100] sm:$0xff]
    %v7694 = vld [vmem:[%s6338 + $0x108] sm:$0xff]
    %v7695 = vld [vmem:[%s6338 + $0x110] sm:$0xff]
    %v7696 = vld [vmem:[%s6338 + $0x118] sm:$0xff]
    %v7697 = vpack.c.bf16 %v7667, %v7665
    %v7698 = vpack.c.bf16 %v7668, %v7666
    %v7699 = vpack.c.bf16 %v7671, %v7669
    %v7700 = vpack.c.bf16 %v7672, %v7670
    %v7701 = vpack.c.bf16 %v7675, %v7673
    %v7702 = vpack.c.bf16 %v7676, %v7674
    %v7703 = vpack.c.bf16 %v7679, %v7677
    %v7704 = vpack.c.bf16 %v7680, %v7678
    %v7705 = vpack.c.bf16 %v7683, %v7681
    %v7706 = vpack.c.bf16 %v7684, %v7682
    %v7707 = vpack.c.bf16 %v7687, %v7685
    %v7708 = vpack.c.bf16 %v7688, %v7686
    %v7709 = vpack.c.bf16 %v7691, %v7689
    %v7710 = vpack.c.bf16 %v7692, %v7690
    %v7711 = vpack.c.bf16 %v7695, %v7693
    %v7712 = vpack.c.bf16 %v7696, %v7694
    %v7713 = vld [vmem:[#allocation7] sm:$0xff]
    %v7714 = vld [vmem:[#allocation7 + $0x8] sm:$0xff]
    %v7715 = vld [vmem:[#allocation7 + $0x10] sm:$0xff]
    %v7716 = vld [vmem:[#allocation7 + $0x18] sm:$0xff]
    %v7717 = vld [vmem:[#allocation7 + $0x20] sm:$0xff]
    %v7718 = vld [vmem:[#allocation7 + $0x28] sm:$0xff]
    %v7719 = vld [vmem:[#allocation7 + $0x30] sm:$0xff]
    %v7720 = vld [vmem:[#allocation7 + $0x38] sm:$0xff]
    %v7721 = vld [vmem:[#allocation7 + $0x40] sm:$0xff]
    %v7722 = vld [vmem:[#allocation7 + $0x48] sm:$0xff]
    %v7723 = vld [vmem:[#allocation7 + $0x50] sm:$0xff]
    %v7724 = vld [vmem:[#allocation7 + $0x58] sm:$0xff]
    %v7725 = vld [vmem:[#allocation7 + $0x60] sm:$0xff]
    %v7726 = vld [vmem:[#allocation7 + $0x68] sm:$0xff]
    %v7727 = vld [vmem:[#allocation7 + $0x70] sm:$0xff]
    %v7728 = vld [vmem:[#allocation7 + $0x78] sm:$0xff]
    %s7729 = scalar_lea.vmem %s3, 896
    %v7730 = vld [vmem:[%s7729] sm:$0xf]
    %v7731 = vld [vmem:[%s7729 + $0x4] sm:$0xf]
    %v7732 = vld [vmem:[%s7729 + $0x8] sm:$0xf]
    %v7733 = vld [vmem:[%s7729 + $0xc] sm:$0xf]
    %v7734 = vld [vmem:[%s7729 + $0x10] sm:$0xf]
    %v7735 = vld [vmem:[%s7729 + $0x14] sm:$0xf]
    %v7736 = vld [vmem:[%s7729 + $0x18] sm:$0xf]
    %v7737 = vld [vmem:[%s7729 + $0x1c] sm:$0xf]
    %v7738 = vld [vmem:[%s7729 + $0x20] sm:$0xf]
    %v7739 = vld [vmem:[%s7729 + $0x24] sm:$0xf]
    %v7740 = vld [vmem:[%s7729 + $0x28] sm:$0xf]
    %v7741 = vld [vmem:[%s7729 + $0x2c] sm:$0xf]
    %v7742 = vld [vmem:[%s7729 + $0x30] sm:$0xf]
    %v7743 = vld [vmem:[%s7729 + $0x34] sm:$0xf]
    %v7744 = vld [vmem:[%s7729 + $0x38] sm:$0xf]
    %v7745 = vld [vmem:[%s7729 + $0x3c] sm:$0xf]
    %v7746 = vld [vmem:[%s7729 + $0x40] sm:$0xf]
    %v7747 = vld [vmem:[%s7729 + $0x44] sm:$0xf]
    %v7748 = vld [vmem:[%s7729 + $0x48] sm:$0xf]
    %v7749 = vld [vmem:[%s7729 + $0x4c] sm:$0xf]
    %v7750 = vld [vmem:[%s7729 + $0x50] sm:$0xf]
    %v7751 = vld [vmem:[%s7729 + $0x54] sm:$0xf]
    %v7752 = vld [vmem:[%s7729 + $0x58] sm:$0xf]
    %v7753 = vld [vmem:[%s7729 + $0x5c] sm:$0xf]
    %v7754 = vld [vmem:[%s7729 + $0x60] sm:$0xf]
    %v7755 = vld [vmem:[%s7729 + $0x64] sm:$0xf]
    %v7756 = vld [vmem:[%s7729 + $0x68] sm:$0xf]
    %v7757 = vld [vmem:[%s7729 + $0x6c] sm:$0xf]
    %v7758 = vld [vmem:[%s7729 + $0x70] sm:$0xf]
    %v7759 = vld [vmem:[%s7729 + $0x74] sm:$0xf]
    %v7760 = vld [vmem:[%s7729 + $0x78] sm:$0xf]
    %v7761 = vld [vmem:[%s7729 + $0x7c] sm:$0xf]
    %v7794 = vunpack.c.l.b16 %v7730
    %v7795 = vunpack.c.l.b16 %v7731
    %v7796 = vunpack.c.l.b16 %v7732
    %v7797 = vunpack.c.l.b16 %v7733
    %v7798 = vunpack.c.l.b16 %v7734
    %v7799 = vunpack.c.l.b16 %v7735
    %v7800 = vunpack.c.l.b16 %v7736
    %v7801 = vunpack.c.l.b16 %v7737
    %v7802 = vunpack.c.l.b16 %v7738
    %v7803 = vunpack.c.l.b16 %v7739
    %v7804 = vunpack.c.l.b16 %v7740
    %v7805 = vunpack.c.l.b16 %v7741
    %v7806 = vunpack.c.l.b16 %v7742
    %v7807 = vunpack.c.l.b16 %v7743
    %v7808 = vunpack.c.l.b16 %v7744
    %v7809 = vunpack.c.l.b16 %v7745
    %v7810 = vunpack.c.l.b16 %v7746
    %v7811 = vunpack.c.l.b16 %v7747
    %v7812 = vunpack.c.l.b16 %v7748
    %v7813 = vunpack.c.l.b16 %v7749
    %v7814 = vunpack.c.l.b16 %v7750
    %v7815 = vunpack.c.l.b16 %v7751
    %v7816 = vunpack.c.l.b16 %v7752
    %v7817 = vunpack.c.l.b16 %v7753
    %v7818 = vunpack.c.l.b16 %v7754
    %v7819 = vunpack.c.l.b16 %v7755
    %v7820 = vunpack.c.l.b16 %v7756
    %v7821 = vunpack.c.l.b16 %v7757
    %v7822 = vunpack.c.l.b16 %v7758
    %v7823 = vunpack.c.l.b16 %v7759
    %v7824 = vunpack.c.l.b16 %v7760
    %v7825 = vunpack.c.l.b16 %v7761
    %v7826 = vpack.c.b16 %v7795, %v7794
    %v7827 = vpack.c.b16 %v7797, %v7796
    %v7828 = vpack.c.b16 %v7799, %v7798
    %v7829 = vpack.c.b16 %v7801, %v7800
    %v7830 = vpack.c.b16 %v7803, %v7802
    %v7831 = vpack.c.b16 %v7805, %v7804
    %v7832 = vpack.c.b16 %v7807, %v7806
    %v7833 = vpack.c.b16 %v7809, %v7808
    %v7834 = vpack.c.b16 %v7811, %v7810
    %v7835 = vpack.c.b16 %v7813, %v7812
    %v7836 = vpack.c.b16 %v7815, %v7814
    %v7837 = vpack.c.b16 %v7817, %v7816
    %v7838 = vpack.c.b16 %v7819, %v7818
    %v7839 = vpack.c.b16 %v7821, %v7820
    %v7840 = vpack.c.b16 %v7823, %v7822
    %v7841 = vpack.c.b16 %v7825, %v7824
    %7858 = vmatprep.subr.bf16.mxu0 0
    %7859 = vmatpush1.bf16.msra.mxu0 %v7826
    %7860 = vmatprep.subr.bf16.mxu0 0
    %7861 = vmatpush1.bf16.msra.mxu0 %v7827
    %7862 = vmatprep.subr.bf16.mxu0 0
    %7863 = vmatpush1.bf16.msra.mxu0 %v7828
    %7864 = vmatprep.subr.bf16.mxu0 0
    %7865 = vmatpush1.bf16.msra.mxu0 %v7829
    %7866 = vmatprep.subr.bf16.mxu0 0
    %7867 = vmatpush1.bf16.msra.mxu0 %v7830
    %7868 = vmatprep.subr.bf16.mxu0 0
    %7869 = vmatpush1.bf16.msra.mxu0 %v7831
    %7870 = vmatprep.subr.bf16.mxu0 0
    %7871 = vmatpush1.bf16.msra.mxu0 %v7832
    %7872 = vmatprep.subr.bf16.mxu0 0
    %7873 = vmatpush1.bf16.msra.mxu0 %v7833
    %7874 = vmatprep.subr.bf16.mxu0 0
    %7875 = vmatpush1.bf16.msra.mxu0 %v7834
    %7876 = vmatprep.subr.bf16.mxu0 0
    %7877 = vmatpush1.bf16.msra.mxu0 %v7835
    %7878 = vmatprep.subr.bf16.mxu0 0
    %7879 = vmatpush1.bf16.msra.mxu0 %v7836
    %7880 = vmatprep.subr.bf16.mxu0 0
    %7881 = vmatpush1.bf16.msra.mxu0 %v7837
    %7882 = vmatprep.subr.bf16.mxu0 0
    %7883 = vmatpush1.bf16.msra.mxu0 %v7838
    %7884 = vmatprep.subr.bf16.mxu0 0
    %7885 = vmatpush1.bf16.msra.mxu0 %v7839
    %7886 = vmatprep.subr.bf16.mxu0 0
    %7887 = vmatpush1.bf16.msra.mxu0 %v7840
    %7888 = vmatprep.subr.bf16.mxu0 0
    %7889 = vmatpush1.bf16.msra.mxu0 %v7841
    %7890 = vmatprep.mubr.bf16.mxu0 %v7698
    %7891 = vmatmul.mubr.bf16.gmra.mrb[0].mxu0 %v7697
    %v7892 = vpop.f32.mrb[0].mxu0
    %v7893 = vadd.f32 0.0, %v7892
    %v7894 = vpop.f32.mrb[0].mxu0
    %v7895 = vpop.f32.mrb[0].mxu0
    %v7896 = vadd.f32 0.0, %v7895
    %v7897 = vpop.f32.mrb[0].mxu0
    %7898 = vmatprep.mubr.bf16.mxu0 %v7700
    %7899 = vmatmul.mubr.bf16.gmra.mrb[0].mxu0 %v7699
    %v7900 = vpop.f32.mrb[0].mxu0
    %v7901 = vadd.f32 0.0, %v7900
    %v7902 = vpop.f32.mrb[0].mxu0
    %v7903 = vpop.f32.mrb[0].mxu0
    %v7904 = vadd.f32 0.0, %v7903
    %v7905 = vpop.f32.mrb[0].mxu0
    %7906 = vmatprep.mubr.bf16.mxu0 %v7702
    %7907 = vmatmul.mubr.bf16.gmra.mrb[0].mxu0 %v7701
    %v7908 = vpop.f32.mrb[0].mxu0
    %v7909 = vadd.f32 0.0, %v7908
    %v7910 = vpop.f32.mrb[0].mxu0
    %v7911 = vpop.f32.mrb[0].mxu0
    %v7912 = vadd.f32 0.0, %v7911
    %v7913 = vpop.f32.mrb[0].mxu0
    %7914 = vmatprep.mubr.bf16.mxu0 %v7704
    %7915 = vmatmul.mubr.bf16.gmra.mrb[0].mxu0 %v7703
    %v7916 = vpop.f32.mrb[0].mxu0
    %v7917 = vadd.f32 0.0, %v7916
    %v7918 = vpop.f32.mrb[0].mxu0
    %v7919 = vpop.f32.mrb[0].mxu0
    %v7920 = vadd.f32 0.0, %v7919
    %v7921 = vpop.f32.mrb[0].mxu0
    %7922 = vmatprep.mubr.bf16.mxu0 %v7706
    %7923 = vmatmul.mubr.bf16.gmra.mrb[0].mxu0 %v7705
    %v7924 = vpop.f32.mrb[0].mxu0
    %v7925 = vadd.f32 0.0, %v7924
    %v7926 = vpop.f32.mrb[0].mxu0
    %v7927 = vpop.f32.mrb[0].mxu0
    %v7928 = vadd.f32 0.0, %v7927
    %v7929 = vpop.f32.mrb[0].mxu0
    %7930 = vmatprep.mubr.bf16.mxu0 %v7708
    %7931 = vmatmul.mubr.bf16.gmra.mrb[0].mxu0 %v7707
    %v7932 = vpop.f32.mrb[0].mxu0
    %v7933 = vadd.f32 0.0, %v7932
    %v7934 = vpop.f32.mrb[0].mxu0
    %v7935 = vpop.f32.mrb[0].mxu0
    %v7936 = vadd.f32 0.0, %v7935
    %v7937 = vpop.f32.mrb[0].mxu0
    %7938 = vmatprep.mubr.bf16.mxu0 %v7710
    %7939 = vmatmul.mubr.bf16.gmra.mrb[0].mxu0 %v7709
    %v7940 = vpop.f32.mrb[0].mxu0
    %v7941 = vadd.f32 0.0, %v7940
    %v7942 = vpop.f32.mrb[0].mxu0
    %v7943 = vpop.f32.mrb[0].mxu0
    %v7944 = vadd.f32 0.0, %v7943
    %v7945 = vpop.f32.mrb[0].mxu0
    %7946 = vmatprep.mubr.bf16.mxu0 %v7712
    %7947 = vmatmul.mubr.bf16.gmra.mrb[0].mxu0 %v7711
    %v7948 = vpop.f32.mrb[0].mxu0
    %v7949 = vadd.f32 0.0, %v7948
    %v7950 = vpop.f32.mrb[0].mxu0
    %v7951 = vpop.f32.mrb[0].mxu0
    %v7952 = vadd.f32 0.0, %v7951
    %v7953 = vpop.f32.mrb[0].mxu0
    %7954 = vdwg.mxu0
    %v7955 = vadd.f32 %v7713, %v7893
    %v7956 = vadd.f32 %v7714, %v7896
    %v7957 = vadd.f32 %v7715, %v7901
    %v7958 = vadd.f32 %v7716, %v7904
    %v7959 = vadd.f32 %v7717, %v7909
    %v7960 = vadd.f32 %v7718, %v7912
    %v7961 = vadd.f32 %v7719, %v7917
    %v7962 = vadd.f32 %v7720, %v7920
    %v7963 = vadd.f32 %v7721, %v7925
    %v7964 = vadd.f32 %v7722, %v7928
    %v7965 = vadd.f32 %v7723, %v7933
    %v7966 = vadd.f32 %v7724, %v7936
    %v7967 = vadd.f32 %v7725, %v7941
    %v7968 = vadd.f32 %v7726, %v7944
    %v7969 = vadd.f32 %v7727, %v7949
    %v7970 = vadd.f32 %v7728, %v7952
    %7971 = vst.msk [vmem:[#allocation7] sm:$0xff] %vm5597, %v7955
    %7972 = vst.msk [vmem:[#allocation7 + $0x8] sm:$0xff] %vm5597, %v7956
    %7973 = vst.msk [vmem:[#allocation7 + $0x10] sm:$0xff] %vm5597, %v7957
    %7974 = vst.msk [vmem:[#allocation7 + $0x18] sm:$0xff] %vm5597, %v7958
    %7975 = vst.msk [vmem:[#allocation7 + $0x20] sm:$0xff] %vm5597, %v7959
    %7976 = vst.msk [vmem:[#allocation7 + $0x28] sm:$0xff] %vm5597, %v7960
    %7977 = vst.msk [vmem:[#allocation7 + $0x30] sm:$0xff] %vm5597, %v7961
    %7978 = vst.msk [vmem:[#allocation7 + $0x38] sm:$0xff] %vm5597, %v7962
    %7979 = vst.msk [vmem:[#allocation7 + $0x40] sm:$0xff] %vm5597, %v7963
    %7980 = vst.msk [vmem:[#allocation7 + $0x48] sm:$0xff] %vm5597, %v7964
    %7981 = vst.msk [vmem:[#allocation7 + $0x50] sm:$0xff] %vm5597, %v7965
    %7982 = vst.msk [vmem:[#allocation7 + $0x58] sm:$0xff] %vm5597, %v7966
    %7983 = vst.msk [vmem:[#allocation7 + $0x60] sm:$0xff] %vm5597, %v7967
    %7984 = vst.msk [vmem:[#allocation7 + $0x68] sm:$0xff] %vm5597, %v7968
    %7985 = vst.msk [vmem:[#allocation7 + $0x70] sm:$0xff] %vm5597, %v7969
    %7986 = vst.msk [vmem:[#allocation7 + $0x78] sm:$0xff] %vm5597, %v7970
    %v7987 = vld [vmem:[#allocation3] sm:$0xfc]
    %v7988 = vld [vmem:[#allocation3 + $0x8] sm:$0xfc]
    %v7989 = vld [vmem:[#allocation3 + $0x10] sm:$0x3]
    %v7990 = vld [vmem:[#allocation3 + $0x18] sm:$0x3]
    %v7991 = vld [vmem:[#allocation3 + $0x20] sm:$0xfc]
    %v7992 = vld [vmem:[#allocation3 + $0x28] sm:$0xfc]
    %v7993 = vld [vmem:[#allocation3 + $0x30] sm:$0x3]
    %v7994 = vld [vmem:[#allocation3 + $0x38] sm:$0x3]
    %v7995 = vld [vmem:[#allocation3 + $0x40] sm:$0xfc]
    %v7996 = vld [vmem:[#allocation3 + $0x48] sm:$0xfc]
    %v7997 = vld [vmem:[#allocation3 + $0x50] sm:$0x3]
    %v7998 = vld [vmem:[#allocation3 + $0x58] sm:$0x3]
    %v7999 = vld [vmem:[#allocation3 + $0x60] sm:$0xfc]
    %v8000 = vld [vmem:[#allocation3 + $0x68] sm:$0xfc]
    %v8001 = vld [vmem:[#allocation3 + $0x70] sm:$0x3]
    %v8002 = vld [vmem:[#allocation3 + $0x78] sm:$0x3]
    %v8003 = vld [vmem:[#allocation3 + $0x80] sm:$0xfc]
    %v8004 = vld [vmem:[#allocation3 + $0x88] sm:$0xfc]
    %v8005 = vld [vmem:[#allocation3 + $0x90] sm:$0x3]
    %v8006 = vld [vmem:[#allocation3 + $0x98] sm:$0x3]
    %v8007 = vld [vmem:[#allocation3 + $0xa0] sm:$0xfc]
    %v8008 = vld [vmem:[#allocation3 + $0xa8] sm:$0xfc]
    %v8009 = vld [vmem:[#allocation3 + $0xb0] sm:$0x3]
    %v8010 = vld [vmem:[#allocation3 + $0xb8] sm:$0x3]
    %v8011 = vld [vmem:[#allocation3 + $0xc0] sm:$0xfc]
    %v8012 = vld [vmem:[#allocation3 + $0xc8] sm:$0xfc]
    %v8013 = vld [vmem:[#allocation3 + $0xd0] sm:$0x3]
    %v8014 = vld [vmem:[#allocation3 + $0xd8] sm:$0x3]
    %v8015 = vld [vmem:[#allocation3 + $0xe0] sm:$0xfc]
    %v8016 = vld [vmem:[#allocation3 + $0xe8] sm:$0xfc]
    %v8017 = vld [vmem:[#allocation3 + $0xf0] sm:$0x3]
    %v8018 = vld [vmem:[#allocation3 + $0xf8] sm:$0x3]
    %v8019 = vld [vmem:[#allocation3 + $0x100] sm:$0xfc]
    %v8020 = vld [vmem:[#allocation3 + $0x108] sm:$0xfc]
    %v8021 = vld [vmem:[#allocation3 + $0x110] sm:$0x3]
    %v8022 = vld [vmem:[#allocation3 + $0x118] sm:$0x3]
    %v8023 = vld [vmem:[#allocation3 + $0x120] sm:$0xfc]
    %v8024 = vld [vmem:[#allocation3 + $0x128] sm:$0xfc]
    %v8025 = vld [vmem:[#allocation3 + $0x130] sm:$0x3]
    %v8026 = vld [vmem:[#allocation3 + $0x138] sm:$0x3]
    %v8027 = vld [vmem:[#allocation3 + $0x140] sm:$0xfc]
    %v8028 = vld [vmem:[#allocation3 + $0x148] sm:$0xfc]
    %v8029 = vld [vmem:[#allocation3 + $0x150] sm:$0x3]
    %v8030 = vld [vmem:[#allocation3 + $0x158] sm:$0x3]
    %v8031 = vld [vmem:[#allocation3 + $0x160] sm:$0xfc]
    %v8032 = vld [vmem:[#allocation3 + $0x168] sm:$0xfc]
    %v8033 = vld [vmem:[#allocation3 + $0x170] sm:$0x3]
    %v8034 = vld [vmem:[#allocation3 + $0x178] sm:$0x3]
    %v8035 = vld [vmem:[#allocation3 + $0x180] sm:$0xfc]
    %v8036 = vld [vmem:[#allocation3 + $0x188] sm:$0xfc]
    %v8037 = vld [vmem:[#allocation3 + $0x190] sm:$0x3]
    %v8038 = vld [vmem:[#allocation3 + $0x198] sm:$0x3]
    %v8039 = vld [vmem:[#allocation3 + $0x1a0] sm:$0xfc]
    %v8040 = vld [vmem:[#allocation3 + $0x1a8] sm:$0xfc]
    %v8041 = vld [vmem:[#allocation3 + $0x1b0] sm:$0x3]
    %v8042 = vld [vmem:[#allocation3 + $0x1b8] sm:$0x3]
    %v8043 = vld [vmem:[#allocation3 + $0x1c0] sm:$0xfc]
    %v8044 = vld [vmem:[#allocation3 + $0x1c8] sm:$0xfc]
    %v8045 = vld [vmem:[#allocation3 + $0x1d0] sm:$0x3]
    %v8046 = vld [vmem:[#allocation3 + $0x1d8] sm:$0x3]
    %v8047 = vld [vmem:[#allocation3 + $0x1e0] sm:$0xfc]
    %v8048 = vld [vmem:[#allocation3 + $0x1e8] sm:$0xfc]
    %v8049 = vld [vmem:[#allocation3 + $0x1f0] sm:$0x3]
    %v8050 = vld [vmem:[#allocation3 + $0x1f8] sm:$0x3]
    %v8051 = vld [vmem:[#allocation3 + $0x200] sm:$0xfc]
    %v8052 = vld [vmem:[#allocation3 + $0x208] sm:$0xfc]
    %v8053 = vld [vmem:[#allocation3 + $0x210] sm:$0x3]
    %v8054 = vld [vmem:[#allocation3 + $0x218] sm:$0x3]
    %v8055 = vld [vmem:[#allocation3 + $0x220] sm:$0xfc]
    %v8056 = vld [vmem:[#allocation3 + $0x228] sm:$0xfc]
    %v8057 = vld [vmem:[#allocation3 + $0x230] sm:$0x3]
    %v8058 = vld [vmem:[#allocation3 + $0x238] sm:$0x3]
    %v8059 = vld [vmem:[#allocation3 + $0x240] sm:$0xfc]
    %v8060 = vld [vmem:[#allocation3 + $0x248] sm:$0xfc]
    %v8061 = vld [vmem:[#allocation3 + $0x250] sm:$0x3]
    %v8062 = vld [vmem:[#allocation3 + $0x258] sm:$0x3]
    %v8063 = vld [vmem:[#allocation3 + $0x260] sm:$0xfc]
    %v8064 = vld [vmem:[#allocation3 + $0x268] sm:$0xfc]
    %v8065 = vld [vmem:[#allocation3 + $0x270] sm:$0x3]
    %v8066 = vld [vmem:[#allocation3 + $0x278] sm:$0x3]
    %v8147 = vrot.slane %v7987, 2
    %v8148 = vrot.slane %v7989, 2
    %v8149 = vsel %vm3778, %v8147, %v8148
    %v8150 = vrot.slane %v7988, 2
    %v8151 = vrot.slane %v7990, 2
    %v8152 = vsel %vm3778, %v8150, %v8151
    %v8153 = vrot.slane %v7991, 2
    %v8154 = vrot.slane %v7993, 2
    %v8155 = vsel %vm3778, %v8153, %v8154
    %v8156 = vrot.slane %v7992, 2
    %v8157 = vrot.slane %v7994, 2
    %v8158 = vsel %vm3778, %v8156, %v8157
    %v8159 = vrot.slane %v7995, 2
    %v8160 = vrot.slane %v7997, 2
    %v8161 = vsel %vm3778, %v8159, %v8160
    %v8162 = vrot.slane %v7996, 2
    %v8163 = vrot.slane %v7998, 2
    %v8164 = vsel %vm3778, %v8162, %v8163
    %v8165 = vrot.slane %v7999, 2
    %v8166 = vrot.slane %v8001, 2
    %v8167 = vsel %vm3778, %v8165, %v8166
    %v8168 = vrot.slane %v8000, 2
    %v8169 = vrot.slane %v8002, 2
    %v8170 = vsel %vm3778, %v8168, %v8169
    %v8171 = vrot.slane %v8003, 2
    %v8172 = vrot.slane %v8005, 2
    %v8173 = vsel %vm3778, %v8171, %v8172
    %v8174 = vrot.slane %v8004, 2
    %v8175 = vrot.slane %v8006, 2
    %v8176 = vsel %vm3778, %v8174, %v8175
    %v8177 = vrot.slane %v8007, 2
    %v8178 = vrot.slane %v8009, 2
    %v8179 = vsel %vm3778, %v8177, %v8178
    %v8180 = vrot.slane %v8008, 2
    %v8181 = vrot.slane %v8010, 2
    %v8182 = vsel %vm3778, %v8180, %v8181
    %v8183 = vrot.slane %v8011, 2
    %v8184 = vrot.slane %v8013, 2
    %v8185 = vsel %vm3778, %v8183, %v8184
    %v8186 = vrot.slane %v8012, 2
    %v8187 = vrot.slane %v8014, 2
    %v8188 = vsel %vm3778, %v8186, %v8187
    %v8189 = vrot.slane %v8015, 2
    %v8190 = vrot.slane %v8017, 2
    %v8191 = vsel %vm3778, %v8189, %v8190
    %v8192 = vrot.slane %v8016, 2
    %v8193 = vrot.slane %v8018, 2
    %v8194 = vsel %vm3778, %v8192, %v8193
    %v8195 = vrot.slane %v8019, 2
    %v8196 = vrot.slane %v8021, 2
    %v8197 = vsel %vm3778, %v8195, %v8196
    %v8198 = vrot.slane %v8020, 2
    %v8199 = vrot.slane %v8022, 2
    %v8200 = vsel %vm3778, %v8198, %v8199
    %v8201 = vrot.slane %v8023, 2
    %v8202 = vrot.slane %v8025, 2
    %v8203 = vsel %vm3778, %v8201, %v8202
    %v8204 = vrot.slane %v8024, 2
    %v8205 = vrot.slane %v8026, 2
    %v8206 = vsel %vm3778, %v8204, %v8205
    %v8207 = vrot.slane %v8027, 2
    %v8208 = vrot.slane %v8029, 2
    %v8209 = vsel %vm3778, %v8207, %v8208
    %v8210 = vrot.slane %v8028, 2
    %v8211 = vrot.slane %v8030, 2
    %v8212 = vsel %vm3778, %v8210, %v8211
    %v8213 = vrot.slane %v8031, 2
    %v8214 = vrot.slane %v8033, 2
    %v8215 = vsel %vm3778, %v8213, %v8214
    %v8216 = vrot.slane %v8032, 2
    %v8217 = vrot.slane %v8034, 2
    %v8218 = vsel %vm3778, %v8216, %v8217
    %v8219 = vrot.slane %v8035, 2
    %v8220 = vrot.slane %v8037, 2
    %v8221 = vsel %vm3778, %v8219, %v8220
    %v8222 = vrot.slane %v8036, 2
    %v8223 = vrot.slane %v8038, 2
    %v8224 = vsel %vm3778, %v8222, %v8223
    %v8225 = vrot.slane %v8039, 2
    %v8226 = vrot.slane %v8041, 2
    %v8227 = vsel %vm3778, %v8225, %v8226
    %v8228 = vrot.slane %v8040, 2
    %v8229 = vrot.slane %v8042, 2
    %v8230 = vsel %vm3778, %v8228, %v8229
    %v8231 = vrot.slane %v8043, 2
    %v8232 = vrot.slane %v8045, 2
    %v8233 = vsel %vm3778, %v8231, %v8232
    %v8234 = vrot.slane %v8044, 2
    %v8235 = vrot.slane %v8046, 2
    %v8236 = vsel %vm3778, %v8234, %v8235
    %v8237 = vrot.slane %v8047, 2
    %v8238 = vrot.slane %v8049, 2
    %v8239 = vsel %vm3778, %v8237, %v8238
    %v8240 = vrot.slane %v8048, 2
    %v8241 = vrot.slane %v8050, 2
    %v8242 = vsel %vm3778, %v8240, %v8241
    %v8243 = vrot.slane %v8051, 2
    %v8244 = vrot.slane %v8053, 2
    %v8245 = vsel %vm3778, %v8243, %v8244
    %v8246 = vrot.slane %v8052, 2
    %v8247 = vrot.slane %v8054, 2
    %v8248 = vsel %vm3778, %v8246, %v8247
    %v8249 = vrot.slane %v8055, 2
    %v8250 = vrot.slane %v8057, 2
    %v8251 = vsel %vm3778, %v8249, %v8250
    %v8252 = vrot.slane %v8056, 2
    %v8253 = vrot.slane %v8058, 2
    %v8254 = vsel %vm3778, %v8252, %v8253
    %v8255 = vrot.slane %v8059, 2
    %v8256 = vrot.slane %v8061, 2
    %v8257 = vsel %vm3778, %v8255, %v8256
    %v8258 = vrot.slane %v8060, 2
    %v8259 = vrot.slane %v8062, 2
    %v8260 = vsel %vm3778, %v8258, %v8259
    %v8261 = vrot.slane %v8063, 2
    %v8262 = vrot.slane %v8065, 2
    %v8263 = vsel %vm3778, %v8261, %v8262
    %v8264 = vrot.slane %v8064, 2
    %v8265 = vrot.slane %v8066, 2
    %v8266 = vsel %vm3778, %v8264, %v8265
    %8307 = vst [vmem:[#allocation5] sm:$0xff] %v8149
    %8308 = vst [vmem:[#allocation5 + $0x8] sm:$0xff] %v8152
    %8309 = vst [vmem:[#allocation5 + $0x10] sm:$0xff] %v8155
    %8310 = vst [vmem:[#allocation5 + $0x18] sm:$0xff] %v8158
    %8311 = vst [vmem:[#allocation5 + $0x20] sm:$0xff] %v8161
    %8312 = vst [vmem:[#allocation5 + $0x28] sm:$0xff] %v8164
    %8313 = vst [vmem:[#allocation5 + $0x30] sm:$0xff] %v8167
    %8314 = vst [vmem:[#allocation5 + $0x38] sm:$0xff] %v8170
    %8315 = vst [vmem:[#allocation5 + $0x40] sm:$0xff] %v8173
    %8316 = vst [vmem:[#allocation5 + $0x48] sm:$0xff] %v8176
    %8317 = vst [vmem:[#allocation5 + $0x50] sm:$0xff] %v8179
    %8318 = vst [vmem:[#allocation5 + $0x58] sm:$0xff] %v8182
    %8319 = vst [vmem:[#allocation5 + $0x60] sm:$0xff] %v8185
    %8320 = vst [vmem:[#allocation5 + $0x68] sm:$0xff] %v8188
    %8321 = vst [vmem:[#allocation5 + $0x70] sm:$0xff] %v8191
    %8322 = vst [vmem:[#allocation5 + $0x78] sm:$0xff] %v8194
    %8323 = vst [vmem:[#allocation5 + $0x80] sm:$0xff] %v8197
    %8324 = vst [vmem:[#allocation5 + $0x88] sm:$0xff] %v8200
    %8325 = vst [vmem:[#allocation5 + $0x90] sm:$0xff] %v8203
    %8326 = vst [vmem:[#allocation5 + $0x98] sm:$0xff] %v8206
    %8327 = vst [vmem:[#allocation5 + $0xa0] sm:$0xff] %v8209
    %8328 = vst [vmem:[#allocation5 + $0xa8] sm:$0xff] %v8212
    %8329 = vst [vmem:[#allocation5 + $0xb0] sm:$0xff] %v8215
    %8330 = vst [vmem:[#allocation5 + $0xb8] sm:$0xff] %v8218
    %8331 = vst [vmem:[#allocation5 + $0xc0] sm:$0xff] %v8221
    %8332 = vst [vmem:[#allocation5 + $0xc8] sm:$0xff] %v8224
    %8333 = vst [vmem:[#allocation5 + $0xd0] sm:$0xff] %v8227
    %8334 = vst [vmem:[#allocation5 + $0xd8] sm:$0xff] %v8230
    %8335 = vst [vmem:[#allocation5 + $0xe0] sm:$0xff] %v8233
    %8336 = vst [vmem:[#allocation5 + $0xe8] sm:$0xff] %v8236
    %8337 = vst [vmem:[#allocation5 + $0xf0] sm:$0xff] %v8239
    %8338 = vst [vmem:[#allocation5 + $0xf8] sm:$0xff] %v8242
    %8339 = vst [vmem:[#allocation5 + $0x100] sm:$0xff] %v8245
    %8340 = vst [vmem:[#allocation5 + $0x108] sm:$0xff] %v8248
    %8341 = vst [vmem:[#allocation5 + $0x110] sm:$0xff] %v8251
    %8342 = vst [vmem:[#allocation5 + $0x118] sm:$0xff] %v8254
    %8343 = vst [vmem:[#allocation5 + $0x120] sm:$0xff] %v8257
    %8344 = vst [vmem:[#allocation5 + $0x128] sm:$0xff] %v8260
    %8345 = vst [vmem:[#allocation5 + $0x130] sm:$0xff] %v8263
    %8346 = vst [vmem:[#allocation5 + $0x138] sm:$0xff] %v8266
    %v8347 = vld [vmem:[#allocation5] sm:$0xff]
    %v8348 = vld [vmem:[#allocation5 + $0x8] sm:$0xff]
    %v8349 = vld [vmem:[#allocation5 + $0x10] sm:$0xff]
    %v8350 = vld [vmem:[#allocation5 + $0x18] sm:$0xff]
    %v8351 = vld [vmem:[#allocation5 + $0x20] sm:$0xff]
    %v8352 = vld [vmem:[#allocation5 + $0x28] sm:$0xff]
    %v8353 = vld [vmem:[#allocation5 + $0x30] sm:$0xff]
    %v8354 = vld [vmem:[#allocation5 + $0x38] sm:$0xff]
    %v8355 = vld [vmem:[#allocation5 + $0x40] sm:$0xff]
    %v8356 = vld [vmem:[#allocation5 + $0x48] sm:$0xff]
    %v8357 = vld [vmem:[#allocation5 + $0x50] sm:$0xff]
    %v8358 = vld [vmem:[#allocation5 + $0x58] sm:$0xff]
    %v8359 = vld [vmem:[#allocation5 + $0x60] sm:$0xff]
    %v8360 = vld [vmem:[#allocation5 + $0x68] sm:$0xff]
    %v8361 = vld [vmem:[#allocation5 + $0x70] sm:$0xff]
    %v8362 = vld [vmem:[#allocation5 + $0x78] sm:$0xff]
    %v8363 = vld [vmem:[#allocation5 + $0xa0] sm:$0xff]
    %v8364 = vld [vmem:[#allocation5 + $0xa8] sm:$0xff]
    %v8365 = vld [vmem:[#allocation5 + $0xb0] sm:$0xff]
    %v8366 = vld [vmem:[#allocation5 + $0xb8] sm:$0xff]
    %v8367 = vld [vmem:[#allocation5 + $0xc0] sm:$0xff]
    %v8368 = vld [vmem:[#allocation5 + $0xc8] sm:$0xff]
    %v8369 = vld [vmem:[#allocation5 + $0xd0] sm:$0xff]
    %v8370 = vld [vmem:[#allocation5 + $0xd8] sm:$0xff]
    %v8371 = vld [vmem:[#allocation5 + $0xe0] sm:$0xff]
    %v8372 = vld [vmem:[#allocation5 + $0xe8] sm:$0xff]
    %v8373 = vld [vmem:[#allocation5 + $0xf0] sm:$0xff]
    %v8374 = vld [vmem:[#allocation5 + $0xf8] sm:$0xff]
    %v8375 = vld [vmem:[#allocation5 + $0x100] sm:$0xff]
    %v8376 = vld [vmem:[#allocation5 + $0x108] sm:$0xff]
    %v8377 = vld [vmem:[#allocation5 + $0x110] sm:$0xff]
    %v8378 = vld [vmem:[#allocation5 + $0x118] sm:$0xff]
    %v8379 = vpack.c.bf16 %v8349, %v8347
    %v8380 = vpack.c.bf16 %v8350, %v8348
    %v8381 = vpack.c.bf16 %v8353, %v8351
    %v8382 = vpack.c.bf16 %v8354, %v8352
    %v8383 = vpack.c.bf16 %v8357, %v8355
    %v8384 = vpack.c.bf16 %v8358, %v8356
    %v8385 = vpack.c.bf16 %v8361, %v8359
    %v8386 = vpack.c.bf16 %v8362, %v8360
    %v8387 = vpack.c.bf16 %v8365, %v8363
    %v8388 = vpack.c.bf16 %v8366, %v8364
    %v8389 = vpack.c.bf16 %v8369, %v8367
    %v8390 = vpack.c.bf16 %v8370, %v8368
    %v8391 = vpack.c.bf16 %v8373, %v8371
    %v8392 = vpack.c.bf16 %v8374, %v8372
    %v8393 = vpack.c.bf16 %v8377, %v8375
    %v8394 = vpack.c.bf16 %v8378, %v8376
    %v8395 = vld [vmem:[#allocation7] sm:$0xff]
    %v8396 = vld [vmem:[#allocation7 + $0x8] sm:$0xff]
    %v8397 = vld [vmem:[#allocation7 + $0x10] sm:$0xff]
    %v8398 = vld [vmem:[#allocation7 + $0x18] sm:$0xff]
    %v8399 = vld [vmem:[#allocation7 + $0x20] sm:$0xff]
    %v8400 = vld [vmem:[#allocation7 + $0x28] sm:$0xff]
    %v8401 = vld [vmem:[#allocation7 + $0x30] sm:$0xff]
    %v8402 = vld [vmem:[#allocation7 + $0x38] sm:$0xff]
    %v8403 = vld [vmem:[#allocation7 + $0x40] sm:$0xff]
    %v8404 = vld [vmem:[#allocation7 + $0x48] sm:$0xff]
    %v8405 = vld [vmem:[#allocation7 + $0x50] sm:$0xff]
    %v8406 = vld [vmem:[#allocation7 + $0x58] sm:$0xff]
    %v8407 = vld [vmem:[#allocation7 + $0x60] sm:$0xff]
    %v8408 = vld [vmem:[#allocation7 + $0x68] sm:$0xff]
    %v8409 = vld [vmem:[#allocation7 + $0x70] sm:$0xff]
    %v8410 = vld [vmem:[#allocation7 + $0x78] sm:$0xff]
    %s8411 = scalar_lea.vmem %s3, 256
    %v8412 = vld [vmem:[%s8411] sm:$0xf]
    %v8413 = vld [vmem:[%s8411 + $0x4] sm:$0xf]
    %v8414 = vld [vmem:[%s8411 + $0x8] sm:$0xf]
    %v8415 = vld [vmem:[%s8411 + $0xc] sm:$0xf]
    %v8416 = vld [vmem:[%s8411 + $0x10] sm:$0xf]
    %v8417 = vld [vmem:[%s8411 + $0x14] sm:$0xf]
    %v8418 = vld [vmem:[%s8411 + $0x18] sm:$0xf]
    %v8419 = vld [vmem:[%s8411 + $0x1c] sm:$0xf]
    %v8420 = vld [vmem:[%s8411 + $0x20] sm:$0xf]
    %v8421 = vld [vmem:[%s8411 + $0x24] sm:$0xf]
    %v8422 = vld [vmem:[%s8411 + $0x28] sm:$0xf]
    %v8423 = vld [vmem:[%s8411 + $0x2c] sm:$0xf]
    %v8424 = vld [vmem:[%s8411 + $0x30] sm:$0xf]
    %v8425 = vld [vmem:[%s8411 + $0x34] sm:$0xf]
    %v8426 = vld [vmem:[%s8411 + $0x38] sm:$0xf]
    %v8427 = vld [vmem:[%s8411 + $0x3c] sm:$0xf]
    %v8428 = vld [vmem:[%s8411 + $0x40] sm:$0xf]
    %v8429 = vld [vmem:[%s8411 + $0x44] sm:$0xf]
    %v8430 = vld [vmem:[%s8411 + $0x48] sm:$0xf]
    %v8431 = vld [vmem:[%s8411 + $0x4c] sm:$0xf]
    %v8432 = vld [vmem:[%s8411 + $0x50] sm:$0xf]
    %v8433 = vld [vmem:[%s8411 + $0x54] sm:$0xf]
    %v8434 = vld [vmem:[%s8411 + $0x58] sm:$0xf]
    %v8435 = vld [vmem:[%s8411 + $0x5c] sm:$0xf]
    %v8436 = vld [vmem:[%s8411 + $0x60] sm:$0xf]
    %v8437 = vld [vmem:[%s8411 + $0x64] sm:$0xf]
    %v8438 = vld [vmem:[%s8411 + $0x68] sm:$0xf]
    %v8439 = vld [vmem:[%s8411 + $0x6c] sm:$0xf]
    %v8440 = vld [vmem:[%s8411 + $0x70] sm:$0xf]
    %v8441 = vld [vmem:[%s8411 + $0x74] sm:$0xf]
    %v8442 = vld [vmem:[%s8411 + $0x78] sm:$0xf]
    %v8443 = vld [vmem:[%s8411 + $0x7c] sm:$0xf]
    %v8476 = vunpack.c.l.b16 %v8412
    %v8477 = vunpack.c.l.b16 %v8413
    %v8478 = vunpack.c.l.b16 %v8414
    %v8479 = vunpack.c.l.b16 %v8415
    %v8480 = vunpack.c.l.b16 %v8416
    %v8481 = vunpack.c.l.b16 %v8417
    %v8482 = vunpack.c.l.b16 %v8418
    %v8483 = vunpack.c.l.b16 %v8419
    %v8484 = vunpack.c.l.b16 %v8420
    %v8485 = vunpack.c.l.b16 %v8421
    %v8486 = vunpack.c.l.b16 %v8422
    %v8487 = vunpack.c.l.b16 %v8423
    %v8488 = vunpack.c.l.b16 %v8424
    %v8489 = vunpack.c.l.b16 %v8425
    %v8490 = vunpack.c.l.b16 %v8426
    %v8491 = vunpack.c.l.b16 %v8427
    %v8492 = vunpack.c.l.b16 %v8428
    %v8493 = vunpack.c.l.b16 %v8429
    %v8494 = vunpack.c.l.b16 %v8430
    %v8495 = vunpack.c.l.b16 %v8431
    %v8496 = vunpack.c.l.b16 %v8432
    %v8497 = vunpack.c.l.b16 %v8433
    %v8498 = vunpack.c.l.b16 %v8434
    %v8499 = vunpack.c.l.b16 %v8435
    %v8500 = vunpack.c.l.b16 %v8436
    %v8501 = vunpack.c.l.b16 %v8437
    %v8502 = vunpack.c.l.b16 %v8438
    %v8503 = vunpack.c.l.b16 %v8439
    %v8504 = vunpack.c.l.b16 %v8440
    %v8505 = vunpack.c.l.b16 %v8441
    %v8506 = vunpack.c.l.b16 %v8442
    %v8507 = vunpack.c.l.b16 %v8443
    %v8508 = vpack.c.b16 %v8477, %v8476
    %v8509 = vpack.c.b16 %v8479, %v8478
    %v8510 = vpack.c.b16 %v8481, %v8480
    %v8511 = vpack.c.b16 %v8483, %v8482
    %v8512 = vpack.c.b16 %v8485, %v8484
    %v8513 = vpack.c.b16 %v8487, %v8486
    %v8514 = vpack.c.b16 %v8489, %v8488
    %v8515 = vpack.c.b16 %v8491, %v8490
    %v8516 = vpack.c.b16 %v8493, %v8492
    %v8517 = vpack.c.b16 %v8495, %v8494
    %v8518 = vpack.c.b16 %v8497, %v8496
    %v8519 = vpack.c.b16 %v8499, %v8498
    %v8520 = vpack.c.b16 %v8501, %v8500
    %v8521 = vpack.c.b16 %v8503, %v8502
    %v8522 = vpack.c.b16 %v8505, %v8504
    %v8523 = vpack.c.b16 %v8507, %v8506
    %8540 = vmatprep.subr.bf16.mxu0 0
    %8541 = vmatpush1.bf16.msra.mxu0 %v8508
    %8542 = vmatprep.subr.bf16.mxu0 0
    %8543 = vmatpush1.bf16.msra.mxu0 %v8509
    %8544 = vmatprep.subr.bf16.mxu0 0
    %8545 = vmatpush1.bf16.msra.mxu0 %v8510
    %8546 = vmatprep.subr.bf16.mxu0 0
    %8547 = vmatpush1.bf16.msra.mxu0 %v8511
    %8548 = vmatprep.subr.bf16.mxu0 0
    %8549 = vmatpush1.bf16.msra.mxu0 %v8512
    %8550 = vmatprep.subr.bf16.mxu0 0
    %8551 = vmatpush1.bf16.msra.mxu0 %v8513
    %8552 = vmatprep.subr.bf16.mxu0 0
    %8553 = vmatpush1.bf16.msra.mxu0 %v8514
    %8554 = vmatprep.subr.bf16.mxu0 0
    %8555 = vmatpush1.bf16.msra.mxu0 %v8515
    %8556 = vmatprep.subr.bf16.mxu0 0
    %8557 = vmatpush1.bf16.msra.mxu0 %v8516
    %8558 = vmatprep.subr.bf16.mxu0 0
    %8559 = vmatpush1.bf16.msra.mxu0 %v8517
    %8560 = vmatprep.subr.bf16.mxu0 0
    %8561 = vmatpush1.bf16.msra.mxu0 %v8518
    %8562 = vmatprep.subr.bf16.mxu0 0
    %8563 = vmatpush1.bf16.msra.mxu0 %v8519
    %8564 = vmatprep.subr.bf16.mxu0 0
    %8565 = vmatpush1.bf16.msra.mxu0 %v8520
    %8566 = vmatprep.subr.bf16.mxu0 0
    %8567 = vmatpush1.bf16.msra.mxu0 %v8521
    %8568 = vmatprep.subr.bf16.mxu0 0
    %8569 = vmatpush1.bf16.msra.mxu0 %v8522
    %8570 = vmatprep.subr.bf16.mxu0 0
    %8571 = vmatpush1.bf16.msra.mxu0 %v8523
    %8572 = vmatprep.mubr.bf16.mxu0 %v8380
    %8573 = vmatmul.mubr.bf16.gmra.mrb[0].mxu0 %v8379
    %v8574 = vpop.f32.mrb[0].mxu0
    %v8575 = vadd.f32 0.0, %v8574
    %v8576 = vpop.f32.mrb[0].mxu0
    %v8577 = vpop.f32.mrb[0].mxu0
    %v8578 = vadd.f32 0.0, %v8577
    %v8579 = vpop.f32.mrb[0].mxu0
    %8580 = vmatprep.mubr.bf16.mxu0 %v8382
    %8581 = vmatmul.mubr.bf16.gmra.mrb[0].mxu0 %v8381
    %v8582 = vpop.f32.mrb[0].mxu0
    %v8583 = vadd.f32 0.0, %v8582
    %v8584 = vpop.f32.mrb[0].mxu0
    %v8585 = vpop.f32.mrb[0].mxu0
    %v8586 = vadd.f32 0.0, %v8585
    %v8587 = vpop.f32.mrb[0].mxu0
    %8588 = vmatprep.mubr.bf16.mxu0 %v8384
    %8589 = vmatmul.mubr.bf16.gmra.mrb[0].mxu0 %v8383
    %v8590 = vpop.f32.mrb[0].mxu0
    %v8591 = vadd.f32 0.0, %v8590
    %v8592 = vpop.f32.mrb[0].mxu0
    %v8593 = vpop.f32.mrb[0].mxu0
    %v8594 = vadd.f32 0.0, %v8593
    %v8595 = vpop.f32.mrb[0].mxu0
    %8596 = vmatprep.mubr.bf16.mxu0 %v8386
    %8597 = vmatmul.mubr.bf16.gmra.mrb[0].mxu0 %v8385
    %v8598 = vpop.f32.mrb[0].mxu0
    %v8599 = vadd.f32 0.0, %v8598
    %v8600 = vpop.f32.mrb[0].mxu0
    %v8601 = vpop.f32.mrb[0].mxu0
    %v8602 = vadd.f32 0.0, %v8601
    %v8603 = vpop.f32.mrb[0].mxu0
    %8604 = vmatprep.mubr.bf16.mxu0 %v8388
    %8605 = vmatmul.mubr.bf16.gmra.mrb[0].mxu0 %v8387
    %v8606 = vpop.f32.mrb[0].mxu0
    %v8607 = vadd.f32 0.0, %v8606
    %v8608 = vpop.f32.mrb[0].mxu0
    %v8609 = vpop.f32.mrb[0].mxu0
    %v8610 = vadd.f32 0.0, %v8609
    %v8611 = vpop.f32.mrb[0].mxu0
    %8612 = vmatprep.mubr.bf16.mxu0 %v8390
    %8613 = vmatmul.mubr.bf16.gmra.mrb[0].mxu0 %v8389
    %v8614 = vpop.f32.mrb[0].mxu0
    %v8615 = vadd.f32 0.0, %v8614
    %v8616 = vpop.f32.mrb[0].mxu0
    %v8617 = vpop.f32.mrb[0].mxu0
    %v8618 = vadd.f32 0.0, %v8617
    %v8619 = vpop.f32.mrb[0].mxu0
    %8620 = vmatprep.mubr.bf16.mxu0 %v8392
    %8621 = vmatmul.mubr.bf16.gmra.mrb[0].mxu0 %v8391
    %v8622 = vpop.f32.mrb[0].mxu0
    %v8623 = vadd.f32 0.0, %v8622
    %v8624 = vpop.f32.mrb[0].mxu0
    %v8625 = vpop.f32.mrb[0].mxu0
    %v8626 = vadd.f32 0.0, %v8625
    %v8627 = vpop.f32.mrb[0].mxu0
    %8628 = vmatprep.mubr.bf16.mxu0 %v8394
    %8629 = vmatmul.mubr.bf16.gmra.mrb[0].mxu0 %v8393
    %v8630 = vpop.f32.mrb[0].mxu0
    %v8631 = vadd.f32 0.0, %v8630
    %v8632 = vpop.f32.mrb[0].mxu0
    %v8633 = vpop.f32.mrb[0].mxu0
    %v8634 = vadd.f32 0.0, %v8633
    %v8635 = vpop.f32.mrb[0].mxu0
    %8636 = vdwg.mxu0
    %v8637 = vadd.f32 %v8395, %v8575
    %v8638 = vadd.f32 %v8396, %v8578
    %v8639 = vadd.f32 %v8397, %v8583
    %v8640 = vadd.f32 %v8398, %v8586
    %v8641 = vadd.f32 %v8399, %v8591
    %v8642 = vadd.f32 %v8400, %v8594
    %v8643 = vadd.f32 %v8401, %v8599
    %v8644 = vadd.f32 %v8402, %v8602
    %v8645 = vadd.f32 %v8403, %v8607
    %v8646 = vadd.f32 %v8404, %v8610
    %v8647 = vadd.f32 %v8405, %v8615
    %v8648 = vadd.f32 %v8406, %v8618
    %v8649 = vadd.f32 %v8407, %v8623
    %v8650 = vadd.f32 %v8408, %v8626
    %v8651 = vadd.f32 %v8409, %v8631
    %v8652 = vadd.f32 %v8410, %v8634
    %8653 = vst.msk [vmem:[#allocation7] sm:$0xff] %vm5597, %v8637
    %8654 = vst.msk [vmem:[#allocation7 + $0x8] sm:$0xff] %vm5597, %v8638
    %8655 = vst.msk [vmem:[#allocation7 + $0x10] sm:$0xff] %vm5597, %v8639
    %8656 = vst.msk [vmem:[#allocation7 + $0x18] sm:$0xff] %vm5597, %v8640
    %8657 = vst.msk [vmem:[#allocation7 + $0x20] sm:$0xff] %vm5597, %v8641
    %8658 = vst.msk [vmem:[#allocation7 + $0x28] sm:$0xff] %vm5597, %v8642
    %8659 = vst.msk [vmem:[#allocation7 + $0x30] sm:$0xff] %vm5597, %v8643
    %8660 = vst.msk [vmem:[#allocation7 + $0x38] sm:$0xff] %vm5597, %v8644
    %8661 = vst.msk [vmem:[#allocation7 + $0x40] sm:$0xff] %vm5597, %v8645
    %8662 = vst.msk [vmem:[#allocation7 + $0x48] sm:$0xff] %vm5597, %v8646
    %8663 = vst.msk [vmem:[#allocation7 + $0x50] sm:$0xff] %vm5597, %v8647
    %8664 = vst.msk [vmem:[#allocation7 + $0x58] sm:$0xff] %vm5597, %v8648
    %8665 = vst.msk [vmem:[#allocation7 + $0x60] sm:$0xff] %vm5597, %v8649
    %8666 = vst.msk [vmem:[#allocation7 + $0x68] sm:$0xff] %vm5597, %v8650
    %8667 = vst.msk [vmem:[#allocation7 + $0x70] sm:$0xff] %vm5597, %v8651
    %8668 = vst.msk [vmem:[#allocation7 + $0x78] sm:$0xff] %vm5597, %v8652
    %v8669 = vld [vmem:[%s6015] sm:$0xff]
    %v8670 = vld [vmem:[%s6015 + $0x8] sm:$0xff]
    %v8671 = vld [vmem:[%s6015 + $0x10] sm:$0xff]
    %v8672 = vld [vmem:[%s6015 + $0x18] sm:$0xff]
    %v8673 = vld [vmem:[%s6015 + $0x20] sm:$0xff]
    %v8674 = vld [vmem:[%s6015 + $0x28] sm:$0xff]
    %v8675 = vld [vmem:[%s6015 + $0x30] sm:$0xff]
    %v8676 = vld [vmem:[%s6015 + $0x38] sm:$0xff]
    %v8677 = vld [vmem:[%s6015 + $0x40] sm:$0xff]
    %v8678 = vld [vmem:[%s6015 + $0x48] sm:$0xff]
    %v8679 = vld [vmem:[%s6015 + $0x50] sm:$0xff]
    %v8680 = vld [vmem:[%s6015 + $0x58] sm:$0xff]
    %v8681 = vld [vmem:[%s6015 + $0x60] sm:$0xff]
    %v8682 = vld [vmem:[%s6015 + $0x68] sm:$0xff]
    %v8683 = vld [vmem:[%s6015 + $0x70] sm:$0xff]
    %v8684 = vld [vmem:[%s6015 + $0x78] sm:$0xff]
    %v8685 = vld [vmem:[%s6015 + $0xa0] sm:$0xff]
    %v8686 = vld [vmem:[%s6015 + $0xa8] sm:$0xff]
    %v8687 = vld [vmem:[%s6015 + $0xb0] sm:$0xff]
    %v8688 = vld [vmem:[%s6015 + $0xb8] sm:$0xff]
    %v8689 = vld [vmem:[%s6015 + $0xc0] sm:$0xff]
    %v8690 = vld [vmem:[%s6015 + $0xc8] sm:$0xff]
    %v8691 = vld [vmem:[%s6015 + $0xd0] sm:$0xff]
    %v8692 = vld [vmem:[%s6015 + $0xd8] sm:$0xff]
    %v8693 = vld [vmem:[%s6015 + $0xe0] sm:$0xff]
    %v8694 = vld [vmem:[%s6015 + $0xe8] sm:$0xff]
    %v8695 = vld [vmem:[%s6015 + $0xf0] sm:$0xff]
    %v8696 = vld [vmem:[%s6015 + $0xf8] sm:$0xff]
    %v8697 = vld [vmem:[%s6015 + $0x100] sm:$0xff]
    %v8698 = vld [vmem:[%s6015 + $0x108] sm:$0xff]
    %v8699 = vld [vmem:[%s6015 + $0x110] sm:$0xff]
    %v8700 = vld [vmem:[%s6015 + $0x118] sm:$0xff]
    %v8701 = vpack.c.bf16 %v8671, %v8669
    %v8702 = vpack.c.bf16 %v8672, %v8670
    %v8703 = vpack.c.bf16 %v8675, %v8673
    %v8704 = vpack.c.bf16 %v8676, %v8674
    %v8705 = vpack.c.bf16 %v8679, %v8677
    %v8706 = vpack.c.bf16 %v8680, %v8678
    %v8707 = vpack.c.bf16 %v8683, %v8681
    %v8708 = vpack.c.bf16 %v8684, %v8682
    %v8709 = vpack.c.bf16 %v8687, %v8685
    %v8710 = vpack.c.bf16 %v8688, %v8686
    %v8711 = vpack.c.bf16 %v8691, %v8689
    %v8712 = vpack.c.bf16 %v8692, %v8690
    %v8713 = vpack.c.bf16 %v8695, %v8693
    %v8714 = vpack.c.bf16 %v8696, %v8694
    %v8715 = vpack.c.bf16 %v8699, %v8697
    %v8716 = vpack.c.bf16 %v8700, %v8698
    %v8717 = vld [vmem:[#allocation7] sm:$0xff]
    %v8718 = vld [vmem:[#allocation7 + $0x8] sm:$0xff]
    %v8719 = vld [vmem:[#allocation7 + $0x10] sm:$0xff]
    %v8720 = vld [vmem:[#allocation7 + $0x18] sm:$0xff]
    %v8721 = vld [vmem:[#allocation7 + $0x20] sm:$0xff]
    %v8722 = vld [vmem:[#allocation7 + $0x28] sm:$0xff]
    %v8723 = vld [vmem:[#allocation7 + $0x30] sm:$0xff]
    %v8724 = vld [vmem:[#allocation7 + $0x38] sm:$0xff]
    %v8725 = vld [vmem:[#allocation7 + $0x40] sm:$0xff]
    %v8726 = vld [vmem:[#allocation7 + $0x48] sm:$0xff]
    %v8727 = vld [vmem:[#allocation7 + $0x50] sm:$0xff]
    %v8728 = vld [vmem:[#allocation7 + $0x58] sm:$0xff]
    %v8729 = vld [vmem:[#allocation7 + $0x60] sm:$0xff]
    %v8730 = vld [vmem:[#allocation7 + $0x68] sm:$0xff]
    %v8731 = vld [vmem:[#allocation7 + $0x70] sm:$0xff]
    %v8732 = vld [vmem:[#allocation7 + $0x78] sm:$0xff]
    %s8733 = scalar_lea.vmem %s3, 640
    %v8734 = vld [vmem:[%s8733] sm:$0xf]
    %v8735 = vld [vmem:[%s8733 + $0x4] sm:$0xf]
    %v8736 = vld [vmem:[%s8733 + $0x8] sm:$0xf]
    %v8737 = vld [vmem:[%s8733 + $0xc] sm:$0xf]
    %v8738 = vld [vmem:[%s8733 + $0x10] sm:$0xf]
    %v8739 = vld [vmem:[%s8733 + $0x14] sm:$0xf]
    %v8740 = vld [vmem:[%s8733 + $0x18] sm:$0xf]
    %v8741 = vld [vmem:[%s8733 + $0x1c] sm:$0xf]
    %v8742 = vld [vmem:[%s8733 + $0x20] sm:$0xf]
    %v8743 = vld [vmem:[%s8733 + $0x24] sm:$0xf]
    %v8744 = vld [vmem:[%s8733 + $0x28] sm:$0xf]
    %v8745 = vld [vmem:[%s8733 + $0x2c] sm:$0xf]
    %v8746 = vld [vmem:[%s8733 + $0x30] sm:$0xf]
    %v8747 = vld [vmem:[%s8733 + $0x34] sm:$0xf]
    %v8748 = vld [vmem:[%s8733 + $0x38] sm:$0xf]
    %v8749 = vld [vmem:[%s8733 + $0x3c] sm:$0xf]
    %v8750 = vld [vmem:[%s8733 + $0x40] sm:$0xf]
    %v8751 = vld [vmem:[%s8733 + $0x44] sm:$0xf]
    %v8752 = vld [vmem:[%s8733 + $0x48] sm:$0xf]
    %v8753 = vld [vmem:[%s8733 + $0x4c] sm:$0xf]
    %v8754 = vld [vmem:[%s8733 + $0x50] sm:$0xf]
    %v8755 = vld [vmem:[%s8733 + $0x54] sm:$0xf]
    %v8756 = vld [vmem:[%s8733 + $0x58] sm:$0xf]
    %v8757 = vld [vmem:[%s8733 + $0x5c] sm:$0xf]
    %v8758 = vld [vmem:[%s8733 + $0x60] sm:$0xf]
    %v8759 = vld [vmem:[%s8733 + $0x64] sm:$0xf]
    %v8760 = vld [vmem:[%s8733 + $0x68] sm:$0xf]
    %v8761 = vld [vmem:[%s8733 + $0x6c] sm:$0xf]
    %v8762 = vld [vmem:[%s8733 + $0x70] sm:$0xf]
    %v8763 = vld [vmem:[%s8733 + $0x74] sm:$0xf]
    %v8764 = vld [vmem:[%s8733 + $0x78] sm:$0xf]
    %v8765 = vld [vmem:[%s8733 + $0x7c] sm:$0xf]
    %v8798 = vunpack.c.l.b16 %v8734
    %v8799 = vunpack.c.l.b16 %v8735
    %v8800 = vunpack.c.l.b16 %v8736
    %v8801 = vunpack.c.l.b16 %v8737
    %v8802 = vunpack.c.l.b16 %v8738
    %v8803 = vunpack.c.l.b16 %v8739
    %v8804 = vunpack.c.l.b16 %v8740
    %v8805 = vunpack.c.l.b16 %v8741
    %v8806 = vunpack.c.l.b16 %v8742
    %v8807 = vunpack.c.l.b16 %v8743
    %v8808 = vunpack.c.l.b16 %v8744
    %v8809 = vunpack.c.l.b16 %v8745
    %v8810 = vunpack.c.l.b16 %v8746
    %v8811 = vunpack.c.l.b16 %v8747
    %v8812 = vunpack.c.l.b16 %v8748
    %v8813 = vunpack.c.l.b16 %v8749
    %v8814 = vunpack.c.l.b16 %v8750
    %v8815 = vunpack.c.l.b16 %v8751
    %v8816 = vunpack.c.l.b16 %v8752
    %v8817 = vunpack.c.l.b16 %v8753
    %v8818 = vunpack.c.l.b16 %v8754
    %v8819 = vunpack.c.l.b16 %v8755
    %v8820 = vunpack.c.l.b16 %v8756
    %v8821 = vunpack.c.l.b16 %v8757
    %v8822 = vunpack.c.l.b16 %v8758
    %v8823 = vunpack.c.l.b16 %v8759
    %v8824 = vunpack.c.l.b16 %v8760
    %v8825 = vunpack.c.l.b16 %v8761
    %v8826 = vunpack.c.l.b16 %v8762
    %v8827 = vunpack.c.l.b16 %v8763
    %v8828 = vunpack.c.l.b16 %v8764
    %v8829 = vunpack.c.l.b16 %v8765
    %v8830 = vpack.c.b16 %v8799, %v8798
    %v8831 = vpack.c.b16 %v8801, %v8800
    %v8832 = vpack.c.b16 %v8803, %v8802
    %v8833 = vpack.c.b16 %v8805, %v8804
    %v8834 = vpack.c.b16 %v8807, %v8806
    %v8835 = vpack.c.b16 %v8809, %v8808
    %v8836 = vpack.c.b16 %v8811, %v8810
    %v8837 = vpack.c.b16 %v8813, %v8812
    %v8838 = vpack.c.b16 %v8815, %v8814
    %v8839 = vpack.c.b16 %v8817, %v8816
    %v8840 = vpack.c.b16 %v8819, %v8818
    %v8841 = vpack.c.b16 %v8821, %v8820
    %v8842 = vpack.c.b16 %v8823, %v8822
    %v8843 = vpack.c.b16 %v8825, %v8824
    %v8844 = vpack.c.b16 %v8827, %v8826
    %v8845 = vpack.c.b16 %v8829, %v8828
    %8862 = vmatprep.subr.bf16.mxu0 0
    %8863 = vmatpush1.bf16.msra.mxu0 %v8830
    %8864 = vmatprep.subr.bf16.mxu0 0
    %8865 = vmatpush1.bf16.msra.mxu0 %v8831
    %8866 = vmatprep.subr.bf16.mxu0 0
    %8867 = vmatpush1.bf16.msra.mxu0 %v8832
    %8868 = vmatprep.subr.bf16.mxu0 0
    %8869 = vmatpush1.bf16.msra.mxu0 %v8833
    %8870 = vmatprep.subr.bf16.mxu0 0
    %8871 = vmatpush1.bf16.msra.mxu0 %v8834
    %8872 = vmatprep.subr.bf16.mxu0 0
    %8873 = vmatpush1.bf16.msra.mxu0 %v8835
    %8874 = vmatprep.subr.bf16.mxu0 0
    %8875 = vmatpush1.bf16.msra.mxu0 %v8836
    %8876 = vmatprep.subr.bf16.mxu0 0
    %8877 = vmatpush1.bf16.msra.mxu0 %v8837
    %8878 = vmatprep.subr.bf16.mxu0 0
    %8879 = vmatpush1.bf16.msra.mxu0 %v8838
    %8880 = vmatprep.subr.bf16.mxu0 0
    %8881 = vmatpush1.bf16.msra.mxu0 %v8839
    %8882 = vmatprep.subr.bf16.mxu0 0
    %8883 = vmatpush1.bf16.msra.mxu0 %v8840
    %8884 = vmatprep.subr.bf16.mxu0 0
    %8885 = vmatpush1.bf16.msra.mxu0 %v8841
    %8886 = vmatprep.subr.bf16.mxu0 0
    %8887 = vmatpush1.bf16.msra.mxu0 %v8842
    %8888 = vmatprep.subr.bf16.mxu0 0
    %8889 = vmatpush1.bf16.msra.mxu0 %v8843
    %8890 = vmatprep.subr.bf16.mxu0 0
    %8891 = vmatpush1.bf16.msra.mxu0 %v8844
    %8892 = vmatprep.subr.bf16.mxu0 0
    %8893 = vmatpush1.bf16.msra.mxu0 %v8845
    %8894 = vmatprep.mubr.bf16.mxu0 %v8702
    %8895 = vmatmul.mubr.bf16.gmra.mrb[0].mxu0 %v8701
    %v8896 = vpop.f32.mrb[0].mxu0
    %v8897 = vadd.f32 0.0, %v8896
    %v8898 = vpop.f32.mrb[0].mxu0
    %v8899 = vpop.f32.mrb[0].mxu0
    %v8900 = vadd.f32 0.0, %v8899
    %v8901 = vpop.f32.mrb[0].mxu0
    %8902 = vmatprep.mubr.bf16.mxu0 %v8704
    %8903 = vmatmul.mubr.bf16.gmra.mrb[0].mxu0 %v8703
    %v8904 = vpop.f32.mrb[0].mxu0
    %v8905 = vadd.f32 0.0, %v8904
    %v8906 = vpop.f32.mrb[0].mxu0
    %v8907 = vpop.f32.mrb[0].mxu0
    %v8908 = vadd.f32 0.0, %v8907
    %v8909 = vpop.f32.mrb[0].mxu0
    %8910 = vmatprep.mubr.bf16.mxu0 %v8706
    %8911 = vmatmul.mubr.bf16.gmra.mrb[0].mxu0 %v8705
    %v8912 = vpop.f32.mrb[0].mxu0
    %v8913 = vadd.f32 0.0, %v8912
    %v8914 = vpop.f32.mrb[0].mxu0
    %v8915 = vpop.f32.mrb[0].mxu0
    %v8916 = vadd.f32 0.0, %v8915
    %v8917 = vpop.f32.mrb[0].mxu0
    %8918 = vmatprep.mubr.bf16.mxu0 %v8708
    %8919 = vmatmul.mubr.bf16.gmra.mrb[0].mxu0 %v8707
    %v8920 = vpop.f32.mrb[0].mxu0
    %v8921 = vadd.f32 0.0, %v8920
    %v8922 = vpop.f32.mrb[0].mxu0
    %v8923 = vpop.f32.mrb[0].mxu0
    %v8924 = vadd.f32 0.0, %v8923
    %v8925 = vpop.f32.mrb[0].mxu0
    %8926 = vmatprep.mubr.bf16.mxu0 %v8710
    %8927 = vmatmul.mubr.bf16.gmra.mrb[0].mxu0 %v8709
    %v8928 = vpop.f32.mrb[0].mxu0
    %v8929 = vadd.f32 0.0, %v8928
    %v8930 = vpop.f32.mrb[0].mxu0
    %v8931 = vpop.f32.mrb[0].mxu0
    %v8932 = vadd.f32 0.0, %v8931
    %v8933 = vpop.f32.mrb[0].mxu0
    %8934 = vmatprep.mubr.bf16.mxu0 %v8712
    %8935 = vmatmul.mubr.bf16.gmra.mrb[0].mxu0 %v8711
    %v8936 = vpop.f32.mrb[0].mxu0
    %v8937 = vadd.f32 0.0, %v8936
    %v8938 = vpop.f32.mrb[0].mxu0
    %v8939 = vpop.f32.mrb[0].mxu0
    %v8940 = vadd.f32 0.0, %v8939
    %v8941 = vpop.f32.mrb[0].mxu0
    %8942 = vmatprep.mubr.bf16.mxu0 %v8714
    %8943 = vmatmul.mubr.bf16.gmra.mrb[0].mxu0 %v8713
    %v8944 = vpop.f32.mrb[0].mxu0
    %v8945 = vadd.f32 0.0, %v8944
    %v8946 = vpop.f32.mrb[0].mxu0
    %v8947 = vpop.f32.mrb[0].mxu0
    %v8948 = vadd.f32 0.0, %v8947
    %v8949 = vpop.f32.mrb[0].mxu0
    %8950 = vmatprep.mubr.bf16.mxu0 %v8716
    %8951 = vmatmul.mubr.bf16.gmra.mrb[0].mxu0 %v8715
    %v8952 = vpop.f32.mrb[0].mxu0
    %v8953 = vadd.f32 0.0, %v8952
    %v8954 = vpop.f32.mrb[0].mxu0
    %v8955 = vpop.f32.mrb[0].mxu0
    %v8956 = vadd.f32 0.0, %v8955
    %v8957 = vpop.f32.mrb[0].mxu0
    %8958 = vdwg.mxu0
    %v8959 = vadd.f32 %v8717, %v8897
    %v8960 = vadd.f32 %v8718, %v8900
    %v8961 = vadd.f32 %v8719, %v8905
    %v8962 = vadd.f32 %v8720, %v8908
    %v8963 = vadd.f32 %v8721, %v8913
    %v8964 = vadd.f32 %v8722, %v8916
    %v8965 = vadd.f32 %v8723, %v8921
    %v8966 = vadd.f32 %v8724, %v8924
    %v8967 = vadd.f32 %v8725, %v8929
    %v8968 = vadd.f32 %v8726, %v8932
    %v8969 = vadd.f32 %v8727, %v8937
    %v8970 = vadd.f32 %v8728, %v8940
    %v8971 = vadd.f32 %v8729, %v8945
    %v8972 = vadd.f32 %v8730, %v8948
    %v8973 = vadd.f32 %v8731, %v8953
    %v8974 = vadd.f32 %v8732, %v8956
    %8975 = vst.msk [vmem:[#allocation7] sm:$0xff] %vm5597, %v8959
    %8976 = vst.msk [vmem:[#allocation7 + $0x8] sm:$0xff] %vm5597, %v8960
    %8977 = vst.msk [vmem:[#allocation7 + $0x10] sm:$0xff] %vm5597, %v8961
    %8978 = vst.msk [vmem:[#allocation7 + $0x18] sm:$0xff] %vm5597, %v8962
    %8979 = vst.msk [vmem:[#allocation7 + $0x20] sm:$0xff] %vm5597, %v8963
    %8980 = vst.msk [vmem:[#allocation7 + $0x28] sm:$0xff] %vm5597, %v8964
    %8981 = vst.msk [vmem:[#allocation7 + $0x30] sm:$0xff] %vm5597, %v8965
    %8982 = vst.msk [vmem:[#allocation7 + $0x38] sm:$0xff] %vm5597, %v8966
    %8983 = vst.msk [vmem:[#allocation7 + $0x40] sm:$0xff] %vm5597, %v8967
    %8984 = vst.msk [vmem:[#allocation7 + $0x48] sm:$0xff] %vm5597, %v8968
    %8985 = vst.msk [vmem:[#allocation7 + $0x50] sm:$0xff] %vm5597, %v8969
    %8986 = vst.msk [vmem:[#allocation7 + $0x58] sm:$0xff] %vm5597, %v8970
    %8987 = vst.msk [vmem:[#allocation7 + $0x60] sm:$0xff] %vm5597, %v8971
    %8988 = vst.msk [vmem:[#allocation7 + $0x68] sm:$0xff] %vm5597, %v8972
    %8989 = vst.msk [vmem:[#allocation7 + $0x70] sm:$0xff] %vm5597, %v8973
    %8990 = vst.msk [vmem:[#allocation7 + $0x78] sm:$0xff] %vm5597, %v8974
    %v8991 = vld [vmem:[%s6338] sm:$0xff]
    %v8992 = vld [vmem:[%s6338 + $0x8] sm:$0xff]
    %v8993 = vld [vmem:[%s6338 + $0x10] sm:$0xff]
    %v8994 = vld [vmem:[%s6338 + $0x18] sm:$0xff]
    %v8995 = vld [vmem:[%s6338 + $0x20] sm:$0xff]
    %v8996 = vld [vmem:[%s6338 + $0x28] sm:$0xff]
    %v8997 = vld [vmem:[%s6338 + $0x30] sm:$0xff]
    %v8998 = vld [vmem:[%s6338 + $0x38] sm:$0xff]
    %v8999 = vld [vmem:[%s6338 + $0x40] sm:$0xff]
    %v9000 = vld [vmem:[%s6338 + $0x48] sm:$0xff]
    %v9001 = vld [vmem:[%s6338 + $0x50] sm:$0xff]
    %v9002 = vld [vmem:[%s6338 + $0x58] sm:$0xff]
    %v9003 = vld [vmem:[%s6338 + $0x60] sm:$0xff]
    %v9004 = vld [vmem:[%s6338 + $0x68] sm:$0xff]
    %v9005 = vld [vmem:[%s6338 + $0x70] sm:$0xff]
    %v9006 = vld [vmem:[%s6338 + $0x78] sm:$0xff]
    %v9007 = vld [vmem:[%s6338 + $0xa0] sm:$0xff]
    %v9008 = vld [vmem:[%s6338 + $0xa8] sm:$0xff]
    %v9009 = vld [vmem:[%s6338 + $0xb0] sm:$0xff]
    %v9010 = vld [vmem:[%s6338 + $0xb8] sm:$0xff]
    %v9011 = vld [vmem:[%s6338 + $0xc0] sm:$0xff]
    %v9012 = vld [vmem:[%s6338 + $0xc8] sm:$0xff]
    %v9013 = vld [vmem:[%s6338 + $0xd0] sm:$0xff]
    %v9014 = vld [vmem:[%s6338 + $0xd8] sm:$0xff]
    %v9015 = vld [vmem:[%s6338 + $0xe0] sm:$0xff]
    %v9016 = vld [vmem:[%s6338 + $0xe8] sm:$0xff]
    %v9017 = vld [vmem:[%s6338 + $0xf0] sm:$0xff]
    %v9018 = vld [vmem:[%s6338 + $0xf8] sm:$0xff]
    %v9019 = vld [vmem:[%s6338 + $0x100] sm:$0xff]
    %v9020 = vld [vmem:[%s6338 + $0x108] sm:$0xff]
    %v9021 = vld [vmem:[%s6338 + $0x110] sm:$0xff]
    %v9022 = vld [vmem:[%s6338 + $0x118] sm:$0xff]
    %v9023 = vpack.c.bf16 %v8993, %v8991
    %v9024 = vpack.c.bf16 %v8994, %v8992
    %v9025 = vpack.c.bf16 %v8997, %v8995
    %v9026 = vpack.c.bf16 %v8998, %v8996
    %v9027 = vpack.c.bf16 %v9001, %v8999
    %v9028 = vpack.c.bf16 %v9002, %v9000
    %v9029 = vpack.c.bf16 %v9005, %v9003
    %v9030 = vpack.c.bf16 %v9006, %v9004
    %v9031 = vpack.c.bf16 %v9009, %v9007
    %v9032 = vpack.c.bf16 %v9010, %v9008
    %v9033 = vpack.c.bf16 %v9013, %v9011
    %v9034 = vpack.c.bf16 %v9014, %v9012
    %v9035 = vpack.c.bf16 %v9017, %v9015
    %v9036 = vpack.c.bf16 %v9018, %v9016
    %v9037 = vpack.c.bf16 %v9021, %v9019
    %v9038 = vpack.c.bf16 %v9022, %v9020
    %v9039 = vld [vmem:[#allocation7] sm:$0xff]
    %v9040 = vld [vmem:[#allocation7 + $0x8] sm:$0xff]
    %v9041 = vld [vmem:[#allocation7 + $0x10] sm:$0xff]
    %v9042 = vld [vmem:[#allocation7 + $0x18] sm:$0xff]
    %v9043 = vld [vmem:[#allocation7 + $0x20] sm:$0xff]
    %v9044 = vld [vmem:[#allocation7 + $0x28] sm:$0xff]
    %v9045 = vld [vmem:[#allocation7 + $0x30] sm:$0xff]
    %v9046 = vld [vmem:[#allocation7 + $0x38] sm:$0xff]
    %v9047 = vld [vmem:[#allocation7 + $0x40] sm:$0xff]
    %v9048 = vld [vmem:[#allocation7 + $0x48] sm:$0xff]
    %v9049 = vld [vmem:[#allocation7 + $0x50] sm:$0xff]
    %v9050 = vld [vmem:[#allocation7 + $0x58] sm:$0xff]
    %v9051 = vld [vmem:[#allocation7 + $0x60] sm:$0xff]
    %v9052 = vld [vmem:[#allocation7 + $0x68] sm:$0xff]
    %v9053 = vld [vmem:[#allocation7 + $0x70] sm:$0xff]
    %v9054 = vld [vmem:[#allocation7 + $0x78] sm:$0xff]
    %s9055 = scalar_lea.vmem %s3, 1024
    %v9056 = vld [vmem:[%s9055] sm:$0xf]
    %v9057 = vld [vmem:[%s9055 + $0x4] sm:$0xf]
    %v9058 = vld [vmem:[%s9055 + $0x8] sm:$0xf]
    %v9059 = vld [vmem:[%s9055 + $0xc] sm:$0xf]
    %v9060 = vld [vmem:[%s9055 + $0x10] sm:$0xf]
    %v9061 = vld [vmem:[%s9055 + $0x14] sm:$0xf]
    %v9062 = vld [vmem:[%s9055 + $0x18] sm:$0xf]
    %v9063 = vld [vmem:[%s9055 + $0x1c] sm:$0xf]
    %v9064 = vld [vmem:[%s9055 + $0x20] sm:$0xf]
    %v9065 = vld [vmem:[%s9055 + $0x24] sm:$0xf]
    %v9066 = vld [vmem:[%s9055 + $0x28] sm:$0xf]
    %v9067 = vld [vmem:[%s9055 + $0x2c] sm:$0xf]
    %v9068 = vld [vmem:[%s9055 + $0x30] sm:$0xf]
    %v9069 = vld [vmem:[%s9055 + $0x34] sm:$0xf]
    %v9070 = vld [vmem:[%s9055 + $0x38] sm:$0xf]
    %v9071 = vld [vmem:[%s9055 + $0x3c] sm:$0xf]
    %v9072 = vld [vmem:[%s9055 + $0x40] sm:$0xf]
    %v9073 = vld [vmem:[%s9055 + $0x44] sm:$0xf]
    %v9074 = vld [vmem:[%s9055 + $0x48] sm:$0xf]
    %v9075 = vld [vmem:[%s9055 + $0x4c] sm:$0xf]
    %v9076 = vld [vmem:[%s9055 + $0x50] sm:$0xf]
    %v9077 = vld [vmem:[%s9055 + $0x54] sm:$0xf]
    %v9078 = vld [vmem:[%s9055 + $0x58] sm:$0xf]
    %v9079 = vld [vmem:[%s9055 + $0x5c] sm:$0xf]
    %v9080 = vld [vmem:[%s9055 + $0x60] sm:$0xf]
    %v9081 = vld [vmem:[%s9055 + $0x64] sm:$0xf]
    %v9082 = vld [vmem:[%s9055 + $0x68] sm:$0xf]
    %v9083 = vld [vmem:[%s9055 + $0x6c] sm:$0xf]
    %v9084 = vld [vmem:[%s9055 + $0x70] sm:$0xf]
    %v9085 = vld [vmem:[%s9055 + $0x74] sm:$0xf]
    %v9086 = vld [vmem:[%s9055 + $0x78] sm:$0xf]
    %v9087 = vld [vmem:[%s9055 + $0x7c] sm:$0xf]
    %v9120 = vunpack.c.l.b16 %v9056
    %v9121 = vunpack.c.l.b16 %v9057
    %v9122 = vunpack.c.l.b16 %v9058
    %v9123 = vunpack.c.l.b16 %v9059
    %v9124 = vunpack.c.l.b16 %v9060
    %v9125 = vunpack.c.l.b16 %v9061
    %v9126 = vunpack.c.l.b16 %v9062
    %v9127 = vunpack.c.l.b16 %v9063
    %v9128 = vunpack.c.l.b16 %v9064
    %v9129 = vunpack.c.l.b16 %v9065
    %v9130 = vunpack.c.l.b16 %v9066
    %v9131 = vunpack.c.l.b16 %v9067
    %v9132 = vunpack.c.l.b16 %v9068
    %v9133 = vunpack.c.l.b16 %v9069
    %v9134 = vunpack.c.l.b16 %v9070
    %v9135 = vunpack.c.l.b16 %v9071
    %v9136 = vunpack.c.l.b16 %v9072
    %v9137 = vunpack.c.l.b16 %v9073
    %v9138 = vunpack.c.l.b16 %v9074
    %v9139 = vunpack.c.l.b16 %v9075
    %v9140 = vunpack.c.l.b16 %v9076
    %v9141 = vunpack.c.l.b16 %v9077
    %v9142 = vunpack.c.l.b16 %v9078
    %v9143 = vunpack.c.l.b16 %v9079
    %v9144 = vunpack.c.l.b16 %v9080
    %v9145 = vunpack.c.l.b16 %v9081
    %v9146 = vunpack.c.l.b16 %v9082
    %v9147 = vunpack.c.l.b16 %v9083
    %v9148 = vunpack.c.l.b16 %v9084
    %v9149 = vunpack.c.l.b16 %v9085
    %v9150 = vunpack.c.l.b16 %v9086
    %v9151 = vunpack.c.l.b16 %v9087
    %v9152 = vpack.c.b16 %v9121, %v9120
    %v9153 = vpack.c.b16 %v9123, %v9122
    %v9154 = vpack.c.b16 %v9125, %v9124
    %v9155 = vpack.c.b16 %v9127, %v9126
    %v9156 = vpack.c.b16 %v9129, %v9128
    %v9157 = vpack.c.b16 %v9131, %v9130
    %v9158 = vpack.c.b16 %v9133, %v9132
    %v9159 = vpack.c.b16 %v9135, %v9134
    %v9160 = vpack.c.b16 %v9137, %v9136
    %v9161 = vpack.c.b16 %v9139, %v9138
    %v9162 = vpack.c.b16 %v9141, %v9140
    %v9163 = vpack.c.b16 %v9143, %v9142
    %v9164 = vpack.c.b16 %v9145, %v9144
    %v9165 = vpack.c.b16 %v9147, %v9146
    %v9166 = vpack.c.b16 %v9149, %v9148
    %v9167 = vpack.c.b16 %v9151, %v9150
    %9184 = vmatprep.subr.bf16.mxu0 0
    %9185 = vmatpush1.bf16.msra.mxu0 %v9152
    %9186 = vmatprep.subr.bf16.mxu0 0
    %9187 = vmatpush1.bf16.msra.mxu0 %v9153
    %9188 = vmatprep.subr.bf16.mxu0 0
    %9189 = vmatpush1.bf16.msra.mxu0 %v9154
    %9190 = vmatprep.subr.bf16.mxu0 0
    %9191 = vmatpush1.bf16.msra.mxu0 %v9155
    %9192 = vmatprep.subr.bf16.mxu0 0
    %9193 = vmatpush1.bf16.msra.mxu0 %v9156
    %9194 = vmatprep.subr.bf16.mxu0 0
    %9195 = vmatpush1.bf16.msra.mxu0 %v9157
    %9196 = vmatprep.subr.bf16.mxu0 0
    %9197 = vmatpush1.bf16.msra.mxu0 %v9158
    %9198 = vmatprep.subr.bf16.mxu0 0
    %9199 = vmatpush1.bf16.msra.mxu0 %v9159
    %9200 = vmatprep.subr.bf16.mxu0 0
    %9201 = vmatpush1.bf16.msra.mxu0 %v9160
    %9202 = vmatprep.subr.bf16.mxu0 0
    %9203 = vmatpush1.bf16.msra.mxu0 %v9161
    %9204 = vmatprep.subr.bf16.mxu0 0
    %9205 = vmatpush1.bf16.msra.mxu0 %v9162
    %9206 = vmatprep.subr.bf16.mxu0 0
    %9207 = vmatpush1.bf16.msra.mxu0 %v9163
    %9208 = vmatprep.subr.bf16.mxu0 0
    %9209 = vmatpush1.bf16.msra.mxu0 %v9164
    %9210 = vmatprep.subr.bf16.mxu0 0
    %9211 = vmatpush1.bf16.msra.mxu0 %v9165
    %9212 = vmatprep.subr.bf16.mxu0 0
    %9213 = vmatpush1.bf16.msra.mxu0 %v9166
    %9214 = vmatprep.subr.bf16.mxu0 0
    %9215 = vmatpush1.bf16.msra.mxu0 %v9167
    %9216 = vmatprep.mubr.bf16.mxu0 %v9024
    %9217 = vmatmul.mubr.bf16.gmra.mrb[0].mxu0 %v9023
    %v9218 = vpop.f32.mrb[0].mxu0
    %v9219 = vadd.f32 0.0, %v9218
    %v9220 = vpop.f32.mrb[0].mxu0
    %v9221 = vpop.f32.mrb[0].mxu0
    %v9222 = vadd.f32 0.0, %v9221
    %v9223 = vpop.f32.mrb[0].mxu0
    %9224 = vmatprep.mubr.bf16.mxu0 %v9026
    %9225 = vmatmul.mubr.bf16.gmra.mrb[0].mxu0 %v9025
    %v9226 = vpop.f32.mrb[0].mxu0
    %v9227 = vadd.f32 0.0, %v9226
    %v9228 = vpop.f32.mrb[0].mxu0
    %v9229 = vpop.f32.mrb[0].mxu0
    %v9230 = vadd.f32 0.0, %v9229
    %v9231 = vpop.f32.mrb[0].mxu0
    %9232 = vmatprep.mubr.bf16.mxu0 %v9028
    %9233 = vmatmul.mubr.bf16.gmra.mrb[0].mxu0 %v9027
    %v9234 = vpop.f32.mrb[0].mxu0
    %v9235 = vadd.f32 0.0, %v9234
    %v9236 = vpop.f32.mrb[0].mxu0
    %v9237 = vpop.f32.mrb[0].mxu0
    %v9238 = vadd.f32 0.0, %v9237
    %v9239 = vpop.f32.mrb[0].mxu0
    %9240 = vmatprep.mubr.bf16.mxu0 %v9030
    %9241 = vmatmul.mubr.bf16.gmra.mrb[0].mxu0 %v9029
    %v9242 = vpop.f32.mrb[0].mxu0
    %v9243 = vadd.f32 0.0, %v9242
    %v9244 = vpop.f32.mrb[0].mxu0
    %v9245 = vpop.f32.mrb[0].mxu0
    %v9246 = vadd.f32 0.0, %v9245
    %v9247 = vpop.f32.mrb[0].mxu0
    %9248 = vmatprep.mubr.bf16.mxu0 %v9032
    %9249 = vmatmul.mubr.bf16.gmra.mrb[0].mxu0 %v9031
    %v9250 = vpop.f32.mrb[0].mxu0
    %v9251 = vadd.f32 0.0, %v9250
    %v9252 = vpop.f32.mrb[0].mxu0
    %v9253 = vpop.f32.mrb[0].mxu0
    %v9254 = vadd.f32 0.0, %v9253
    %v9255 = vpop.f32.mrb[0].mxu0
    %9256 = vmatprep.mubr.bf16.mxu0 %v9034
    %9257 = vmatmul.mubr.bf16.gmra.mrb[0].mxu0 %v9033
    %v9258 = vpop.f32.mrb[0].mxu0
    %v9259 = vadd.f32 0.0, %v9258
    %v9260 = vpop.f32.mrb[0].mxu0
    %v9261 = vpop.f32.mrb[0].mxu0
    %v9262 = vadd.f32 0.0, %v9261
    %v9263 = vpop.f32.mrb[0].mxu0
    %9264 = vmatprep.mubr.bf16.mxu0 %v9036
    %9265 = vmatmul.mubr.bf16.gmra.mrb[0].mxu0 %v9035
    %v9266 = vpop.f32.mrb[0].mxu0
    %v9267 = vadd.f32 0.0, %v9266
    %v9268 = vpop.f32.mrb[0].mxu0
    %v9269 = vpop.f32.mrb[0].mxu0
    %v9270 = vadd.f32 0.0, %v9269
    %v9271 = vpop.f32.mrb[0].mxu0
    %9272 = vmatprep.mubr.bf16.mxu0 %v9038
    %9273 = vmatmul.mubr.bf16.gmra.mrb[0].mxu0 %v9037
    %v9274 = vpop.f32.mrb[0].mxu0
    %v9275 = vadd.f32 0.0, %v9274
    %v9276 = vpop.f32.mrb[0].mxu0
    %v9277 = vpop.f32.mrb[0].mxu0
    %v9278 = vadd.f32 0.0, %v9277
    %v9279 = vpop.f32.mrb[0].mxu0
    %9280 = vdwg.mxu0
    %v9281 = vadd.f32 %v9039, %v9219
    %v9282 = vadd.f32 %v9040, %v9222
    %v9283 = vadd.f32 %v9041, %v9227
    %v9284 = vadd.f32 %v9042, %v9230
    %v9285 = vadd.f32 %v9043, %v9235
    %v9286 = vadd.f32 %v9044, %v9238
    %v9287 = vadd.f32 %v9045, %v9243
    %v9288 = vadd.f32 %v9046, %v9246
    %v9289 = vadd.f32 %v9047, %v9251
    %v9290 = vadd.f32 %v9048, %v9254
    %v9291 = vadd.f32 %v9049, %v9259
    %v9292 = vadd.f32 %v9050, %v9262
    %v9293 = vadd.f32 %v9051, %v9267
    %v9294 = vadd.f32 %v9052, %v9270
    %v9295 = vadd.f32 %v9053, %v9275
    %v9296 = vadd.f32 %v9054, %v9278
    %9297 = vst.msk [vmem:[#allocation7] sm:$0xff] %vm5597, %v9281
    %9298 = vst.msk [vmem:[#allocation7 + $0x8] sm:$0xff] %vm5597, %v9282
    %9299 = vst.msk [vmem:[#allocation7 + $0x10] sm:$0xff] %vm5597, %v9283
    %9300 = vst.msk [vmem:[#allocation7 + $0x18] sm:$0xff] %vm5597, %v9284
    %9301 = vst.msk [vmem:[#allocation7 + $0x20] sm:$0xff] %vm5597, %v9285
    %9302 = vst.msk [vmem:[#allocation7 + $0x28] sm:$0xff] %vm5597, %v9286
    %9303 = vst.msk [vmem:[#allocation7 + $0x30] sm:$0xff] %vm5597, %v9287
    %9304 = vst.msk [vmem:[#allocation7 + $0x38] sm:$0xff] %vm5597, %v9288
    %9305 = vst.msk [vmem:[#allocation7 + $0x40] sm:$0xff] %vm5597, %v9289
    %9306 = vst.msk [vmem:[#allocation7 + $0x48] sm:$0xff] %vm5597, %v9290
    %9307 = vst.msk [vmem:[#allocation7 + $0x50] sm:$0xff] %vm5597, %v9291
    %9308 = vst.msk [vmem:[#allocation7 + $0x58] sm:$0xff] %vm5597, %v9292
    %9309 = vst.msk [vmem:[#allocation7 + $0x60] sm:$0xff] %vm5597, %v9293
    %9310 = vst.msk [vmem:[#allocation7 + $0x68] sm:$0xff] %vm5597, %v9294
    %9311 = vst.msk [vmem:[#allocation7 + $0x70] sm:$0xff] %vm5597, %v9295
    %9312 = vst.msk [vmem:[#allocation7 + $0x78] sm:$0xff] %vm5597, %v9296
    %v9313 = vld [vmem:[#allocation7] sm:$0xff]
    %v9314 = vld [vmem:[#allocation7 + $0x8] sm:$0xff]
    %v9315 = vld [vmem:[#allocation7 + $0x10] sm:$0xff]
    %v9316 = vld [vmem:[#allocation7 + $0x18] sm:$0xff]
    %v9317 = vld [vmem:[#allocation7 + $0x20] sm:$0xff]
    %v9318 = vld [vmem:[#allocation7 + $0x28] sm:$0xff]
    %v9319 = vld [vmem:[#allocation7 + $0x30] sm:$0xff]
    %v9320 = vld [vmem:[#allocation7 + $0x38] sm:$0xff]
    %v9321 = vld [vmem:[#allocation7 + $0x40] sm:$0xff]
    %v9322 = vld [vmem:[#allocation7 + $0x48] sm:$0xff]
    %v9323 = vld [vmem:[#allocation7 + $0x50] sm:$0xff]
    %v9324 = vld [vmem:[#allocation7 + $0x58] sm:$0xff]
    %v9325 = vld [vmem:[#allocation7 + $0x60] sm:$0xff]
    %v9326 = vld [vmem:[#allocation7 + $0x68] sm:$0xff]
    %v9327 = vld [vmem:[#allocation7 + $0x70] sm:$0xff]
    %v9328 = vld [vmem:[#allocation7 + $0x78] sm:$0xff]
    %v9329 = vld [vmem:[%s4] sm:$0x1]
    %v9331 = vlaneseq
    %v9332 = vshrl.u32 %v9331, 7
    %v9333 = vsub.s32 0, %v9332
    %v9334 = vrot.slane %v9329, %v9333
    %v9336 = vadd.f32 %v9313, %v9334
    %v9337 = vadd.f32 %v9314, %v9334
    %v9338 = vadd.f32 %v9315, %v9334
    %v9339 = vadd.f32 %v9316, %v9334
    %v9340 = vadd.f32 %v9317, %v9334
    %v9341 = vadd.f32 %v9318, %v9334
    %v9342 = vadd.f32 %v9319, %v9334
    %v9343 = vadd.f32 %v9320, %v9334
    %v9344 = vadd.f32 %v9321, %v9334
    %v9345 = vadd.f32 %v9322, %v9334
    %v9346 = vadd.f32 %v9323, %v9334
    %v9347 = vadd.f32 %v9324, %v9334
    %v9348 = vadd.f32 %v9325, %v9334
    %v9349 = vadd.f32 %v9326, %v9334
    %v9350 = vadd.f32 %v9327, %v9334
    %v9351 = vadd.f32 %v9328, %v9334
    %9352 = vst.msk [vmem:[#allocation8] sm:$0xff] %vm5597, %v9336
    %9353 = vst.msk [vmem:[#allocation8 + $0x8] sm:$0xff] %vm5597, %v9337
    %9354 = vst.msk [vmem:[#allocation8 + $0x10] sm:$0xff] %vm5597, %v9338
    %9355 = vst.msk [vmem:[#allocation8 + $0x18] sm:$0xff] %vm5597, %v9339
    %9356 = vst.msk [vmem:[#allocation8 + $0x20] sm:$0xff] %vm5597, %v9340
    %9357 = vst.msk [vmem:[#allocation8 + $0x28] sm:$0xff] %vm5597, %v9341
    %9358 = vst.msk [vmem:[#allocation8 + $0x30] sm:$0xff] %vm5597, %v9342
    %9359 = vst.msk [vmem:[#allocation8 + $0x38] sm:$0xff] %vm5597, %v9343
    %9360 = vst.msk [vmem:[#allocation8 + $0x40] sm:$0xff] %vm5597, %v9344
    %9361 = vst.msk [vmem:[#allocation8 + $0x48] sm:$0xff] %vm5597, %v9345
    %9362 = vst.msk [vmem:[#allocation8 + $0x50] sm:$0xff] %vm5597, %v9346
    %9363 = vst.msk [vmem:[#allocation8 + $0x58] sm:$0xff] %vm5597, %v9347
    %9364 = vst.msk [vmem:[#allocation8 + $0x60] sm:$0xff] %vm5597, %v9348
    %9365 = vst.msk [vmem:[#allocation8 + $0x68] sm:$0xff] %vm5597, %v9349
    %9366 = vst.msk [vmem:[#allocation8 + $0x70] sm:$0xff] %vm5597, %v9350
    %9367 = vst.msk [vmem:[#allocation8 + $0x78] sm:$0xff] %vm5597, %v9351
    // Predicated region
    $region22: #{final_conv_block.1} parent=1 // pred_check
      _
    $region23: #{final_conv_block.1} parent=1 // pred_check_branch
      %9369 = sbr.rel (0) target = $region25
    $region24: #{final_conv_block.1} parent=1 // pred_region
      %s9371 = ssub.s32 2048, 2048
      %9372 = vsyncadd [#allocation9], %s9371
      %s9373 = sshll.u32 [#allocation8], 4
      %s9374 = int_to_ptr.vmem [resolvable:$true] %s9373
      %9379 = dma.vmem_to_hbm [thread:$0]  %s9374, 2048, %s5, [#allocation9], 128, 128, 8
    $region25: #{final_conv_block.1} parent=1 // pred_fallthru
      _
    // Predicated region
    $region26: #{final_conv_block.1} parent=1 // pred_check
      _
    $region27: #{final_conv_block.1} parent=1 // pred_check_branch
      %9381 = sbr.rel (0) target = $region29
    $region28: #{final_conv_block.1} parent=1 // pred_region
      %9382 = dma.done [#allocation9], 2048
    $region29: #{final_conv_block.1} parent=1 // pred_fallthru
      _
    %9383 = vsyncpa [#allocation9], 1

</llo_original>
